<compile_context>
chip_gen: v5e
topology: v5e:2x2
jax: 0.10.0
libtpu: 0.0.40
codegen_flags: <defaults>
</compile_context>

<pallas_src>
import jax
import jax.numpy as jnp
from jax.experimental import pallas as pl
from jax.experimental.pallas import tpu as pltpu

EPS = 1e-5
N_ATT1 = 13
N_ATT2 = 21


# ------------------------------------------------------------------
# Fused kernel: GAP + fc1/fc2/fc3 (+ReLU) + concat + cls head
# ------------------------------------------------------------------
def _isnet_kernel(obj_ref, att1_ref, att2_ref,
                  w1_ref, b1_ref, w2_ref, b2_ref, w3_ref, b3_ref,
                  g1_ref, be1_ref, wc1_ref, bc1_ref,
                  g2_ref, be2_ref, wc2_ref, bc2_ref,
                  out_ref):
    B = obj_ref.shape[0]

    # ---- AvgPool2d(kernel_size=8) over the full 8x8 map == mean over the
    #      spatial (lane) axis of the (B, C, H*W) input, then fc1 + ReLU.
    gap = jnp.mean(obj_ref[...], axis=-1)                               # (B, C) f32
    obj_act = jnp.dot(gap.astype(jnp.bfloat16), w1_ref[...],
                      preferred_element_type=jnp.float32) + b1_ref[...]
    obj_act = jnp.maximum(obj_act, 0.0)                                 # (B, 128)

    # ---- fc2 / fc3 + ReLU on the flattened attention tokens (rows b*S + s).
    a1 = jnp.dot(att1_ref[...].astype(jnp.bfloat16), w2_ref[...],
                 preferred_element_type=jnp.float32) + b2_ref[...]
    a1 = jnp.maximum(a1, 0.0)                                           # (B*13, 128)
    a2 = jnp.dot(att2_ref[...].astype(jnp.bfloat16), w3_ref[...],
                 preferred_element_type=jnp.float32) + b3_ref[...]
    a2 = jnp.maximum(a2, 0.0)                                           # (B*21, 128)

    # ---- torch.cat([obj, att1.view(B,-1), att2.view(B,-1)], dim=-1)
    #      Built with static single-row slices + lane-axis concatenation
    #      (no in-kernel reshapes); 128-aligned lane offsets throughout.
    rows = []
    for b in range(B):
        parts = [obj_act[b:b + 1, :]]
        for s in range(N_ATT1):
            r = b * N_ATT1 + s
            parts.append(a1[r:r + 1, :])
        for s in range(N_ATT2):
            r = b * N_ATT2 + s
            parts.append(a2[r:r + 1, :])
        rows.append(jnp.concatenate(parts, axis=-1))                    # (1, 4480)
    x = jnp.concatenate(rows, axis=0)                                   # (B, 4480)

    # ---- cls head: BN1d -> Linear -> ReLU -> BN1d -> Linear (all BN in f32)
    mu = jnp.mean(x, axis=0, keepdims=True)
    var = jnp.mean((x - mu) ** 2, axis=0, keepdims=True)
    xh = (x - mu) * jax.lax.rsqrt(var + EPS) * g1_ref[...] + be1_ref[...]

    h = jnp.dot(xh.astype(jnp.bfloat16), wc1_ref[...],
                preferred_element_type=jnp.float32) + bc1_ref[...]      # (B, 16)
    h = jnp.maximum(h, 0.0)

    mu2 = jnp.mean(h, axis=0, keepdims=True)
    var2 = jnp.mean((h - mu2) ** 2, axis=0, keepdims=True)
    hh = (h - mu2) * jax.lax.rsqrt(var2 + EPS) * g2_ref[...] + be2_ref[...]

    out_ref[...] = jnp.dot(hh, wc2_ref[...],
                           preferred_element_type=jnp.float32) + bc2_ref[...]  # (B, 1)


_VM = pl.BlockSpec(memory_space=pltpu.MemorySpace.VMEM)


# ------------------------------------------------------------------
# Wrapper: only free (contiguous) reshapes outside the kernel.
# ------------------------------------------------------------------
def isnet_forward(params, object_level, att1, att2):
    B, C, H, W = object_level.shape
    S1, S2 = att1.shape[1], att2.shape[1]
    assert S1 == N_ATT1 and S2 == N_ATT2

    obj_in = object_level.reshape(B, C, H * W)          # no transpose, no copy
    att1_in = att1.reshape(B * S1, att1.shape[-1])
    att2_in = att2.reshape(B * S2, att2.shape[-1])

    out = pl.pallas_call(
        _isnet_kernel,
        out_shape=jax.ShapeDtypeStruct((B, params["wc2"].shape[1]), jnp.float32),
        in_specs=[_VM] * 17,
        out_specs=_VM,
    )(obj_in, att1_in, att2_in,
      params["w1"], params["b1"],
      params["w2"], params["b2"],
      params["w3"], params["b3"],
      params["bn1_g"], params["bn1_b"], params["wc1"], params["bc1"],
      params["bn2_g"], params["bn2_b"], params["wc2"], params["bc2"])
    return out


# ------------------------------------------------------------------
# Deterministic parameter construction (PyTorch-Linear-style uniform init).
# Large matmul weights are stored in bf16 (one-time cast); everything else f32.
# ------------------------------------------------------------------
def make_params(key, inner_dim=128, object_dim=2048, feat_dim=512, num_class=1):
    def linear(k, fan_in, fan_out, w_dtype=jnp.float32):
        bound = 1.0 / (fan_in ** 0.5)
        kw, kb = jax.random.split(k)
        w = jax.random.uniform(kw, (fan_in, fan_out), jnp.float32, -bound, bound)
        b = jax.random.uniform(kb, (1, fan_out), jnp.float32, -bound, bound)
        return w.astype(w_dtype), b

    k1, k2, k3, k4, k5 = jax.random.split(key, 5)
    cat_dim = inner_dim * (1 + N_ATT1 + N_ATT2)
    hid = num_class * 16

    w1, b1 = linear(k1, object_dim, inner_dim, jnp.bfloat16)   # fc1
    w2, b2 = linear(k2, feat_dim, inner_dim, jnp.bfloat16)     # fc2
    w3, b3 = linear(k3, feat_dim, inner_dim, jnp.bfloat16)     # fc3
    wc1, bc1 = linear(k4, cat_dim, hid, jnp.bfloat16)          # cls Linear #1
    wc2, bc2 = linear(k5, hid, num_class)                      # cls Linear #2 (f32)

    return dict(
        w1=w1, b1=b1, w2=w2, b2=b2, w3=w3, b3=b3,
        bn1_g=jnp.ones((1, cat_dim), jnp.float32),
        bn1_b=jnp.zeros((1, cat_dim), jnp.float32),
        wc1=wc1, bc1=bc1,
        bn2_g=jnp.ones((1, hid), jnp.float32),
        bn2_b=jnp.zeros((1, hid), jnp.float32),
        wc2=wc2, bc2=bc2,
    )


if __name__ == "__main__":
    key = jax.random.PRNGKey(0)
    kp, kx1, kx2, kx3 = jax.random.split(key, 4)

    # Shapes implied by the module defaults (kernel_size=8 -> 8x8 spatial,
    # object_dim=2048 channels, feat_dim=512, 13 / 21 attention tokens).
    B = 2
    params = make_params(kp)
    object_level = jax.random.normal(kx1, (B, 2048, 8, 8), jnp.float32)
    att1 = jax.random.normal(kx2, (B, N_ATT1, 512), jnp.float32)
    att2 = jax.random.normal(kx3, (B, N_ATT2, 512), jnp.float32)

    fwd = jax.jit(isnet_forward)
    out = fwd(params, object_level, att1, att2)
    out = jax.block_until_ready(out)
    assert out.shape == (B, 1) and out.dtype == jnp.float32
    print("KERNEL_OK")
</pallas_src>

<mosaic_0001>
module attributes {stable_mosaic.version = 11 : i64} {
  func.func @_isnet_kernel(%arg0: memref<2x2048x64xf32, #tpu.memory_space<vmem>>, %arg1: memref<26x512xf32, #tpu.memory_space<vmem>>, %arg2: memref<42x512xf32, #tpu.memory_space<vmem>>, %arg3: memref<2048x128xbf16, #tpu.memory_space<vmem>>, %arg4: memref<1x128xf32, #tpu.memory_space<vmem>>, %arg5: memref<512x128xbf16, #tpu.memory_space<vmem>>, %arg6: memref<1x128xf32, #tpu.memory_space<vmem>>, %arg7: memref<512x128xbf16, #tpu.memory_space<vmem>>, %arg8: memref<1x128xf32, #tpu.memory_space<vmem>>, %arg9: memref<1x4480xf32, #tpu.memory_space<vmem>>, %arg10: memref<1x4480xf32, #tpu.memory_space<vmem>>, %arg11: memref<4480x16xbf16, #tpu.memory_space<vmem>>, %arg12: memref<1x16xf32, #tpu.memory_space<vmem>>, %arg13: memref<1x16xf32, #tpu.memory_space<vmem>>, %arg14: memref<1x16xf32, #tpu.memory_space<vmem>>, %arg15: memref<16x1xf32, #tpu.memory_space<vmem>>, %arg16: memref<1x1xf32, #tpu.memory_space<vmem>>, %arg17: memref<2x1xf32, #tpu.memory_space<vmem>>) attributes {dimension_semantics = [], scalar_prefetch = 0 : i64, scratch_operands = 0 : i64, tpu.core_type = #tpu.core_type<tc>} {
    %c0 = arith.constant 0 : index
    %c0_0 = arith.constant 0 : index
    %c0_1 = arith.constant 0 : index
    %0 = vector.load %arg0[%c0, %c0_0, %c0_1] : memref<2x2048x64xf32, #tpu.memory_space<vmem>>, vector<2x2048x64xf32>
    %cst = arith.constant dense<0.000000e+00> : vector<2x2048xf32>
    %1 = vector.multi_reduction <add>, %0, %cst [2] : vector<2x2048x64xf32> to vector<2x2048xf32>
    %cst_2 = arith.constant 6.400000e+01 : f32
    %2 = vector.broadcast %cst_2 : f32 to vector<2x2048xf32>
    %3 = arith.divf %1, %2 : vector<2x2048xf32>
    %4 = arith.truncf %3 : vector<2x2048xf32> to vector<2x2048xbf16>
    %c0_3 = arith.constant 0 : index
    %c0_4 = arith.constant 0 : index
    %5 = vector.load %arg3[%c0_3, %c0_4] : memref<2048x128xbf16, #tpu.memory_space<vmem>>, vector<2048x128xbf16>
    %cst_5 = arith.constant dense<0.000000e+00> : vector<2x128xf32>
    %6 = tpu.matmul %4, %5, %cst_5 {dimension_numbers = #tpu.dot_dimension_numbers<[1], [0], [0], [1], [0, 0, 1, 1], [], []>} : vector<2x2048xbf16>, vector<2048x128xbf16>, vector<2x128xf32> -> vector<2x128xf32>
    %c0_6 = arith.constant 0 : index
    %c0_7 = arith.constant 0 : index
    %7 = vector.load %arg4[%c0_6, %c0_7] : memref<1x128xf32, #tpu.memory_space<vmem>>, vector<1x128xf32>
    %8 = vector.broadcast %7 : vector<1x128xf32> to vector<2x128xf32>
    %9 = arith.addf %6, %8 : vector<2x128xf32>
    %cst_8 = arith.constant 0.000000e+00 : f32
    %10 = vector.broadcast %cst_8 : f32 to vector<2x128xf32>
    %11 = arith.maximumf %9, %10 : vector<2x128xf32>
    %c0_9 = arith.constant 0 : index
    %c0_10 = arith.constant 0 : index
    %12 = vector.load %arg1[%c0_9, %c0_10] : memref<26x512xf32, #tpu.memory_space<vmem>>, vector<26x512xf32>
    %13 = arith.truncf %12 : vector<26x512xf32> to vector<26x512xbf16>
    %c0_11 = arith.constant 0 : index
    %c0_12 = arith.constant 0 : index
    %14 = vector.load %arg5[%c0_11, %c0_12] : memref<512x128xbf16, #tpu.memory_space<vmem>>, vector<512x128xbf16>
    %cst_13 = arith.constant dense<0.000000e+00> : vector<26x128xf32>
    %15 = tpu.matmul %13, %14, %cst_13 {dimension_numbers = #tpu.dot_dimension_numbers<[1], [0], [0], [1], [0, 0, 1, 1], [], []>} : vector<26x512xbf16>, vector<512x128xbf16>, vector<26x128xf32> -> vector<26x128xf32>
    %c0_14 = arith.constant 0 : index
    %c0_15 = arith.constant 0 : index
    %16 = vector.load %arg6[%c0_14, %c0_15] : memref<1x128xf32, #tpu.memory_space<vmem>>, vector<1x128xf32>
    %17 = vector.broadcast %16 : vector<1x128xf32> to vector<26x128xf32>
    %18 = arith.addf %15, %17 : vector<26x128xf32>
    %cst_16 = arith.constant 0.000000e+00 : f32
    %19 = vector.broadcast %cst_16 : f32 to vector<26x128xf32>
    %20 = arith.maximumf %18, %19 : vector<26x128xf32>
    %c0_17 = arith.constant 0 : index
    %c0_18 = arith.constant 0 : index
    %21 = vector.load %arg2[%c0_17, %c0_18] : memref<42x512xf32, #tpu.memory_space<vmem>>, vector<42x512xf32>
    %22 = arith.truncf %21 : vector<42x512xf32> to vector<42x512xbf16>
    %c0_19 = arith.constant 0 : index
    %c0_20 = arith.constant 0 : index
    %23 = vector.load %arg7[%c0_19, %c0_20] : memref<512x128xbf16, #tpu.memory_space<vmem>>, vector<512x128xbf16>
    %cst_21 = arith.constant dense<0.000000e+00> : vector<42x128xf32>
    %24 = tpu.matmul %22, %23, %cst_21 {dimension_numbers = #tpu.dot_dimension_numbers<[1], [0], [0], [1], [0, 0, 1, 1], [], []>} : vector<42x512xbf16>, vector<512x128xbf16>, vector<42x128xf32> -> vector<42x128xf32>
    %c0_22 = arith.constant 0 : index
    %c0_23 = arith.constant 0 : index
    %25 = vector.load %arg8[%c0_22, %c0_23] : memref<1x128xf32, #tpu.memory_space<vmem>>, vector<1x128xf32>
    %26 = vector.broadcast %25 : vector<1x128xf32> to vector<42x128xf32>
    %27 = arith.addf %24, %26 : vector<42x128xf32>
    %cst_24 = arith.constant 0.000000e+00 : f32
    %28 = vector.broadcast %cst_24 : f32 to vector<42x128xf32>
    %29 = arith.maximumf %27, %28 : vector<42x128xf32>
    %30 = vector.extract_strided_slice %11 {offsets = [0, 0], sizes = [1, 128], strides = [1, 1]} : vector<2x128xf32> to vector<1x128xf32>
    %31 = vector.extract_strided_slice %20 {offsets = [0, 0], sizes = [1, 128], strides = [1, 1]} : vector<26x128xf32> to vector<1x128xf32>
    %32 = vector.extract_strided_slice %20 {offsets = [1, 0], sizes = [1, 128], strides = [1, 1]} : vector<26x128xf32> to vector<1x128xf32>
    %33 = vector.extract_strided_slice %20 {offsets = [2, 0], sizes = [1, 128], strides = [1, 1]} : vector<26x128xf32> to vector<1x128xf32>
    %34 = vector.extract_strided_slice %20 {offsets = [3, 0], sizes = [1, 128], strides = [1, 1]} : vector<26x128xf32> to vector<1x128xf32>
    %35 = vector.extract_strided_slice %20 {offsets = [4, 0], sizes = [1, 128], strides = [1, 1]} : vector<26x128xf32> to vector<1x128xf32>
    %36 = vector.extract_strided_slice %20 {offsets = [5, 0], sizes = [1, 128], strides = [1, 1]} : vector<26x128xf32> to vector<1x128xf32>
    %37 = vector.extract_strided_slice %20 {offsets = [6, 0], sizes = [1, 128], strides = [1, 1]} : vector<26x128xf32> to vector<1x128xf32>
    %38 = vector.extract_strided_slice %20 {offsets = [7, 0], sizes = [1, 128], strides = [1, 1]} : vector<26x128xf32> to vector<1x128xf32>
    %39 = vector.extract_strided_slice %20 {offsets = [8, 0], sizes = [1, 128], strides = [1, 1]} : vector<26x128xf32> to vector<1x128xf32>
    %40 = vector.extract_strided_slice %20 {offsets = [9, 0], sizes = [1, 128], strides = [1, 1]} : vector<26x128xf32> to vector<1x128xf32>
    %41 = vector.extract_strided_slice %20 {offsets = [10, 0], sizes = [1, 128], strides = [1, 1]} : vector<26x128xf32> to vector<1x128xf32>
    %42 = vector.extract_strided_slice %20 {offsets = [11, 0], sizes = [1, 128], strides = [1, 1]} : vector<26x128xf32> to vector<1x128xf32>
    %43 = vector.extract_strided_slice %20 {offsets = [12, 0], sizes = [1, 128], strides = [1, 1]} : vector<26x128xf32> to vector<1x128xf32>
    %44 = vector.extract_strided_slice %29 {offsets = [0, 0], sizes = [1, 128], strides = [1, 1]} : vector<42x128xf32> to vector<1x128xf32>
    %45 = vector.extract_strided_slice %29 {offsets = [1, 0], sizes = [1, 128], strides = [1, 1]} : vector<42x128xf32> to vector<1x128xf32>
    %46 = vector.extract_strided_slice %29 {offsets = [2, 0], sizes = [1, 128], strides = [1, 1]} : vector<42x128xf32> to vector<1x128xf32>
    %47 = vector.extract_strided_slice %29 {offsets = [3, 0], sizes = [1, 128], strides = [1, 1]} : vector<42x128xf32> to vector<1x128xf32>
    %48 = vector.extract_strided_slice %29 {offsets = [4, 0], sizes = [1, 128], strides = [1, 1]} : vector<42x128xf32> to vector<1x128xf32>
    %49 = vector.extract_strided_slice %29 {offsets = [5, 0], sizes = [1, 128], strides = [1, 1]} : vector<42x128xf32> to vector<1x128xf32>
    %50 = vector.extract_strided_slice %29 {offsets = [6, 0], sizes = [1, 128], strides = [1, 1]} : vector<42x128xf32> to vector<1x128xf32>
    %51 = vector.extract_strided_slice %29 {offsets = [7, 0], sizes = [1, 128], strides = [1, 1]} : vector<42x128xf32> to vector<1x128xf32>
    %52 = vector.extract_strided_slice %29 {offsets = [8, 0], sizes = [1, 128], strides = [1, 1]} : vector<42x128xf32> to vector<1x128xf32>
    %53 = vector.extract_strided_slice %29 {offsets = [9, 0], sizes = [1, 128], strides = [1, 1]} : vector<42x128xf32> to vector<1x128xf32>
    %54 = vector.extract_strided_slice %29 {offsets = [10, 0], sizes = [1, 128], strides = [1, 1]} : vector<42x128xf32> to vector<1x128xf32>
    %55 = vector.extract_strided_slice %29 {offsets = [11, 0], sizes = [1, 128], strides = [1, 1]} : vector<42x128xf32> to vector<1x128xf32>
    %56 = vector.extract_strided_slice %29 {offsets = [12, 0], sizes = [1, 128], strides = [1, 1]} : vector<42x128xf32> to vector<1x128xf32>
    %57 = vector.extract_strided_slice %29 {offsets = [13, 0], sizes = [1, 128], strides = [1, 1]} : vector<42x128xf32> to vector<1x128xf32>
    %58 = vector.extract_strided_slice %29 {offsets = [14, 0], sizes = [1, 128], strides = [1, 1]} : vector<42x128xf32> to vector<1x128xf32>
    %59 = vector.extract_strided_slice %29 {offsets = [15, 0], sizes = [1, 128], strides = [1, 1]} : vector<42x128xf32> to vector<1x128xf32>
    %60 = vector.extract_strided_slice %29 {offsets = [16, 0], sizes = [1, 128], strides = [1, 1]} : vector<42x128xf32> to vector<1x128xf32>
    %61 = vector.extract_strided_slice %29 {offsets = [17, 0], sizes = [1, 128], strides = [1, 1]} : vector<42x128xf32> to vector<1x128xf32>
    %62 = vector.extract_strided_slice %29 {offsets = [18, 0], sizes = [1, 128], strides = [1, 1]} : vector<42x128xf32> to vector<1x128xf32>
    %63 = vector.extract_strided_slice %29 {offsets = [19, 0], sizes = [1, 128], strides = [1, 1]} : vector<42x128xf32> to vector<1x128xf32>
    %64 = vector.extract_strided_slice %29 {offsets = [20, 0], sizes = [1, 128], strides = [1, 1]} : vector<42x128xf32> to vector<1x128xf32>
    %65 = tpu.concatenate %30, %31, %32, %33, %34, %35, %36, %37, %38, %39, %40, %41, %42, %43, %44, %45 in 1 : vector<1x128xf32>, vector<1x128xf32>, vector<1x128xf32>, vector<1x128xf32>, vector<1x128xf32>, vector<1x128xf32>, vector<1x128xf32>, vector<1x128xf32>, vector<1x128xf32>, vector<1x128xf32>, vector<1x128xf32>, vector<1x128xf32>, vector<1x128xf32>, vector<1x128xf32>, vector<1x128xf32>, vector<1x128xf32> -> vector<1x2048xf32>
    %66 = tpu.concatenate %46, %47, %48, %49, %50, %51, %52, %53, %54, %55, %56, %57, %58, %59, %60, %61 in 1 : vector<1x128xf32>, vector<1x128xf32>, vector<1x128xf32>, vector<1x128xf32>, vector<1x128xf32>, vector<1x128xf32>, vector<1x128xf32>, vector<1x128xf32>, vector<1x128xf32>, vector<1x128xf32>, vector<1x128xf32>, vector<1x128xf32>, vector<1x128xf32>, vector<1x128xf32>, vector<1x128xf32>, vector<1x128xf32> -> vector<1x2048xf32>
    %67 = tpu.concatenate %62, %63, %64 in 1 : vector<1x128xf32>, vector<1x128xf32>, vector<1x128xf32> -> vector<1x384xf32>
    %68 = tpu.concatenate %65, %66, %67 in 1 : vector<1x2048xf32>, vector<1x2048xf32>, vector<1x384xf32> -> vector<1x4480xf32>
    %69 = vector.extract_strided_slice %11 {offsets = [1, 0], sizes = [1, 128], strides = [1, 1]} : vector<2x128xf32> to vector<1x128xf32>
    %70 = vector.extract_strided_slice %20 {offsets = [13, 0], sizes = [1, 128], strides = [1, 1]} : vector<26x128xf32> to vector<1x128xf32>
    %71 = vector.extract_strided_slice %20 {offsets = [14, 0], sizes = [1, 128], strides = [1, 1]} : vector<26x128xf32> to vector<1x128xf32>
    %72 = vector.extract_strided_slice %20 {offsets = [15, 0], sizes = [1, 128], strides = [1, 1]} : vector<26x128xf32> to vector<1x128xf32>
    %73 = vector.extract_strided_slice %20 {offsets = [16, 0], sizes = [1, 128], strides = [1, 1]} : vector<26x128xf32> to vector<1x128xf32>
    %74 = vector.extract_strided_slice %20 {offsets = [17, 0], sizes = [1, 128], strides = [1, 1]} : vector<26x128xf32> to vector<1x128xf32>
    %75 = vector.extract_strided_slice %20 {offsets = [18, 0], sizes = [1, 128], strides = [1, 1]} : vector<26x128xf32> to vector<1x128xf32>
    %76 = vector.extract_strided_slice %20 {offsets = [19, 0], sizes = [1, 128], strides = [1, 1]} : vector<26x128xf32> to vector<1x128xf32>
    %77 = vector.extract_strided_slice %20 {offsets = [20, 0], sizes = [1, 128], strides = [1, 1]} : vector<26x128xf32> to vector<1x128xf32>
    %78 = vector.extract_strided_slice %20 {offsets = [21, 0], sizes = [1, 128], strides = [1, 1]} : vector<26x128xf32> to vector<1x128xf32>
    %79 = vector.extract_strided_slice %20 {offsets = [22, 0], sizes = [1, 128], strides = [1, 1]} : vector<26x128xf32> to vector<1x128xf32>
    %80 = vector.extract_strided_slice %20 {offsets = [23, 0], sizes = [1, 128], strides = [1, 1]} : vector<26x128xf32> to vector<1x128xf32>
    %81 = vector.extract_strided_slice %20 {offsets = [24, 0], sizes = [1, 128], strides = [1, 1]} : vector<26x128xf32> to vector<1x128xf32>
    %82 = vector.extract_strided_slice %20 {offsets = [25, 0], sizes = [1, 128], strides = [1, 1]} : vector<26x128xf32> to vector<1x128xf32>
    %83 = vector.extract_strided_slice %29 {offsets = [21, 0], sizes = [1, 128], strides = [1, 1]} : vector<42x128xf32> to vector<1x128xf32>
    %84 = vector.extract_strided_slice %29 {offsets = [22, 0], sizes = [1, 128], strides = [1, 1]} : vector<42x128xf32> to vector<1x128xf32>
    %85 = vector.extract_strided_slice %29 {offsets = [23, 0], sizes = [1, 128], strides = [1, 1]} : vector<42x128xf32> to vector<1x128xf32>
    %86 = vector.extract_strided_slice %29 {offsets = [24, 0], sizes = [1, 128], strides = [1, 1]} : vector<42x128xf32> to vector<1x128xf32>
    %87 = vector.extract_strided_slice %29 {offsets = [25, 0], sizes = [1, 128], strides = [1, 1]} : vector<42x128xf32> to vector<1x128xf32>
    %88 = vector.extract_strided_slice %29 {offsets = [26, 0], sizes = [1, 128], strides = [1, 1]} : vector<42x128xf32> to vector<1x128xf32>
    %89 = vector.extract_strided_slice %29 {offsets = [27, 0], sizes = [1, 128], strides = [1, 1]} : vector<42x128xf32> to vector<1x128xf32>
    %90 = vector.extract_strided_slice %29 {offsets = [28, 0], sizes = [1, 128], strides = [1, 1]} : vector<42x128xf32> to vector<1x128xf32>
    %91 = vector.extract_strided_slice %29 {offsets = [29, 0], sizes = [1, 128], strides = [1, 1]} : vector<42x128xf32> to vector<1x128xf32>
    %92 = vector.extract_strided_slice %29 {offsets = [30, 0], sizes = [1, 128], strides = [1, 1]} : vector<42x128xf32> to vector<1x128xf32>
    %93 = vector.extract_strided_slice %29 {offsets = [31, 0], sizes = [1, 128], strides = [1, 1]} : vector<42x128xf32> to vector<1x128xf32>
    %94 = vector.extract_strided_slice %29 {offsets = [32, 0], sizes = [1, 128], strides = [1, 1]} : vector<42x128xf32> to vector<1x128xf32>
    %95 = vector.extract_strided_slice %29 {offsets = [33, 0], sizes = [1, 128], strides = [1, 1]} : vector<42x128xf32> to vector<1x128xf32>
    %96 = vector.extract_strided_slice %29 {offsets = [34, 0], sizes = [1, 128], strides = [1, 1]} : vector<42x128xf32> to vector<1x128xf32>
    %97 = vector.extract_strided_slice %29 {offsets = [35, 0], sizes = [1, 128], strides = [1, 1]} : vector<42x128xf32> to vector<1x128xf32>
    %98 = vector.extract_strided_slice %29 {offsets = [36, 0], sizes = [1, 128], strides = [1, 1]} : vector<42x128xf32> to vector<1x128xf32>
    %99 = vector.extract_strided_slice %29 {offsets = [37, 0], sizes = [1, 128], strides = [1, 1]} : vector<42x128xf32> to vector<1x128xf32>
    %100 = vector.extract_strided_slice %29 {offsets = [38, 0], sizes = [1, 128], strides = [1, 1]} : vector<42x128xf32> to vector<1x128xf32>
    %101 = vector.extract_strided_slice %29 {offsets = [39, 0], sizes = [1, 128], strides = [1, 1]} : vector<42x128xf32> to vector<1x128xf32>
    %102 = vector.extract_strided_slice %29 {offsets = [40, 0], sizes = [1, 128], strides = [1, 1]} : vector<42x128xf32> to vector<1x128xf32>
    %103 = vector.extract_strided_slice %29 {offsets = [41, 0], sizes = [1, 128], strides = [1, 1]} : vector<42x128xf32> to vector<1x128xf32>
    %104 = tpu.concatenate %69, %70, %71, %72, %73, %74, %75, %76, %77, %78, %79, %80, %81, %82, %83, %84 in 1 : vector<1x128xf32>, vector<1x128xf32>, vector<1x128xf32>, vector<1x128xf32>, vector<1x128xf32>, vector<1x128xf32>, vector<1x128xf32>, vector<1x128xf32>, vector<1x128xf32>, vector<1x128xf32>, vector<1x128xf32>, vector<1x128xf32>, vector<1x128xf32>, vector<1x128xf32>, vector<1x128xf32>, vector<1x128xf32> -> vector<1x2048xf32>
    %105 = tpu.concatenate %85, %86, %87, %88, %89, %90, %91, %92, %93, %94, %95, %96, %97, %98, %99, %100 in 1 : vector<1x128xf32>, vector<1x128xf32>, vector<1x128xf32>, vector<1x128xf32>, vector<1x128xf32>, vector<1x128xf32>, vector<1x128xf32>, vector<1x128xf32>, vector<1x128xf32>, vector<1x128xf32>, vector<1x128xf32>, vector<1x128xf32>, vector<1x128xf32>, vector<1x128xf32>, vector<1x128xf32>, vector<1x128xf32> -> vector<1x2048xf32>
    %106 = tpu.concatenate %101, %102, %103 in 1 : vector<1x128xf32>, vector<1x128xf32>, vector<1x128xf32> -> vector<1x384xf32>
    %107 = tpu.concatenate %104, %105, %106 in 1 : vector<1x2048xf32>, vector<1x2048xf32>, vector<1x384xf32> -> vector<1x4480xf32>
    %108 = tpu.concatenate %68, %107 in 0 : vector<1x4480xf32>, vector<1x4480xf32> -> vector<2x4480xf32>
    %cst_25 = arith.constant dense<0.000000e+00> : vector<4480xf32>
    %109 = vector.multi_reduction <add>, %108, %cst_25 [0] : vector<2x4480xf32> to vector<4480xf32>
    %110 = vector.shape_cast %109 : vector<4480xf32> to vector<1x4480xf32>
    %cst_26 = arith.constant 2.000000e+00 : f32
    %111 = vector.broadcast %cst_26 : f32 to vector<1x4480xf32>
    %112 = arith.divf %110, %111 : vector<1x4480xf32>
    %113 = vector.broadcast %112 : vector<1x4480xf32> to vector<2x4480xf32>
    %114 = arith.subf %108, %113 : vector<2x4480xf32>
    %115 = arith.mulf %114, %114 : vector<2x4480xf32>
    %cst_27 = arith.constant dense<0.000000e+00> : vector<4480xf32>
    %116 = vector.multi_reduction <add>, %115, %cst_27 [0] : vector<2x4480xf32> to vector<4480xf32>
    %117 = vector.shape_cast %116 : vector<4480xf32> to vector<1x4480xf32>
    %cst_28 = arith.constant 2.000000e+00 : f32
    %118 = vector.broadcast %cst_28 : f32 to vector<1x4480xf32>
    %119 = arith.divf %117, %118 : vector<1x4480xf32>
    %120 = vector.broadcast %112 : vector<1x4480xf32> to vector<2x4480xf32>
    %121 = arith.subf %108, %120 : vector<2x4480xf32>
    %cst_29 = arith.constant 9.99999974E-6 : f32
    %122 = vector.broadcast %cst_29 : f32 to vector<1x4480xf32>
    %123 = arith.addf %119, %122 : vector<1x4480xf32>
    %124 = math.rsqrt %123 : vector<1x4480xf32>
    %125 = vector.broadcast %124 : vector<1x4480xf32> to vector<2x4480xf32>
    %126 = arith.mulf %121, %125 : vector<2x4480xf32>
    %c0_30 = arith.constant 0 : index
    %c0_31 = arith.constant 0 : index
    %127 = vector.load %arg9[%c0_30, %c0_31] : memref<1x4480xf32, #tpu.memory_space<vmem>>, vector<1x4480xf32>
    %128 = vector.broadcast %127 : vector<1x4480xf32> to vector<2x4480xf32>
    %129 = arith.mulf %126, %128 : vector<2x4480xf32>
    %c0_32 = arith.constant 0 : index
    %c0_33 = arith.constant 0 : index
    %130 = vector.load %arg10[%c0_32, %c0_33] : memref<1x4480xf32, #tpu.memory_space<vmem>>, vector<1x4480xf32>
    %131 = vector.broadcast %130 : vector<1x4480xf32> to vector<2x4480xf32>
    %132 = arith.addf %129, %131 : vector<2x4480xf32>
    %133 = arith.truncf %132 : vector<2x4480xf32> to vector<2x4480xbf16>
    %c0_34 = arith.constant 0 : index
    %c0_35 = arith.constant 0 : index
    %134 = vector.load %arg11[%c0_34, %c0_35] : memref<4480x16xbf16, #tpu.memory_space<vmem>>, vector<4480x16xbf16>
    %cst_36 = arith.constant dense<0.000000e+00> : vector<2x16xf32>
    %135 = tpu.matmul %133, %134, %cst_36 {dimension_numbers = #tpu.dot_dimension_numbers<[1], [0], [0], [1], [0, 0, 1, 1], [], []>} : vector<2x4480xbf16>, vector<4480x16xbf16>, vector<2x16xf32> -> vector<2x16xf32>
    %c0_37 = arith.constant 0 : index
    %c0_38 = arith.constant 0 : index
    %136 = vector.load %arg12[%c0_37, %c0_38] : memref<1x16xf32, #tpu.memory_space<vmem>>, vector<1x16xf32>
    %137 = vector.broadcast %136 : vector<1x16xf32> to vector<2x16xf32>
    %138 = arith.addf %135, %137 : vector<2x16xf32>
    %cst_39 = arith.constant 0.000000e+00 : f32
    %139 = vector.broadcast %cst_39 : f32 to vector<2x16xf32>
    %140 = arith.maximumf %138, %139 : vector<2x16xf32>
    %cst_40 = arith.constant dense<0.000000e+00> : vector<16xf32>
    %141 = vector.multi_reduction <add>, %140, %cst_40 [0] : vector<2x16xf32> to vector<16xf32>
    %142 = vector.shape_cast %141 : vector<16xf32> to vector<1x16xf32>
    %cst_41 = arith.constant 2.000000e+00 : f32
    %143 = vector.broadcast %cst_41 : f32 to vector<1x16xf32>
    %144 = arith.divf %142, %143 : vector<1x16xf32>
    %145 = vector.broadcast %144 : vector<1x16xf32> to vector<2x16xf32>
    %146 = arith.subf %140, %145 : vector<2x16xf32>
    %147 = arith.mulf %146, %146 : vector<2x16xf32>
    %cst_42 = arith.constant dense<0.000000e+00> : vector<16xf32>
    %148 = vector.multi_reduction <add>, %147, %cst_42 [0] : vector<2x16xf32> to vector<16xf32>
    %149 = vector.shape_cast %148 : vector<16xf32> to vector<1x16xf32>
    %cst_43 = arith.constant 2.000000e+00 : f32
    %150 = vector.broadcast %cst_43 : f32 to vector<1x16xf32>
    %151 = arith.divf %149, %150 : vector<1x16xf32>
    %152 = vector.broadcast %144 : vector<1x16xf32> to vector<2x16xf32>
    %153 = arith.subf %140, %152 : vector<2x16xf32>
    %cst_44 = arith.constant 9.99999974E-6 : f32
    %154 = vector.broadcast %cst_44 : f32 to vector<1x16xf32>
    %155 = arith.addf %151, %154 : vector<1x16xf32>
    %156 = math.rsqrt %155 : vector<1x16xf32>
    %157 = vector.broadcast %156 : vector<1x16xf32> to vector<2x16xf32>
    %158 = arith.mulf %153, %157 : vector<2x16xf32>
    %c0_45 = arith.constant 0 : index
    %c0_46 = arith.constant 0 : index
    %159 = vector.load %arg13[%c0_45, %c0_46] : memref<1x16xf32, #tpu.memory_space<vmem>>, vector<1x16xf32>
    %160 = vector.broadcast %159 : vector<1x16xf32> to vector<2x16xf32>
    %161 = arith.mulf %158, %160 : vector<2x16xf32>
    %c0_47 = arith.constant 0 : index
    %c0_48 = arith.constant 0 : index
    %162 = vector.load %arg14[%c0_47, %c0_48] : memref<1x16xf32, #tpu.memory_space<vmem>>, vector<1x16xf32>
    %163 = vector.broadcast %162 : vector<1x16xf32> to vector<2x16xf32>
    %164 = arith.addf %161, %163 : vector<2x16xf32>
    %c0_49 = arith.constant 0 : index
    %c0_50 = arith.constant 0 : index
    %165 = vector.load %arg15[%c0_49, %c0_50] : memref<16x1xf32, #tpu.memory_space<vmem>>, vector<16x1xf32>
    %cst_51 = arith.constant dense<0.000000e+00> : vector<2x1xf32>
    %166 = tpu.matmul %164, %165, %cst_51 {dimension_numbers = #tpu.dot_dimension_numbers<[1], [0], [0], [1], [0, 0, 1, 1], [], []>} : vector<2x16xf32>, vector<16x1xf32>, vector<2x1xf32> -> vector<2x1xf32>
    %c0_52 = arith.constant 0 : index
    %c0_53 = arith.constant 0 : index
    %167 = vector.load %arg16[%c0_52, %c0_53] : memref<1x1xf32, #tpu.memory_space<vmem>>, vector<1x1xf32>
    %168 = vector.broadcast %167 : vector<1x1xf32> to vector<2x1xf32>
    %169 = arith.addf %166, %168 : vector<2x1xf32>
    %c0_54 = arith.constant 0 : index
    %c0_55 = arith.constant 0 : index
    %170 = vector.load %arg17[%c0_54, %c0_55] : memref<2x1xf32, #tpu.memory_space<vmem>>, vector<2x1xf32>
    tpu.vector_store %arg17[%c0_54, %c0_55], %169 {strides = array<i32>} : memref<2x1xf32, #tpu.memory_space<vmem>>, vector<2x1xf32>,
    return
  }
}

</mosaic_0001>

<llo_original>
// kernel: isnet_forward.1
$region0: #{isnet_forward.1}
  #allocation0 [shape = 'u32[]', space=smem, size = 0x4, offset = 0x4, fixed_abs, tag = 'smem constant byte address 0x4 - core index']
  #allocation1 [shape = 'u32[72,128]{1,0:T(1,128)}', space=vmem, size = 0x9000, scoped, tag = 'internal scratch']
  #allocation2 [shape = 'f32[1,1]{1,0:T(1,128)S(1)}', space=vmem, size = 0x200, scoped, tag = 'scoped memory for isnet_forward.1']
  %s0 = inlined_call_operand.vmem [shape: f32[2,2048,64], index: 0, kind: input, shape index: {}]
  %s1 = inlined_call_operand.vmem [shape: f32[26,512], index: 1, kind: input, shape index: {}]
  %s2 = inlined_call_operand.vmem [shape: f32[42,512], index: 2, kind: input, shape index: {}]
  %s3 = inlined_call_operand.vmem [shape: bf16[2048,128], index: 3, kind: input, shape index: {}]
  %s4 = inlined_call_operand.vmem [shape: f32[1,128], index: 4, kind: input, shape index: {}]
  %s5 = inlined_call_operand.vmem [shape: bf16[512,128], index: 5, kind: input, shape index: {}]
  %s6 = inlined_call_operand.vmem [shape: f32[1,128], index: 6, kind: input, shape index: {}]
  %s7 = inlined_call_operand.vmem [shape: bf16[512,128], index: 7, kind: input, shape index: {}]
  %s8 = inlined_call_operand.vmem [shape: f32[1,128], index: 8, kind: input, shape index: {}]
  %s9 = inlined_call_operand.vmem [shape: f32[1,4480], index: 9, kind: input, shape index: {}]
  %s10 = inlined_call_operand.vmem [shape: f32[1,4480], index: 10, kind: input, shape index: {}]
  %s11 = inlined_call_operand.vmem [shape: bf16[4480,16], index: 11, kind: input, shape index: {}]
  %s12 = inlined_call_operand.vmem [shape: f32[1,16], index: 12, kind: input, shape index: {}]
  %s13 = inlined_call_operand.vmem [shape: f32[1,16], index: 13, kind: input, shape index: {}]
  %s14 = inlined_call_operand.vmem [shape: f32[1,16], index: 14, kind: input, shape index: {}]
  %s15 = inlined_call_operand.vmem [shape: f32[16,1], index: 15, kind: input, shape index: {}]
  %s16 = inlined_call_operand.<no memory space> [shape: f32[1,1], index: 16, kind: input, shape index: {}]
  %s17 = inlined_call_operand.vmem [shape: f32[2,1], index: 17, kind: output, shape index: {}]
  %s18 = sld [smem:[#allocation0]]
  $region78: #{isnet_forward.1} parent=0
    _
  %s20 = ssub.s32 1, %s18
  %s21 = scalar_select 0, %s20, %s18
  %v22 = vstv %s16
  %23 = vst [vmem:[#allocation2] sm:$0x1] %v22
  // Predicated region
  $region2: #{isnet_forward.1} parent=0 // pred_check
    _
  $region3: #{isnet_forward.1} parent=0 // pred_check_branch
    %25 = sbr.rel (0) target = $region5
  $region4: #{isnet_forward.1} parent=0 // pred_region
    _
  $region5: #{isnet_forward.1} parent=0 // pred_fallthru
    _
  // Predicated region
  $region6: #{isnet_forward.1} parent=0 // pred_check
    _
  $region7: #{isnet_forward.1} parent=0 // pred_check_branch
    %27 = sbr.rel (0) target = $region9
  $region8: #{isnet_forward.1} parent=0 // pred_region
    _
  $region9: #{isnet_forward.1} parent=0 // pred_fallthru
    _
  // Predicated region
  $region10: #{isnet_forward.1} parent=0 // pred_check
    _
  $region11: #{isnet_forward.1} parent=0 // pred_check_branch
    %29 = sbr.rel (0) target = $region13
  $region12: #{isnet_forward.1} parent=0 // pred_region
    _
  $region13: #{isnet_forward.1} parent=0 // pred_fallthru
    _
  // Predicated region
  $region14: #{isnet_forward.1} parent=0 // pred_check
    _
  $region15: #{isnet_forward.1} parent=0 // pred_check_branch
    %31 = sbr.rel (0) target = $region17
  $region16: #{isnet_forward.1} parent=0 // pred_region
    _
  $region17: #{isnet_forward.1} parent=0 // pred_fallthru
    _
  // Predicated region
  $region18: #{isnet_forward.1} parent=0 // pred_check
    _
  $region19: #{isnet_forward.1} parent=0 // pred_check_branch
    %33 = sbr.rel (0) target = $region21
  $region20: #{isnet_forward.1} parent=0 // pred_region
    _
  $region21: #{isnet_forward.1} parent=0 // pred_fallthru
    _
  // Predicated region
  $region22: #{isnet_forward.1} parent=0 // pred_check
    _
  $region23: #{isnet_forward.1} parent=0 // pred_check_branch
    %35 = sbr.rel (0) target = $region25
  $region24: #{isnet_forward.1} parent=0 // pred_region
    _
  $region25: #{isnet_forward.1} parent=0 // pred_fallthru
    _
  // Predicated region
  $region26: #{isnet_forward.1} parent=0 // pred_check
    _
  $region27: #{isnet_forward.1} parent=0 // pred_check_branch
    %37 = sbr.rel (0) target = $region29
  $region28: #{isnet_forward.1} parent=0 // pred_region
    _
  $region29: #{isnet_forward.1} parent=0 // pred_fallthru
    _
  // Predicated region
  $region30: #{isnet_forward.1} parent=0 // pred_check
    _
  $region31: #{isnet_forward.1} parent=0 // pred_check_branch
    %39 = sbr.rel (0) target = $region33
  $region32: #{isnet_forward.1} parent=0 // pred_region
    _
  $region33: #{isnet_forward.1} parent=0 // pred_fallthru
    _
  // Predicated region
  $region34: #{isnet_forward.1} parent=0 // pred_check
    _
  $region35: #{isnet_forward.1} parent=0 // pred_check_branch
    %41 = sbr.rel (0) target = $region37
  $region36: #{isnet_forward.1} parent=0 // pred_region
    _
  $region37: #{isnet_forward.1} parent=0 // pred_fallthru
    _
  // Predicated region
  $region38: #{isnet_forward.1} parent=0 // pred_check
    _
  $region39: #{isnet_forward.1} parent=0 // pred_check_branch
    %43 = sbr.rel (0) target = $region41
  $region40: #{isnet_forward.1} parent=0 // pred_region
    _
  $region41: #{isnet_forward.1} parent=0 // pred_fallthru
    _
  // Predicated region
  $region42: #{isnet_forward.1} parent=0 // pred_check
    _
  $region43: #{isnet_forward.1} parent=0 // pred_check_branch
    %45 = sbr.rel (0) target = $region45
  $region44: #{isnet_forward.1} parent=0 // pred_region
    _
  $region45: #{isnet_forward.1} parent=0 // pred_fallthru
    _
  // Predicated region
  $region46: #{isnet_forward.1} parent=0 // pred_check
    _
  $region47: #{isnet_forward.1} parent=0 // pred_check_branch
    %47 = sbr.rel (0) target = $region49
  $region48: #{isnet_forward.1} parent=0 // pred_region
    _
  $region49: #{isnet_forward.1} parent=0 // pred_fallthru
    _
  // Predicated region
  $region50: #{isnet_forward.1} parent=0 // pred_check
    _
  $region51: #{isnet_forward.1} parent=0 // pred_check_branch
    %49 = sbr.rel (0) target = $region53
  $region52: #{isnet_forward.1} parent=0 // pred_region
    _
  $region53: #{isnet_forward.1} parent=0 // pred_fallthru
    _
  // Predicated region
  $region54: #{isnet_forward.1} parent=0 // pred_check
    _
  $region55: #{isnet_forward.1} parent=0 // pred_check_branch
    %51 = sbr.rel (0) target = $region57
  $region56: #{isnet_forward.1} parent=0 // pred_region
    _
  $region57: #{isnet_forward.1} parent=0 // pred_fallthru
    _
  // Predicated region
  $region58: #{isnet_forward.1} parent=0 // pred_check
    _
  $region59: #{isnet_forward.1} parent=0 // pred_check_branch
    %53 = sbr.rel (0) target = $region61
  $region60: #{isnet_forward.1} parent=0 // pred_region
    _
  $region61: #{isnet_forward.1} parent=0 // pred_fallthru
    _
  // Predicated region
  $region62: #{isnet_forward.1} parent=0 // pred_check
    _
  $region63: #{isnet_forward.1} parent=0 // pred_check_branch
    %55 = sbr.rel (0) target = $region65
  $region64: #{isnet_forward.1} parent=0 // pred_region
    _
  $region65: #{isnet_forward.1} parent=0 // pred_fallthru
    _
  // Predicated region
  $region66: #{isnet_forward.1} parent=0 // pred_check
    _
  $region67: #{isnet_forward.1} parent=0 // pred_check_branch
    %57 = sbr.rel (0) target = $region69
  $region68: #{isnet_forward.1} parent=0 // pred_region
    _
  $region69: #{isnet_forward.1} parent=0 // pred_fallthru
    _
  %v58 = vld [vmem:[%s0] sm:$0xff]
  %v59 = vld [vmem:[%s0 + $0x8] sm:$0xff]
  %v60 = vld [vmem:[%s0 + $0x10] sm:$0xff]
  %v61 = vld [vmem:[%s0 + $0x18] sm:$0xff]
  %v62 = vld [vmem:[%s0 + $0x20] sm:$0xff]
  %v63 = vld [vmem:[%s0 + $0x28] sm:$0xff]
  %v64 = vld [vmem:[%s0 + $0x30] sm:$0xff]
  %v65 = vld [vmem:[%s0 + $0x38] sm:$0xff]
  %v66 = vld [vmem:[%s0 + $0x40] sm:$0xff]
  %v67 = vld [vmem:[%s0 + $0x48] sm:$0xff]
  %v68 = vld [vmem:[%s0 + $0x50] sm:$0xff]
  %v69 = vld [vmem:[%s0 + $0x58] sm:$0xff]
  %v70 = vld [vmem:[%s0 + $0x60] sm:$0xff]
  %v71 = vld [vmem:[%s0 + $0x68] sm:$0xff]
  %v72 = vld [vmem:[%s0 + $0x70] sm:$0xff]
  %v73 = vld [vmem:[%s0 + $0x78] sm:$0xff]
  %v74 = vld [vmem:[%s0 + $0x80] sm:$0xff]
  %v75 = vld [vmem:[%s0 + $0x88] sm:$0xff]
  %v76 = vld [vmem:[%s0 + $0x90] sm:$0xff]
  %v77 = vld [vmem:[%s0 + $0x98] sm:$0xff]
  %v78 = vld [vmem:[%s0 + $0xa0] sm:$0xff]
  %v79 = vld [vmem:[%s0 + $0xa8] sm:$0xff]
  %v80 = vld [vmem:[%s0 + $0xb0] sm:$0xff]
  %v81 = vld [vmem:[%s0 + $0xb8] sm:$0xff]
  %v82 = vld [vmem:[%s0 + $0xc0] sm:$0xff]
  %v83 = vld [vmem:[%s0 + $0xc8] sm:$0xff]
  %v84 = vld [vmem:[%s0 + $0xd0] sm:$0xff]
  %v85 = vld [vmem:[%s0 + $0xd8] sm:$0xff]
  %v86 = vld [vmem:[%s0 + $0xe0] sm:$0xff]
  %v87 = vld [vmem:[%s0 + $0xe8] sm:$0xff]
  %v88 = vld [vmem:[%s0 + $0xf0] sm:$0xff]
  %v89 = vld [vmem:[%s0 + $0xf8] sm:$0xff]
  %v90 = vld [vmem:[%s0 + $0x100] sm:$0xff]
  %v91 = vld [vmem:[%s0 + $0x108] sm:$0xff]
  %v92 = vld [vmem:[%s0 + $0x110] sm:$0xff]
  %v93 = vld [vmem:[%s0 + $0x118] sm:$0xff]
  %v94 = vld [vmem:[%s0 + $0x120] sm:$0xff]
  %v95 = vld [vmem:[%s0 + $0x128] sm:$0xff]
  %v96 = vld [vmem:[%s0 + $0x130] sm:$0xff]
  %v97 = vld [vmem:[%s0 + $0x138] sm:$0xff]
  %v98 = vld [vmem:[%s0 + $0x140] sm:$0xff]
  %v99 = vld [vmem:[%s0 + $0x148] sm:$0xff]
  %v100 = vld [vmem:[%s0 + $0x150] sm:$0xff]
  %v101 = vld [vmem:[%s0 + $0x158] sm:$0xff]
  %v102 = vld [vmem:[%s0 + $0x160] sm:$0xff]
  %v103 = vld [vmem:[%s0 + $0x168] sm:$0xff]
  %v104 = vld [vmem:[%s0 + $0x170] sm:$0xff]
  %v105 = vld [vmem:[%s0 + $0x178] sm:$0xff]
  %v106 = vld [vmem:[%s0 + $0x180] sm:$0xff]
  %v107 = vld [vmem:[%s0 + $0x188] sm:$0xff]
  %v108 = vld [vmem:[%s0 + $0x190] sm:$0xff]
  %v109 = vld [vmem:[%s0 + $0x198] sm:$0xff]
  %v110 = vld [vmem:[%s0 + $0x1a0] sm:$0xff]
  %v111 = vld [vmem:[%s0 + $0x1a8] sm:$0xff]
  %v112 = vld [vmem:[%s0 + $0x1b0] sm:$0xff]
  %v113 = vld [vmem:[%s0 + $0x1b8] sm:$0xff]
  %v114 = vld [vmem:[%s0 + $0x1c0] sm:$0xff]
  %v115 = vld [vmem:[%s0 + $0x1c8] sm:$0xff]
  %v116 = vld [vmem:[%s0 + $0x1d0] sm:$0xff]
  %v117 = vld [vmem:[%s0 + $0x1d8] sm:$0xff]
  %v118 = vld [vmem:[%s0 + $0x1e0] sm:$0xff]
  %v119 = vld [vmem:[%s0 + $0x1e8] sm:$0xff]
  %v120 = vld [vmem:[%s0 + $0x1f0] sm:$0xff]
  %v121 = vld [vmem:[%s0 + $0x1f8] sm:$0xff]
  %v122 = vld [vmem:[%s0 + $0x200] sm:$0xff]
  %v123 = vld [vmem:[%s0 + $0x208] sm:$0xff]
  %v124 = vld [vmem:[%s0 + $0x210] sm:$0xff]
  %v125 = vld [vmem:[%s0 + $0x218] sm:$0xff]
  %v126 = vld [vmem:[%s0 + $0x220] sm:$0xff]
  %v127 = vld [vmem:[%s0 + $0x228] sm:$0xff]
  %v128 = vld [vmem:[%s0 + $0x230] sm:$0xff]
  %v129 = vld [vmem:[%s0 + $0x238] sm:$0xff]
  %v130 = vld [vmem:[%s0 + $0x240] sm:$0xff]
  %v131 = vld [vmem:[%s0 + $0x248] sm:$0xff]
  %v132 = vld [vmem:[%s0 + $0x250] sm:$0xff]
  %v133 = vld [vmem:[%s0 + $0x258] sm:$0xff]
  %v134 = vld [vmem:[%s0 + $0x260] sm:$0xff]
  %v135 = vld [vmem:[%s0 + $0x268] sm:$0xff]
  %v136 = vld [vmem:[%s0 + $0x270] sm:$0xff]
  %v137 = vld [vmem:[%s0 + $0x278] sm:$0xff]
  %v138 = vld [vmem:[%s0 + $0x280] sm:$0xff]
  %v139 = vld [vmem:[%s0 + $0x288] sm:$0xff]
  %v140 = vld [vmem:[%s0 + $0x290] sm:$0xff]
  %v141 = vld [vmem:[%s0 + $0x298] sm:$0xff]
  %v142 = vld [vmem:[%s0 + $0x2a0] sm:$0xff]
  %v143 = vld [vmem:[%s0 + $0x2a8] sm:$0xff]
  %v144 = vld [vmem:[%s0 + $0x2b0] sm:$0xff]
  %v145 = vld [vmem:[%s0 + $0x2b8] sm:$0xff]
  %v146 = vld [vmem:[%s0 + $0x2c0] sm:$0xff]
  %v147 = vld [vmem:[%s0 + $0x2c8] sm:$0xff]
  %v148 = vld [vmem:[%s0 + $0x2d0] sm:$0xff]
  %v149 = vld [vmem:[%s0 + $0x2d8] sm:$0xff]
  %v150 = vld [vmem:[%s0 + $0x2e0] sm:$0xff]
  %v151 = vld [vmem:[%s0 + $0x2e8] sm:$0xff]
  %v152 = vld [vmem:[%s0 + $0x2f0] sm:$0xff]
  %v153 = vld [vmem:[%s0 + $0x2f8] sm:$0xff]
  %v154 = vld [vmem:[%s0 + $0x300] sm:$0xff]
  %v155 = vld [vmem:[%s0 + $0x308] sm:$0xff]
  %v156 = vld [vmem:[%s0 + $0x310] sm:$0xff]
  %v157 = vld [vmem:[%s0 + $0x318] sm:$0xff]
  %v158 = vld [vmem:[%s0 + $0x320] sm:$0xff]
  %v159 = vld [vmem:[%s0 + $0x328] sm:$0xff]
  %v160 = vld [vmem:[%s0 + $0x330] sm:$0xff]
  %v161 = vld [vmem:[%s0 + $0x338] sm:$0xff]
  %v162 = vld [vmem:[%s0 + $0x340] sm:$0xff]
  %v163 = vld [vmem:[%s0 + $0x348] sm:$0xff]
  %v164 = vld [vmem:[%s0 + $0x350] sm:$0xff]
  %v165 = vld [vmem:[%s0 + $0x358] sm:$0xff]
  %v166 = vld [vmem:[%s0 + $0x360] sm:$0xff]
  %v167 = vld [vmem:[%s0 + $0x368] sm:$0xff]
  %v168 = vld [vmem:[%s0 + $0x370] sm:$0xff]
  %v169 = vld [vmem:[%s0 + $0x378] sm:$0xff]
  %v170 = vld [vmem:[%s0 + $0x380] sm:$0xff]
  %v171 = vld [vmem:[%s0 + $0x388] sm:$0xff]
  %v172 = vld [vmem:[%s0 + $0x390] sm:$0xff]
  %v173 = vld [vmem:[%s0 + $0x398] sm:$0xff]
  %v174 = vld [vmem:[%s0 + $0x3a0] sm:$0xff]
  %v175 = vld [vmem:[%s0 + $0x3a8] sm:$0xff]
  %v176 = vld [vmem:[%s0 + $0x3b0] sm:$0xff]
  %v177 = vld [vmem:[%s0 + $0x3b8] sm:$0xff]
  %v178 = vld [vmem:[%s0 + $0x3c0] sm:$0xff]
  %v179 = vld [vmem:[%s0 + $0x3c8] sm:$0xff]
  %v180 = vld [vmem:[%s0 + $0x3d0] sm:$0xff]
  %v181 = vld [vmem:[%s0 + $0x3d8] sm:$0xff]
  %v182 = vld [vmem:[%s0 + $0x3e0] sm:$0xff]
  %v183 = vld [vmem:[%s0 + $0x3e8] sm:$0xff]
  %v184 = vld [vmem:[%s0 + $0x3f0] sm:$0xff]
  %v185 = vld [vmem:[%s0 + $0x3f8] sm:$0xff]
  %v186 = vld [vmem:[%s0 + $0x400] sm:$0xff]
  %v187 = vld [vmem:[%s0 + $0x408] sm:$0xff]
  %v188 = vld [vmem:[%s0 + $0x410] sm:$0xff]
  %v189 = vld [vmem:[%s0 + $0x418] sm:$0xff]
  %v190 = vld [vmem:[%s0 + $0x420] sm:$0xff]
  %v191 = vld [vmem:[%s0 + $0x428] sm:$0xff]
  %v192 = vld [vmem:[%s0 + $0x430] sm:$0xff]
  %v193 = vld [vmem:[%s0 + $0x438] sm:$0xff]
  %v194 = vld [vmem:[%s0 + $0x440] sm:$0xff]
  %v195 = vld [vmem:[%s0 + $0x448] sm:$0xff]
  %v196 = vld [vmem:[%s0 + $0x450] sm:$0xff]
  %v197 = vld [vmem:[%s0 + $0x458] sm:$0xff]
  %v198 = vld [vmem:[%s0 + $0x460] sm:$0xff]
  %v199 = vld [vmem:[%s0 + $0x468] sm:$0xff]
  %v200 = vld [vmem:[%s0 + $0x470] sm:$0xff]
  %v201 = vld [vmem:[%s0 + $0x478] sm:$0xff]
  %v202 = vld [vmem:[%s0 + $0x480] sm:$0xff]
  %v203 = vld [vmem:[%s0 + $0x488] sm:$0xff]
  %v204 = vld [vmem:[%s0 + $0x490] sm:$0xff]
  %v205 = vld [vmem:[%s0 + $0x498] sm:$0xff]
  %v206 = vld [vmem:[%s0 + $0x4a0] sm:$0xff]
  %v207 = vld [vmem:[%s0 + $0x4a8] sm:$0xff]
  %v208 = vld [vmem:[%s0 + $0x4b0] sm:$0xff]
  %v209 = vld [vmem:[%s0 + $0x4b8] sm:$0xff]
  %v210 = vld [vmem:[%s0 + $0x4c0] sm:$0xff]
  %v211 = vld [vmem:[%s0 + $0x4c8] sm:$0xff]
  %v212 = vld [vmem:[%s0 + $0x4d0] sm:$0xff]
  %v213 = vld [vmem:[%s0 + $0x4d8] sm:$0xff]
  %v214 = vld [vmem:[%s0 + $0x4e0] sm:$0xff]
  %v215 = vld [vmem:[%s0 + $0x4e8] sm:$0xff]
  %v216 = vld [vmem:[%s0 + $0x4f0] sm:$0xff]
  %v217 = vld [vmem:[%s0 + $0x4f8] sm:$0xff]
  %v218 = vld [vmem:[%s0 + $0x500] sm:$0xff]
  %v219 = vld [vmem:[%s0 + $0x508] sm:$0xff]
  %v220 = vld [vmem:[%s0 + $0x510] sm:$0xff]
  %v221 = vld [vmem:[%s0 + $0x518] sm:$0xff]
  %v222 = vld [vmem:[%s0 + $0x520] sm:$0xff]
  %v223 = vld [vmem:[%s0 + $0x528] sm:$0xff]
  %v224 = vld [vmem:[%s0 + $0x530] sm:$0xff]
  %v225 = vld [vmem:[%s0 + $0x538] sm:$0xff]
  %v226 = vld [vmem:[%s0 + $0x540] sm:$0xff]
  %v227 = vld [vmem:[%s0 + $0x548] sm:$0xff]
  %v228 = vld [vmem:[%s0 + $0x550] sm:$0xff]
  %v229 = vld [vmem:[%s0 + $0x558] sm:$0xff]
  %v230 = vld [vmem:[%s0 + $0x560] sm:$0xff]
  %v231 = vld [vmem:[%s0 + $0x568] sm:$0xff]
  %v232 = vld [vmem:[%s0 + $0x570] sm:$0xff]
  %v233 = vld [vmem:[%s0 + $0x578] sm:$0xff]
  %v234 = vld [vmem:[%s0 + $0x580] sm:$0xff]
  %v235 = vld [vmem:[%s0 + $0x588] sm:$0xff]
  %v236 = vld [vmem:[%s0 + $0x590] sm:$0xff]
  %v237 = vld [vmem:[%s0 + $0x598] sm:$0xff]
  %v238 = vld [vmem:[%s0 + $0x5a0] sm:$0xff]
  %v239 = vld [vmem:[%s0 + $0x5a8] sm:$0xff]
  %v240 = vld [vmem:[%s0 + $0x5b0] sm:$0xff]
  %v241 = vld [vmem:[%s0 + $0x5b8] sm:$0xff]
  %v242 = vld [vmem:[%s0 + $0x5c0] sm:$0xff]
  %v243 = vld [vmem:[%s0 + $0x5c8] sm:$0xff]
  %v244 = vld [vmem:[%s0 + $0x5d0] sm:$0xff]
  %v245 = vld [vmem:[%s0 + $0x5d8] sm:$0xff]
  %v246 = vld [vmem:[%s0 + $0x5e0] sm:$0xff]
  %v247 = vld [vmem:[%s0 + $0x5e8] sm:$0xff]
  %v248 = vld [vmem:[%s0 + $0x5f0] sm:$0xff]
  %v249 = vld [vmem:[%s0 + $0x5f8] sm:$0xff]
  %v250 = vld [vmem:[%s0 + $0x600] sm:$0xff]
  %v251 = vld [vmem:[%s0 + $0x608] sm:$0xff]
  %v252 = vld [vmem:[%s0 + $0x610] sm:$0xff]
  %v253 = vld [vmem:[%s0 + $0x618] sm:$0xff]
  %v254 = vld [vmem:[%s0 + $0x620] sm:$0xff]
  %v255 = vld [vmem:[%s0 + $0x628] sm:$0xff]
  %v256 = vld [vmem:[%s0 + $0x630] sm:$0xff]
  %v257 = vld [vmem:[%s0 + $0x638] sm:$0xff]
  %v258 = vld [vmem:[%s0 + $0x640] sm:$0xff]
  %v259 = vld [vmem:[%s0 + $0x648] sm:$0xff]
  %v260 = vld [vmem:[%s0 + $0x650] sm:$0xff]
  %v261 = vld [vmem:[%s0 + $0x658] sm:$0xff]
  %v262 = vld [vmem:[%s0 + $0x660] sm:$0xff]
  %v263 = vld [vmem:[%s0 + $0x668] sm:$0xff]
  %v264 = vld [vmem:[%s0 + $0x670] sm:$0xff]
  %v265 = vld [vmem:[%s0 + $0x678] sm:$0xff]
  %v266 = vld [vmem:[%s0 + $0x680] sm:$0xff]
  %v267 = vld [vmem:[%s0 + $0x688] sm:$0xff]
  %v268 = vld [vmem:[%s0 + $0x690] sm:$0xff]
  %v269 = vld [vmem:[%s0 + $0x698] sm:$0xff]
  %v270 = vld [vmem:[%s0 + $0x6a0] sm:$0xff]
  %v271 = vld [vmem:[%s0 + $0x6a8] sm:$0xff]
  %v272 = vld [vmem:[%s0 + $0x6b0] sm:$0xff]
  %v273 = vld [vmem:[%s0 + $0x6b8] sm:$0xff]
  %v274 = vld [vmem:[%s0 + $0x6c0] sm:$0xff]
  %v275 = vld [vmem:[%s0 + $0x6c8] sm:$0xff]
  %v276 = vld [vmem:[%s0 + $0x6d0] sm:$0xff]
  %v277 = vld [vmem:[%s0 + $0x6d8] sm:$0xff]
  %v278 = vld [vmem:[%s0 + $0x6e0] sm:$0xff]
  %v279 = vld [vmem:[%s0 + $0x6e8] sm:$0xff]
  %v280 = vld [vmem:[%s0 + $0x6f0] sm:$0xff]
  %v281 = vld [vmem:[%s0 + $0x6f8] sm:$0xff]
  %v282 = vld [vmem:[%s0 + $0x700] sm:$0xff]
  %v283 = vld [vmem:[%s0 + $0x708] sm:$0xff]
  %v284 = vld [vmem:[%s0 + $0x710] sm:$0xff]
  %v285 = vld [vmem:[%s0 + $0x718] sm:$0xff]
  %v286 = vld [vmem:[%s0 + $0x720] sm:$0xff]
  %v287 = vld [vmem:[%s0 + $0x728] sm:$0xff]
  %v288 = vld [vmem:[%s0 + $0x730] sm:$0xff]
  %v289 = vld [vmem:[%s0 + $0x738] sm:$0xff]
  %v290 = vld [vmem:[%s0 + $0x740] sm:$0xff]
  %v291 = vld [vmem:[%s0 + $0x748] sm:$0xff]
  %v292 = vld [vmem:[%s0 + $0x750] sm:$0xff]
  %v293 = vld [vmem:[%s0 + $0x758] sm:$0xff]
  %v294 = vld [vmem:[%s0 + $0x760] sm:$0xff]
  %v295 = vld [vmem:[%s0 + $0x768] sm:$0xff]
  %v296 = vld [vmem:[%s0 + $0x770] sm:$0xff]
  %v297 = vld [vmem:[%s0 + $0x778] sm:$0xff]
  %v298 = vld [vmem:[%s0 + $0x780] sm:$0xff]
  %v299 = vld [vmem:[%s0 + $0x788] sm:$0xff]
  %v300 = vld [vmem:[%s0 + $0x790] sm:$0xff]
  %v301 = vld [vmem:[%s0 + $0x798] sm:$0xff]
  %v302 = vld [vmem:[%s0 + $0x7a0] sm:$0xff]
  %v303 = vld [vmem:[%s0 + $0x7a8] sm:$0xff]
  %v304 = vld [vmem:[%s0 + $0x7b0] sm:$0xff]
  %v305 = vld [vmem:[%s0 + $0x7b8] sm:$0xff]
  %v306 = vld [vmem:[%s0 + $0x7c0] sm:$0xff]
  %v307 = vld [vmem:[%s0 + $0x7c8] sm:$0xff]
  %v308 = vld [vmem:[%s0 + $0x7d0] sm:$0xff]
  %v309 = vld [vmem:[%s0 + $0x7d8] sm:$0xff]
  %v310 = vld [vmem:[%s0 + $0x7e0] sm:$0xff]
  %v311 = vld [vmem:[%s0 + $0x7e8] sm:$0xff]
  %v312 = vld [vmem:[%s0 + $0x7f0] sm:$0xff]
  %v313 = vld [vmem:[%s0 + $0x7f8] sm:$0xff]
  %v314 = vld [vmem:[%s0 + $0x800] sm:$0xff]
  %v315 = vld [vmem:[%s0 + $0x808] sm:$0xff]
  %v316 = vld [vmem:[%s0 + $0x810] sm:$0xff]
  %v317 = vld [vmem:[%s0 + $0x818] sm:$0xff]
  %v318 = vld [vmem:[%s0 + $0x820] sm:$0xff]
  %v319 = vld [vmem:[%s0 + $0x828] sm:$0xff]
  %v320 = vld [vmem:[%s0 + $0x830] sm:$0xff]
  %v321 = vld [vmem:[%s0 + $0x838] sm:$0xff]
  %v322 = vld [vmem:[%s0 + $0x840] sm:$0xff]
  %v323 = vld [vmem:[%s0 + $0x848] sm:$0xff]
  %v324 = vld [vmem:[%s0 + $0x850] sm:$0xff]
  %v325 = vld [vmem:[%s0 + $0x858] sm:$0xff]
  %v326 = vld [vmem:[%s0 + $0x860] sm:$0xff]
  %v327 = vld [vmem:[%s0 + $0x868] sm:$0xff]
  %v328 = vld [vmem:[%s0 + $0x870] sm:$0xff]
  %v329 = vld [vmem:[%s0 + $0x878] sm:$0xff]
  %v330 = vld [vmem:[%s0 + $0x880] sm:$0xff]
  %v331 = vld [vmem:[%s0 + $0x888] sm:$0xff]
  %v332 = vld [vmem:[%s0 + $0x890] sm:$0xff]
  %v333 = vld [vmem:[%s0 + $0x898] sm:$0xff]
  %v334 = vld [vmem:[%s0 + $0x8a0] sm:$0xff]
  %v335 = vld [vmem:[%s0 + $0x8a8] sm:$0xff]
  %v336 = vld [vmem:[%s0 + $0x8b0] sm:$0xff]
  %v337 = vld [vmem:[%s0 + $0x8b8] sm:$0xff]
  %v338 = vld [vmem:[%s0 + $0x8c0] sm:$0xff]
  %v339 = vld [vmem:[%s0 + $0x8c8] sm:$0xff]
  %v340 = vld [vmem:[%s0 + $0x8d0] sm:$0xff]
  %v341 = vld [vmem:[%s0 + $0x8d8] sm:$0xff]
  %v342 = vld [vmem:[%s0 + $0x8e0] sm:$0xff]
  %v343 = vld [vmem:[%s0 + $0x8e8] sm:$0xff]
  %v344 = vld [vmem:[%s0 + $0x8f0] sm:$0xff]
  %v345 = vld [vmem:[%s0 + $0x8f8] sm:$0xff]
  %v346 = vld [vmem:[%s0 + $0x900] sm:$0xff]
  %v347 = vld [vmem:[%s0 + $0x908] sm:$0xff]
  %v348 = vld [vmem:[%s0 + $0x910] sm:$0xff]
  %v349 = vld [vmem:[%s0 + $0x918] sm:$0xff]
  %v350 = vld [vmem:[%s0 + $0x920] sm:$0xff]
  %v351 = vld [vmem:[%s0 + $0x928] sm:$0xff]
  %v352 = vld [vmem:[%s0 + $0x930] sm:$0xff]
  %v353 = vld [vmem:[%s0 + $0x938] sm:$0xff]
  %v354 = vld [vmem:[%s0 + $0x940] sm:$0xff]
  %v355 = vld [vmem:[%s0 + $0x948] sm:$0xff]
  %v356 = vld [vmem:[%s0 + $0x950] sm:$0xff]
  %v357 = vld [vmem:[%s0 + $0x958] sm:$0xff]
  %v358 = vld [vmem:[%s0 + $0x960] sm:$0xff]
  %v359 = vld [vmem:[%s0 + $0x968] sm:$0xff]
  %v360 = vld [vmem:[%s0 + $0x970] sm:$0xff]
  %v361 = vld [vmem:[%s0 + $0x978] sm:$0xff]
  %v362 = vld [vmem:[%s0 + $0x980] sm:$0xff]
  %v363 = vld [vmem:[%s0 + $0x988] sm:$0xff]
  %v364 = vld [vmem:[%s0 + $0x990] sm:$0xff]
  %v365 = vld [vmem:[%s0 + $0x998] sm:$0xff]
  %v366 = vld [vmem:[%s0 + $0x9a0] sm:$0xff]
  %v367 = vld [vmem:[%s0 + $0x9a8] sm:$0xff]
  %v368 = vld [vmem:[%s0 + $0x9b0] sm:$0xff]
  %v369 = vld [vmem:[%s0 + $0x9b8] sm:$0xff]
  %v370 = vld [vmem:[%s0 + $0x9c0] sm:$0xff]
  %v371 = vld [vmem:[%s0 + $0x9c8] sm:$0xff]
  %v372 = vld [vmem:[%s0 + $0x9d0] sm:$0xff]
  %v373 = vld [vmem:[%s0 + $0x9d8] sm:$0xff]
  %v374 = vld [vmem:[%s0 + $0x9e0] sm:$0xff]
  %v375 = vld [vmem:[%s0 + $0x9e8] sm:$0xff]
  %v376 = vld [vmem:[%s0 + $0x9f0] sm:$0xff]
  %v377 = vld [vmem:[%s0 + $0x9f8] sm:$0xff]
  %v378 = vld [vmem:[%s0 + $0xa00] sm:$0xff]
  %v379 = vld [vmem:[%s0 + $0xa08] sm:$0xff]
  %v380 = vld [vmem:[%s0 + $0xa10] sm:$0xff]
  %v381 = vld [vmem:[%s0 + $0xa18] sm:$0xff]
  %v382 = vld [vmem:[%s0 + $0xa20] sm:$0xff]
  %v383 = vld [vmem:[%s0 + $0xa28] sm:$0xff]
  %v384 = vld [vmem:[%s0 + $0xa30] sm:$0xff]
  %v385 = vld [vmem:[%s0 + $0xa38] sm:$0xff]
  %v386 = vld [vmem:[%s0 + $0xa40] sm:$0xff]
  %v387 = vld [vmem:[%s0 + $0xa48] sm:$0xff]
  %v388 = vld [vmem:[%s0 + $0xa50] sm:$0xff]
  %v389 = vld [vmem:[%s0 + $0xa58] sm:$0xff]
  %v390 = vld [vmem:[%s0 + $0xa60] sm:$0xff]
  %v391 = vld [vmem:[%s0 + $0xa68] sm:$0xff]
  %v392 = vld [vmem:[%s0 + $0xa70] sm:$0xff]
  %v393 = vld [vmem:[%s0 + $0xa78] sm:$0xff]
  %v394 = vld [vmem:[%s0 + $0xa80] sm:$0xff]
  %v395 = vld [vmem:[%s0 + $0xa88] sm:$0xff]
  %v396 = vld [vmem:[%s0 + $0xa90] sm:$0xff]
  %v397 = vld [vmem:[%s0 + $0xa98] sm:$0xff]
  %v398 = vld [vmem:[%s0 + $0xaa0] sm:$0xff]
  %v399 = vld [vmem:[%s0 + $0xaa8] sm:$0xff]
  %v400 = vld [vmem:[%s0 + $0xab0] sm:$0xff]
  %v401 = vld [vmem:[%s0 + $0xab8] sm:$0xff]
  %v402 = vld [vmem:[%s0 + $0xac0] sm:$0xff]
  %v403 = vld [vmem:[%s0 + $0xac8] sm:$0xff]
  %v404 = vld [vmem:[%s0 + $0xad0] sm:$0xff]
  %v405 = vld [vmem:[%s0 + $0xad8] sm:$0xff]
  %v406 = vld [vmem:[%s0 + $0xae0] sm:$0xff]
  %v407 = vld [vmem:[%s0 + $0xae8] sm:$0xff]
  %v408 = vld [vmem:[%s0 + $0xaf0] sm:$0xff]
  %v409 = vld [vmem:[%s0 + $0xaf8] sm:$0xff]
  %v410 = vld [vmem:[%s0 + $0xb00] sm:$0xff]
  %v411 = vld [vmem:[%s0 + $0xb08] sm:$0xff]
  %v412 = vld [vmem:[%s0 + $0xb10] sm:$0xff]
  %v413 = vld [vmem:[%s0 + $0xb18] sm:$0xff]
  %v414 = vld [vmem:[%s0 + $0xb20] sm:$0xff]
  %v415 = vld [vmem:[%s0 + $0xb28] sm:$0xff]
  %v416 = vld [vmem:[%s0 + $0xb30] sm:$0xff]
  %v417 = vld [vmem:[%s0 + $0xb38] sm:$0xff]
  %v418 = vld [vmem:[%s0 + $0xb40] sm:$0xff]
  %v419 = vld [vmem:[%s0 + $0xb48] sm:$0xff]
  %v420 = vld [vmem:[%s0 + $0xb50] sm:$0xff]
  %v421 = vld [vmem:[%s0 + $0xb58] sm:$0xff]
  %v422 = vld [vmem:[%s0 + $0xb60] sm:$0xff]
  %v423 = vld [vmem:[%s0 + $0xb68] sm:$0xff]
  %v424 = vld [vmem:[%s0 + $0xb70] sm:$0xff]
  %v425 = vld [vmem:[%s0 + $0xb78] sm:$0xff]
  %v426 = vld [vmem:[%s0 + $0xb80] sm:$0xff]
  %v427 = vld [vmem:[%s0 + $0xb88] sm:$0xff]
  %v428 = vld [vmem:[%s0 + $0xb90] sm:$0xff]
  %v429 = vld [vmem:[%s0 + $0xb98] sm:$0xff]
  %v430 = vld [vmem:[%s0 + $0xba0] sm:$0xff]
  %v431 = vld [vmem:[%s0 + $0xba8] sm:$0xff]
  %v432 = vld [vmem:[%s0 + $0xbb0] sm:$0xff]
  %v433 = vld [vmem:[%s0 + $0xbb8] sm:$0xff]
  %v434 = vld [vmem:[%s0 + $0xbc0] sm:$0xff]
  %v435 = vld [vmem:[%s0 + $0xbc8] sm:$0xff]
  %v436 = vld [vmem:[%s0 + $0xbd0] sm:$0xff]
  %v437 = vld [vmem:[%s0 + $0xbd8] sm:$0xff]
  %v438 = vld [vmem:[%s0 + $0xbe0] sm:$0xff]
  %v439 = vld [vmem:[%s0 + $0xbe8] sm:$0xff]
  %v440 = vld [vmem:[%s0 + $0xbf0] sm:$0xff]
  %v441 = vld [vmem:[%s0 + $0xbf8] sm:$0xff]
  %v442 = vld [vmem:[%s0 + $0xc00] sm:$0xff]
  %v443 = vld [vmem:[%s0 + $0xc08] sm:$0xff]
  %v444 = vld [vmem:[%s0 + $0xc10] sm:$0xff]
  %v445 = vld [vmem:[%s0 + $0xc18] sm:$0xff]
  %v446 = vld [vmem:[%s0 + $0xc20] sm:$0xff]
  %v447 = vld [vmem:[%s0 + $0xc28] sm:$0xff]
  %v448 = vld [vmem:[%s0 + $0xc30] sm:$0xff]
  %v449 = vld [vmem:[%s0 + $0xc38] sm:$0xff]
  %v450 = vld [vmem:[%s0 + $0xc40] sm:$0xff]
  %v451 = vld [vmem:[%s0 + $0xc48] sm:$0xff]
  %v452 = vld [vmem:[%s0 + $0xc50] sm:$0xff]
  %v453 = vld [vmem:[%s0 + $0xc58] sm:$0xff]
  %v454 = vld [vmem:[%s0 + $0xc60] sm:$0xff]
  %v455 = vld [vmem:[%s0 + $0xc68] sm:$0xff]
  %v456 = vld [vmem:[%s0 + $0xc70] sm:$0xff]
  %v457 = vld [vmem:[%s0 + $0xc78] sm:$0xff]
  %v458 = vld [vmem:[%s0 + $0xc80] sm:$0xff]
  %v459 = vld [vmem:[%s0 + $0xc88] sm:$0xff]
  %v460 = vld [vmem:[%s0 + $0xc90] sm:$0xff]
  %v461 = vld [vmem:[%s0 + $0xc98] sm:$0xff]
  %v462 = vld [vmem:[%s0 + $0xca0] sm:$0xff]
  %v463 = vld [vmem:[%s0 + $0xca8] sm:$0xff]
  %v464 = vld [vmem:[%s0 + $0xcb0] sm:$0xff]
  %v465 = vld [vmem:[%s0 + $0xcb8] sm:$0xff]
  %v466 = vld [vmem:[%s0 + $0xcc0] sm:$0xff]
  %v467 = vld [vmem:[%s0 + $0xcc8] sm:$0xff]
  %v468 = vld [vmem:[%s0 + $0xcd0] sm:$0xff]
  %v469 = vld [vmem:[%s0 + $0xcd8] sm:$0xff]
  %v470 = vld [vmem:[%s0 + $0xce0] sm:$0xff]
  %v471 = vld [vmem:[%s0 + $0xce8] sm:$0xff]
  %v472 = vld [vmem:[%s0 + $0xcf0] sm:$0xff]
  %v473 = vld [vmem:[%s0 + $0xcf8] sm:$0xff]
  %v474 = vld [vmem:[%s0 + $0xd00] sm:$0xff]
  %v475 = vld [vmem:[%s0 + $0xd08] sm:$0xff]
  %v476 = vld [vmem:[%s0 + $0xd10] sm:$0xff]
  %v477 = vld [vmem:[%s0 + $0xd18] sm:$0xff]
  %v478 = vld [vmem:[%s0 + $0xd20] sm:$0xff]
  %v479 = vld [vmem:[%s0 + $0xd28] sm:$0xff]
  %v480 = vld [vmem:[%s0 + $0xd30] sm:$0xff]
  %v481 = vld [vmem:[%s0 + $0xd38] sm:$0xff]
  %v482 = vld [vmem:[%s0 + $0xd40] sm:$0xff]
  %v483 = vld [vmem:[%s0 + $0xd48] sm:$0xff]
  %v484 = vld [vmem:[%s0 + $0xd50] sm:$0xff]
  %v485 = vld [vmem:[%s0 + $0xd58] sm:$0xff]
  %v486 = vld [vmem:[%s0 + $0xd60] sm:$0xff]
  %v487 = vld [vmem:[%s0 + $0xd68] sm:$0xff]
  %v488 = vld [vmem:[%s0 + $0xd70] sm:$0xff]
  %v489 = vld [vmem:[%s0 + $0xd78] sm:$0xff]
  %v490 = vld [vmem:[%s0 + $0xd80] sm:$0xff]
  %v491 = vld [vmem:[%s0 + $0xd88] sm:$0xff]
  %v492 = vld [vmem:[%s0 + $0xd90] sm:$0xff]
  %v493 = vld [vmem:[%s0 + $0xd98] sm:$0xff]
  %v494 = vld [vmem:[%s0 + $0xda0] sm:$0xff]
  %v495 = vld [vmem:[%s0 + $0xda8] sm:$0xff]
  %v496 = vld [vmem:[%s0 + $0xdb0] sm:$0xff]
  %v497 = vld [vmem:[%s0 + $0xdb8] sm:$0xff]
  %v498 = vld [vmem:[%s0 + $0xdc0] sm:$0xff]
  %v499 = vld [vmem:[%s0 + $0xdc8] sm:$0xff]
  %v500 = vld [vmem:[%s0 + $0xdd0] sm:$0xff]
  %v501 = vld [vmem:[%s0 + $0xdd8] sm:$0xff]
  %v502 = vld [vmem:[%s0 + $0xde0] sm:$0xff]
  %v503 = vld [vmem:[%s0 + $0xde8] sm:$0xff]
  %v504 = vld [vmem:[%s0 + $0xdf0] sm:$0xff]
  %v505 = vld [vmem:[%s0 + $0xdf8] sm:$0xff]
  %v506 = vld [vmem:[%s0 + $0xe00] sm:$0xff]
  %v507 = vld [vmem:[%s0 + $0xe08] sm:$0xff]
  %v508 = vld [vmem:[%s0 + $0xe10] sm:$0xff]
  %v509 = vld [vmem:[%s0 + $0xe18] sm:$0xff]
  %v510 = vld [vmem:[%s0 + $0xe20] sm:$0xff]
  %v511 = vld [vmem:[%s0 + $0xe28] sm:$0xff]
  %v512 = vld [vmem:[%s0 + $0xe30] sm:$0xff]
  %v513 = vld [vmem:[%s0 + $0xe38] sm:$0xff]
  %v514 = vld [vmem:[%s0 + $0xe40] sm:$0xff]
  %v515 = vld [vmem:[%s0 + $0xe48] sm:$0xff]
  %v516 = vld [vmem:[%s0 + $0xe50] sm:$0xff]
  %v517 = vld [vmem:[%s0 + $0xe58] sm:$0xff]
  %v518 = vld [vmem:[%s0 + $0xe60] sm:$0xff]
  %v519 = vld [vmem:[%s0 + $0xe68] sm:$0xff]
  %v520 = vld [vmem:[%s0 + $0xe70] sm:$0xff]
  %v521 = vld [vmem:[%s0 + $0xe78] sm:$0xff]
  %v522 = vld [vmem:[%s0 + $0xe80] sm:$0xff]
  %v523 = vld [vmem:[%s0 + $0xe88] sm:$0xff]
  %v524 = vld [vmem:[%s0 + $0xe90] sm:$0xff]
  %v525 = vld [vmem:[%s0 + $0xe98] sm:$0xff]
  %v526 = vld [vmem:[%s0 + $0xea0] sm:$0xff]
  %v527 = vld [vmem:[%s0 + $0xea8] sm:$0xff]
  %v528 = vld [vmem:[%s0 + $0xeb0] sm:$0xff]
  %v529 = vld [vmem:[%s0 + $0xeb8] sm:$0xff]
  %v530 = vld [vmem:[%s0 + $0xec0] sm:$0xff]
  %v531 = vld [vmem:[%s0 + $0xec8] sm:$0xff]
  %v532 = vld [vmem:[%s0 + $0xed0] sm:$0xff]
  %v533 = vld [vmem:[%s0 + $0xed8] sm:$0xff]
  %v534 = vld [vmem:[%s0 + $0xee0] sm:$0xff]
  %v535 = vld [vmem:[%s0 + $0xee8] sm:$0xff]
  %v536 = vld [vmem:[%s0 + $0xef0] sm:$0xff]
  %v537 = vld [vmem:[%s0 + $0xef8] sm:$0xff]
  %v538 = vld [vmem:[%s0 + $0xf00] sm:$0xff]
  %v539 = vld [vmem:[%s0 + $0xf08] sm:$0xff]
  %v540 = vld [vmem:[%s0 + $0xf10] sm:$0xff]
  %v541 = vld [vmem:[%s0 + $0xf18] sm:$0xff]
  %v542 = vld [vmem:[%s0 + $0xf20] sm:$0xff]
  %v543 = vld [vmem:[%s0 + $0xf28] sm:$0xff]
  %v544 = vld [vmem:[%s0 + $0xf30] sm:$0xff]
  %v545 = vld [vmem:[%s0 + $0xf38] sm:$0xff]
  %v546 = vld [vmem:[%s0 + $0xf40] sm:$0xff]
  %v547 = vld [vmem:[%s0 + $0xf48] sm:$0xff]
  %v548 = vld [vmem:[%s0 + $0xf50] sm:$0xff]
  %v549 = vld [vmem:[%s0 + $0xf58] sm:$0xff]
  %v550 = vld [vmem:[%s0 + $0xf60] sm:$0xff]
  %v551 = vld [vmem:[%s0 + $0xf68] sm:$0xff]
  %v552 = vld [vmem:[%s0 + $0xf70] sm:$0xff]
  %v553 = vld [vmem:[%s0 + $0xf78] sm:$0xff]
  %v554 = vld [vmem:[%s0 + $0xf80] sm:$0xff]
  %v555 = vld [vmem:[%s0 + $0xf88] sm:$0xff]
  %v556 = vld [vmem:[%s0 + $0xf90] sm:$0xff]
  %v557 = vld [vmem:[%s0 + $0xf98] sm:$0xff]
  %v558 = vld [vmem:[%s0 + $0xfa0] sm:$0xff]
  %v559 = vld [vmem:[%s0 + $0xfa8] sm:$0xff]
  %v560 = vld [vmem:[%s0 + $0xfb0] sm:$0xff]
  %v561 = vld [vmem:[%s0 + $0xfb8] sm:$0xff]
  %v562 = vld [vmem:[%s0 + $0xfc0] sm:$0xff]
  %v563 = vld [vmem:[%s0 + $0xfc8] sm:$0xff]
  %v564 = vld [vmem:[%s0 + $0xfd0] sm:$0xff]
  %v565 = vld [vmem:[%s0 + $0xfd8] sm:$0xff]
  %v566 = vld [vmem:[%s0 + $0xfe0] sm:$0xff]
  %v567 = vld [vmem:[%s0 + $0xfe8] sm:$0xff]
  %v568 = vld [vmem:[%s0 + $0xff0] sm:$0xff]
  %v569 = vld [vmem:[%s0 + $0xff8] sm:$0xff]
  %vm570 = vcmask 523264
  %v571 = vsel %vm570, %v58, 0.0
  %572 = vadd.xlane.f32.xlu0 %v571
  %v573 = vpop.xlane.xlu0 %572
  %v574 = vsel %vm570, %v59, 0.0
  %575 = vadd.xlane.f32.xlu0 %v574
  %v576 = vpop.xlane.xlu0 %575
  %v577 = vsel %vm570, %v60, 0.0
  %578 = vadd.xlane.f32.xlu0 %v577
  %v579 = vpop.xlane.xlu0 %578
  %v580 = vsel %vm570, %v61, 0.0
  %581 = vadd.xlane.f32.xlu0 %v580
  %v582 = vpop.xlane.xlu0 %581
  %v583 = vsel %vm570, %v62, 0.0
  %584 = vadd.xlane.f32.xlu0 %v583
  %v585 = vpop.xlane.xlu0 %584
  %v586 = vsel %vm570, %v63, 0.0
  %587 = vadd.xlane.f32.xlu0 %v586
  %v588 = vpop.xlane.xlu0 %587
  %v589 = vsel %vm570, %v64, 0.0
  %590 = vadd.xlane.f32.xlu0 %v589
  %v591 = vpop.xlane.xlu0 %590
  %v592 = vsel %vm570, %v65, 0.0
  %593 = vadd.xlane.f32.xlu0 %v592
  %v594 = vpop.xlane.xlu0 %593
  %v595 = vsel %vm570, %v66, 0.0
  %596 = vadd.xlane.f32.xlu0 %v595
  %v597 = vpop.xlane.xlu0 %596
  %v598 = vsel %vm570, %v67, 0.0
  %599 = vadd.xlane.f32.xlu0 %v598
  %v600 = vpop.xlane.xlu0 %599
  %v601 = vsel %vm570, %v68, 0.0
  %602 = vadd.xlane.f32.xlu0 %v601
  %v603 = vpop.xlane.xlu0 %602
  %v604 = vsel %vm570, %v69, 0.0
  %605 = vadd.xlane.f32.xlu0 %v604
  %v606 = vpop.xlane.xlu0 %605
  %v607 = vsel %vm570, %v70, 0.0
  %608 = vadd.xlane.f32.xlu0 %v607
  %v609 = vpop.xlane.xlu0 %608
  %v610 = vsel %vm570, %v71, 0.0
  %611 = vadd.xlane.f32.xlu0 %v610
  %v612 = vpop.xlane.xlu0 %611
  %v613 = vsel %vm570, %v72, 0.0
  %614 = vadd.xlane.f32.xlu0 %v613
  %v615 = vpop.xlane.xlu0 %614
  %v616 = vsel %vm570, %v73, 0.0
  %617 = vadd.xlane.f32.xlu0 %v616
  %v618 = vpop.xlane.xlu0 %617
  %v619 = vsel %vm570, %v74, 0.0
  %620 = vadd.xlane.f32.xlu0 %v619
  %v621 = vpop.xlane.xlu0 %620
  %v622 = vsel %vm570, %v75, 0.0
  %623 = vadd.xlane.f32.xlu0 %v622
  %v624 = vpop.xlane.xlu0 %623
  %v625 = vsel %vm570, %v76, 0.0
  %626 = vadd.xlane.f32.xlu0 %v625
  %v627 = vpop.xlane.xlu0 %626
  %v628 = vsel %vm570, %v77, 0.0
  %629 = vadd.xlane.f32.xlu0 %v628
  %v630 = vpop.xlane.xlu0 %629
  %v631 = vsel %vm570, %v78, 0.0
  %632 = vadd.xlane.f32.xlu0 %v631
  %v633 = vpop.xlane.xlu0 %632
  %v634 = vsel %vm570, %v79, 0.0
  %635 = vadd.xlane.f32.xlu0 %v634
  %v636 = vpop.xlane.xlu0 %635
  %v637 = vsel %vm570, %v80, 0.0
  %638 = vadd.xlane.f32.xlu0 %v637
  %v639 = vpop.xlane.xlu0 %638
  %v640 = vsel %vm570, %v81, 0.0
  %641 = vadd.xlane.f32.xlu0 %v640
  %v642 = vpop.xlane.xlu0 %641
  %v643 = vsel %vm570, %v82, 0.0
  %644 = vadd.xlane.f32.xlu0 %v643
  %v645 = vpop.xlane.xlu0 %644
  %v646 = vsel %vm570, %v83, 0.0
  %647 = vadd.xlane.f32.xlu0 %v646
  %v648 = vpop.xlane.xlu0 %647
  %v649 = vsel %vm570, %v84, 0.0
  %650 = vadd.xlane.f32.xlu0 %v649
  %v651 = vpop.xlane.xlu0 %650
  %v652 = vsel %vm570, %v85, 0.0
  %653 = vadd.xlane.f32.xlu0 %v652
  %v654 = vpop.xlane.xlu0 %653
  %v655 = vsel %vm570, %v86, 0.0
  %656 = vadd.xlane.f32.xlu0 %v655
  %v657 = vpop.xlane.xlu0 %656
  %v658 = vsel %vm570, %v87, 0.0
  %659 = vadd.xlane.f32.xlu0 %v658
  %v660 = vpop.xlane.xlu0 %659
  %v661 = vsel %vm570, %v88, 0.0
  %662 = vadd.xlane.f32.xlu0 %v661
  %v663 = vpop.xlane.xlu0 %662
  %v664 = vsel %vm570, %v89, 0.0
  %665 = vadd.xlane.f32.xlu0 %v664
  %v666 = vpop.xlane.xlu0 %665
  %v667 = vsel %vm570, %v90, 0.0
  %668 = vadd.xlane.f32.xlu0 %v667
  %v669 = vpop.xlane.xlu0 %668
  %v670 = vsel %vm570, %v91, 0.0
  %671 = vadd.xlane.f32.xlu0 %v670
  %v672 = vpop.xlane.xlu0 %671
  %v673 = vsel %vm570, %v92, 0.0
  %674 = vadd.xlane.f32.xlu0 %v673
  %v675 = vpop.xlane.xlu0 %674
  %v676 = vsel %vm570, %v93, 0.0
  %677 = vadd.xlane.f32.xlu0 %v676
  %v678 = vpop.xlane.xlu0 %677
  %v679 = vsel %vm570, %v94, 0.0
  %680 = vadd.xlane.f32.xlu0 %v679
  %v681 = vpop.xlane.xlu0 %680
  %v682 = vsel %vm570, %v95, 0.0
  %683 = vadd.xlane.f32.xlu0 %v682
  %v684 = vpop.xlane.xlu0 %683
  %v685 = vsel %vm570, %v96, 0.0
  %686 = vadd.xlane.f32.xlu0 %v685
  %v687 = vpop.xlane.xlu0 %686
  %v688 = vsel %vm570, %v97, 0.0
  %689 = vadd.xlane.f32.xlu0 %v688
  %v690 = vpop.xlane.xlu0 %689
  %v691 = vsel %vm570, %v98, 0.0
  %692 = vadd.xlane.f32.xlu0 %v691
  %v693 = vpop.xlane.xlu0 %692
  %v694 = vsel %vm570, %v99, 0.0
  %695 = vadd.xlane.f32.xlu0 %v694
  %v696 = vpop.xlane.xlu0 %695
  %v697 = vsel %vm570, %v100, 0.0
  %698 = vadd.xlane.f32.xlu0 %v697
  %v699 = vpop.xlane.xlu0 %698
  %v700 = vsel %vm570, %v101, 0.0
  %701 = vadd.xlane.f32.xlu0 %v700
  %v702 = vpop.xlane.xlu0 %701
  %v703 = vsel %vm570, %v102, 0.0
  %704 = vadd.xlane.f32.xlu0 %v703
  %v705 = vpop.xlane.xlu0 %704
  %v706 = vsel %vm570, %v103, 0.0
  %707 = vadd.xlane.f32.xlu0 %v706
  %v708 = vpop.xlane.xlu0 %707
  %v709 = vsel %vm570, %v104, 0.0
  %710 = vadd.xlane.f32.xlu0 %v709
  %v711 = vpop.xlane.xlu0 %710
  %v712 = vsel %vm570, %v105, 0.0
  %713 = vadd.xlane.f32.xlu0 %v712
  %v714 = vpop.xlane.xlu0 %713
  %v715 = vsel %vm570, %v106, 0.0
  %716 = vadd.xlane.f32.xlu0 %v715
  %v717 = vpop.xlane.xlu0 %716
  %v718 = vsel %vm570, %v107, 0.0
  %719 = vadd.xlane.f32.xlu0 %v718
  %v720 = vpop.xlane.xlu0 %719
  %v721 = vsel %vm570, %v108, 0.0
  %722 = vadd.xlane.f32.xlu0 %v721
  %v723 = vpop.xlane.xlu0 %722
  %v724 = vsel %vm570, %v109, 0.0
  %725 = vadd.xlane.f32.xlu0 %v724
  %v726 = vpop.xlane.xlu0 %725
  %v727 = vsel %vm570, %v110, 0.0
  %728 = vadd.xlane.f32.xlu0 %v727
  %v729 = vpop.xlane.xlu0 %728
  %v730 = vsel %vm570, %v111, 0.0
  %731 = vadd.xlane.f32.xlu0 %v730
  %v732 = vpop.xlane.xlu0 %731
  %v733 = vsel %vm570, %v112, 0.0
  %734 = vadd.xlane.f32.xlu0 %v733
  %v735 = vpop.xlane.xlu0 %734
  %v736 = vsel %vm570, %v113, 0.0
  %737 = vadd.xlane.f32.xlu0 %v736
  %v738 = vpop.xlane.xlu0 %737
  %v739 = vsel %vm570, %v114, 0.0
  %740 = vadd.xlane.f32.xlu0 %v739
  %v741 = vpop.xlane.xlu0 %740
  %v742 = vsel %vm570, %v115, 0.0
  %743 = vadd.xlane.f32.xlu0 %v742
  %v744 = vpop.xlane.xlu0 %743
  %v745 = vsel %vm570, %v116, 0.0
  %746 = vadd.xlane.f32.xlu0 %v745
  %v747 = vpop.xlane.xlu0 %746
  %v748 = vsel %vm570, %v117, 0.0
  %749 = vadd.xlane.f32.xlu0 %v748
  %v750 = vpop.xlane.xlu0 %749
  %v751 = vsel %vm570, %v118, 0.0
  %752 = vadd.xlane.f32.xlu0 %v751
  %v753 = vpop.xlane.xlu0 %752
  %v754 = vsel %vm570, %v119, 0.0
  %755 = vadd.xlane.f32.xlu0 %v754
  %v756 = vpop.xlane.xlu0 %755
  %v757 = vsel %vm570, %v120, 0.0
  %758 = vadd.xlane.f32.xlu0 %v757
  %v759 = vpop.xlane.xlu0 %758
  %v760 = vsel %vm570, %v121, 0.0
  %761 = vadd.xlane.f32.xlu0 %v760
  %v762 = vpop.xlane.xlu0 %761
  %v763 = vsel %vm570, %v122, 0.0
  %764 = vadd.xlane.f32.xlu0 %v763
  %v765 = vpop.xlane.xlu0 %764
  %v766 = vsel %vm570, %v123, 0.0
  %767 = vadd.xlane.f32.xlu0 %v766
  %v768 = vpop.xlane.xlu0 %767
  %v769 = vsel %vm570, %v124, 0.0
  %770 = vadd.xlane.f32.xlu0 %v769
  %v771 = vpop.xlane.xlu0 %770
  %v772 = vsel %vm570, %v125, 0.0
  %773 = vadd.xlane.f32.xlu0 %v772
  %v774 = vpop.xlane.xlu0 %773
  %v775 = vsel %vm570, %v126, 0.0
  %776 = vadd.xlane.f32.xlu0 %v775
  %v777 = vpop.xlane.xlu0 %776
  %v778 = vsel %vm570, %v127, 0.0
  %779 = vadd.xlane.f32.xlu0 %v778
  %v780 = vpop.xlane.xlu0 %779
  %v781 = vsel %vm570, %v128, 0.0
  %782 = vadd.xlane.f32.xlu0 %v781
  %v783 = vpop.xlane.xlu0 %782
  %v784 = vsel %vm570, %v129, 0.0
  %785 = vadd.xlane.f32.xlu0 %v784
  %v786 = vpop.xlane.xlu0 %785
  %v787 = vsel %vm570, %v130, 0.0
  %788 = vadd.xlane.f32.xlu0 %v787
  %v789 = vpop.xlane.xlu0 %788
  %v790 = vsel %vm570, %v131, 0.0
  %791 = vadd.xlane.f32.xlu0 %v790
  %v792 = vpop.xlane.xlu0 %791
  %v793 = vsel %vm570, %v132, 0.0
  %794 = vadd.xlane.f32.xlu0 %v793
  %v795 = vpop.xlane.xlu0 %794
  %v796 = vsel %vm570, %v133, 0.0
  %797 = vadd.xlane.f32.xlu0 %v796
  %v798 = vpop.xlane.xlu0 %797
  %v799 = vsel %vm570, %v134, 0.0
  %800 = vadd.xlane.f32.xlu0 %v799
  %v801 = vpop.xlane.xlu0 %800
  %v802 = vsel %vm570, %v135, 0.0
  %803 = vadd.xlane.f32.xlu0 %v802
  %v804 = vpop.xlane.xlu0 %803
  %v805 = vsel %vm570, %v136, 0.0
  %806 = vadd.xlane.f32.xlu0 %v805
  %v807 = vpop.xlane.xlu0 %806
  %v808 = vsel %vm570, %v137, 0.0
  %809 = vadd.xlane.f32.xlu0 %v808
  %v810 = vpop.xlane.xlu0 %809
  %v811 = vsel %vm570, %v138, 0.0
  %812 = vadd.xlane.f32.xlu0 %v811
  %v813 = vpop.xlane.xlu0 %812
  %v814 = vsel %vm570, %v139, 0.0
  %815 = vadd.xlane.f32.xlu0 %v814
  %v816 = vpop.xlane.xlu0 %815
  %v817 = vsel %vm570, %v140, 0.0
  %818 = vadd.xlane.f32.xlu0 %v817
  %v819 = vpop.xlane.xlu0 %818
  %v820 = vsel %vm570, %v141, 0.0
  %821 = vadd.xlane.f32.xlu0 %v820
  %v822 = vpop.xlane.xlu0 %821
  %v823 = vsel %vm570, %v142, 0.0
  %824 = vadd.xlane.f32.xlu0 %v823
  %v825 = vpop.xlane.xlu0 %824
  %v826 = vsel %vm570, %v143, 0.0
  %827 = vadd.xlane.f32.xlu0 %v826
  %v828 = vpop.xlane.xlu0 %827
  %v829 = vsel %vm570, %v144, 0.0
  %830 = vadd.xlane.f32.xlu0 %v829
  %v831 = vpop.xlane.xlu0 %830
  %v832 = vsel %vm570, %v145, 0.0
  %833 = vadd.xlane.f32.xlu0 %v832
  %v834 = vpop.xlane.xlu0 %833
  %v835 = vsel %vm570, %v146, 0.0
  %836 = vadd.xlane.f32.xlu0 %v835
  %v837 = vpop.xlane.xlu0 %836
  %v838 = vsel %vm570, %v147, 0.0
  %839 = vadd.xlane.f32.xlu0 %v838
  %v840 = vpop.xlane.xlu0 %839
  %v841 = vsel %vm570, %v148, 0.0
  %842 = vadd.xlane.f32.xlu0 %v841
  %v843 = vpop.xlane.xlu0 %842
  %v844 = vsel %vm570, %v149, 0.0
  %845 = vadd.xlane.f32.xlu0 %v844
  %v846 = vpop.xlane.xlu0 %845
  %v847 = vsel %vm570, %v150, 0.0
  %848 = vadd.xlane.f32.xlu0 %v847
  %v849 = vpop.xlane.xlu0 %848
  %v850 = vsel %vm570, %v151, 0.0
  %851 = vadd.xlane.f32.xlu0 %v850
  %v852 = vpop.xlane.xlu0 %851
  %v853 = vsel %vm570, %v152, 0.0
  %854 = vadd.xlane.f32.xlu0 %v853
  %v855 = vpop.xlane.xlu0 %854
  %v856 = vsel %vm570, %v153, 0.0
  %857 = vadd.xlane.f32.xlu0 %v856
  %v858 = vpop.xlane.xlu0 %857
  %v859 = vsel %vm570, %v154, 0.0
  %860 = vadd.xlane.f32.xlu0 %v859
  %v861 = vpop.xlane.xlu0 %860
  %v862 = vsel %vm570, %v155, 0.0
  %863 = vadd.xlane.f32.xlu0 %v862
  %v864 = vpop.xlane.xlu0 %863
  %v865 = vsel %vm570, %v156, 0.0
  %866 = vadd.xlane.f32.xlu0 %v865
  %v867 = vpop.xlane.xlu0 %866
  %v868 = vsel %vm570, %v157, 0.0
  %869 = vadd.xlane.f32.xlu0 %v868
  %v870 = vpop.xlane.xlu0 %869
  %v871 = vsel %vm570, %v158, 0.0
  %872 = vadd.xlane.f32.xlu0 %v871
  %v873 = vpop.xlane.xlu0 %872
  %v874 = vsel %vm570, %v159, 0.0
  %875 = vadd.xlane.f32.xlu0 %v874
  %v876 = vpop.xlane.xlu0 %875
  %v877 = vsel %vm570, %v160, 0.0
  %878 = vadd.xlane.f32.xlu0 %v877
  %v879 = vpop.xlane.xlu0 %878
  %v880 = vsel %vm570, %v161, 0.0
  %881 = vadd.xlane.f32.xlu0 %v880
  %v882 = vpop.xlane.xlu0 %881
  %v883 = vsel %vm570, %v162, 0.0
  %884 = vadd.xlane.f32.xlu0 %v883
  %v885 = vpop.xlane.xlu0 %884
  %v886 = vsel %vm570, %v163, 0.0
  %887 = vadd.xlane.f32.xlu0 %v886
  %v888 = vpop.xlane.xlu0 %887
  %v889 = vsel %vm570, %v164, 0.0
  %890 = vadd.xlane.f32.xlu0 %v889
  %v891 = vpop.xlane.xlu0 %890
  %v892 = vsel %vm570, %v165, 0.0
  %893 = vadd.xlane.f32.xlu0 %v892
  %v894 = vpop.xlane.xlu0 %893
  %v895 = vsel %vm570, %v166, 0.0
  %896 = vadd.xlane.f32.xlu0 %v895
  %v897 = vpop.xlane.xlu0 %896
  %v898 = vsel %vm570, %v167, 0.0
  %899 = vadd.xlane.f32.xlu0 %v898
  %v900 = vpop.xlane.xlu0 %899
  %v901 = vsel %vm570, %v168, 0.0
  %902 = vadd.xlane.f32.xlu0 %v901
  %v903 = vpop.xlane.xlu0 %902
  %v904 = vsel %vm570, %v169, 0.0
  %905 = vadd.xlane.f32.xlu0 %v904
  %v906 = vpop.xlane.xlu0 %905
  %v907 = vsel %vm570, %v170, 0.0
  %908 = vadd.xlane.f32.xlu0 %v907
  %v909 = vpop.xlane.xlu0 %908
  %v910 = vsel %vm570, %v171, 0.0
  %911 = vadd.xlane.f32.xlu0 %v910
  %v912 = vpop.xlane.xlu0 %911
  %v913 = vsel %vm570, %v172, 0.0
  %914 = vadd.xlane.f32.xlu0 %v913
  %v915 = vpop.xlane.xlu0 %914
  %v916 = vsel %vm570, %v173, 0.0
  %917 = vadd.xlane.f32.xlu0 %v916
  %v918 = vpop.xlane.xlu0 %917
  %v919 = vsel %vm570, %v174, 0.0
  %920 = vadd.xlane.f32.xlu0 %v919
  %v921 = vpop.xlane.xlu0 %920
  %v922 = vsel %vm570, %v175, 0.0
  %923 = vadd.xlane.f32.xlu0 %v922
  %v924 = vpop.xlane.xlu0 %923
  %v925 = vsel %vm570, %v176, 0.0
  %926 = vadd.xlane.f32.xlu0 %v925
  %v927 = vpop.xlane.xlu0 %926
  %v928 = vsel %vm570, %v177, 0.0
  %929 = vadd.xlane.f32.xlu0 %v928
  %v930 = vpop.xlane.xlu0 %929
  %v931 = vsel %vm570, %v178, 0.0
  %932 = vadd.xlane.f32.xlu0 %v931
  %v933 = vpop.xlane.xlu0 %932
  %v934 = vsel %vm570, %v179, 0.0
  %935 = vadd.xlane.f32.xlu0 %v934
  %v936 = vpop.xlane.xlu0 %935
  %v937 = vsel %vm570, %v180, 0.0
  %938 = vadd.xlane.f32.xlu0 %v937
  %v939 = vpop.xlane.xlu0 %938
  %v940 = vsel %vm570, %v181, 0.0
  %941 = vadd.xlane.f32.xlu0 %v940
  %v942 = vpop.xlane.xlu0 %941
  %v943 = vsel %vm570, %v182, 0.0
  %944 = vadd.xlane.f32.xlu0 %v943
  %v945 = vpop.xlane.xlu0 %944
  %v946 = vsel %vm570, %v183, 0.0
  %947 = vadd.xlane.f32.xlu0 %v946
  %v948 = vpop.xlane.xlu0 %947
  %v949 = vsel %vm570, %v184, 0.0
  %950 = vadd.xlane.f32.xlu0 %v949
  %v951 = vpop.xlane.xlu0 %950
  %v952 = vsel %vm570, %v185, 0.0
  %953 = vadd.xlane.f32.xlu0 %v952
  %v954 = vpop.xlane.xlu0 %953
  %v955 = vsel %vm570, %v186, 0.0
  %956 = vadd.xlane.f32.xlu0 %v955
  %v957 = vpop.xlane.xlu0 %956
  %v958 = vsel %vm570, %v187, 0.0
  %959 = vadd.xlane.f32.xlu0 %v958
  %v960 = vpop.xlane.xlu0 %959
  %v961 = vsel %vm570, %v188, 0.0
  %962 = vadd.xlane.f32.xlu0 %v961
  %v963 = vpop.xlane.xlu0 %962
  %v964 = vsel %vm570, %v189, 0.0
  %965 = vadd.xlane.f32.xlu0 %v964
  %v966 = vpop.xlane.xlu0 %965
  %v967 = vsel %vm570, %v190, 0.0
  %968 = vadd.xlane.f32.xlu0 %v967
  %v969 = vpop.xlane.xlu0 %968
  %v970 = vsel %vm570, %v191, 0.0
  %971 = vadd.xlane.f32.xlu0 %v970
  %v972 = vpop.xlane.xlu0 %971
  %v973 = vsel %vm570, %v192, 0.0
  %974 = vadd.xlane.f32.xlu0 %v973
  %v975 = vpop.xlane.xlu0 %974
  %v976 = vsel %vm570, %v193, 0.0
  %977 = vadd.xlane.f32.xlu0 %v976
  %v978 = vpop.xlane.xlu0 %977
  %v979 = vsel %vm570, %v194, 0.0
  %980 = vadd.xlane.f32.xlu0 %v979
  %v981 = vpop.xlane.xlu0 %980
  %v982 = vsel %vm570, %v195, 0.0
  %983 = vadd.xlane.f32.xlu0 %v982
  %v984 = vpop.xlane.xlu0 %983
  %v985 = vsel %vm570, %v196, 0.0
  %986 = vadd.xlane.f32.xlu0 %v985
  %v987 = vpop.xlane.xlu0 %986
  %v988 = vsel %vm570, %v197, 0.0
  %989 = vadd.xlane.f32.xlu0 %v988
  %v990 = vpop.xlane.xlu0 %989
  %v991 = vsel %vm570, %v198, 0.0
  %992 = vadd.xlane.f32.xlu0 %v991
  %v993 = vpop.xlane.xlu0 %992
  %v994 = vsel %vm570, %v199, 0.0
  %995 = vadd.xlane.f32.xlu0 %v994
  %v996 = vpop.xlane.xlu0 %995
  %v997 = vsel %vm570, %v200, 0.0
  %998 = vadd.xlane.f32.xlu0 %v997
  %v999 = vpop.xlane.xlu0 %998
  %v1000 = vsel %vm570, %v201, 0.0
  %1001 = vadd.xlane.f32.xlu0 %v1000
  %v1002 = vpop.xlane.xlu0 %1001
  %v1003 = vsel %vm570, %v202, 0.0
  %1004 = vadd.xlane.f32.xlu0 %v1003
  %v1005 = vpop.xlane.xlu0 %1004
  %v1006 = vsel %vm570, %v203, 0.0
  %1007 = vadd.xlane.f32.xlu0 %v1006
  %v1008 = vpop.xlane.xlu0 %1007
  %v1009 = vsel %vm570, %v204, 0.0
  %1010 = vadd.xlane.f32.xlu0 %v1009
  %v1011 = vpop.xlane.xlu0 %1010
  %v1012 = vsel %vm570, %v205, 0.0
  %1013 = vadd.xlane.f32.xlu0 %v1012
  %v1014 = vpop.xlane.xlu0 %1013
  %v1015 = vsel %vm570, %v206, 0.0
  %1016 = vadd.xlane.f32.xlu0 %v1015
  %v1017 = vpop.xlane.xlu0 %1016
  %v1018 = vsel %vm570, %v207, 0.0
  %1019 = vadd.xlane.f32.xlu0 %v1018
  %v1020 = vpop.xlane.xlu0 %1019
  %v1021 = vsel %vm570, %v208, 0.0
  %1022 = vadd.xlane.f32.xlu0 %v1021
  %v1023 = vpop.xlane.xlu0 %1022
  %v1024 = vsel %vm570, %v209, 0.0
  %1025 = vadd.xlane.f32.xlu0 %v1024
  %v1026 = vpop.xlane.xlu0 %1025
  %v1027 = vsel %vm570, %v210, 0.0
  %1028 = vadd.xlane.f32.xlu0 %v1027
  %v1029 = vpop.xlane.xlu0 %1028
  %v1030 = vsel %vm570, %v211, 0.0
  %1031 = vadd.xlane.f32.xlu0 %v1030
  %v1032 = vpop.xlane.xlu0 %1031
  %v1033 = vsel %vm570, %v212, 0.0
  %1034 = vadd.xlane.f32.xlu0 %v1033
  %v1035 = vpop.xlane.xlu0 %1034
  %v1036 = vsel %vm570, %v213, 0.0
  %1037 = vadd.xlane.f32.xlu0 %v1036
  %v1038 = vpop.xlane.xlu0 %1037
  %v1039 = vsel %vm570, %v214, 0.0
  %1040 = vadd.xlane.f32.xlu0 %v1039
  %v1041 = vpop.xlane.xlu0 %1040
  %v1042 = vsel %vm570, %v215, 0.0
  %1043 = vadd.xlane.f32.xlu0 %v1042
  %v1044 = vpop.xlane.xlu0 %1043
  %v1045 = vsel %vm570, %v216, 0.0
  %1046 = vadd.xlane.f32.xlu0 %v1045
  %v1047 = vpop.xlane.xlu0 %1046
  %v1048 = vsel %vm570, %v217, 0.0
  %1049 = vadd.xlane.f32.xlu0 %v1048
  %v1050 = vpop.xlane.xlu0 %1049
  %v1051 = vsel %vm570, %v218, 0.0
  %1052 = vadd.xlane.f32.xlu0 %v1051
  %v1053 = vpop.xlane.xlu0 %1052
  %v1054 = vsel %vm570, %v219, 0.0
  %1055 = vadd.xlane.f32.xlu0 %v1054
  %v1056 = vpop.xlane.xlu0 %1055
  %v1057 = vsel %vm570, %v220, 0.0
  %1058 = vadd.xlane.f32.xlu0 %v1057
  %v1059 = vpop.xlane.xlu0 %1058
  %v1060 = vsel %vm570, %v221, 0.0
  %1061 = vadd.xlane.f32.xlu0 %v1060
  %v1062 = vpop.xlane.xlu0 %1061
  %v1063 = vsel %vm570, %v222, 0.0
  %1064 = vadd.xlane.f32.xlu0 %v1063
  %v1065 = vpop.xlane.xlu0 %1064
  %v1066 = vsel %vm570, %v223, 0.0
  %1067 = vadd.xlane.f32.xlu0 %v1066
  %v1068 = vpop.xlane.xlu0 %1067
  %v1069 = vsel %vm570, %v224, 0.0
  %1070 = vadd.xlane.f32.xlu0 %v1069
  %v1071 = vpop.xlane.xlu0 %1070
  %v1072 = vsel %vm570, %v225, 0.0
  %1073 = vadd.xlane.f32.xlu0 %v1072
  %v1074 = vpop.xlane.xlu0 %1073
  %v1075 = vsel %vm570, %v226, 0.0
  %1076 = vadd.xlane.f32.xlu0 %v1075
  %v1077 = vpop.xlane.xlu0 %1076
  %v1078 = vsel %vm570, %v227, 0.0
  %1079 = vadd.xlane.f32.xlu0 %v1078
  %v1080 = vpop.xlane.xlu0 %1079
  %v1081 = vsel %vm570, %v228, 0.0
  %1082 = vadd.xlane.f32.xlu0 %v1081
  %v1083 = vpop.xlane.xlu0 %1082
  %v1084 = vsel %vm570, %v229, 0.0
  %1085 = vadd.xlane.f32.xlu0 %v1084
  %v1086 = vpop.xlane.xlu0 %1085
  %v1087 = vsel %vm570, %v230, 0.0
  %1088 = vadd.xlane.f32.xlu0 %v1087
  %v1089 = vpop.xlane.xlu0 %1088
  %v1090 = vsel %vm570, %v231, 0.0
  %1091 = vadd.xlane.f32.xlu0 %v1090
  %v1092 = vpop.xlane.xlu0 %1091
  %v1093 = vsel %vm570, %v232, 0.0
  %1094 = vadd.xlane.f32.xlu0 %v1093
  %v1095 = vpop.xlane.xlu0 %1094
  %v1096 = vsel %vm570, %v233, 0.0
  %1097 = vadd.xlane.f32.xlu0 %v1096
  %v1098 = vpop.xlane.xlu0 %1097
  %v1099 = vsel %vm570, %v234, 0.0
  %1100 = vadd.xlane.f32.xlu0 %v1099
  %v1101 = vpop.xlane.xlu0 %1100
  %v1102 = vsel %vm570, %v235, 0.0
  %1103 = vadd.xlane.f32.xlu0 %v1102
  %v1104 = vpop.xlane.xlu0 %1103
  %v1105 = vsel %vm570, %v236, 0.0
  %1106 = vadd.xlane.f32.xlu0 %v1105
  %v1107 = vpop.xlane.xlu0 %1106
  %v1108 = vsel %vm570, %v237, 0.0
  %1109 = vadd.xlane.f32.xlu0 %v1108
  %v1110 = vpop.xlane.xlu0 %1109
  %v1111 = vsel %vm570, %v238, 0.0
  %1112 = vadd.xlane.f32.xlu0 %v1111
  %v1113 = vpop.xlane.xlu0 %1112
  %v1114 = vsel %vm570, %v239, 0.0
  %1115 = vadd.xlane.f32.xlu0 %v1114
  %v1116 = vpop.xlane.xlu0 %1115
  %v1117 = vsel %vm570, %v240, 0.0
  %1118 = vadd.xlane.f32.xlu0 %v1117
  %v1119 = vpop.xlane.xlu0 %1118
  %v1120 = vsel %vm570, %v241, 0.0
  %1121 = vadd.xlane.f32.xlu0 %v1120
  %v1122 = vpop.xlane.xlu0 %1121
  %v1123 = vsel %vm570, %v242, 0.0
  %1124 = vadd.xlane.f32.xlu0 %v1123
  %v1125 = vpop.xlane.xlu0 %1124
  %v1126 = vsel %vm570, %v243, 0.0
  %1127 = vadd.xlane.f32.xlu0 %v1126
  %v1128 = vpop.xlane.xlu0 %1127
  %v1129 = vsel %vm570, %v244, 0.0
  %1130 = vadd.xlane.f32.xlu0 %v1129
  %v1131 = vpop.xlane.xlu0 %1130
  %v1132 = vsel %vm570, %v245, 0.0
  %1133 = vadd.xlane.f32.xlu0 %v1132
  %v1134 = vpop.xlane.xlu0 %1133
  %v1135 = vsel %vm570, %v246, 0.0
  %1136 = vadd.xlane.f32.xlu0 %v1135
  %v1137 = vpop.xlane.xlu0 %1136
  %v1138 = vsel %vm570, %v247, 0.0
  %1139 = vadd.xlane.f32.xlu0 %v1138
  %v1140 = vpop.xlane.xlu0 %1139
  %v1141 = vsel %vm570, %v248, 0.0
  %1142 = vadd.xlane.f32.xlu0 %v1141
  %v1143 = vpop.xlane.xlu0 %1142
  %v1144 = vsel %vm570, %v249, 0.0
  %1145 = vadd.xlane.f32.xlu0 %v1144
  %v1146 = vpop.xlane.xlu0 %1145
  %v1147 = vsel %vm570, %v250, 0.0
  %1148 = vadd.xlane.f32.xlu0 %v1147
  %v1149 = vpop.xlane.xlu0 %1148
  %v1150 = vsel %vm570, %v251, 0.0
  %1151 = vadd.xlane.f32.xlu0 %v1150
  %v1152 = vpop.xlane.xlu0 %1151
  %v1153 = vsel %vm570, %v252, 0.0
  %1154 = vadd.xlane.f32.xlu0 %v1153
  %v1155 = vpop.xlane.xlu0 %1154
  %v1156 = vsel %vm570, %v253, 0.0
  %1157 = vadd.xlane.f32.xlu0 %v1156
  %v1158 = vpop.xlane.xlu0 %1157
  %v1159 = vsel %vm570, %v254, 0.0
  %1160 = vadd.xlane.f32.xlu0 %v1159
  %v1161 = vpop.xlane.xlu0 %1160
  %v1162 = vsel %vm570, %v255, 0.0
  %1163 = vadd.xlane.f32.xlu0 %v1162
  %v1164 = vpop.xlane.xlu0 %1163
  %v1165 = vsel %vm570, %v256, 0.0
  %1166 = vadd.xlane.f32.xlu0 %v1165
  %v1167 = vpop.xlane.xlu0 %1166
  %v1168 = vsel %vm570, %v257, 0.0
  %1169 = vadd.xlane.f32.xlu0 %v1168
  %v1170 = vpop.xlane.xlu0 %1169
  %v1171 = vsel %vm570, %v258, 0.0
  %1172 = vadd.xlane.f32.xlu0 %v1171
  %v1173 = vpop.xlane.xlu0 %1172
  %v1174 = vsel %vm570, %v259, 0.0
  %1175 = vadd.xlane.f32.xlu0 %v1174
  %v1176 = vpop.xlane.xlu0 %1175
  %v1177 = vsel %vm570, %v260, 0.0
  %1178 = vadd.xlane.f32.xlu0 %v1177
  %v1179 = vpop.xlane.xlu0 %1178
  %v1180 = vsel %vm570, %v261, 0.0
  %1181 = vadd.xlane.f32.xlu0 %v1180
  %v1182 = vpop.xlane.xlu0 %1181
  %v1183 = vsel %vm570, %v262, 0.0
  %1184 = vadd.xlane.f32.xlu0 %v1183
  %v1185 = vpop.xlane.xlu0 %1184
  %v1186 = vsel %vm570, %v263, 0.0
  %1187 = vadd.xlane.f32.xlu0 %v1186
  %v1188 = vpop.xlane.xlu0 %1187
  %v1189 = vsel %vm570, %v264, 0.0
  %1190 = vadd.xlane.f32.xlu0 %v1189
  %v1191 = vpop.xlane.xlu0 %1190
  %v1192 = vsel %vm570, %v265, 0.0
  %1193 = vadd.xlane.f32.xlu0 %v1192
  %v1194 = vpop.xlane.xlu0 %1193
  %v1195 = vsel %vm570, %v266, 0.0
  %1196 = vadd.xlane.f32.xlu0 %v1195
  %v1197 = vpop.xlane.xlu0 %1196
  %v1198 = vsel %vm570, %v267, 0.0
  %1199 = vadd.xlane.f32.xlu0 %v1198
  %v1200 = vpop.xlane.xlu0 %1199
  %v1201 = vsel %vm570, %v268, 0.0
  %1202 = vadd.xlane.f32.xlu0 %v1201
  %v1203 = vpop.xlane.xlu0 %1202
  %v1204 = vsel %vm570, %v269, 0.0
  %1205 = vadd.xlane.f32.xlu0 %v1204
  %v1206 = vpop.xlane.xlu0 %1205
  %v1207 = vsel %vm570, %v270, 0.0
  %1208 = vadd.xlane.f32.xlu0 %v1207
  %v1209 = vpop.xlane.xlu0 %1208
  %v1210 = vsel %vm570, %v271, 0.0
  %1211 = vadd.xlane.f32.xlu0 %v1210
  %v1212 = vpop.xlane.xlu0 %1211
  %v1213 = vsel %vm570, %v272, 0.0
  %1214 = vadd.xlane.f32.xlu0 %v1213
  %v1215 = vpop.xlane.xlu0 %1214
  %v1216 = vsel %vm570, %v273, 0.0
  %1217 = vadd.xlane.f32.xlu0 %v1216
  %v1218 = vpop.xlane.xlu0 %1217
  %v1219 = vsel %vm570, %v274, 0.0
  %1220 = vadd.xlane.f32.xlu0 %v1219
  %v1221 = vpop.xlane.xlu0 %1220
  %v1222 = vsel %vm570, %v275, 0.0
  %1223 = vadd.xlane.f32.xlu0 %v1222
  %v1224 = vpop.xlane.xlu0 %1223
  %v1225 = vsel %vm570, %v276, 0.0
  %1226 = vadd.xlane.f32.xlu0 %v1225
  %v1227 = vpop.xlane.xlu0 %1226
  %v1228 = vsel %vm570, %v277, 0.0
  %1229 = vadd.xlane.f32.xlu0 %v1228
  %v1230 = vpop.xlane.xlu0 %1229
  %v1231 = vsel %vm570, %v278, 0.0
  %1232 = vadd.xlane.f32.xlu0 %v1231
  %v1233 = vpop.xlane.xlu0 %1232
  %v1234 = vsel %vm570, %v279, 0.0
  %1235 = vadd.xlane.f32.xlu0 %v1234
  %v1236 = vpop.xlane.xlu0 %1235
  %v1237 = vsel %vm570, %v280, 0.0
  %1238 = vadd.xlane.f32.xlu0 %v1237
  %v1239 = vpop.xlane.xlu0 %1238
  %v1240 = vsel %vm570, %v281, 0.0
  %1241 = vadd.xlane.f32.xlu0 %v1240
  %v1242 = vpop.xlane.xlu0 %1241
  %v1243 = vsel %vm570, %v282, 0.0
  %1244 = vadd.xlane.f32.xlu0 %v1243
  %v1245 = vpop.xlane.xlu0 %1244
  %v1246 = vsel %vm570, %v283, 0.0
  %1247 = vadd.xlane.f32.xlu0 %v1246
  %v1248 = vpop.xlane.xlu0 %1247
  %v1249 = vsel %vm570, %v284, 0.0
  %1250 = vadd.xlane.f32.xlu0 %v1249
  %v1251 = vpop.xlane.xlu0 %1250
  %v1252 = vsel %vm570, %v285, 0.0
  %1253 = vadd.xlane.f32.xlu0 %v1252
  %v1254 = vpop.xlane.xlu0 %1253
  %v1255 = vsel %vm570, %v286, 0.0
  %1256 = vadd.xlane.f32.xlu0 %v1255
  %v1257 = vpop.xlane.xlu0 %1256
  %v1258 = vsel %vm570, %v287, 0.0
  %1259 = vadd.xlane.f32.xlu0 %v1258
  %v1260 = vpop.xlane.xlu0 %1259
  %v1261 = vsel %vm570, %v288, 0.0
  %1262 = vadd.xlane.f32.xlu0 %v1261
  %v1263 = vpop.xlane.xlu0 %1262
  %v1264 = vsel %vm570, %v289, 0.0
  %1265 = vadd.xlane.f32.xlu0 %v1264
  %v1266 = vpop.xlane.xlu0 %1265
  %v1267 = vsel %vm570, %v290, 0.0
  %1268 = vadd.xlane.f32.xlu0 %v1267
  %v1269 = vpop.xlane.xlu0 %1268
  %v1270 = vsel %vm570, %v291, 0.0
  %1271 = vadd.xlane.f32.xlu0 %v1270
  %v1272 = vpop.xlane.xlu0 %1271
  %v1273 = vsel %vm570, %v292, 0.0
  %1274 = vadd.xlane.f32.xlu0 %v1273
  %v1275 = vpop.xlane.xlu0 %1274
  %v1276 = vsel %vm570, %v293, 0.0
  %1277 = vadd.xlane.f32.xlu0 %v1276
  %v1278 = vpop.xlane.xlu0 %1277
  %v1279 = vsel %vm570, %v294, 0.0
  %1280 = vadd.xlane.f32.xlu0 %v1279
  %v1281 = vpop.xlane.xlu0 %1280
  %v1282 = vsel %vm570, %v295, 0.0
  %1283 = vadd.xlane.f32.xlu0 %v1282
  %v1284 = vpop.xlane.xlu0 %1283
  %v1285 = vsel %vm570, %v296, 0.0
  %1286 = vadd.xlane.f32.xlu0 %v1285
  %v1287 = vpop.xlane.xlu0 %1286
  %v1288 = vsel %vm570, %v297, 0.0
  %1289 = vadd.xlane.f32.xlu0 %v1288
  %v1290 = vpop.xlane.xlu0 %1289
  %v1291 = vsel %vm570, %v298, 0.0
  %1292 = vadd.xlane.f32.xlu0 %v1291
  %v1293 = vpop.xlane.xlu0 %1292
  %v1294 = vsel %vm570, %v299, 0.0
  %1295 = vadd.xlane.f32.xlu0 %v1294
  %v1296 = vpop.xlane.xlu0 %1295
  %v1297 = vsel %vm570, %v300, 0.0
  %1298 = vadd.xlane.f32.xlu0 %v1297
  %v1299 = vpop.xlane.xlu0 %1298
  %v1300 = vsel %vm570, %v301, 0.0
  %1301 = vadd.xlane.f32.xlu0 %v1300
  %v1302 = vpop.xlane.xlu0 %1301
  %v1303 = vsel %vm570, %v302, 0.0
  %1304 = vadd.xlane.f32.xlu0 %v1303
  %v1305 = vpop.xlane.xlu0 %1304
  %v1306 = vsel %vm570, %v303, 0.0
  %1307 = vadd.xlane.f32.xlu0 %v1306
  %v1308 = vpop.xlane.xlu0 %1307
  %v1309 = vsel %vm570, %v304, 0.0
  %1310 = vadd.xlane.f32.xlu0 %v1309
  %v1311 = vpop.xlane.xlu0 %1310
  %v1312 = vsel %vm570, %v305, 0.0
  %1313 = vadd.xlane.f32.xlu0 %v1312
  %v1314 = vpop.xlane.xlu0 %1313
  %v1315 = vsel %vm570, %v306, 0.0
  %1316 = vadd.xlane.f32.xlu0 %v1315
  %v1317 = vpop.xlane.xlu0 %1316
  %v1318 = vsel %vm570, %v307, 0.0
  %1319 = vadd.xlane.f32.xlu0 %v1318
  %v1320 = vpop.xlane.xlu0 %1319
  %v1321 = vsel %vm570, %v308, 0.0
  %1322 = vadd.xlane.f32.xlu0 %v1321
  %v1323 = vpop.xlane.xlu0 %1322
  %v1324 = vsel %vm570, %v309, 0.0
  %1325 = vadd.xlane.f32.xlu0 %v1324
  %v1326 = vpop.xlane.xlu0 %1325
  %v1327 = vsel %vm570, %v310, 0.0
  %1328 = vadd.xlane.f32.xlu0 %v1327
  %v1329 = vpop.xlane.xlu0 %1328
  %v1330 = vsel %vm570, %v311, 0.0
  %1331 = vadd.xlane.f32.xlu0 %v1330
  %v1332 = vpop.xlane.xlu0 %1331
  %v1333 = vsel %vm570, %v312, 0.0
  %1334 = vadd.xlane.f32.xlu0 %v1333
  %v1335 = vpop.xlane.xlu0 %1334
  %v1336 = vsel %vm570, %v313, 0.0
  %1337 = vadd.xlane.f32.xlu0 %v1336
  %v1338 = vpop.xlane.xlu0 %1337
  %v1339 = vsel %vm570, %v314, 0.0
  %1340 = vadd.xlane.f32.xlu0 %v1339
  %v1341 = vpop.xlane.xlu0 %1340
  %v1342 = vsel %vm570, %v315, 0.0
  %1343 = vadd.xlane.f32.xlu0 %v1342
  %v1344 = vpop.xlane.xlu0 %1343
  %v1345 = vsel %vm570, %v316, 0.0
  %1346 = vadd.xlane.f32.xlu0 %v1345
  %v1347 = vpop.xlane.xlu0 %1346
  %v1348 = vsel %vm570, %v317, 0.0
  %1349 = vadd.xlane.f32.xlu0 %v1348
  %v1350 = vpop.xlane.xlu0 %1349
  %v1351 = vsel %vm570, %v318, 0.0
  %1352 = vadd.xlane.f32.xlu0 %v1351
  %v1353 = vpop.xlane.xlu0 %1352
  %v1354 = vsel %vm570, %v319, 0.0
  %1355 = vadd.xlane.f32.xlu0 %v1354
  %v1356 = vpop.xlane.xlu0 %1355
  %v1357 = vsel %vm570, %v320, 0.0
  %1358 = vadd.xlane.f32.xlu0 %v1357
  %v1359 = vpop.xlane.xlu0 %1358
  %v1360 = vsel %vm570, %v321, 0.0
  %1361 = vadd.xlane.f32.xlu0 %v1360
  %v1362 = vpop.xlane.xlu0 %1361
  %v1363 = vsel %vm570, %v322, 0.0
  %1364 = vadd.xlane.f32.xlu0 %v1363
  %v1365 = vpop.xlane.xlu0 %1364
  %v1366 = vsel %vm570, %v323, 0.0
  %1367 = vadd.xlane.f32.xlu0 %v1366
  %v1368 = vpop.xlane.xlu0 %1367
  %v1369 = vsel %vm570, %v324, 0.0
  %1370 = vadd.xlane.f32.xlu0 %v1369
  %v1371 = vpop.xlane.xlu0 %1370
  %v1372 = vsel %vm570, %v325, 0.0
  %1373 = vadd.xlane.f32.xlu0 %v1372
  %v1374 = vpop.xlane.xlu0 %1373
  %v1375 = vsel %vm570, %v326, 0.0
  %1376 = vadd.xlane.f32.xlu0 %v1375
  %v1377 = vpop.xlane.xlu0 %1376
  %v1378 = vsel %vm570, %v327, 0.0
  %1379 = vadd.xlane.f32.xlu0 %v1378
  %v1380 = vpop.xlane.xlu0 %1379
  %v1381 = vsel %vm570, %v328, 0.0
  %1382 = vadd.xlane.f32.xlu0 %v1381
  %v1383 = vpop.xlane.xlu0 %1382
  %v1384 = vsel %vm570, %v329, 0.0
  %1385 = vadd.xlane.f32.xlu0 %v1384
  %v1386 = vpop.xlane.xlu0 %1385
  %v1387 = vsel %vm570, %v330, 0.0
  %1388 = vadd.xlane.f32.xlu0 %v1387
  %v1389 = vpop.xlane.xlu0 %1388
  %v1390 = vsel %vm570, %v331, 0.0
  %1391 = vadd.xlane.f32.xlu0 %v1390
  %v1392 = vpop.xlane.xlu0 %1391
  %v1393 = vsel %vm570, %v332, 0.0
  %1394 = vadd.xlane.f32.xlu0 %v1393
  %v1395 = vpop.xlane.xlu0 %1394
  %v1396 = vsel %vm570, %v333, 0.0
  %1397 = vadd.xlane.f32.xlu0 %v1396
  %v1398 = vpop.xlane.xlu0 %1397
  %v1399 = vsel %vm570, %v334, 0.0
  %1400 = vadd.xlane.f32.xlu0 %v1399
  %v1401 = vpop.xlane.xlu0 %1400
  %v1402 = vsel %vm570, %v335, 0.0
  %1403 = vadd.xlane.f32.xlu0 %v1402
  %v1404 = vpop.xlane.xlu0 %1403
  %v1405 = vsel %vm570, %v336, 0.0
  %1406 = vadd.xlane.f32.xlu0 %v1405
  %v1407 = vpop.xlane.xlu0 %1406
  %v1408 = vsel %vm570, %v337, 0.0
  %1409 = vadd.xlane.f32.xlu0 %v1408
  %v1410 = vpop.xlane.xlu0 %1409
  %v1411 = vsel %vm570, %v338, 0.0
  %1412 = vadd.xlane.f32.xlu0 %v1411
  %v1413 = vpop.xlane.xlu0 %1412
  %v1414 = vsel %vm570, %v339, 0.0
  %1415 = vadd.xlane.f32.xlu0 %v1414
  %v1416 = vpop.xlane.xlu0 %1415
  %v1417 = vsel %vm570, %v340, 0.0
  %1418 = vadd.xlane.f32.xlu0 %v1417
  %v1419 = vpop.xlane.xlu0 %1418
  %v1420 = vsel %vm570, %v341, 0.0
  %1421 = vadd.xlane.f32.xlu0 %v1420
  %v1422 = vpop.xlane.xlu0 %1421
  %v1423 = vsel %vm570, %v342, 0.0
  %1424 = vadd.xlane.f32.xlu0 %v1423
  %v1425 = vpop.xlane.xlu0 %1424
  %v1426 = vsel %vm570, %v343, 0.0
  %1427 = vadd.xlane.f32.xlu0 %v1426
  %v1428 = vpop.xlane.xlu0 %1427
  %v1429 = vsel %vm570, %v344, 0.0
  %1430 = vadd.xlane.f32.xlu0 %v1429
  %v1431 = vpop.xlane.xlu0 %1430
  %v1432 = vsel %vm570, %v345, 0.0
  %1433 = vadd.xlane.f32.xlu0 %v1432
  %v1434 = vpop.xlane.xlu0 %1433
  %v1435 = vsel %vm570, %v346, 0.0
  %1436 = vadd.xlane.f32.xlu0 %v1435
  %v1437 = vpop.xlane.xlu0 %1436
  %v1438 = vsel %vm570, %v347, 0.0
  %1439 = vadd.xlane.f32.xlu0 %v1438
  %v1440 = vpop.xlane.xlu0 %1439
  %v1441 = vsel %vm570, %v348, 0.0
  %1442 = vadd.xlane.f32.xlu0 %v1441
  %v1443 = vpop.xlane.xlu0 %1442
  %v1444 = vsel %vm570, %v349, 0.0
  %1445 = vadd.xlane.f32.xlu0 %v1444
  %v1446 = vpop.xlane.xlu0 %1445
  %v1447 = vsel %vm570, %v350, 0.0
  %1448 = vadd.xlane.f32.xlu0 %v1447
  %v1449 = vpop.xlane.xlu0 %1448
  %v1450 = vsel %vm570, %v351, 0.0
  %1451 = vadd.xlane.f32.xlu0 %v1450
  %v1452 = vpop.xlane.xlu0 %1451
  %v1453 = vsel %vm570, %v352, 0.0
  %1454 = vadd.xlane.f32.xlu0 %v1453
  %v1455 = vpop.xlane.xlu0 %1454
  %v1456 = vsel %vm570, %v353, 0.0
  %1457 = vadd.xlane.f32.xlu0 %v1456
  %v1458 = vpop.xlane.xlu0 %1457
  %v1459 = vsel %vm570, %v354, 0.0
  %1460 = vadd.xlane.f32.xlu0 %v1459
  %v1461 = vpop.xlane.xlu0 %1460
  %v1462 = vsel %vm570, %v355, 0.0
  %1463 = vadd.xlane.f32.xlu0 %v1462
  %v1464 = vpop.xlane.xlu0 %1463
  %v1465 = vsel %vm570, %v356, 0.0
  %1466 = vadd.xlane.f32.xlu0 %v1465
  %v1467 = vpop.xlane.xlu0 %1466
  %v1468 = vsel %vm570, %v357, 0.0
  %1469 = vadd.xlane.f32.xlu0 %v1468
  %v1470 = vpop.xlane.xlu0 %1469
  %v1471 = vsel %vm570, %v358, 0.0
  %1472 = vadd.xlane.f32.xlu0 %v1471
  %v1473 = vpop.xlane.xlu0 %1472
  %v1474 = vsel %vm570, %v359, 0.0
  %1475 = vadd.xlane.f32.xlu0 %v1474
  %v1476 = vpop.xlane.xlu0 %1475
  %v1477 = vsel %vm570, %v360, 0.0
  %1478 = vadd.xlane.f32.xlu0 %v1477
  %v1479 = vpop.xlane.xlu0 %1478
  %v1480 = vsel %vm570, %v361, 0.0
  %1481 = vadd.xlane.f32.xlu0 %v1480
  %v1482 = vpop.xlane.xlu0 %1481
  %v1483 = vsel %vm570, %v362, 0.0
  %1484 = vadd.xlane.f32.xlu0 %v1483
  %v1485 = vpop.xlane.xlu0 %1484
  %v1486 = vsel %vm570, %v363, 0.0
  %1487 = vadd.xlane.f32.xlu0 %v1486
  %v1488 = vpop.xlane.xlu0 %1487
  %v1489 = vsel %vm570, %v364, 0.0
  %1490 = vadd.xlane.f32.xlu0 %v1489
  %v1491 = vpop.xlane.xlu0 %1490
  %v1492 = vsel %vm570, %v365, 0.0
  %1493 = vadd.xlane.f32.xlu0 %v1492
  %v1494 = vpop.xlane.xlu0 %1493
  %v1495 = vsel %vm570, %v366, 0.0
  %1496 = vadd.xlane.f32.xlu0 %v1495
  %v1497 = vpop.xlane.xlu0 %1496
  %v1498 = vsel %vm570, %v367, 0.0
  %1499 = vadd.xlane.f32.xlu0 %v1498
  %v1500 = vpop.xlane.xlu0 %1499
  %v1501 = vsel %vm570, %v368, 0.0
  %1502 = vadd.xlane.f32.xlu0 %v1501
  %v1503 = vpop.xlane.xlu0 %1502
  %v1504 = vsel %vm570, %v369, 0.0
  %1505 = vadd.xlane.f32.xlu0 %v1504
  %v1506 = vpop.xlane.xlu0 %1505
  %v1507 = vsel %vm570, %v370, 0.0
  %1508 = vadd.xlane.f32.xlu0 %v1507
  %v1509 = vpop.xlane.xlu0 %1508
  %v1510 = vsel %vm570, %v371, 0.0
  %1511 = vadd.xlane.f32.xlu0 %v1510
  %v1512 = vpop.xlane.xlu0 %1511
  %v1513 = vsel %vm570, %v372, 0.0
  %1514 = vadd.xlane.f32.xlu0 %v1513
  %v1515 = vpop.xlane.xlu0 %1514
  %v1516 = vsel %vm570, %v373, 0.0
  %1517 = vadd.xlane.f32.xlu0 %v1516
  %v1518 = vpop.xlane.xlu0 %1517
  %v1519 = vsel %vm570, %v374, 0.0
  %1520 = vadd.xlane.f32.xlu0 %v1519
  %v1521 = vpop.xlane.xlu0 %1520
  %v1522 = vsel %vm570, %v375, 0.0
  %1523 = vadd.xlane.f32.xlu0 %v1522
  %v1524 = vpop.xlane.xlu0 %1523
  %v1525 = vsel %vm570, %v376, 0.0
  %1526 = vadd.xlane.f32.xlu0 %v1525
  %v1527 = vpop.xlane.xlu0 %1526
  %v1528 = vsel %vm570, %v377, 0.0
  %1529 = vadd.xlane.f32.xlu0 %v1528
  %v1530 = vpop.xlane.xlu0 %1529
  %v1531 = vsel %vm570, %v378, 0.0
  %1532 = vadd.xlane.f32.xlu0 %v1531
  %v1533 = vpop.xlane.xlu0 %1532
  %v1534 = vsel %vm570, %v379, 0.0
  %1535 = vadd.xlane.f32.xlu0 %v1534
  %v1536 = vpop.xlane.xlu0 %1535
  %v1537 = vsel %vm570, %v380, 0.0
  %1538 = vadd.xlane.f32.xlu0 %v1537
  %v1539 = vpop.xlane.xlu0 %1538
  %v1540 = vsel %vm570, %v381, 0.0
  %1541 = vadd.xlane.f32.xlu0 %v1540
  %v1542 = vpop.xlane.xlu0 %1541
  %v1543 = vsel %vm570, %v382, 0.0
  %1544 = vadd.xlane.f32.xlu0 %v1543
  %v1545 = vpop.xlane.xlu0 %1544
  %v1546 = vsel %vm570, %v383, 0.0
  %1547 = vadd.xlane.f32.xlu0 %v1546
  %v1548 = vpop.xlane.xlu0 %1547
  %v1549 = vsel %vm570, %v384, 0.0
  %1550 = vadd.xlane.f32.xlu0 %v1549
  %v1551 = vpop.xlane.xlu0 %1550
  %v1552 = vsel %vm570, %v385, 0.0
  %1553 = vadd.xlane.f32.xlu0 %v1552
  %v1554 = vpop.xlane.xlu0 %1553
  %v1555 = vsel %vm570, %v386, 0.0
  %1556 = vadd.xlane.f32.xlu0 %v1555
  %v1557 = vpop.xlane.xlu0 %1556
  %v1558 = vsel %vm570, %v387, 0.0
  %1559 = vadd.xlane.f32.xlu0 %v1558
  %v1560 = vpop.xlane.xlu0 %1559
  %v1561 = vsel %vm570, %v388, 0.0
  %1562 = vadd.xlane.f32.xlu0 %v1561
  %v1563 = vpop.xlane.xlu0 %1562
  %v1564 = vsel %vm570, %v389, 0.0
  %1565 = vadd.xlane.f32.xlu0 %v1564
  %v1566 = vpop.xlane.xlu0 %1565
  %v1567 = vsel %vm570, %v390, 0.0
  %1568 = vadd.xlane.f32.xlu0 %v1567
  %v1569 = vpop.xlane.xlu0 %1568
  %v1570 = vsel %vm570, %v391, 0.0
  %1571 = vadd.xlane.f32.xlu0 %v1570
  %v1572 = vpop.xlane.xlu0 %1571
  %v1573 = vsel %vm570, %v392, 0.0
  %1574 = vadd.xlane.f32.xlu0 %v1573
  %v1575 = vpop.xlane.xlu0 %1574
  %v1576 = vsel %vm570, %v393, 0.0
  %1577 = vadd.xlane.f32.xlu0 %v1576
  %v1578 = vpop.xlane.xlu0 %1577
  %v1579 = vsel %vm570, %v394, 0.0
  %1580 = vadd.xlane.f32.xlu0 %v1579
  %v1581 = vpop.xlane.xlu0 %1580
  %v1582 = vsel %vm570, %v395, 0.0
  %1583 = vadd.xlane.f32.xlu0 %v1582
  %v1584 = vpop.xlane.xlu0 %1583
  %v1585 = vsel %vm570, %v396, 0.0
  %1586 = vadd.xlane.f32.xlu0 %v1585
  %v1587 = vpop.xlane.xlu0 %1586
  %v1588 = vsel %vm570, %v397, 0.0
  %1589 = vadd.xlane.f32.xlu0 %v1588
  %v1590 = vpop.xlane.xlu0 %1589
  %v1591 = vsel %vm570, %v398, 0.0
  %1592 = vadd.xlane.f32.xlu0 %v1591
  %v1593 = vpop.xlane.xlu0 %1592
  %v1594 = vsel %vm570, %v399, 0.0
  %1595 = vadd.xlane.f32.xlu0 %v1594
  %v1596 = vpop.xlane.xlu0 %1595
  %v1597 = vsel %vm570, %v400, 0.0
  %1598 = vadd.xlane.f32.xlu0 %v1597
  %v1599 = vpop.xlane.xlu0 %1598
  %v1600 = vsel %vm570, %v401, 0.0
  %1601 = vadd.xlane.f32.xlu0 %v1600
  %v1602 = vpop.xlane.xlu0 %1601
  %v1603 = vsel %vm570, %v402, 0.0
  %1604 = vadd.xlane.f32.xlu0 %v1603
  %v1605 = vpop.xlane.xlu0 %1604
  %v1606 = vsel %vm570, %v403, 0.0
  %1607 = vadd.xlane.f32.xlu0 %v1606
  %v1608 = vpop.xlane.xlu0 %1607
  %v1609 = vsel %vm570, %v404, 0.0
  %1610 = vadd.xlane.f32.xlu0 %v1609
  %v1611 = vpop.xlane.xlu0 %1610
  %v1612 = vsel %vm570, %v405, 0.0
  %1613 = vadd.xlane.f32.xlu0 %v1612
  %v1614 = vpop.xlane.xlu0 %1613
  %v1615 = vsel %vm570, %v406, 0.0
  %1616 = vadd.xlane.f32.xlu0 %v1615
  %v1617 = vpop.xlane.xlu0 %1616
  %v1618 = vsel %vm570, %v407, 0.0
  %1619 = vadd.xlane.f32.xlu0 %v1618
  %v1620 = vpop.xlane.xlu0 %1619
  %v1621 = vsel %vm570, %v408, 0.0
  %1622 = vadd.xlane.f32.xlu0 %v1621
  %v1623 = vpop.xlane.xlu0 %1622
  %v1624 = vsel %vm570, %v409, 0.0
  %1625 = vadd.xlane.f32.xlu0 %v1624
  %v1626 = vpop.xlane.xlu0 %1625
  %v1627 = vsel %vm570, %v410, 0.0
  %1628 = vadd.xlane.f32.xlu0 %v1627
  %v1629 = vpop.xlane.xlu0 %1628
  %v1630 = vsel %vm570, %v411, 0.0
  %1631 = vadd.xlane.f32.xlu0 %v1630
  %v1632 = vpop.xlane.xlu0 %1631
  %v1633 = vsel %vm570, %v412, 0.0
  %1634 = vadd.xlane.f32.xlu0 %v1633
  %v1635 = vpop.xlane.xlu0 %1634
  %v1636 = vsel %vm570, %v413, 0.0
  %1637 = vadd.xlane.f32.xlu0 %v1636
  %v1638 = vpop.xlane.xlu0 %1637
  %v1639 = vsel %vm570, %v414, 0.0
  %1640 = vadd.xlane.f32.xlu0 %v1639
  %v1641 = vpop.xlane.xlu0 %1640
  %v1642 = vsel %vm570, %v415, 0.0
  %1643 = vadd.xlane.f32.xlu0 %v1642
  %v1644 = vpop.xlane.xlu0 %1643
  %v1645 = vsel %vm570, %v416, 0.0
  %1646 = vadd.xlane.f32.xlu0 %v1645
  %v1647 = vpop.xlane.xlu0 %1646
  %v1648 = vsel %vm570, %v417, 0.0
  %1649 = vadd.xlane.f32.xlu0 %v1648
  %v1650 = vpop.xlane.xlu0 %1649
  %v1651 = vsel %vm570, %v418, 0.0
  %1652 = vadd.xlane.f32.xlu0 %v1651
  %v1653 = vpop.xlane.xlu0 %1652
  %v1654 = vsel %vm570, %v419, 0.0
  %1655 = vadd.xlane.f32.xlu0 %v1654
  %v1656 = vpop.xlane.xlu0 %1655
  %v1657 = vsel %vm570, %v420, 0.0
  %1658 = vadd.xlane.f32.xlu0 %v1657
  %v1659 = vpop.xlane.xlu0 %1658
  %v1660 = vsel %vm570, %v421, 0.0
  %1661 = vadd.xlane.f32.xlu0 %v1660
  %v1662 = vpop.xlane.xlu0 %1661
  %v1663 = vsel %vm570, %v422, 0.0
  %1664 = vadd.xlane.f32.xlu0 %v1663
  %v1665 = vpop.xlane.xlu0 %1664
  %v1666 = vsel %vm570, %v423, 0.0
  %1667 = vadd.xlane.f32.xlu0 %v1666
  %v1668 = vpop.xlane.xlu0 %1667
  %v1669 = vsel %vm570, %v424, 0.0
  %1670 = vadd.xlane.f32.xlu0 %v1669
  %v1671 = vpop.xlane.xlu0 %1670
  %v1672 = vsel %vm570, %v425, 0.0
  %1673 = vadd.xlane.f32.xlu0 %v1672
  %v1674 = vpop.xlane.xlu0 %1673
  %v1675 = vsel %vm570, %v426, 0.0
  %1676 = vadd.xlane.f32.xlu0 %v1675
  %v1677 = vpop.xlane.xlu0 %1676
  %v1678 = vsel %vm570, %v427, 0.0
  %1679 = vadd.xlane.f32.xlu0 %v1678
  %v1680 = vpop.xlane.xlu0 %1679
  %v1681 = vsel %vm570, %v428, 0.0
  %1682 = vadd.xlane.f32.xlu0 %v1681
  %v1683 = vpop.xlane.xlu0 %1682
  %v1684 = vsel %vm570, %v429, 0.0
  %1685 = vadd.xlane.f32.xlu0 %v1684
  %v1686 = vpop.xlane.xlu0 %1685
  %v1687 = vsel %vm570, %v430, 0.0
  %1688 = vadd.xlane.f32.xlu0 %v1687
  %v1689 = vpop.xlane.xlu0 %1688
  %v1690 = vsel %vm570, %v431, 0.0
  %1691 = vadd.xlane.f32.xlu0 %v1690
  %v1692 = vpop.xlane.xlu0 %1691
  %v1693 = vsel %vm570, %v432, 0.0
  %1694 = vadd.xlane.f32.xlu0 %v1693
  %v1695 = vpop.xlane.xlu0 %1694
  %v1696 = vsel %vm570, %v433, 0.0
  %1697 = vadd.xlane.f32.xlu0 %v1696
  %v1698 = vpop.xlane.xlu0 %1697
  %v1699 = vsel %vm570, %v434, 0.0
  %1700 = vadd.xlane.f32.xlu0 %v1699
  %v1701 = vpop.xlane.xlu0 %1700
  %v1702 = vsel %vm570, %v435, 0.0
  %1703 = vadd.xlane.f32.xlu0 %v1702
  %v1704 = vpop.xlane.xlu0 %1703
  %v1705 = vsel %vm570, %v436, 0.0
  %1706 = vadd.xlane.f32.xlu0 %v1705
  %v1707 = vpop.xlane.xlu0 %1706
  %v1708 = vsel %vm570, %v437, 0.0
  %1709 = vadd.xlane.f32.xlu0 %v1708
  %v1710 = vpop.xlane.xlu0 %1709
  %v1711 = vsel %vm570, %v438, 0.0
  %1712 = vadd.xlane.f32.xlu0 %v1711
  %v1713 = vpop.xlane.xlu0 %1712
  %v1714 = vsel %vm570, %v439, 0.0
  %1715 = vadd.xlane.f32.xlu0 %v1714
  %v1716 = vpop.xlane.xlu0 %1715
  %v1717 = vsel %vm570, %v440, 0.0
  %1718 = vadd.xlane.f32.xlu0 %v1717
  %v1719 = vpop.xlane.xlu0 %1718
  %v1720 = vsel %vm570, %v441, 0.0
  %1721 = vadd.xlane.f32.xlu0 %v1720
  %v1722 = vpop.xlane.xlu0 %1721
  %v1723 = vsel %vm570, %v442, 0.0
  %1724 = vadd.xlane.f32.xlu0 %v1723
  %v1725 = vpop.xlane.xlu0 %1724
  %v1726 = vsel %vm570, %v443, 0.0
  %1727 = vadd.xlane.f32.xlu0 %v1726
  %v1728 = vpop.xlane.xlu0 %1727
  %v1729 = vsel %vm570, %v444, 0.0
  %1730 = vadd.xlane.f32.xlu0 %v1729
  %v1731 = vpop.xlane.xlu0 %1730
  %v1732 = vsel %vm570, %v445, 0.0
  %1733 = vadd.xlane.f32.xlu0 %v1732
  %v1734 = vpop.xlane.xlu0 %1733
  %v1735 = vsel %vm570, %v446, 0.0
  %1736 = vadd.xlane.f32.xlu0 %v1735
  %v1737 = vpop.xlane.xlu0 %1736
  %v1738 = vsel %vm570, %v447, 0.0
  %1739 = vadd.xlane.f32.xlu0 %v1738
  %v1740 = vpop.xlane.xlu0 %1739
  %v1741 = vsel %vm570, %v448, 0.0
  %1742 = vadd.xlane.f32.xlu0 %v1741
  %v1743 = vpop.xlane.xlu0 %1742
  %v1744 = vsel %vm570, %v449, 0.0
  %1745 = vadd.xlane.f32.xlu0 %v1744
  %v1746 = vpop.xlane.xlu0 %1745
  %v1747 = vsel %vm570, %v450, 0.0
  %1748 = vadd.xlane.f32.xlu0 %v1747
  %v1749 = vpop.xlane.xlu0 %1748
  %v1750 = vsel %vm570, %v451, 0.0
  %1751 = vadd.xlane.f32.xlu0 %v1750
  %v1752 = vpop.xlane.xlu0 %1751
  %v1753 = vsel %vm570, %v452, 0.0
  %1754 = vadd.xlane.f32.xlu0 %v1753
  %v1755 = vpop.xlane.xlu0 %1754
  %v1756 = vsel %vm570, %v453, 0.0
  %1757 = vadd.xlane.f32.xlu0 %v1756
  %v1758 = vpop.xlane.xlu0 %1757
  %v1759 = vsel %vm570, %v454, 0.0
  %1760 = vadd.xlane.f32.xlu0 %v1759
  %v1761 = vpop.xlane.xlu0 %1760
  %v1762 = vsel %vm570, %v455, 0.0
  %1763 = vadd.xlane.f32.xlu0 %v1762
  %v1764 = vpop.xlane.xlu0 %1763
  %v1765 = vsel %vm570, %v456, 0.0
  %1766 = vadd.xlane.f32.xlu0 %v1765
  %v1767 = vpop.xlane.xlu0 %1766
  %v1768 = vsel %vm570, %v457, 0.0
  %1769 = vadd.xlane.f32.xlu0 %v1768
  %v1770 = vpop.xlane.xlu0 %1769
  %v1771 = vsel %vm570, %v458, 0.0
  %1772 = vadd.xlane.f32.xlu0 %v1771
  %v1773 = vpop.xlane.xlu0 %1772
  %v1774 = vsel %vm570, %v459, 0.0
  %1775 = vadd.xlane.f32.xlu0 %v1774
  %v1776 = vpop.xlane.xlu0 %1775
  %v1777 = vsel %vm570, %v460, 0.0
  %1778 = vadd.xlane.f32.xlu0 %v1777
  %v1779 = vpop.xlane.xlu0 %1778
  %v1780 = vsel %vm570, %v461, 0.0
  %1781 = vadd.xlane.f32.xlu0 %v1780
  %v1782 = vpop.xlane.xlu0 %1781
  %v1783 = vsel %vm570, %v462, 0.0
  %1784 = vadd.xlane.f32.xlu0 %v1783
  %v1785 = vpop.xlane.xlu0 %1784
  %v1786 = vsel %vm570, %v463, 0.0
  %1787 = vadd.xlane.f32.xlu0 %v1786
  %v1788 = vpop.xlane.xlu0 %1787
  %v1789 = vsel %vm570, %v464, 0.0
  %1790 = vadd.xlane.f32.xlu0 %v1789
  %v1791 = vpop.xlane.xlu0 %1790
  %v1792 = vsel %vm570, %v465, 0.0
  %1793 = vadd.xlane.f32.xlu0 %v1792
  %v1794 = vpop.xlane.xlu0 %1793
  %v1795 = vsel %vm570, %v466, 0.0
  %1796 = vadd.xlane.f32.xlu0 %v1795
  %v1797 = vpop.xlane.xlu0 %1796
  %v1798 = vsel %vm570, %v467, 0.0
  %1799 = vadd.xlane.f32.xlu0 %v1798
  %v1800 = vpop.xlane.xlu0 %1799
  %v1801 = vsel %vm570, %v468, 0.0
  %1802 = vadd.xlane.f32.xlu0 %v1801
  %v1803 = vpop.xlane.xlu0 %1802
  %v1804 = vsel %vm570, %v469, 0.0
  %1805 = vadd.xlane.f32.xlu0 %v1804
  %v1806 = vpop.xlane.xlu0 %1805
  %v1807 = vsel %vm570, %v470, 0.0
  %1808 = vadd.xlane.f32.xlu0 %v1807
  %v1809 = vpop.xlane.xlu0 %1808
  %v1810 = vsel %vm570, %v471, 0.0
  %1811 = vadd.xlane.f32.xlu0 %v1810
  %v1812 = vpop.xlane.xlu0 %1811
  %v1813 = vsel %vm570, %v472, 0.0
  %1814 = vadd.xlane.f32.xlu0 %v1813
  %v1815 = vpop.xlane.xlu0 %1814
  %v1816 = vsel %vm570, %v473, 0.0
  %1817 = vadd.xlane.f32.xlu0 %v1816
  %v1818 = vpop.xlane.xlu0 %1817
  %v1819 = vsel %vm570, %v474, 0.0
  %1820 = vadd.xlane.f32.xlu0 %v1819
  %v1821 = vpop.xlane.xlu0 %1820
  %v1822 = vsel %vm570, %v475, 0.0
  %1823 = vadd.xlane.f32.xlu0 %v1822
  %v1824 = vpop.xlane.xlu0 %1823
  %v1825 = vsel %vm570, %v476, 0.0
  %1826 = vadd.xlane.f32.xlu0 %v1825
  %v1827 = vpop.xlane.xlu0 %1826
  %v1828 = vsel %vm570, %v477, 0.0
  %1829 = vadd.xlane.f32.xlu0 %v1828
  %v1830 = vpop.xlane.xlu0 %1829
  %v1831 = vsel %vm570, %v478, 0.0
  %1832 = vadd.xlane.f32.xlu0 %v1831
  %v1833 = vpop.xlane.xlu0 %1832
  %v1834 = vsel %vm570, %v479, 0.0
  %1835 = vadd.xlane.f32.xlu0 %v1834
  %v1836 = vpop.xlane.xlu0 %1835
  %v1837 = vsel %vm570, %v480, 0.0
  %1838 = vadd.xlane.f32.xlu0 %v1837
  %v1839 = vpop.xlane.xlu0 %1838
  %v1840 = vsel %vm570, %v481, 0.0
  %1841 = vadd.xlane.f32.xlu0 %v1840
  %v1842 = vpop.xlane.xlu0 %1841
  %v1843 = vsel %vm570, %v482, 0.0
  %1844 = vadd.xlane.f32.xlu0 %v1843
  %v1845 = vpop.xlane.xlu0 %1844
  %v1846 = vsel %vm570, %v483, 0.0
  %1847 = vadd.xlane.f32.xlu0 %v1846
  %v1848 = vpop.xlane.xlu0 %1847
  %v1849 = vsel %vm570, %v484, 0.0
  %1850 = vadd.xlane.f32.xlu0 %v1849
  %v1851 = vpop.xlane.xlu0 %1850
  %v1852 = vsel %vm570, %v485, 0.0
  %1853 = vadd.xlane.f32.xlu0 %v1852
  %v1854 = vpop.xlane.xlu0 %1853
  %v1855 = vsel %vm570, %v486, 0.0
  %1856 = vadd.xlane.f32.xlu0 %v1855
  %v1857 = vpop.xlane.xlu0 %1856
  %v1858 = vsel %vm570, %v487, 0.0
  %1859 = vadd.xlane.f32.xlu0 %v1858
  %v1860 = vpop.xlane.xlu0 %1859
  %v1861 = vsel %vm570, %v488, 0.0
  %1862 = vadd.xlane.f32.xlu0 %v1861
  %v1863 = vpop.xlane.xlu0 %1862
  %v1864 = vsel %vm570, %v489, 0.0
  %1865 = vadd.xlane.f32.xlu0 %v1864
  %v1866 = vpop.xlane.xlu0 %1865
  %v1867 = vsel %vm570, %v490, 0.0
  %1868 = vadd.xlane.f32.xlu0 %v1867
  %v1869 = vpop.xlane.xlu0 %1868
  %v1870 = vsel %vm570, %v491, 0.0
  %1871 = vadd.xlane.f32.xlu0 %v1870
  %v1872 = vpop.xlane.xlu0 %1871
  %v1873 = vsel %vm570, %v492, 0.0
  %1874 = vadd.xlane.f32.xlu0 %v1873
  %v1875 = vpop.xlane.xlu0 %1874
  %v1876 = vsel %vm570, %v493, 0.0
  %1877 = vadd.xlane.f32.xlu0 %v1876
  %v1878 = vpop.xlane.xlu0 %1877
  %v1879 = vsel %vm570, %v494, 0.0
  %1880 = vadd.xlane.f32.xlu0 %v1879
  %v1881 = vpop.xlane.xlu0 %1880
  %v1882 = vsel %vm570, %v495, 0.0
  %1883 = vadd.xlane.f32.xlu0 %v1882
  %v1884 = vpop.xlane.xlu0 %1883
  %v1885 = vsel %vm570, %v496, 0.0
  %1886 = vadd.xlane.f32.xlu0 %v1885
  %v1887 = vpop.xlane.xlu0 %1886
  %v1888 = vsel %vm570, %v497, 0.0
  %1889 = vadd.xlane.f32.xlu0 %v1888
  %v1890 = vpop.xlane.xlu0 %1889
  %v1891 = vsel %vm570, %v498, 0.0
  %1892 = vadd.xlane.f32.xlu0 %v1891
  %v1893 = vpop.xlane.xlu0 %1892
  %v1894 = vsel %vm570, %v499, 0.0
  %1895 = vadd.xlane.f32.xlu0 %v1894
  %v1896 = vpop.xlane.xlu0 %1895
  %v1897 = vsel %vm570, %v500, 0.0
  %1898 = vadd.xlane.f32.xlu0 %v1897
  %v1899 = vpop.xlane.xlu0 %1898
  %v1900 = vsel %vm570, %v501, 0.0
  %1901 = vadd.xlane.f32.xlu0 %v1900
  %v1902 = vpop.xlane.xlu0 %1901
  %v1903 = vsel %vm570, %v502, 0.0
  %1904 = vadd.xlane.f32.xlu0 %v1903
  %v1905 = vpop.xlane.xlu0 %1904
  %v1906 = vsel %vm570, %v503, 0.0
  %1907 = vadd.xlane.f32.xlu0 %v1906
  %v1908 = vpop.xlane.xlu0 %1907
  %v1909 = vsel %vm570, %v504, 0.0
  %1910 = vadd.xlane.f32.xlu0 %v1909
  %v1911 = vpop.xlane.xlu0 %1910
  %v1912 = vsel %vm570, %v505, 0.0
  %1913 = vadd.xlane.f32.xlu0 %v1912
  %v1914 = vpop.xlane.xlu0 %1913
  %v1915 = vsel %vm570, %v506, 0.0
  %1916 = vadd.xlane.f32.xlu0 %v1915
  %v1917 = vpop.xlane.xlu0 %1916
  %v1918 = vsel %vm570, %v507, 0.0
  %1919 = vadd.xlane.f32.xlu0 %v1918
  %v1920 = vpop.xlane.xlu0 %1919
  %v1921 = vsel %vm570, %v508, 0.0
  %1922 = vadd.xlane.f32.xlu0 %v1921
  %v1923 = vpop.xlane.xlu0 %1922
  %v1924 = vsel %vm570, %v509, 0.0
  %1925 = vadd.xlane.f32.xlu0 %v1924
  %v1926 = vpop.xlane.xlu0 %1925
  %v1927 = vsel %vm570, %v510, 0.0
  %1928 = vadd.xlane.f32.xlu0 %v1927
  %v1929 = vpop.xlane.xlu0 %1928
  %v1930 = vsel %vm570, %v511, 0.0
  %1931 = vadd.xlane.f32.xlu0 %v1930
  %v1932 = vpop.xlane.xlu0 %1931
  %v1933 = vsel %vm570, %v512, 0.0
  %1934 = vadd.xlane.f32.xlu0 %v1933
  %v1935 = vpop.xlane.xlu0 %1934
  %v1936 = vsel %vm570, %v513, 0.0
  %1937 = vadd.xlane.f32.xlu0 %v1936
  %v1938 = vpop.xlane.xlu0 %1937
  %v1939 = vsel %vm570, %v514, 0.0
  %1940 = vadd.xlane.f32.xlu0 %v1939
  %v1941 = vpop.xlane.xlu0 %1940
  %v1942 = vsel %vm570, %v515, 0.0
  %1943 = vadd.xlane.f32.xlu0 %v1942
  %v1944 = vpop.xlane.xlu0 %1943
  %v1945 = vsel %vm570, %v516, 0.0
  %1946 = vadd.xlane.f32.xlu0 %v1945
  %v1947 = vpop.xlane.xlu0 %1946
  %v1948 = vsel %vm570, %v517, 0.0
  %1949 = vadd.xlane.f32.xlu0 %v1948
  %v1950 = vpop.xlane.xlu0 %1949
  %v1951 = vsel %vm570, %v518, 0.0
  %1952 = vadd.xlane.f32.xlu0 %v1951
  %v1953 = vpop.xlane.xlu0 %1952
  %v1954 = vsel %vm570, %v519, 0.0
  %1955 = vadd.xlane.f32.xlu0 %v1954
  %v1956 = vpop.xlane.xlu0 %1955
  %v1957 = vsel %vm570, %v520, 0.0
  %1958 = vadd.xlane.f32.xlu0 %v1957
  %v1959 = vpop.xlane.xlu0 %1958
  %v1960 = vsel %vm570, %v521, 0.0
  %1961 = vadd.xlane.f32.xlu0 %v1960
  %v1962 = vpop.xlane.xlu0 %1961
  %v1963 = vsel %vm570, %v522, 0.0
  %1964 = vadd.xlane.f32.xlu0 %v1963
  %v1965 = vpop.xlane.xlu0 %1964
  %v1966 = vsel %vm570, %v523, 0.0
  %1967 = vadd.xlane.f32.xlu0 %v1966
  %v1968 = vpop.xlane.xlu0 %1967
  %v1969 = vsel %vm570, %v524, 0.0
  %1970 = vadd.xlane.f32.xlu0 %v1969
  %v1971 = vpop.xlane.xlu0 %1970
  %v1972 = vsel %vm570, %v525, 0.0
  %1973 = vadd.xlane.f32.xlu0 %v1972
  %v1974 = vpop.xlane.xlu0 %1973
  %v1975 = vsel %vm570, %v526, 0.0
  %1976 = vadd.xlane.f32.xlu0 %v1975
  %v1977 = vpop.xlane.xlu0 %1976
  %v1978 = vsel %vm570, %v527, 0.0
  %1979 = vadd.xlane.f32.xlu0 %v1978
  %v1980 = vpop.xlane.xlu0 %1979
  %v1981 = vsel %vm570, %v528, 0.0
  %1982 = vadd.xlane.f32.xlu0 %v1981
  %v1983 = vpop.xlane.xlu0 %1982
  %v1984 = vsel %vm570, %v529, 0.0
  %1985 = vadd.xlane.f32.xlu0 %v1984
  %v1986 = vpop.xlane.xlu0 %1985
  %v1987 = vsel %vm570, %v530, 0.0
  %1988 = vadd.xlane.f32.xlu0 %v1987
  %v1989 = vpop.xlane.xlu0 %1988
  %v1990 = vsel %vm570, %v531, 0.0
  %1991 = vadd.xlane.f32.xlu0 %v1990
  %v1992 = vpop.xlane.xlu0 %1991
  %v1993 = vsel %vm570, %v532, 0.0
  %1994 = vadd.xlane.f32.xlu0 %v1993
  %v1995 = vpop.xlane.xlu0 %1994
  %v1996 = vsel %vm570, %v533, 0.0
  %1997 = vadd.xlane.f32.xlu0 %v1996
  %v1998 = vpop.xlane.xlu0 %1997
  %v1999 = vsel %vm570, %v534, 0.0
  %2000 = vadd.xlane.f32.xlu0 %v1999
  %v2001 = vpop.xlane.xlu0 %2000
  %v2002 = vsel %vm570, %v535, 0.0
  %2003 = vadd.xlane.f32.xlu0 %v2002
  %v2004 = vpop.xlane.xlu0 %2003
  %v2005 = vsel %vm570, %v536, 0.0
  %2006 = vadd.xlane.f32.xlu0 %v2005
  %v2007 = vpop.xlane.xlu0 %2006
  %v2008 = vsel %vm570, %v537, 0.0
  %2009 = vadd.xlane.f32.xlu0 %v2008
  %v2010 = vpop.xlane.xlu0 %2009
  %v2011 = vsel %vm570, %v538, 0.0
  %2012 = vadd.xlane.f32.xlu0 %v2011
  %v2013 = vpop.xlane.xlu0 %2012
  %v2014 = vsel %vm570, %v539, 0.0
  %2015 = vadd.xlane.f32.xlu0 %v2014
  %v2016 = vpop.xlane.xlu0 %2015
  %v2017 = vsel %vm570, %v540, 0.0
  %2018 = vadd.xlane.f32.xlu0 %v2017
  %v2019 = vpop.xlane.xlu0 %2018
  %v2020 = vsel %vm570, %v541, 0.0
  %2021 = vadd.xlane.f32.xlu0 %v2020
  %v2022 = vpop.xlane.xlu0 %2021
  %v2023 = vsel %vm570, %v542, 0.0
  %2024 = vadd.xlane.f32.xlu0 %v2023
  %v2025 = vpop.xlane.xlu0 %2024
  %v2026 = vsel %vm570, %v543, 0.0
  %2027 = vadd.xlane.f32.xlu0 %v2026
  %v2028 = vpop.xlane.xlu0 %2027
  %v2029 = vsel %vm570, %v544, 0.0
  %2030 = vadd.xlane.f32.xlu0 %v2029
  %v2031 = vpop.xlane.xlu0 %2030
  %v2032 = vsel %vm570, %v545, 0.0
  %2033 = vadd.xlane.f32.xlu0 %v2032
  %v2034 = vpop.xlane.xlu0 %2033
  %v2035 = vsel %vm570, %v546, 0.0
  %2036 = vadd.xlane.f32.xlu0 %v2035
  %v2037 = vpop.xlane.xlu0 %2036
  %v2038 = vsel %vm570, %v547, 0.0
  %2039 = vadd.xlane.f32.xlu0 %v2038
  %v2040 = vpop.xlane.xlu0 %2039
  %v2041 = vsel %vm570, %v548, 0.0
  %2042 = vadd.xlane.f32.xlu0 %v2041
  %v2043 = vpop.xlane.xlu0 %2042
  %v2044 = vsel %vm570, %v549, 0.0
  %2045 = vadd.xlane.f32.xlu0 %v2044
  %v2046 = vpop.xlane.xlu0 %2045
  %v2047 = vsel %vm570, %v550, 0.0
  %2048 = vadd.xlane.f32.xlu0 %v2047
  %v2049 = vpop.xlane.xlu0 %2048
  %v2050 = vsel %vm570, %v551, 0.0
  %2051 = vadd.xlane.f32.xlu0 %v2050
  %v2052 = vpop.xlane.xlu0 %2051
  %v2053 = vsel %vm570, %v552, 0.0
  %2054 = vadd.xlane.f32.xlu0 %v2053
  %v2055 = vpop.xlane.xlu0 %2054
  %v2056 = vsel %vm570, %v553, 0.0
  %2057 = vadd.xlane.f32.xlu0 %v2056
  %v2058 = vpop.xlane.xlu0 %2057
  %v2059 = vsel %vm570, %v554, 0.0
  %2060 = vadd.xlane.f32.xlu0 %v2059
  %v2061 = vpop.xlane.xlu0 %2060
  %v2062 = vsel %vm570, %v555, 0.0
  %2063 = vadd.xlane.f32.xlu0 %v2062
  %v2064 = vpop.xlane.xlu0 %2063
  %v2065 = vsel %vm570, %v556, 0.0
  %2066 = vadd.xlane.f32.xlu0 %v2065
  %v2067 = vpop.xlane.xlu0 %2066
  %v2068 = vsel %vm570, %v557, 0.0
  %2069 = vadd.xlane.f32.xlu0 %v2068
  %v2070 = vpop.xlane.xlu0 %2069
  %v2071 = vsel %vm570, %v558, 0.0
  %2072 = vadd.xlane.f32.xlu0 %v2071
  %v2073 = vpop.xlane.xlu0 %2072
  %v2074 = vsel %vm570, %v559, 0.0
  %2075 = vadd.xlane.f32.xlu0 %v2074
  %v2076 = vpop.xlane.xlu0 %2075
  %v2077 = vsel %vm570, %v560, 0.0
  %2078 = vadd.xlane.f32.xlu0 %v2077
  %v2079 = vpop.xlane.xlu0 %2078
  %v2080 = vsel %vm570, %v561, 0.0
  %2081 = vadd.xlane.f32.xlu0 %v2080
  %v2082 = vpop.xlane.xlu0 %2081
  %v2083 = vsel %vm570, %v562, 0.0
  %2084 = vadd.xlane.f32.xlu0 %v2083
  %v2085 = vpop.xlane.xlu0 %2084
  %v2086 = vsel %vm570, %v563, 0.0
  %2087 = vadd.xlane.f32.xlu0 %v2086
  %v2088 = vpop.xlane.xlu0 %2087
  %v2089 = vsel %vm570, %v564, 0.0
  %2090 = vadd.xlane.f32.xlu0 %v2089
  %v2091 = vpop.xlane.xlu0 %2090
  %v2092 = vsel %vm570, %v565, 0.0
  %2093 = vadd.xlane.f32.xlu0 %v2092
  %v2094 = vpop.xlane.xlu0 %2093
  %v2095 = vsel %vm570, %v566, 0.0
  %2096 = vadd.xlane.f32.xlu0 %v2095
  %v2097 = vpop.xlane.xlu0 %2096
  %v2098 = vsel %vm570, %v567, 0.0
  %2099 = vadd.xlane.f32.xlu0 %v2098
  %v2100 = vpop.xlane.xlu0 %2099
  %v2101 = vsel %vm570, %v568, 0.0
  %2102 = vadd.xlane.f32.xlu0 %v2101
  %v2103 = vpop.xlane.xlu0 %2102
  %v2104 = vsel %vm570, %v569, 0.0
  %2105 = vadd.xlane.f32.xlu0 %v2104
  %v2106 = vpop.xlane.xlu0 %2105
  %v2107 = vrcp.pop 64.0
  %v2108 = vmul.f32 64.0, %v2107
  %v2109 = vsub.f32 1.0, %v2108
  %v2110 = vmul.f32 %v2107, %v2109
  %v2111 = vadd.f32 %v2107, %v2110
  %vm2112 = vweird.f32 %v2107
  %v2113 = vsel %vm2112, %v2107, %v2111
  %v2114 = vmul.f32 %v573, %v2113
  %v2115 = vmul.f32 %v576, %v2113
  %v2116 = vmul.f32 %v579, %v2113
  %v2117 = vmul.f32 %v582, %v2113
  %v2118 = vmul.f32 %v585, %v2113
  %v2119 = vmul.f32 %v588, %v2113
  %v2120 = vmul.f32 %v591, %v2113
  %v2121 = vmul.f32 %v594, %v2113
  %v2122 = vmul.f32 %v597, %v2113
  %v2123 = vmul.f32 %v600, %v2113
  %v2124 = vmul.f32 %v603, %v2113
  %v2125 = vmul.f32 %v606, %v2113
  %v2126 = vmul.f32 %v609, %v2113
  %v2127 = vmul.f32 %v612, %v2113
  %v2128 = vmul.f32 %v615, %v2113
  %v2129 = vmul.f32 %v618, %v2113
  %v2130 = vmul.f32 %v621, %v2113
  %v2131 = vmul.f32 %v624, %v2113
  %v2132 = vmul.f32 %v627, %v2113
  %v2133 = vmul.f32 %v630, %v2113
  %v2134 = vmul.f32 %v633, %v2113
  %v2135 = vmul.f32 %v636, %v2113
  %v2136 = vmul.f32 %v639, %v2113
  %v2137 = vmul.f32 %v642, %v2113
  %v2138 = vmul.f32 %v645, %v2113
  %v2139 = vmul.f32 %v648, %v2113
  %v2140 = vmul.f32 %v651, %v2113
  %v2141 = vmul.f32 %v654, %v2113
  %v2142 = vmul.f32 %v657, %v2113
  %v2143 = vmul.f32 %v660, %v2113
  %v2144 = vmul.f32 %v663, %v2113
  %v2145 = vmul.f32 %v666, %v2113
  %v2146 = vmul.f32 %v669, %v2113
  %v2147 = vmul.f32 %v672, %v2113
  %v2148 = vmul.f32 %v675, %v2113
  %v2149 = vmul.f32 %v678, %v2113
  %v2150 = vmul.f32 %v681, %v2113
  %v2151 = vmul.f32 %v684, %v2113
  %v2152 = vmul.f32 %v687, %v2113
  %v2153 = vmul.f32 %v690, %v2113
  %v2154 = vmul.f32 %v693, %v2113
  %v2155 = vmul.f32 %v696, %v2113
  %v2156 = vmul.f32 %v699, %v2113
  %v2157 = vmul.f32 %v702, %v2113
  %v2158 = vmul.f32 %v705, %v2113
  %v2159 = vmul.f32 %v708, %v2113
  %v2160 = vmul.f32 %v711, %v2113
  %v2161 = vmul.f32 %v714, %v2113
  %v2162 = vmul.f32 %v717, %v2113
  %v2163 = vmul.f32 %v720, %v2113
  %v2164 = vmul.f32 %v723, %v2113
  %v2165 = vmul.f32 %v726, %v2113
  %v2166 = vmul.f32 %v729, %v2113
  %v2167 = vmul.f32 %v732, %v2113
  %v2168 = vmul.f32 %v735, %v2113
  %v2169 = vmul.f32 %v738, %v2113
  %v2170 = vmul.f32 %v741, %v2113
  %v2171 = vmul.f32 %v744, %v2113
  %v2172 = vmul.f32 %v747, %v2113
  %v2173 = vmul.f32 %v750, %v2113
  %v2174 = vmul.f32 %v753, %v2113
  %v2175 = vmul.f32 %v756, %v2113
  %v2176 = vmul.f32 %v759, %v2113
  %v2177 = vmul.f32 %v762, %v2113
  %v2178 = vmul.f32 %v765, %v2113
  %v2179 = vmul.f32 %v768, %v2113
  %v2180 = vmul.f32 %v771, %v2113
  %v2181 = vmul.f32 %v774, %v2113
  %v2182 = vmul.f32 %v777, %v2113
  %v2183 = vmul.f32 %v780, %v2113
  %v2184 = vmul.f32 %v783, %v2113
  %v2185 = vmul.f32 %v786, %v2113
  %v2186 = vmul.f32 %v789, %v2113
  %v2187 = vmul.f32 %v792, %v2113
  %v2188 = vmul.f32 %v795, %v2113
  %v2189 = vmul.f32 %v798, %v2113
  %v2190 = vmul.f32 %v801, %v2113
  %v2191 = vmul.f32 %v804, %v2113
  %v2192 = vmul.f32 %v807, %v2113
  %v2193 = vmul.f32 %v810, %v2113
  %v2194 = vmul.f32 %v813, %v2113
  %v2195 = vmul.f32 %v816, %v2113
  %v2196 = vmul.f32 %v819, %v2113
  %v2197 = vmul.f32 %v822, %v2113
  %v2198 = vmul.f32 %v825, %v2113
  %v2199 = vmul.f32 %v828, %v2113
  %v2200 = vmul.f32 %v831, %v2113
  %v2201 = vmul.f32 %v834, %v2113
  %v2202 = vmul.f32 %v837, %v2113
  %v2203 = vmul.f32 %v840, %v2113
  %v2204 = vmul.f32 %v843, %v2113
  %v2205 = vmul.f32 %v846, %v2113
  %v2206 = vmul.f32 %v849, %v2113
  %v2207 = vmul.f32 %v852, %v2113
  %v2208 = vmul.f32 %v855, %v2113
  %v2209 = vmul.f32 %v858, %v2113
  %v2210 = vmul.f32 %v861, %v2113
  %v2211 = vmul.f32 %v864, %v2113
  %v2212 = vmul.f32 %v867, %v2113
  %v2213 = vmul.f32 %v870, %v2113
  %v2214 = vmul.f32 %v873, %v2113
  %v2215 = vmul.f32 %v876, %v2113
  %v2216 = vmul.f32 %v879, %v2113
  %v2217 = vmul.f32 %v882, %v2113
  %v2218 = vmul.f32 %v885, %v2113
  %v2219 = vmul.f32 %v888, %v2113
  %v2220 = vmul.f32 %v891, %v2113
  %v2221 = vmul.f32 %v894, %v2113
  %v2222 = vmul.f32 %v897, %v2113
  %v2223 = vmul.f32 %v900, %v2113
  %v2224 = vmul.f32 %v903, %v2113
  %v2225 = vmul.f32 %v906, %v2113
  %v2226 = vmul.f32 %v909, %v2113
  %v2227 = vmul.f32 %v912, %v2113
  %v2228 = vmul.f32 %v915, %v2113
  %v2229 = vmul.f32 %v918, %v2113
  %v2230 = vmul.f32 %v921, %v2113
  %v2231 = vmul.f32 %v924, %v2113
  %v2232 = vmul.f32 %v927, %v2113
  %v2233 = vmul.f32 %v930, %v2113
  %v2234 = vmul.f32 %v933, %v2113
  %v2235 = vmul.f32 %v936, %v2113
  %v2236 = vmul.f32 %v939, %v2113
  %v2237 = vmul.f32 %v942, %v2113
  %v2238 = vmul.f32 %v945, %v2113
  %v2239 = vmul.f32 %v948, %v2113
  %v2240 = vmul.f32 %v951, %v2113
  %v2241 = vmul.f32 %v954, %v2113
  %v2242 = vmul.f32 %v957, %v2113
  %v2243 = vmul.f32 %v960, %v2113
  %v2244 = vmul.f32 %v963, %v2113
  %v2245 = vmul.f32 %v966, %v2113
  %v2246 = vmul.f32 %v969, %v2113
  %v2247 = vmul.f32 %v972, %v2113
  %v2248 = vmul.f32 %v975, %v2113
  %v2249 = vmul.f32 %v978, %v2113
  %v2250 = vmul.f32 %v981, %v2113
  %v2251 = vmul.f32 %v984, %v2113
  %v2252 = vmul.f32 %v987, %v2113
  %v2253 = vmul.f32 %v990, %v2113
  %v2254 = vmul.f32 %v993, %v2113
  %v2255 = vmul.f32 %v996, %v2113
  %v2256 = vmul.f32 %v999, %v2113
  %v2257 = vmul.f32 %v1002, %v2113
  %v2258 = vmul.f32 %v1005, %v2113
  %v2259 = vmul.f32 %v1008, %v2113
  %v2260 = vmul.f32 %v1011, %v2113
  %v2261 = vmul.f32 %v1014, %v2113
  %v2262 = vmul.f32 %v1017, %v2113
  %v2263 = vmul.f32 %v1020, %v2113
  %v2264 = vmul.f32 %v1023, %v2113
  %v2265 = vmul.f32 %v1026, %v2113
  %v2266 = vmul.f32 %v1029, %v2113
  %v2267 = vmul.f32 %v1032, %v2113
  %v2268 = vmul.f32 %v1035, %v2113
  %v2269 = vmul.f32 %v1038, %v2113
  %v2270 = vmul.f32 %v1041, %v2113
  %v2271 = vmul.f32 %v1044, %v2113
  %v2272 = vmul.f32 %v1047, %v2113
  %v2273 = vmul.f32 %v1050, %v2113
  %v2274 = vmul.f32 %v1053, %v2113
  %v2275 = vmul.f32 %v1056, %v2113
  %v2276 = vmul.f32 %v1059, %v2113
  %v2277 = vmul.f32 %v1062, %v2113
  %v2278 = vmul.f32 %v1065, %v2113
  %v2279 = vmul.f32 %v1068, %v2113
  %v2280 = vmul.f32 %v1071, %v2113
  %v2281 = vmul.f32 %v1074, %v2113
  %v2282 = vmul.f32 %v1077, %v2113
  %v2283 = vmul.f32 %v1080, %v2113
  %v2284 = vmul.f32 %v1083, %v2113
  %v2285 = vmul.f32 %v1086, %v2113
  %v2286 = vmul.f32 %v1089, %v2113
  %v2287 = vmul.f32 %v1092, %v2113
  %v2288 = vmul.f32 %v1095, %v2113
  %v2289 = vmul.f32 %v1098, %v2113
  %v2290 = vmul.f32 %v1101, %v2113
  %v2291 = vmul.f32 %v1104, %v2113
  %v2292 = vmul.f32 %v1107, %v2113
  %v2293 = vmul.f32 %v1110, %v2113
  %v2294 = vmul.f32 %v1113, %v2113
  %v2295 = vmul.f32 %v1116, %v2113
  %v2296 = vmul.f32 %v1119, %v2113
  %v2297 = vmul.f32 %v1122, %v2113
  %v2298 = vmul.f32 %v1125, %v2113
  %v2299 = vmul.f32 %v1128, %v2113
  %v2300 = vmul.f32 %v1131, %v2113
  %v2301 = vmul.f32 %v1134, %v2113
  %v2302 = vmul.f32 %v1137, %v2113
  %v2303 = vmul.f32 %v1140, %v2113
  %v2304 = vmul.f32 %v1143, %v2113
  %v2305 = vmul.f32 %v1146, %v2113
  %v2306 = vmul.f32 %v1149, %v2113
  %v2307 = vmul.f32 %v1152, %v2113
  %v2308 = vmul.f32 %v1155, %v2113
  %v2309 = vmul.f32 %v1158, %v2113
  %v2310 = vmul.f32 %v1161, %v2113
  %v2311 = vmul.f32 %v1164, %v2113
  %v2312 = vmul.f32 %v1167, %v2113
  %v2313 = vmul.f32 %v1170, %v2113
  %v2314 = vmul.f32 %v1173, %v2113
  %v2315 = vmul.f32 %v1176, %v2113
  %v2316 = vmul.f32 %v1179, %v2113
  %v2317 = vmul.f32 %v1182, %v2113
  %v2318 = vmul.f32 %v1185, %v2113
  %v2319 = vmul.f32 %v1188, %v2113
  %v2320 = vmul.f32 %v1191, %v2113
  %v2321 = vmul.f32 %v1194, %v2113
  %v2322 = vmul.f32 %v1197, %v2113
  %v2323 = vmul.f32 %v1200, %v2113
  %v2324 = vmul.f32 %v1203, %v2113
  %v2325 = vmul.f32 %v1206, %v2113
  %v2326 = vmul.f32 %v1209, %v2113
  %v2327 = vmul.f32 %v1212, %v2113
  %v2328 = vmul.f32 %v1215, %v2113
  %v2329 = vmul.f32 %v1218, %v2113
  %v2330 = vmul.f32 %v1221, %v2113
  %v2331 = vmul.f32 %v1224, %v2113
  %v2332 = vmul.f32 %v1227, %v2113
  %v2333 = vmul.f32 %v1230, %v2113
  %v2334 = vmul.f32 %v1233, %v2113
  %v2335 = vmul.f32 %v1236, %v2113
  %v2336 = vmul.f32 %v1239, %v2113
  %v2337 = vmul.f32 %v1242, %v2113
  %v2338 = vmul.f32 %v1245, %v2113
  %v2339 = vmul.f32 %v1248, %v2113
  %v2340 = vmul.f32 %v1251, %v2113
  %v2341 = vmul.f32 %v1254, %v2113
  %v2342 = vmul.f32 %v1257, %v2113
  %v2343 = vmul.f32 %v1260, %v2113
  %v2344 = vmul.f32 %v1263, %v2113
  %v2345 = vmul.f32 %v1266, %v2113
  %v2346 = vmul.f32 %v1269, %v2113
  %v2347 = vmul.f32 %v1272, %v2113
  %v2348 = vmul.f32 %v1275, %v2113
  %v2349 = vmul.f32 %v1278, %v2113
  %v2350 = vmul.f32 %v1281, %v2113
  %v2351 = vmul.f32 %v1284, %v2113
  %v2352 = vmul.f32 %v1287, %v2113
  %v2353 = vmul.f32 %v1290, %v2113
  %v2354 = vmul.f32 %v1293, %v2113
  %v2355 = vmul.f32 %v1296, %v2113
  %v2356 = vmul.f32 %v1299, %v2113
  %v2357 = vmul.f32 %v1302, %v2113
  %v2358 = vmul.f32 %v1305, %v2113
  %v2359 = vmul.f32 %v1308, %v2113
  %v2360 = vmul.f32 %v1311, %v2113
  %v2361 = vmul.f32 %v1314, %v2113
  %v2362 = vmul.f32 %v1317, %v2113
  %v2363 = vmul.f32 %v1320, %v2113
  %v2364 = vmul.f32 %v1323, %v2113
  %v2365 = vmul.f32 %v1326, %v2113
  %v2366 = vmul.f32 %v1329, %v2113
  %v2367 = vmul.f32 %v1332, %v2113
  %v2368 = vmul.f32 %v1335, %v2113
  %v2369 = vmul.f32 %v1338, %v2113
  %v2370 = vmul.f32 %v1341, %v2113
  %v2371 = vmul.f32 %v1344, %v2113
  %v2372 = vmul.f32 %v1347, %v2113
  %v2373 = vmul.f32 %v1350, %v2113
  %v2374 = vmul.f32 %v1353, %v2113
  %v2375 = vmul.f32 %v1356, %v2113
  %v2376 = vmul.f32 %v1359, %v2113
  %v2377 = vmul.f32 %v1362, %v2113
  %v2378 = vmul.f32 %v1365, %v2113
  %v2379 = vmul.f32 %v1368, %v2113
  %v2380 = vmul.f32 %v1371, %v2113
  %v2381 = vmul.f32 %v1374, %v2113
  %v2382 = vmul.f32 %v1377, %v2113
  %v2383 = vmul.f32 %v1380, %v2113
  %v2384 = vmul.f32 %v1383, %v2113
  %v2385 = vmul.f32 %v1386, %v2113
  %v2386 = vmul.f32 %v1389, %v2113
  %v2387 = vmul.f32 %v1392, %v2113
  %v2388 = vmul.f32 %v1395, %v2113
  %v2389 = vmul.f32 %v1398, %v2113
  %v2390 = vmul.f32 %v1401, %v2113
  %v2391 = vmul.f32 %v1404, %v2113
  %v2392 = vmul.f32 %v1407, %v2113
  %v2393 = vmul.f32 %v1410, %v2113
  %v2394 = vmul.f32 %v1413, %v2113
  %v2395 = vmul.f32 %v1416, %v2113
  %v2396 = vmul.f32 %v1419, %v2113
  %v2397 = vmul.f32 %v1422, %v2113
  %v2398 = vmul.f32 %v1425, %v2113
  %v2399 = vmul.f32 %v1428, %v2113
  %v2400 = vmul.f32 %v1431, %v2113
  %v2401 = vmul.f32 %v1434, %v2113
  %v2402 = vmul.f32 %v1437, %v2113
  %v2403 = vmul.f32 %v1440, %v2113
  %v2404 = vmul.f32 %v1443, %v2113
  %v2405 = vmul.f32 %v1446, %v2113
  %v2406 = vmul.f32 %v1449, %v2113
  %v2407 = vmul.f32 %v1452, %v2113
  %v2408 = vmul.f32 %v1455, %v2113
  %v2409 = vmul.f32 %v1458, %v2113
  %v2410 = vmul.f32 %v1461, %v2113
  %v2411 = vmul.f32 %v1464, %v2113
  %v2412 = vmul.f32 %v1467, %v2113
  %v2413 = vmul.f32 %v1470, %v2113
  %v2414 = vmul.f32 %v1473, %v2113
  %v2415 = vmul.f32 %v1476, %v2113
  %v2416 = vmul.f32 %v1479, %v2113
  %v2417 = vmul.f32 %v1482, %v2113
  %v2418 = vmul.f32 %v1485, %v2113
  %v2419 = vmul.f32 %v1488, %v2113
  %v2420 = vmul.f32 %v1491, %v2113
  %v2421 = vmul.f32 %v1494, %v2113
  %v2422 = vmul.f32 %v1497, %v2113
  %v2423 = vmul.f32 %v1500, %v2113
  %v2424 = vmul.f32 %v1503, %v2113
  %v2425 = vmul.f32 %v1506, %v2113
  %v2426 = vmul.f32 %v1509, %v2113
  %v2427 = vmul.f32 %v1512, %v2113
  %v2428 = vmul.f32 %v1515, %v2113
  %v2429 = vmul.f32 %v1518, %v2113
  %v2430 = vmul.f32 %v1521, %v2113
  %v2431 = vmul.f32 %v1524, %v2113
  %v2432 = vmul.f32 %v1527, %v2113
  %v2433 = vmul.f32 %v1530, %v2113
  %v2434 = vmul.f32 %v1533, %v2113
  %v2435 = vmul.f32 %v1536, %v2113
  %v2436 = vmul.f32 %v1539, %v2113
  %v2437 = vmul.f32 %v1542, %v2113
  %v2438 = vmul.f32 %v1545, %v2113
  %v2439 = vmul.f32 %v1548, %v2113
  %v2440 = vmul.f32 %v1551, %v2113
  %v2441 = vmul.f32 %v1554, %v2113
  %v2442 = vmul.f32 %v1557, %v2113
  %v2443 = vmul.f32 %v1560, %v2113
  %v2444 = vmul.f32 %v1563, %v2113
  %v2445 = vmul.f32 %v1566, %v2113
  %v2446 = vmul.f32 %v1569, %v2113
  %v2447 = vmul.f32 %v1572, %v2113
  %v2448 = vmul.f32 %v1575, %v2113
  %v2449 = vmul.f32 %v1578, %v2113
  %v2450 = vmul.f32 %v1581, %v2113
  %v2451 = vmul.f32 %v1584, %v2113
  %v2452 = vmul.f32 %v1587, %v2113
  %v2453 = vmul.f32 %v1590, %v2113
  %v2454 = vmul.f32 %v1593, %v2113
  %v2455 = vmul.f32 %v1596, %v2113
  %v2456 = vmul.f32 %v1599, %v2113
  %v2457 = vmul.f32 %v1602, %v2113
  %v2458 = vmul.f32 %v1605, %v2113
  %v2459 = vmul.f32 %v1608, %v2113
  %v2460 = vmul.f32 %v1611, %v2113
  %v2461 = vmul.f32 %v1614, %v2113
  %v2462 = vmul.f32 %v1617, %v2113
  %v2463 = vmul.f32 %v1620, %v2113
  %v2464 = vmul.f32 %v1623, %v2113
  %v2465 = vmul.f32 %v1626, %v2113
  %v2466 = vmul.f32 %v1629, %v2113
  %v2467 = vmul.f32 %v1632, %v2113
  %v2468 = vmul.f32 %v1635, %v2113
  %v2469 = vmul.f32 %v1638, %v2113
  %v2470 = vmul.f32 %v1641, %v2113
  %v2471 = vmul.f32 %v1644, %v2113
  %v2472 = vmul.f32 %v1647, %v2113
  %v2473 = vmul.f32 %v1650, %v2113
  %v2474 = vmul.f32 %v1653, %v2113
  %v2475 = vmul.f32 %v1656, %v2113
  %v2476 = vmul.f32 %v1659, %v2113
  %v2477 = vmul.f32 %v1662, %v2113
  %v2478 = vmul.f32 %v1665, %v2113
  %v2479 = vmul.f32 %v1668, %v2113
  %v2480 = vmul.f32 %v1671, %v2113
  %v2481 = vmul.f32 %v1674, %v2113
  %v2482 = vmul.f32 %v1677, %v2113
  %v2483 = vmul.f32 %v1680, %v2113
  %v2484 = vmul.f32 %v1683, %v2113
  %v2485 = vmul.f32 %v1686, %v2113
  %v2486 = vmul.f32 %v1689, %v2113
  %v2487 = vmul.f32 %v1692, %v2113
  %v2488 = vmul.f32 %v1695, %v2113
  %v2489 = vmul.f32 %v1698, %v2113
  %v2490 = vmul.f32 %v1701, %v2113
  %v2491 = vmul.f32 %v1704, %v2113
  %v2492 = vmul.f32 %v1707, %v2113
  %v2493 = vmul.f32 %v1710, %v2113
  %v2494 = vmul.f32 %v1713, %v2113
  %v2495 = vmul.f32 %v1716, %v2113
  %v2496 = vmul.f32 %v1719, %v2113
  %v2497 = vmul.f32 %v1722, %v2113
  %v2498 = vmul.f32 %v1725, %v2113
  %v2499 = vmul.f32 %v1728, %v2113
  %v2500 = vmul.f32 %v1731, %v2113
  %v2501 = vmul.f32 %v1734, %v2113
  %v2502 = vmul.f32 %v1737, %v2113
  %v2503 = vmul.f32 %v1740, %v2113
  %v2504 = vmul.f32 %v1743, %v2113
  %v2505 = vmul.f32 %v1746, %v2113
  %v2506 = vmul.f32 %v1749, %v2113
  %v2507 = vmul.f32 %v1752, %v2113
  %v2508 = vmul.f32 %v1755, %v2113
  %v2509 = vmul.f32 %v1758, %v2113
  %v2510 = vmul.f32 %v1761, %v2113
  %v2511 = vmul.f32 %v1764, %v2113
  %v2512 = vmul.f32 %v1767, %v2113
  %v2513 = vmul.f32 %v1770, %v2113
  %v2514 = vmul.f32 %v1773, %v2113
  %v2515 = vmul.f32 %v1776, %v2113
  %v2516 = vmul.f32 %v1779, %v2113
  %v2517 = vmul.f32 %v1782, %v2113
  %v2518 = vmul.f32 %v1785, %v2113
  %v2519 = vmul.f32 %v1788, %v2113
  %v2520 = vmul.f32 %v1791, %v2113
  %v2521 = vmul.f32 %v1794, %v2113
  %v2522 = vmul.f32 %v1797, %v2113
  %v2523 = vmul.f32 %v1800, %v2113
  %v2524 = vmul.f32 %v1803, %v2113
  %v2525 = vmul.f32 %v1806, %v2113
  %v2526 = vmul.f32 %v1809, %v2113
  %v2527 = vmul.f32 %v1812, %v2113
  %v2528 = vmul.f32 %v1815, %v2113
  %v2529 = vmul.f32 %v1818, %v2113
  %v2530 = vmul.f32 %v1821, %v2113
  %v2531 = vmul.f32 %v1824, %v2113
  %v2532 = vmul.f32 %v1827, %v2113
  %v2533 = vmul.f32 %v1830, %v2113
  %v2534 = vmul.f32 %v1833, %v2113
  %v2535 = vmul.f32 %v1836, %v2113
  %v2536 = vmul.f32 %v1839, %v2113
  %v2537 = vmul.f32 %v1842, %v2113
  %v2538 = vmul.f32 %v1845, %v2113
  %v2539 = vmul.f32 %v1848, %v2113
  %v2540 = vmul.f32 %v1851, %v2113
  %v2541 = vmul.f32 %v1854, %v2113
  %v2542 = vmul.f32 %v1857, %v2113
  %v2543 = vmul.f32 %v1860, %v2113
  %v2544 = vmul.f32 %v1863, %v2113
  %v2545 = vmul.f32 %v1866, %v2113
  %v2546 = vmul.f32 %v1869, %v2113
  %v2547 = vmul.f32 %v1872, %v2113
  %v2548 = vmul.f32 %v1875, %v2113
  %v2549 = vmul.f32 %v1878, %v2113
  %v2550 = vmul.f32 %v1881, %v2113
  %v2551 = vmul.f32 %v1884, %v2113
  %v2552 = vmul.f32 %v1887, %v2113
  %v2553 = vmul.f32 %v1890, %v2113
  %v2554 = vmul.f32 %v1893, %v2113
  %v2555 = vmul.f32 %v1896, %v2113
  %v2556 = vmul.f32 %v1899, %v2113
  %v2557 = vmul.f32 %v1902, %v2113
  %v2558 = vmul.f32 %v1905, %v2113
  %v2559 = vmul.f32 %v1908, %v2113
  %v2560 = vmul.f32 %v1911, %v2113
  %v2561 = vmul.f32 %v1914, %v2113
  %v2562 = vmul.f32 %v1917, %v2113
  %v2563 = vmul.f32 %v1920, %v2113
  %v2564 = vmul.f32 %v1923, %v2113
  %v2565 = vmul.f32 %v1926, %v2113
  %v2566 = vmul.f32 %v1929, %v2113
  %v2567 = vmul.f32 %v1932, %v2113
  %v2568 = vmul.f32 %v1935, %v2113
  %v2569 = vmul.f32 %v1938, %v2113
  %v2570 = vmul.f32 %v1941, %v2113
  %v2571 = vmul.f32 %v1944, %v2113
  %v2572 = vmul.f32 %v1947, %v2113
  %v2573 = vmul.f32 %v1950, %v2113
  %v2574 = vmul.f32 %v1953, %v2113
  %v2575 = vmul.f32 %v1956, %v2113
  %v2576 = vmul.f32 %v1959, %v2113
  %v2577 = vmul.f32 %v1962, %v2113
  %v2578 = vmul.f32 %v1965, %v2113
  %v2579 = vmul.f32 %v1968, %v2113
  %v2580 = vmul.f32 %v1971, %v2113
  %v2581 = vmul.f32 %v1974, %v2113
  %v2582 = vmul.f32 %v1977, %v2113
  %v2583 = vmul.f32 %v1980, %v2113
  %v2584 = vmul.f32 %v1983, %v2113
  %v2585 = vmul.f32 %v1986, %v2113
  %v2586 = vmul.f32 %v1989, %v2113
  %v2587 = vmul.f32 %v1992, %v2113
  %v2588 = vmul.f32 %v1995, %v2113
  %v2589 = vmul.f32 %v1998, %v2113
  %v2590 = vmul.f32 %v2001, %v2113
  %v2591 = vmul.f32 %v2004, %v2113
  %v2592 = vmul.f32 %v2007, %v2113
  %v2593 = vmul.f32 %v2010, %v2113
  %v2594 = vmul.f32 %v2013, %v2113
  %v2595 = vmul.f32 %v2016, %v2113
  %v2596 = vmul.f32 %v2019, %v2113
  %v2597 = vmul.f32 %v2022, %v2113
  %v2598 = vmul.f32 %v2025, %v2113
  %v2599 = vmul.f32 %v2028, %v2113
  %v2600 = vmul.f32 %v2031, %v2113
  %v2601 = vmul.f32 %v2034, %v2113
  %v2602 = vmul.f32 %v2037, %v2113
  %v2603 = vmul.f32 %v2040, %v2113
  %v2604 = vmul.f32 %v2043, %v2113
  %v2605 = vmul.f32 %v2046, %v2113
  %v2606 = vmul.f32 %v2049, %v2113
  %v2607 = vmul.f32 %v2052, %v2113
  %v2608 = vmul.f32 %v2055, %v2113
  %v2609 = vmul.f32 %v2058, %v2113
  %v2610 = vmul.f32 %v2061, %v2113
  %v2611 = vmul.f32 %v2064, %v2113
  %v2612 = vmul.f32 %v2067, %v2113
  %v2613 = vmul.f32 %v2070, %v2113
  %v2614 = vmul.f32 %v2073, %v2113
  %v2615 = vmul.f32 %v2076, %v2113
  %v2616 = vmul.f32 %v2079, %v2113
  %v2617 = vmul.f32 %v2082, %v2113
  %v2618 = vmul.f32 %v2085, %v2113
  %v2619 = vmul.f32 %v2088, %v2113
  %v2620 = vmul.f32 %v2091, %v2113
  %v2621 = vmul.f32 %v2094, %v2113
  %v2622 = vmul.f32 %v2097, %v2113
  %v2623 = vmul.f32 %v2100, %v2113
  %v2624 = vmul.f32 %v2103, %v2113
  %v2625 = vmul.f32 %v2106, %v2113
  %v2626 = vpack.c.bf16 %v2115, %v2114
  %v2627 = vpack.c.bf16 %v2117, %v2116
  %v2628 = vpack.c.bf16 %v2119, %v2118
  %v2629 = vpack.c.bf16 %v2121, %v2120
  %v2630 = vpack.c.bf16 %v2123, %v2122
  %v2631 = vpack.c.bf16 %v2125, %v2124
  %v2632 = vpack.c.bf16 %v2127, %v2126
  %v2633 = vpack.c.bf16 %v2129, %v2128
  %v2634 = vpack.c.bf16 %v2131, %v2130
  %v2635 = vpack.c.bf16 %v2133, %v2132
  %v2636 = vpack.c.bf16 %v2135, %v2134
  %v2637 = vpack.c.bf16 %v2137, %v2136
  %v2638 = vpack.c.bf16 %v2139, %v2138
  %v2639 = vpack.c.bf16 %v2141, %v2140
  %v2640 = vpack.c.bf16 %v2143, %v2142
  %v2641 = vpack.c.bf16 %v2145, %v2144
  %v2642 = vpack.c.bf16 %v2147, %v2146
  %v2643 = vpack.c.bf16 %v2149, %v2148
  %v2644 = vpack.c.bf16 %v2151, %v2150
  %v2645 = vpack.c.bf16 %v2153, %v2152
  %v2646 = vpack.c.bf16 %v2155, %v2154
  %v2647 = vpack.c.bf16 %v2157, %v2156
  %v2648 = vpack.c.bf16 %v2159, %v2158
  %v2649 = vpack.c.bf16 %v2161, %v2160
  %v2650 = vpack.c.bf16 %v2163, %v2162
  %v2651 = vpack.c.bf16 %v2165, %v2164
  %v2652 = vpack.c.bf16 %v2167, %v2166
  %v2653 = vpack.c.bf16 %v2169, %v2168
  %v2654 = vpack.c.bf16 %v2171, %v2170
  %v2655 = vpack.c.bf16 %v2173, %v2172
  %v2656 = vpack.c.bf16 %v2175, %v2174
  %v2657 = vpack.c.bf16 %v2177, %v2176
  %v2658 = vpack.c.bf16 %v2179, %v2178
  %v2659 = vpack.c.bf16 %v2181, %v2180
  %v2660 = vpack.c.bf16 %v2183, %v2182
  %v2661 = vpack.c.bf16 %v2185, %v2184
  %v2662 = vpack.c.bf16 %v2187, %v2186
  %v2663 = vpack.c.bf16 %v2189, %v2188
  %v2664 = vpack.c.bf16 %v2191, %v2190
  %v2665 = vpack.c.bf16 %v2193, %v2192
  %v2666 = vpack.c.bf16 %v2195, %v2194
  %v2667 = vpack.c.bf16 %v2197, %v2196
  %v2668 = vpack.c.bf16 %v2199, %v2198
  %v2669 = vpack.c.bf16 %v2201, %v2200
  %v2670 = vpack.c.bf16 %v2203, %v2202
  %v2671 = vpack.c.bf16 %v2205, %v2204
  %v2672 = vpack.c.bf16 %v2207, %v2206
  %v2673 = vpack.c.bf16 %v2209, %v2208
  %v2674 = vpack.c.bf16 %v2211, %v2210
  %v2675 = vpack.c.bf16 %v2213, %v2212
  %v2676 = vpack.c.bf16 %v2215, %v2214
  %v2677 = vpack.c.bf16 %v2217, %v2216
  %v2678 = vpack.c.bf16 %v2219, %v2218
  %v2679 = vpack.c.bf16 %v2221, %v2220
  %v2680 = vpack.c.bf16 %v2223, %v2222
  %v2681 = vpack.c.bf16 %v2225, %v2224
  %v2682 = vpack.c.bf16 %v2227, %v2226
  %v2683 = vpack.c.bf16 %v2229, %v2228
  %v2684 = vpack.c.bf16 %v2231, %v2230
  %v2685 = vpack.c.bf16 %v2233, %v2232
  %v2686 = vpack.c.bf16 %v2235, %v2234
  %v2687 = vpack.c.bf16 %v2237, %v2236
  %v2688 = vpack.c.bf16 %v2239, %v2238
  %v2689 = vpack.c.bf16 %v2241, %v2240
  %v2690 = vpack.c.bf16 %v2243, %v2242
  %v2691 = vpack.c.bf16 %v2245, %v2244
  %v2692 = vpack.c.bf16 %v2247, %v2246
  %v2693 = vpack.c.bf16 %v2249, %v2248
  %v2694 = vpack.c.bf16 %v2251, %v2250
  %v2695 = vpack.c.bf16 %v2253, %v2252
  %v2696 = vpack.c.bf16 %v2255, %v2254
  %v2697 = vpack.c.bf16 %v2257, %v2256
  %v2698 = vpack.c.bf16 %v2259, %v2258
  %v2699 = vpack.c.bf16 %v2261, %v2260
  %v2700 = vpack.c.bf16 %v2263, %v2262
  %v2701 = vpack.c.bf16 %v2265, %v2264
  %v2702 = vpack.c.bf16 %v2267, %v2266
  %v2703 = vpack.c.bf16 %v2269, %v2268
  %v2704 = vpack.c.bf16 %v2271, %v2270
  %v2705 = vpack.c.bf16 %v2273, %v2272
  %v2706 = vpack.c.bf16 %v2275, %v2274
  %v2707 = vpack.c.bf16 %v2277, %v2276
  %v2708 = vpack.c.bf16 %v2279, %v2278
  %v2709 = vpack.c.bf16 %v2281, %v2280
  %v2710 = vpack.c.bf16 %v2283, %v2282
  %v2711 = vpack.c.bf16 %v2285, %v2284
  %v2712 = vpack.c.bf16 %v2287, %v2286
  %v2713 = vpack.c.bf16 %v2289, %v2288
  %v2714 = vpack.c.bf16 %v2291, %v2290
  %v2715 = vpack.c.bf16 %v2293, %v2292
  %v2716 = vpack.c.bf16 %v2295, %v2294
  %v2717 = vpack.c.bf16 %v2297, %v2296
  %v2718 = vpack.c.bf16 %v2299, %v2298
  %v2719 = vpack.c.bf16 %v2301, %v2300
  %v2720 = vpack.c.bf16 %v2303, %v2302
  %v2721 = vpack.c.bf16 %v2305, %v2304
  %v2722 = vpack.c.bf16 %v2307, %v2306
  %v2723 = vpack.c.bf16 %v2309, %v2308
  %v2724 = vpack.c.bf16 %v2311, %v2310
  %v2725 = vpack.c.bf16 %v2313, %v2312
  %v2726 = vpack.c.bf16 %v2315, %v2314
  %v2727 = vpack.c.bf16 %v2317, %v2316
  %v2728 = vpack.c.bf16 %v2319, %v2318
  %v2729 = vpack.c.bf16 %v2321, %v2320
  %v2730 = vpack.c.bf16 %v2323, %v2322
  %v2731 = vpack.c.bf16 %v2325, %v2324
  %v2732 = vpack.c.bf16 %v2327, %v2326
  %v2733 = vpack.c.bf16 %v2329, %v2328
  %v2734 = vpack.c.bf16 %v2331, %v2330
  %v2735 = vpack.c.bf16 %v2333, %v2332
  %v2736 = vpack.c.bf16 %v2335, %v2334
  %v2737 = vpack.c.bf16 %v2337, %v2336
  %v2738 = vpack.c.bf16 %v2339, %v2338
  %v2739 = vpack.c.bf16 %v2341, %v2340
  %v2740 = vpack.c.bf16 %v2343, %v2342
  %v2741 = vpack.c.bf16 %v2345, %v2344
  %v2742 = vpack.c.bf16 %v2347, %v2346
  %v2743 = vpack.c.bf16 %v2349, %v2348
  %v2744 = vpack.c.bf16 %v2351, %v2350
  %v2745 = vpack.c.bf16 %v2353, %v2352
  %v2746 = vpack.c.bf16 %v2355, %v2354
  %v2747 = vpack.c.bf16 %v2357, %v2356
  %v2748 = vpack.c.bf16 %v2359, %v2358
  %v2749 = vpack.c.bf16 %v2361, %v2360
  %v2750 = vpack.c.bf16 %v2363, %v2362
  %v2751 = vpack.c.bf16 %v2365, %v2364
  %v2752 = vpack.c.bf16 %v2367, %v2366
  %v2753 = vpack.c.bf16 %v2369, %v2368
  %v2754 = vpack.c.bf16 %v2371, %v2370
  %v2755 = vpack.c.bf16 %v2373, %v2372
  %v2756 = vpack.c.bf16 %v2375, %v2374
  %v2757 = vpack.c.bf16 %v2377, %v2376
  %v2758 = vpack.c.bf16 %v2379, %v2378
  %v2759 = vpack.c.bf16 %v2381, %v2380
  %v2760 = vpack.c.bf16 %v2383, %v2382
  %v2761 = vpack.c.bf16 %v2385, %v2384
  %v2762 = vpack.c.bf16 %v2387, %v2386
  %v2763 = vpack.c.bf16 %v2389, %v2388
  %v2764 = vpack.c.bf16 %v2391, %v2390
  %v2765 = vpack.c.bf16 %v2393, %v2392
  %v2766 = vpack.c.bf16 %v2395, %v2394
  %v2767 = vpack.c.bf16 %v2397, %v2396
  %v2768 = vpack.c.bf16 %v2399, %v2398
  %v2769 = vpack.c.bf16 %v2401, %v2400
  %v2770 = vpack.c.bf16 %v2403, %v2402
  %v2771 = vpack.c.bf16 %v2405, %v2404
  %v2772 = vpack.c.bf16 %v2407, %v2406
  %v2773 = vpack.c.bf16 %v2409, %v2408
  %v2774 = vpack.c.bf16 %v2411, %v2410
  %v2775 = vpack.c.bf16 %v2413, %v2412
  %v2776 = vpack.c.bf16 %v2415, %v2414
  %v2777 = vpack.c.bf16 %v2417, %v2416
  %v2778 = vpack.c.bf16 %v2419, %v2418
  %v2779 = vpack.c.bf16 %v2421, %v2420
  %v2780 = vpack.c.bf16 %v2423, %v2422
  %v2781 = vpack.c.bf16 %v2425, %v2424
  %v2782 = vpack.c.bf16 %v2427, %v2426
  %v2783 = vpack.c.bf16 %v2429, %v2428
  %v2784 = vpack.c.bf16 %v2431, %v2430
  %v2785 = vpack.c.bf16 %v2433, %v2432
  %v2786 = vpack.c.bf16 %v2435, %v2434
  %v2787 = vpack.c.bf16 %v2437, %v2436
  %v2788 = vpack.c.bf16 %v2439, %v2438
  %v2789 = vpack.c.bf16 %v2441, %v2440
  %v2790 = vpack.c.bf16 %v2443, %v2442
  %v2791 = vpack.c.bf16 %v2445, %v2444
  %v2792 = vpack.c.bf16 %v2447, %v2446
  %v2793 = vpack.c.bf16 %v2449, %v2448
  %v2794 = vpack.c.bf16 %v2451, %v2450
  %v2795 = vpack.c.bf16 %v2453, %v2452
  %v2796 = vpack.c.bf16 %v2455, %v2454
  %v2797 = vpack.c.bf16 %v2457, %v2456
  %v2798 = vpack.c.bf16 %v2459, %v2458
  %v2799 = vpack.c.bf16 %v2461, %v2460
  %v2800 = vpack.c.bf16 %v2463, %v2462
  %v2801 = vpack.c.bf16 %v2465, %v2464
  %v2802 = vpack.c.bf16 %v2467, %v2466
  %v2803 = vpack.c.bf16 %v2469, %v2468
  %v2804 = vpack.c.bf16 %v2471, %v2470
  %v2805 = vpack.c.bf16 %v2473, %v2472
  %v2806 = vpack.c.bf16 %v2475, %v2474
  %v2807 = vpack.c.bf16 %v2477, %v2476
  %v2808 = vpack.c.bf16 %v2479, %v2478
  %v2809 = vpack.c.bf16 %v2481, %v2480
  %v2810 = vpack.c.bf16 %v2483, %v2482
  %v2811 = vpack.c.bf16 %v2485, %v2484
  %v2812 = vpack.c.bf16 %v2487, %v2486
  %v2813 = vpack.c.bf16 %v2489, %v2488
  %v2814 = vpack.c.bf16 %v2491, %v2490
  %v2815 = vpack.c.bf16 %v2493, %v2492
  %v2816 = vpack.c.bf16 %v2495, %v2494
  %v2817 = vpack.c.bf16 %v2497, %v2496
  %v2818 = vpack.c.bf16 %v2499, %v2498
  %v2819 = vpack.c.bf16 %v2501, %v2500
  %v2820 = vpack.c.bf16 %v2503, %v2502
  %v2821 = vpack.c.bf16 %v2505, %v2504
  %v2822 = vpack.c.bf16 %v2507, %v2506
  %v2823 = vpack.c.bf16 %v2509, %v2508
  %v2824 = vpack.c.bf16 %v2511, %v2510
  %v2825 = vpack.c.bf16 %v2513, %v2512
  %v2826 = vpack.c.bf16 %v2515, %v2514
  %v2827 = vpack.c.bf16 %v2517, %v2516
  %v2828 = vpack.c.bf16 %v2519, %v2518
  %v2829 = vpack.c.bf16 %v2521, %v2520
  %v2830 = vpack.c.bf16 %v2523, %v2522
  %v2831 = vpack.c.bf16 %v2525, %v2524
  %v2832 = vpack.c.bf16 %v2527, %v2526
  %v2833 = vpack.c.bf16 %v2529, %v2528
  %v2834 = vpack.c.bf16 %v2531, %v2530
  %v2835 = vpack.c.bf16 %v2533, %v2532
  %v2836 = vpack.c.bf16 %v2535, %v2534
  %v2837 = vpack.c.bf16 %v2537, %v2536
  %v2838 = vpack.c.bf16 %v2539, %v2538
  %v2839 = vpack.c.bf16 %v2541, %v2540
  %v2840 = vpack.c.bf16 %v2543, %v2542
  %v2841 = vpack.c.bf16 %v2545, %v2544
  %v2842 = vpack.c.bf16 %v2547, %v2546
  %v2843 = vpack.c.bf16 %v2549, %v2548
  %v2844 = vpack.c.bf16 %v2551, %v2550
  %v2845 = vpack.c.bf16 %v2553, %v2552
  %v2846 = vpack.c.bf16 %v2555, %v2554
  %v2847 = vpack.c.bf16 %v2557, %v2556
  %v2848 = vpack.c.bf16 %v2559, %v2558
  %v2849 = vpack.c.bf16 %v2561, %v2560
  %v2850 = vpack.c.bf16 %v2563, %v2562
  %v2851 = vpack.c.bf16 %v2565, %v2564
  %v2852 = vpack.c.bf16 %v2567, %v2566
  %v2853 = vpack.c.bf16 %v2569, %v2568
  %v2854 = vpack.c.bf16 %v2571, %v2570
  %v2855 = vpack.c.bf16 %v2573, %v2572
  %v2856 = vpack.c.bf16 %v2575, %v2574
  %v2857 = vpack.c.bf16 %v2577, %v2576
  %v2858 = vpack.c.bf16 %v2579, %v2578
  %v2859 = vpack.c.bf16 %v2581, %v2580
  %v2860 = vpack.c.bf16 %v2583, %v2582
  %v2861 = vpack.c.bf16 %v2585, %v2584
  %v2862 = vpack.c.bf16 %v2587, %v2586
  %v2863 = vpack.c.bf16 %v2589, %v2588
  %v2864 = vpack.c.bf16 %v2591, %v2590
  %v2865 = vpack.c.bf16 %v2593, %v2592
  %v2866 = vpack.c.bf16 %v2595, %v2594
  %v2867 = vpack.c.bf16 %v2597, %v2596
  %v2868 = vpack.c.bf16 %v2599, %v2598
  %v2869 = vpack.c.bf16 %v2601, %v2600
  %v2870 = vpack.c.bf16 %v2603, %v2602
  %v2871 = vpack.c.bf16 %v2605, %v2604
  %v2872 = vpack.c.bf16 %v2607, %v2606
  %v2873 = vpack.c.bf16 %v2609, %v2608
  %v2874 = vpack.c.bf16 %v2611, %v2610
  %v2875 = vpack.c.bf16 %v2613, %v2612
  %v2876 = vpack.c.bf16 %v2615, %v2614
  %v2877 = vpack.c.bf16 %v2617, %v2616
  %v2878 = vpack.c.bf16 %v2619, %v2618
  %v2879 = vpack.c.bf16 %v2621, %v2620
  %v2880 = vpack.c.bf16 %v2623, %v2622
  %v2881 = vpack.c.bf16 %v2625, %v2624
  %v2882 = vld [vmem:[%s3] sm:$0xf]
  %v2883 = vld [vmem:[%s3 + $0x4] sm:$0xf]
  %v2884 = vld [vmem:[%s3 + $0x8] sm:$0xf]
  %v2885 = vld [vmem:[%s3 + $0xc] sm:$0xf]
  %v2886 = vld [vmem:[%s3 + $0x10] sm:$0xf]
  %v2887 = vld [vmem:[%s3 + $0x14] sm:$0xf]
  %v2888 = vld [vmem:[%s3 + $0x18] sm:$0xf]
  %v2889 = vld [vmem:[%s3 + $0x1c] sm:$0xf]
  %v2890 = vld [vmem:[%s3 + $0x20] sm:$0xf]
  %v2891 = vld [vmem:[%s3 + $0x24] sm:$0xf]
  %v2892 = vld [vmem:[%s3 + $0x28] sm:$0xf]
  %v2893 = vld [vmem:[%s3 + $0x2c] sm:$0xf]
  %v2894 = vld [vmem:[%s3 + $0x30] sm:$0xf]
  %v2895 = vld [vmem:[%s3 + $0x34] sm:$0xf]
  %v2896 = vld [vmem:[%s3 + $0x38] sm:$0xf]
  %v2897 = vld [vmem:[%s3 + $0x3c] sm:$0xf]
  %v2898 = vld [vmem:[%s3 + $0x40] sm:$0xf]
  %v2899 = vld [vmem:[%s3 + $0x44] sm:$0xf]
  %v2900 = vld [vmem:[%s3 + $0x48] sm:$0xf]
  %v2901 = vld [vmem:[%s3 + $0x4c] sm:$0xf]
  %v2902 = vld [vmem:[%s3 + $0x50] sm:$0xf]
  %v2903 = vld [vmem:[%s3 + $0x54] sm:$0xf]
  %v2904 = vld [vmem:[%s3 + $0x58] sm:$0xf]
  %v2905 = vld [vmem:[%s3 + $0x5c] sm:$0xf]
  %v2906 = vld [vmem:[%s3 + $0x60] sm:$0xf]
  %v2907 = vld [vmem:[%s3 + $0x64] sm:$0xf]
  %v2908 = vld [vmem:[%s3 + $0x68] sm:$0xf]
  %v2909 = vld [vmem:[%s3 + $0x6c] sm:$0xf]
  %v2910 = vld [vmem:[%s3 + $0x70] sm:$0xf]
  %v2911 = vld [vmem:[%s3 + $0x74] sm:$0xf]
  %v2912 = vld [vmem:[%s3 + $0x78] sm:$0xf]
  %v2913 = vld [vmem:[%s3 + $0x7c] sm:$0xf]
  %v2914 = vld [vmem:[%s3 + $0x80] sm:$0xf]
  %v2915 = vld [vmem:[%s3 + $0x84] sm:$0xf]
  %v2916 = vld [vmem:[%s3 + $0x88] sm:$0xf]
  %v2917 = vld [vmem:[%s3 + $0x8c] sm:$0xf]
  %v2918 = vld [vmem:[%s3 + $0x90] sm:$0xf]
  %v2919 = vld [vmem:[%s3 + $0x94] sm:$0xf]
  %v2920 = vld [vmem:[%s3 + $0x98] sm:$0xf]
  %v2921 = vld [vmem:[%s3 + $0x9c] sm:$0xf]
  %v2922 = vld [vmem:[%s3 + $0xa0] sm:$0xf]
  %v2923 = vld [vmem:[%s3 + $0xa4] sm:$0xf]
  %v2924 = vld [vmem:[%s3 + $0xa8] sm:$0xf]
  %v2925 = vld [vmem:[%s3 + $0xac] sm:$0xf]
  %v2926 = vld [vmem:[%s3 + $0xb0] sm:$0xf]
  %v2927 = vld [vmem:[%s3 + $0xb4] sm:$0xf]
  %v2928 = vld [vmem:[%s3 + $0xb8] sm:$0xf]
  %v2929 = vld [vmem:[%s3 + $0xbc] sm:$0xf]
  %v2930 = vld [vmem:[%s3 + $0xc0] sm:$0xf]
  %v2931 = vld [vmem:[%s3 + $0xc4] sm:$0xf]
  %v2932 = vld [vmem:[%s3 + $0xc8] sm:$0xf]
  %v2933 = vld [vmem:[%s3 + $0xcc] sm:$0xf]
  %v2934 = vld [vmem:[%s3 + $0xd0] sm:$0xf]
  %v2935 = vld [vmem:[%s3 + $0xd4] sm:$0xf]
  %v2936 = vld [vmem:[%s3 + $0xd8] sm:$0xf]
  %v2937 = vld [vmem:[%s3 + $0xdc] sm:$0xf]
  %v2938 = vld [vmem:[%s3 + $0xe0] sm:$0xf]
  %v2939 = vld [vmem:[%s3 + $0xe4] sm:$0xf]
  %v2940 = vld [vmem:[%s3 + $0xe8] sm:$0xf]
  %v2941 = vld [vmem:[%s3 + $0xec] sm:$0xf]
  %v2942 = vld [vmem:[%s3 + $0xf0] sm:$0xf]
  %v2943 = vld [vmem:[%s3 + $0xf4] sm:$0xf]
  %v2944 = vld [vmem:[%s3 + $0xf8] sm:$0xf]
  %v2945 = vld [vmem:[%s3 + $0xfc] sm:$0xf]
  %v2946 = vld [vmem:[%s3 + $0x100] sm:$0xf]
  %v2947 = vld [vmem:[%s3 + $0x104] sm:$0xf]
  %v2948 = vld [vmem:[%s3 + $0x108] sm:$0xf]
  %v2949 = vld [vmem:[%s3 + $0x10c] sm:$0xf]
  %v2950 = vld [vmem:[%s3 + $0x110] sm:$0xf]
  %v2951 = vld [vmem:[%s3 + $0x114] sm:$0xf]
  %v2952 = vld [vmem:[%s3 + $0x118] sm:$0xf]
  %v2953 = vld [vmem:[%s3 + $0x11c] sm:$0xf]
  %v2954 = vld [vmem:[%s3 + $0x120] sm:$0xf]
  %v2955 = vld [vmem:[%s3 + $0x124] sm:$0xf]
  %v2956 = vld [vmem:[%s3 + $0x128] sm:$0xf]
  %v2957 = vld [vmem:[%s3 + $0x12c] sm:$0xf]
  %v2958 = vld [vmem:[%s3 + $0x130] sm:$0xf]
  %v2959 = vld [vmem:[%s3 + $0x134] sm:$0xf]
  %v2960 = vld [vmem:[%s3 + $0x138] sm:$0xf]
  %v2961 = vld [vmem:[%s3 + $0x13c] sm:$0xf]
  %v2962 = vld [vmem:[%s3 + $0x140] sm:$0xf]
  %v2963 = vld [vmem:[%s3 + $0x144] sm:$0xf]
  %v2964 = vld [vmem:[%s3 + $0x148] sm:$0xf]
  %v2965 = vld [vmem:[%s3 + $0x14c] sm:$0xf]
  %v2966 = vld [vmem:[%s3 + $0x150] sm:$0xf]
  %v2967 = vld [vmem:[%s3 + $0x154] sm:$0xf]
  %v2968 = vld [vmem:[%s3 + $0x158] sm:$0xf]
  %v2969 = vld [vmem:[%s3 + $0x15c] sm:$0xf]
  %v2970 = vld [vmem:[%s3 + $0x160] sm:$0xf]
  %v2971 = vld [vmem:[%s3 + $0x164] sm:$0xf]
  %v2972 = vld [vmem:[%s3 + $0x168] sm:$0xf]
  %v2973 = vld [vmem:[%s3 + $0x16c] sm:$0xf]
  %v2974 = vld [vmem:[%s3 + $0x170] sm:$0xf]
  %v2975 = vld [vmem:[%s3 + $0x174] sm:$0xf]
  %v2976 = vld [vmem:[%s3 + $0x178] sm:$0xf]
  %v2977 = vld [vmem:[%s3 + $0x17c] sm:$0xf]
  %v2978 = vld [vmem:[%s3 + $0x180] sm:$0xf]
  %v2979 = vld [vmem:[%s3 + $0x184] sm:$0xf]
  %v2980 = vld [vmem:[%s3 + $0x188] sm:$0xf]
  %v2981 = vld [vmem:[%s3 + $0x18c] sm:$0xf]
  %v2982 = vld [vmem:[%s3 + $0x190] sm:$0xf]
  %v2983 = vld [vmem:[%s3 + $0x194] sm:$0xf]
  %v2984 = vld [vmem:[%s3 + $0x198] sm:$0xf]
  %v2985 = vld [vmem:[%s3 + $0x19c] sm:$0xf]
  %v2986 = vld [vmem:[%s3 + $0x1a0] sm:$0xf]
  %v2987 = vld [vmem:[%s3 + $0x1a4] sm:$0xf]
  %v2988 = vld [vmem:[%s3 + $0x1a8] sm:$0xf]
  %v2989 = vld [vmem:[%s3 + $0x1ac] sm:$0xf]
  %v2990 = vld [vmem:[%s3 + $0x1b0] sm:$0xf]
  %v2991 = vld [vmem:[%s3 + $0x1b4] sm:$0xf]
  %v2992 = vld [vmem:[%s3 + $0x1b8] sm:$0xf]
  %v2993 = vld [vmem:[%s3 + $0x1bc] sm:$0xf]
  %v2994 = vld [vmem:[%s3 + $0x1c0] sm:$0xf]
  %v2995 = vld [vmem:[%s3 + $0x1c4] sm:$0xf]
  %v2996 = vld [vmem:[%s3 + $0x1c8] sm:$0xf]
  %v2997 = vld [vmem:[%s3 + $0x1cc] sm:$0xf]
  %v2998 = vld [vmem:[%s3 + $0x1d0] sm:$0xf]
  %v2999 = vld [vmem:[%s3 + $0x1d4] sm:$0xf]
  %v3000 = vld [vmem:[%s3 + $0x1d8] sm:$0xf]
  %v3001 = vld [vmem:[%s3 + $0x1dc] sm:$0xf]
  %v3002 = vld [vmem:[%s3 + $0x1e0] sm:$0xf]
  %v3003 = vld [vmem:[%s3 + $0x1e4] sm:$0xf]
  %v3004 = vld [vmem:[%s3 + $0x1e8] sm:$0xf]
  %v3005 = vld [vmem:[%s3 + $0x1ec] sm:$0xf]
  %v3006 = vld [vmem:[%s3 + $0x1f0] sm:$0xf]
  %v3007 = vld [vmem:[%s3 + $0x1f4] sm:$0xf]
  %v3008 = vld [vmem:[%s3 + $0x1f8] sm:$0xf]
  %v3009 = vld [vmem:[%s3 + $0x1fc] sm:$0xf]
  %v3010 = vld [vmem:[%s3 + $0x200] sm:$0xf]
  %v3011 = vld [vmem:[%s3 + $0x204] sm:$0xf]
  %v3012 = vld [vmem:[%s3 + $0x208] sm:$0xf]
  %v3013 = vld [vmem:[%s3 + $0x20c] sm:$0xf]
  %v3014 = vld [vmem:[%s3 + $0x210] sm:$0xf]
  %v3015 = vld [vmem:[%s3 + $0x214] sm:$0xf]
  %v3016 = vld [vmem:[%s3 + $0x218] sm:$0xf]
  %v3017 = vld [vmem:[%s3 + $0x21c] sm:$0xf]
  %v3018 = vld [vmem:[%s3 + $0x220] sm:$0xf]
  %v3019 = vld [vmem:[%s3 + $0x224] sm:$0xf]
  %v3020 = vld [vmem:[%s3 + $0x228] sm:$0xf]
  %v3021 = vld [vmem:[%s3 + $0x22c] sm:$0xf]
  %v3022 = vld [vmem:[%s3 + $0x230] sm:$0xf]
  %v3023 = vld [vmem:[%s3 + $0x234] sm:$0xf]
  %v3024 = vld [vmem:[%s3 + $0x238] sm:$0xf]
  %v3025 = vld [vmem:[%s3 + $0x23c] sm:$0xf]
  %v3026 = vld [vmem:[%s3 + $0x240] sm:$0xf]
  %v3027 = vld [vmem:[%s3 + $0x244] sm:$0xf]
  %v3028 = vld [vmem:[%s3 + $0x248] sm:$0xf]
  %v3029 = vld [vmem:[%s3 + $0x24c] sm:$0xf]
  %v3030 = vld [vmem:[%s3 + $0x250] sm:$0xf]
  %v3031 = vld [vmem:[%s3 + $0x254] sm:$0xf]
  %v3032 = vld [vmem:[%s3 + $0x258] sm:$0xf]
  %v3033 = vld [vmem:[%s3 + $0x25c] sm:$0xf]
  %v3034 = vld [vmem:[%s3 + $0x260] sm:$0xf]
  %v3035 = vld [vmem:[%s3 + $0x264] sm:$0xf]
  %v3036 = vld [vmem:[%s3 + $0x268] sm:$0xf]
  %v3037 = vld [vmem:[%s3 + $0x26c] sm:$0xf]
  %v3038 = vld [vmem:[%s3 + $0x270] sm:$0xf]
  %v3039 = vld [vmem:[%s3 + $0x274] sm:$0xf]
  %v3040 = vld [vmem:[%s3 + $0x278] sm:$0xf]
  %v3041 = vld [vmem:[%s3 + $0x27c] sm:$0xf]
  %v3042 = vld [vmem:[%s3 + $0x280] sm:$0xf]
  %v3043 = vld [vmem:[%s3 + $0x284] sm:$0xf]
  %v3044 = vld [vmem:[%s3 + $0x288] sm:$0xf]
  %v3045 = vld [vmem:[%s3 + $0x28c] sm:$0xf]
  %v3046 = vld [vmem:[%s3 + $0x290] sm:$0xf]
  %v3047 = vld [vmem:[%s3 + $0x294] sm:$0xf]
  %v3048 = vld [vmem:[%s3 + $0x298] sm:$0xf]
  %v3049 = vld [vmem:[%s3 + $0x29c] sm:$0xf]
  %v3050 = vld [vmem:[%s3 + $0x2a0] sm:$0xf]
  %v3051 = vld [vmem:[%s3 + $0x2a4] sm:$0xf]
  %v3052 = vld [vmem:[%s3 + $0x2a8] sm:$0xf]
  %v3053 = vld [vmem:[%s3 + $0x2ac] sm:$0xf]
  %v3054 = vld [vmem:[%s3 + $0x2b0] sm:$0xf]
  %v3055 = vld [vmem:[%s3 + $0x2b4] sm:$0xf]
  %v3056 = vld [vmem:[%s3 + $0x2b8] sm:$0xf]
  %v3057 = vld [vmem:[%s3 + $0x2bc] sm:$0xf]
  %v3058 = vld [vmem:[%s3 + $0x2c0] sm:$0xf]
  %v3059 = vld [vmem:[%s3 + $0x2c4] sm:$0xf]
  %v3060 = vld [vmem:[%s3 + $0x2c8] sm:$0xf]
  %v3061 = vld [vmem:[%s3 + $0x2cc] sm:$0xf]
  %v3062 = vld [vmem:[%s3 + $0x2d0] sm:$0xf]
  %v3063 = vld [vmem:[%s3 + $0x2d4] sm:$0xf]
  %v3064 = vld [vmem:[%s3 + $0x2d8] sm:$0xf]
  %v3065 = vld [vmem:[%s3 + $0x2dc] sm:$0xf]
  %v3066 = vld [vmem:[%s3 + $0x2e0] sm:$0xf]
  %v3067 = vld [vmem:[%s3 + $0x2e4] sm:$0xf]
  %v3068 = vld [vmem:[%s3 + $0x2e8] sm:$0xf]
  %v3069 = vld [vmem:[%s3 + $0x2ec] sm:$0xf]
  %v3070 = vld [vmem:[%s3 + $0x2f0] sm:$0xf]
  %v3071 = vld [vmem:[%s3 + $0x2f4] sm:$0xf]
  %v3072 = vld [vmem:[%s3 + $0x2f8] sm:$0xf]
  %v3073 = vld [vmem:[%s3 + $0x2fc] sm:$0xf]
  %v3074 = vld [vmem:[%s3 + $0x300] sm:$0xf]
  %v3075 = vld [vmem:[%s3 + $0x304] sm:$0xf]
  %v3076 = vld [vmem:[%s3 + $0x308] sm:$0xf]
  %v3077 = vld [vmem:[%s3 + $0x30c] sm:$0xf]
  %v3078 = vld [vmem:[%s3 + $0x310] sm:$0xf]
  %v3079 = vld [vmem:[%s3 + $0x314] sm:$0xf]
  %v3080 = vld [vmem:[%s3 + $0x318] sm:$0xf]
  %v3081 = vld [vmem:[%s3 + $0x31c] sm:$0xf]
  %v3082 = vld [vmem:[%s3 + $0x320] sm:$0xf]
  %v3083 = vld [vmem:[%s3 + $0x324] sm:$0xf]
  %v3084 = vld [vmem:[%s3 + $0x328] sm:$0xf]
  %v3085 = vld [vmem:[%s3 + $0x32c] sm:$0xf]
  %v3086 = vld [vmem:[%s3 + $0x330] sm:$0xf]
  %v3087 = vld [vmem:[%s3 + $0x334] sm:$0xf]
  %v3088 = vld [vmem:[%s3 + $0x338] sm:$0xf]
  %v3089 = vld [vmem:[%s3 + $0x33c] sm:$0xf]
  %v3090 = vld [vmem:[%s3 + $0x340] sm:$0xf]
  %v3091 = vld [vmem:[%s3 + $0x344] sm:$0xf]
  %v3092 = vld [vmem:[%s3 + $0x348] sm:$0xf]
  %v3093 = vld [vmem:[%s3 + $0x34c] sm:$0xf]
  %v3094 = vld [vmem:[%s3 + $0x350] sm:$0xf]
  %v3095 = vld [vmem:[%s3 + $0x354] sm:$0xf]
  %v3096 = vld [vmem:[%s3 + $0x358] sm:$0xf]
  %v3097 = vld [vmem:[%s3 + $0x35c] sm:$0xf]
  %v3098 = vld [vmem:[%s3 + $0x360] sm:$0xf]
  %v3099 = vld [vmem:[%s3 + $0x364] sm:$0xf]
  %v3100 = vld [vmem:[%s3 + $0x368] sm:$0xf]
  %v3101 = vld [vmem:[%s3 + $0x36c] sm:$0xf]
  %v3102 = vld [vmem:[%s3 + $0x370] sm:$0xf]
  %v3103 = vld [vmem:[%s3 + $0x374] sm:$0xf]
  %v3104 = vld [vmem:[%s3 + $0x378] sm:$0xf]
  %v3105 = vld [vmem:[%s3 + $0x37c] sm:$0xf]
  %v3106 = vld [vmem:[%s3 + $0x380] sm:$0xf]
  %v3107 = vld [vmem:[%s3 + $0x384] sm:$0xf]
  %v3108 = vld [vmem:[%s3 + $0x388] sm:$0xf]
  %v3109 = vld [vmem:[%s3 + $0x38c] sm:$0xf]
  %v3110 = vld [vmem:[%s3 + $0x390] sm:$0xf]
  %v3111 = vld [vmem:[%s3 + $0x394] sm:$0xf]
  %v3112 = vld [vmem:[%s3 + $0x398] sm:$0xf]
  %v3113 = vld [vmem:[%s3 + $0x39c] sm:$0xf]
  %v3114 = vld [vmem:[%s3 + $0x3a0] sm:$0xf]
  %v3115 = vld [vmem:[%s3 + $0x3a4] sm:$0xf]
  %v3116 = vld [vmem:[%s3 + $0x3a8] sm:$0xf]
  %v3117 = vld [vmem:[%s3 + $0x3ac] sm:$0xf]
  %v3118 = vld [vmem:[%s3 + $0x3b0] sm:$0xf]
  %v3119 = vld [vmem:[%s3 + $0x3b4] sm:$0xf]
  %v3120 = vld [vmem:[%s3 + $0x3b8] sm:$0xf]
  %v3121 = vld [vmem:[%s3 + $0x3bc] sm:$0xf]
  %v3122 = vld [vmem:[%s3 + $0x3c0] sm:$0xf]
  %v3123 = vld [vmem:[%s3 + $0x3c4] sm:$0xf]
  %v3124 = vld [vmem:[%s3 + $0x3c8] sm:$0xf]
  %v3125 = vld [vmem:[%s3 + $0x3cc] sm:$0xf]
  %v3126 = vld [vmem:[%s3 + $0x3d0] sm:$0xf]
  %v3127 = vld [vmem:[%s3 + $0x3d4] sm:$0xf]
  %v3128 = vld [vmem:[%s3 + $0x3d8] sm:$0xf]
  %v3129 = vld [vmem:[%s3 + $0x3dc] sm:$0xf]
  %v3130 = vld [vmem:[%s3 + $0x3e0] sm:$0xf]
  %v3131 = vld [vmem:[%s3 + $0x3e4] sm:$0xf]
  %v3132 = vld [vmem:[%s3 + $0x3e8] sm:$0xf]
  %v3133 = vld [vmem:[%s3 + $0x3ec] sm:$0xf]
  %v3134 = vld [vmem:[%s3 + $0x3f0] sm:$0xf]
  %v3135 = vld [vmem:[%s3 + $0x3f4] sm:$0xf]
  %v3136 = vld [vmem:[%s3 + $0x3f8] sm:$0xf]
  %v3137 = vld [vmem:[%s3 + $0x3fc] sm:$0xf]
  %v3138 = vld [vmem:[%s4] sm:$0x1]
  %v3140 = vperm.slane %v3138, 0
  %v3398 = vunpack.c.l.b16 %v2626
  %v3399 = vunpack.c.h.b16 %v2626
  %v3400 = vunpack.c.l.b16 %v2627
  %v3401 = vunpack.c.h.b16 %v2627
  %v3402 = vunpack.c.l.b16 %v2628
  %v3403 = vunpack.c.h.b16 %v2628
  %v3404 = vunpack.c.l.b16 %v2629
  %v3405 = vunpack.c.h.b16 %v2629
  %v3406 = vunpack.c.l.b16 %v2630
  %v3407 = vunpack.c.h.b16 %v2630
  %v3408 = vunpack.c.l.b16 %v2631
  %v3409 = vunpack.c.h.b16 %v2631
  %v3410 = vunpack.c.l.b16 %v2632
  %v3411 = vunpack.c.h.b16 %v2632
  %v3412 = vunpack.c.l.b16 %v2633
  %v3413 = vunpack.c.h.b16 %v2633
  %v3414 = vunpack.c.l.b16 %v2634
  %v3415 = vunpack.c.h.b16 %v2634
  %v3416 = vunpack.c.l.b16 %v2635
  %v3417 = vunpack.c.h.b16 %v2635
  %v3418 = vunpack.c.l.b16 %v2636
  %v3419 = vunpack.c.h.b16 %v2636
  %v3420 = vunpack.c.l.b16 %v2637
  %v3421 = vunpack.c.h.b16 %v2637
  %v3422 = vunpack.c.l.b16 %v2638
  %v3423 = vunpack.c.h.b16 %v2638
  %v3424 = vunpack.c.l.b16 %v2639
  %v3425 = vunpack.c.h.b16 %v2639
  %v3426 = vunpack.c.l.b16 %v2640
  %v3427 = vunpack.c.h.b16 %v2640
  %v3428 = vunpack.c.l.b16 %v2641
  %v3429 = vunpack.c.h.b16 %v2641
  %v3430 = vunpack.c.l.b16 %v2642
  %v3431 = vunpack.c.h.b16 %v2642
  %v3432 = vunpack.c.l.b16 %v2643
  %v3433 = vunpack.c.h.b16 %v2643
  %v3434 = vunpack.c.l.b16 %v2644
  %v3435 = vunpack.c.h.b16 %v2644
  %v3436 = vunpack.c.l.b16 %v2645
  %v3437 = vunpack.c.h.b16 %v2645
  %v3438 = vunpack.c.l.b16 %v2646
  %v3439 = vunpack.c.h.b16 %v2646
  %v3440 = vunpack.c.l.b16 %v2647
  %v3441 = vunpack.c.h.b16 %v2647
  %v3442 = vunpack.c.l.b16 %v2648
  %v3443 = vunpack.c.h.b16 %v2648
  %v3444 = vunpack.c.l.b16 %v2649
  %v3445 = vunpack.c.h.b16 %v2649
  %v3446 = vunpack.c.l.b16 %v2650
  %v3447 = vunpack.c.h.b16 %v2650
  %v3448 = vunpack.c.l.b16 %v2651
  %v3449 = vunpack.c.h.b16 %v2651
  %v3450 = vunpack.c.l.b16 %v2652
  %v3451 = vunpack.c.h.b16 %v2652
  %v3452 = vunpack.c.l.b16 %v2653
  %v3453 = vunpack.c.h.b16 %v2653
  %v3454 = vunpack.c.l.b16 %v2654
  %v3455 = vunpack.c.h.b16 %v2654
  %v3456 = vunpack.c.l.b16 %v2655
  %v3457 = vunpack.c.h.b16 %v2655
  %v3458 = vunpack.c.l.b16 %v2656
  %v3459 = vunpack.c.h.b16 %v2656
  %v3460 = vunpack.c.l.b16 %v2657
  %v3461 = vunpack.c.h.b16 %v2657
  %v3462 = vunpack.c.l.b16 %v2658
  %v3463 = vunpack.c.h.b16 %v2658
  %v3464 = vunpack.c.l.b16 %v2659
  %v3465 = vunpack.c.h.b16 %v2659
  %v3466 = vunpack.c.l.b16 %v2660
  %v3467 = vunpack.c.h.b16 %v2660
  %v3468 = vunpack.c.l.b16 %v2661
  %v3469 = vunpack.c.h.b16 %v2661
  %v3470 = vunpack.c.l.b16 %v2662
  %v3471 = vunpack.c.h.b16 %v2662
  %v3472 = vunpack.c.l.b16 %v2663
  %v3473 = vunpack.c.h.b16 %v2663
  %v3474 = vunpack.c.l.b16 %v2664
  %v3475 = vunpack.c.h.b16 %v2664
  %v3476 = vunpack.c.l.b16 %v2665
  %v3477 = vunpack.c.h.b16 %v2665
  %v3478 = vunpack.c.l.b16 %v2666
  %v3479 = vunpack.c.h.b16 %v2666
  %v3480 = vunpack.c.l.b16 %v2667
  %v3481 = vunpack.c.h.b16 %v2667
  %v3482 = vunpack.c.l.b16 %v2668
  %v3483 = vunpack.c.h.b16 %v2668
  %v3484 = vunpack.c.l.b16 %v2669
  %v3485 = vunpack.c.h.b16 %v2669
  %v3486 = vunpack.c.l.b16 %v2670
  %v3487 = vunpack.c.h.b16 %v2670
  %v3488 = vunpack.c.l.b16 %v2671
  %v3489 = vunpack.c.h.b16 %v2671
  %v3490 = vunpack.c.l.b16 %v2672
  %v3491 = vunpack.c.h.b16 %v2672
  %v3492 = vunpack.c.l.b16 %v2673
  %v3493 = vunpack.c.h.b16 %v2673
  %v3494 = vunpack.c.l.b16 %v2674
  %v3495 = vunpack.c.h.b16 %v2674
  %v3496 = vunpack.c.l.b16 %v2675
  %v3497 = vunpack.c.h.b16 %v2675
  %v3498 = vunpack.c.l.b16 %v2676
  %v3499 = vunpack.c.h.b16 %v2676
  %v3500 = vunpack.c.l.b16 %v2677
  %v3501 = vunpack.c.h.b16 %v2677
  %v3502 = vunpack.c.l.b16 %v2678
  %v3503 = vunpack.c.h.b16 %v2678
  %v3504 = vunpack.c.l.b16 %v2679
  %v3505 = vunpack.c.h.b16 %v2679
  %v3506 = vunpack.c.l.b16 %v2680
  %v3507 = vunpack.c.h.b16 %v2680
  %v3508 = vunpack.c.l.b16 %v2681
  %v3509 = vunpack.c.h.b16 %v2681
  %v3510 = vunpack.c.l.b16 %v2682
  %v3511 = vunpack.c.h.b16 %v2682
  %v3512 = vunpack.c.l.b16 %v2683
  %v3513 = vunpack.c.h.b16 %v2683
  %v3514 = vunpack.c.l.b16 %v2684
  %v3515 = vunpack.c.h.b16 %v2684
  %v3516 = vunpack.c.l.b16 %v2685
  %v3517 = vunpack.c.h.b16 %v2685
  %v3518 = vunpack.c.l.b16 %v2686
  %v3519 = vunpack.c.h.b16 %v2686
  %v3520 = vunpack.c.l.b16 %v2687
  %v3521 = vunpack.c.h.b16 %v2687
  %v3522 = vunpack.c.l.b16 %v2688
  %v3523 = vunpack.c.h.b16 %v2688
  %v3524 = vunpack.c.l.b16 %v2689
  %v3525 = vunpack.c.h.b16 %v2689
  %v3526 = vunpack.c.l.b16 %v2690
  %v3527 = vunpack.c.h.b16 %v2690
  %v3528 = vunpack.c.l.b16 %v2691
  %v3529 = vunpack.c.h.b16 %v2691
  %v3530 = vunpack.c.l.b16 %v2692
  %v3531 = vunpack.c.h.b16 %v2692
  %v3532 = vunpack.c.l.b16 %v2693
  %v3533 = vunpack.c.h.b16 %v2693
  %v3534 = vunpack.c.l.b16 %v2694
  %v3535 = vunpack.c.h.b16 %v2694
  %v3536 = vunpack.c.l.b16 %v2695
  %v3537 = vunpack.c.h.b16 %v2695
  %v3538 = vunpack.c.l.b16 %v2696
  %v3539 = vunpack.c.h.b16 %v2696
  %v3540 = vunpack.c.l.b16 %v2697
  %v3541 = vunpack.c.h.b16 %v2697
  %v3542 = vunpack.c.l.b16 %v2698
  %v3543 = vunpack.c.h.b16 %v2698
  %v3544 = vunpack.c.l.b16 %v2699
  %v3545 = vunpack.c.h.b16 %v2699
  %v3546 = vunpack.c.l.b16 %v2700
  %v3547 = vunpack.c.h.b16 %v2700
  %v3548 = vunpack.c.l.b16 %v2701
  %v3549 = vunpack.c.h.b16 %v2701
  %v3550 = vunpack.c.l.b16 %v2702
  %v3551 = vunpack.c.h.b16 %v2702
  %v3552 = vunpack.c.l.b16 %v2703
  %v3553 = vunpack.c.h.b16 %v2703
  %v3554 = vunpack.c.l.b16 %v2704
  %v3555 = vunpack.c.h.b16 %v2704
  %v3556 = vunpack.c.l.b16 %v2705
  %v3557 = vunpack.c.h.b16 %v2705
  %v3558 = vunpack.c.l.b16 %v2706
  %v3559 = vunpack.c.h.b16 %v2706
  %v3560 = vunpack.c.l.b16 %v2707
  %v3561 = vunpack.c.h.b16 %v2707
  %v3562 = vunpack.c.l.b16 %v2708
  %v3563 = vunpack.c.h.b16 %v2708
  %v3564 = vunpack.c.l.b16 %v2709
  %v3565 = vunpack.c.h.b16 %v2709
  %v3566 = vunpack.c.l.b16 %v2710
  %v3567 = vunpack.c.h.b16 %v2710
  %v3568 = vunpack.c.l.b16 %v2711
  %v3569 = vunpack.c.h.b16 %v2711
  %v3570 = vunpack.c.l.b16 %v2712
  %v3571 = vunpack.c.h.b16 %v2712
  %v3572 = vunpack.c.l.b16 %v2713
  %v3573 = vunpack.c.h.b16 %v2713
  %v3574 = vunpack.c.l.b16 %v2714
  %v3575 = vunpack.c.h.b16 %v2714
  %v3576 = vunpack.c.l.b16 %v2715
  %v3577 = vunpack.c.h.b16 %v2715
  %v3578 = vunpack.c.l.b16 %v2716
  %v3579 = vunpack.c.h.b16 %v2716
  %v3580 = vunpack.c.l.b16 %v2717
  %v3581 = vunpack.c.h.b16 %v2717
  %v3582 = vunpack.c.l.b16 %v2718
  %v3583 = vunpack.c.h.b16 %v2718
  %v3584 = vunpack.c.l.b16 %v2719
  %v3585 = vunpack.c.h.b16 %v2719
  %v3586 = vunpack.c.l.b16 %v2720
  %v3587 = vunpack.c.h.b16 %v2720
  %v3588 = vunpack.c.l.b16 %v2721
  %v3589 = vunpack.c.h.b16 %v2721
  %v3590 = vunpack.c.l.b16 %v2722
  %v3591 = vunpack.c.h.b16 %v2722
  %v3592 = vunpack.c.l.b16 %v2723
  %v3593 = vunpack.c.h.b16 %v2723
  %v3594 = vunpack.c.l.b16 %v2724
  %v3595 = vunpack.c.h.b16 %v2724
  %v3596 = vunpack.c.l.b16 %v2725
  %v3597 = vunpack.c.h.b16 %v2725
  %v3598 = vunpack.c.l.b16 %v2726
  %v3599 = vunpack.c.h.b16 %v2726
  %v3600 = vunpack.c.l.b16 %v2727
  %v3601 = vunpack.c.h.b16 %v2727
  %v3602 = vunpack.c.l.b16 %v2728
  %v3603 = vunpack.c.h.b16 %v2728
  %v3604 = vunpack.c.l.b16 %v2729
  %v3605 = vunpack.c.h.b16 %v2729
  %v3606 = vunpack.c.l.b16 %v2730
  %v3607 = vunpack.c.h.b16 %v2730
  %v3608 = vunpack.c.l.b16 %v2731
  %v3609 = vunpack.c.h.b16 %v2731
  %v3610 = vunpack.c.l.b16 %v2732
  %v3611 = vunpack.c.h.b16 %v2732
  %v3612 = vunpack.c.l.b16 %v2733
  %v3613 = vunpack.c.h.b16 %v2733
  %v3614 = vunpack.c.l.b16 %v2734
  %v3615 = vunpack.c.h.b16 %v2734
  %v3616 = vunpack.c.l.b16 %v2735
  %v3617 = vunpack.c.h.b16 %v2735
  %v3618 = vunpack.c.l.b16 %v2736
  %v3619 = vunpack.c.h.b16 %v2736
  %v3620 = vunpack.c.l.b16 %v2737
  %v3621 = vunpack.c.h.b16 %v2737
  %v3622 = vunpack.c.l.b16 %v2738
  %v3623 = vunpack.c.h.b16 %v2738
  %v3624 = vunpack.c.l.b16 %v2739
  %v3625 = vunpack.c.h.b16 %v2739
  %v3626 = vunpack.c.l.b16 %v2740
  %v3627 = vunpack.c.h.b16 %v2740
  %v3628 = vunpack.c.l.b16 %v2741
  %v3629 = vunpack.c.h.b16 %v2741
  %v3630 = vunpack.c.l.b16 %v2742
  %v3631 = vunpack.c.h.b16 %v2742
  %v3632 = vunpack.c.l.b16 %v2743
  %v3633 = vunpack.c.h.b16 %v2743
  %v3634 = vunpack.c.l.b16 %v2744
  %v3635 = vunpack.c.h.b16 %v2744
  %v3636 = vunpack.c.l.b16 %v2745
  %v3637 = vunpack.c.h.b16 %v2745
  %v3638 = vunpack.c.l.b16 %v2746
  %v3639 = vunpack.c.h.b16 %v2746
  %v3640 = vunpack.c.l.b16 %v2747
  %v3641 = vunpack.c.h.b16 %v2747
  %v3642 = vunpack.c.l.b16 %v2748
  %v3643 = vunpack.c.h.b16 %v2748
  %v3644 = vunpack.c.l.b16 %v2749
  %v3645 = vunpack.c.h.b16 %v2749
  %v3646 = vunpack.c.l.b16 %v2750
  %v3647 = vunpack.c.h.b16 %v2750
  %v3648 = vunpack.c.l.b16 %v2751
  %v3649 = vunpack.c.h.b16 %v2751
  %v3650 = vunpack.c.l.b16 %v2752
  %v3651 = vunpack.c.h.b16 %v2752
  %v3652 = vunpack.c.l.b16 %v2753
  %v3653 = vunpack.c.h.b16 %v2753
  %v3654 = vunpack.c.l.b16 %v2754
  %v3655 = vunpack.c.h.b16 %v2754
  %v3656 = vunpack.c.l.b16 %v2755
  %v3657 = vunpack.c.h.b16 %v2755
  %v3658 = vunpack.c.l.b16 %v2756
  %v3659 = vunpack.c.h.b16 %v2756
  %v3660 = vunpack.c.l.b16 %v2757
  %v3661 = vunpack.c.h.b16 %v2757
  %v3662 = vunpack.c.l.b16 %v2758
  %v3663 = vunpack.c.h.b16 %v2758
  %v3664 = vunpack.c.l.b16 %v2759
  %v3665 = vunpack.c.h.b16 %v2759
  %v3666 = vunpack.c.l.b16 %v2760
  %v3667 = vunpack.c.h.b16 %v2760
  %v3668 = vunpack.c.l.b16 %v2761
  %v3669 = vunpack.c.h.b16 %v2761
  %v3670 = vunpack.c.l.b16 %v2762
  %v3671 = vunpack.c.h.b16 %v2762
  %v3672 = vunpack.c.l.b16 %v2763
  %v3673 = vunpack.c.h.b16 %v2763
  %v3674 = vunpack.c.l.b16 %v2764
  %v3675 = vunpack.c.h.b16 %v2764
  %v3676 = vunpack.c.l.b16 %v2765
  %v3677 = vunpack.c.h.b16 %v2765
  %v3678 = vunpack.c.l.b16 %v2766
  %v3679 = vunpack.c.h.b16 %v2766
  %v3680 = vunpack.c.l.b16 %v2767
  %v3681 = vunpack.c.h.b16 %v2767
  %v3682 = vunpack.c.l.b16 %v2768
  %v3683 = vunpack.c.h.b16 %v2768
  %v3684 = vunpack.c.l.b16 %v2769
  %v3685 = vunpack.c.h.b16 %v2769
  %v3686 = vunpack.c.l.b16 %v2770
  %v3687 = vunpack.c.h.b16 %v2770
  %v3688 = vunpack.c.l.b16 %v2771
  %v3689 = vunpack.c.h.b16 %v2771
  %v3690 = vunpack.c.l.b16 %v2772
  %v3691 = vunpack.c.h.b16 %v2772
  %v3692 = vunpack.c.l.b16 %v2773
  %v3693 = vunpack.c.h.b16 %v2773
  %v3694 = vunpack.c.l.b16 %v2774
  %v3695 = vunpack.c.h.b16 %v2774
  %v3696 = vunpack.c.l.b16 %v2775
  %v3697 = vunpack.c.h.b16 %v2775
  %v3698 = vunpack.c.l.b16 %v2776
  %v3699 = vunpack.c.h.b16 %v2776
  %v3700 = vunpack.c.l.b16 %v2777
  %v3701 = vunpack.c.h.b16 %v2777
  %v3702 = vunpack.c.l.b16 %v2778
  %v3703 = vunpack.c.h.b16 %v2778
  %v3704 = vunpack.c.l.b16 %v2779
  %v3705 = vunpack.c.h.b16 %v2779
  %v3706 = vunpack.c.l.b16 %v2780
  %v3707 = vunpack.c.h.b16 %v2780
  %v3708 = vunpack.c.l.b16 %v2781
  %v3709 = vunpack.c.h.b16 %v2781
  %v3710 = vunpack.c.l.b16 %v2782
  %v3711 = vunpack.c.h.b16 %v2782
  %v3712 = vunpack.c.l.b16 %v2783
  %v3713 = vunpack.c.h.b16 %v2783
  %v3714 = vunpack.c.l.b16 %v2784
  %v3715 = vunpack.c.h.b16 %v2784
  %v3716 = vunpack.c.l.b16 %v2785
  %v3717 = vunpack.c.h.b16 %v2785
  %v3718 = vunpack.c.l.b16 %v2786
  %v3719 = vunpack.c.h.b16 %v2786
  %v3720 = vunpack.c.l.b16 %v2787
  %v3721 = vunpack.c.h.b16 %v2787
  %v3722 = vunpack.c.l.b16 %v2788
  %v3723 = vunpack.c.h.b16 %v2788
  %v3724 = vunpack.c.l.b16 %v2789
  %v3725 = vunpack.c.h.b16 %v2789
  %v3726 = vunpack.c.l.b16 %v2790
  %v3727 = vunpack.c.h.b16 %v2790
  %v3728 = vunpack.c.l.b16 %v2791
  %v3729 = vunpack.c.h.b16 %v2791
  %v3730 = vunpack.c.l.b16 %v2792
  %v3731 = vunpack.c.h.b16 %v2792
  %v3732 = vunpack.c.l.b16 %v2793
  %v3733 = vunpack.c.h.b16 %v2793
  %v3734 = vunpack.c.l.b16 %v2794
  %v3735 = vunpack.c.h.b16 %v2794
  %v3736 = vunpack.c.l.b16 %v2795
  %v3737 = vunpack.c.h.b16 %v2795
  %v3738 = vunpack.c.l.b16 %v2796
  %v3739 = vunpack.c.h.b16 %v2796
  %v3740 = vunpack.c.l.b16 %v2797
  %v3741 = vunpack.c.h.b16 %v2797
  %v3742 = vunpack.c.l.b16 %v2798
  %v3743 = vunpack.c.h.b16 %v2798
  %v3744 = vunpack.c.l.b16 %v2799
  %v3745 = vunpack.c.h.b16 %v2799
  %v3746 = vunpack.c.l.b16 %v2800
  %v3747 = vunpack.c.h.b16 %v2800
  %v3748 = vunpack.c.l.b16 %v2801
  %v3749 = vunpack.c.h.b16 %v2801
  %v3750 = vunpack.c.l.b16 %v2802
  %v3751 = vunpack.c.h.b16 %v2802
  %v3752 = vunpack.c.l.b16 %v2803
  %v3753 = vunpack.c.h.b16 %v2803
  %v3754 = vunpack.c.l.b16 %v2804
  %v3755 = vunpack.c.h.b16 %v2804
  %v3756 = vunpack.c.l.b16 %v2805
  %v3757 = vunpack.c.h.b16 %v2805
  %v3758 = vunpack.c.l.b16 %v2806
  %v3759 = vunpack.c.h.b16 %v2806
  %v3760 = vunpack.c.l.b16 %v2807
  %v3761 = vunpack.c.h.b16 %v2807
  %v3762 = vunpack.c.l.b16 %v2808
  %v3763 = vunpack.c.h.b16 %v2808
  %v3764 = vunpack.c.l.b16 %v2809
  %v3765 = vunpack.c.h.b16 %v2809
  %v3766 = vunpack.c.l.b16 %v2810
  %v3767 = vunpack.c.h.b16 %v2810
  %v3768 = vunpack.c.l.b16 %v2811
  %v3769 = vunpack.c.h.b16 %v2811
  %v3770 = vunpack.c.l.b16 %v2812
  %v3771 = vunpack.c.h.b16 %v2812
  %v3772 = vunpack.c.l.b16 %v2813
  %v3773 = vunpack.c.h.b16 %v2813
  %v3774 = vunpack.c.l.b16 %v2814
  %v3775 = vunpack.c.h.b16 %v2814
  %v3776 = vunpack.c.l.b16 %v2815
  %v3777 = vunpack.c.h.b16 %v2815
  %v3778 = vunpack.c.l.b16 %v2816
  %v3779 = vunpack.c.h.b16 %v2816
  %v3780 = vunpack.c.l.b16 %v2817
  %v3781 = vunpack.c.h.b16 %v2817
  %v3782 = vunpack.c.l.b16 %v2818
  %v3783 = vunpack.c.h.b16 %v2818
  %v3784 = vunpack.c.l.b16 %v2819
  %v3785 = vunpack.c.h.b16 %v2819
  %v3786 = vunpack.c.l.b16 %v2820
  %v3787 = vunpack.c.h.b16 %v2820
  %v3788 = vunpack.c.l.b16 %v2821
  %v3789 = vunpack.c.h.b16 %v2821
  %v3790 = vunpack.c.l.b16 %v2822
  %v3791 = vunpack.c.h.b16 %v2822
  %v3792 = vunpack.c.l.b16 %v2823
  %v3793 = vunpack.c.h.b16 %v2823
  %v3794 = vunpack.c.l.b16 %v2824
  %v3795 = vunpack.c.h.b16 %v2824
  %v3796 = vunpack.c.l.b16 %v2825
  %v3797 = vunpack.c.h.b16 %v2825
  %v3798 = vunpack.c.l.b16 %v2826
  %v3799 = vunpack.c.h.b16 %v2826
  %v3800 = vunpack.c.l.b16 %v2827
  %v3801 = vunpack.c.h.b16 %v2827
  %v3802 = vunpack.c.l.b16 %v2828
  %v3803 = vunpack.c.h.b16 %v2828
  %v3804 = vunpack.c.l.b16 %v2829
  %v3805 = vunpack.c.h.b16 %v2829
  %v3806 = vunpack.c.l.b16 %v2830
  %v3807 = vunpack.c.h.b16 %v2830
  %v3808 = vunpack.c.l.b16 %v2831
  %v3809 = vunpack.c.h.b16 %v2831
  %v3810 = vunpack.c.l.b16 %v2832
  %v3811 = vunpack.c.h.b16 %v2832
  %v3812 = vunpack.c.l.b16 %v2833
  %v3813 = vunpack.c.h.b16 %v2833
  %v3814 = vunpack.c.l.b16 %v2834
  %v3815 = vunpack.c.h.b16 %v2834
  %v3816 = vunpack.c.l.b16 %v2835
  %v3817 = vunpack.c.h.b16 %v2835
  %v3818 = vunpack.c.l.b16 %v2836
  %v3819 = vunpack.c.h.b16 %v2836
  %v3820 = vunpack.c.l.b16 %v2837
  %v3821 = vunpack.c.h.b16 %v2837
  %v3822 = vunpack.c.l.b16 %v2838
  %v3823 = vunpack.c.h.b16 %v2838
  %v3824 = vunpack.c.l.b16 %v2839
  %v3825 = vunpack.c.h.b16 %v2839
  %v3826 = vunpack.c.l.b16 %v2840
  %v3827 = vunpack.c.h.b16 %v2840
  %v3828 = vunpack.c.l.b16 %v2841
  %v3829 = vunpack.c.h.b16 %v2841
  %v3830 = vunpack.c.l.b16 %v2842
  %v3831 = vunpack.c.h.b16 %v2842
  %v3832 = vunpack.c.l.b16 %v2843
  %v3833 = vunpack.c.h.b16 %v2843
  %v3834 = vunpack.c.l.b16 %v2844
  %v3835 = vunpack.c.h.b16 %v2844
  %v3836 = vunpack.c.l.b16 %v2845
  %v3837 = vunpack.c.h.b16 %v2845
  %v3838 = vunpack.c.l.b16 %v2846
  %v3839 = vunpack.c.h.b16 %v2846
  %v3840 = vunpack.c.l.b16 %v2847
  %v3841 = vunpack.c.h.b16 %v2847
  %v3842 = vunpack.c.l.b16 %v2848
  %v3843 = vunpack.c.h.b16 %v2848
  %v3844 = vunpack.c.l.b16 %v2849
  %v3845 = vunpack.c.h.b16 %v2849
  %v3846 = vunpack.c.l.b16 %v2850
  %v3847 = vunpack.c.h.b16 %v2850
  %v3848 = vunpack.c.l.b16 %v2851
  %v3849 = vunpack.c.h.b16 %v2851
  %v3850 = vunpack.c.l.b16 %v2852
  %v3851 = vunpack.c.h.b16 %v2852
  %v3852 = vunpack.c.l.b16 %v2853
  %v3853 = vunpack.c.h.b16 %v2853
  %v3854 = vunpack.c.l.b16 %v2854
  %v3855 = vunpack.c.h.b16 %v2854
  %v3856 = vunpack.c.l.b16 %v2855
  %v3857 = vunpack.c.h.b16 %v2855
  %v3858 = vunpack.c.l.b16 %v2856
  %v3859 = vunpack.c.h.b16 %v2856
  %v3860 = vunpack.c.l.b16 %v2857
  %v3861 = vunpack.c.h.b16 %v2857
  %v3862 = vunpack.c.l.b16 %v2858
  %v3863 = vunpack.c.h.b16 %v2858
  %v3864 = vunpack.c.l.b16 %v2859
  %v3865 = vunpack.c.h.b16 %v2859
  %v3866 = vunpack.c.l.b16 %v2860
  %v3867 = vunpack.c.h.b16 %v2860
  %v3868 = vunpack.c.l.b16 %v2861
  %v3869 = vunpack.c.h.b16 %v2861
  %v3870 = vunpack.c.l.b16 %v2862
  %v3871 = vunpack.c.h.b16 %v2862
  %v3872 = vunpack.c.l.b16 %v2863
  %v3873 = vunpack.c.h.b16 %v2863
  %v3874 = vunpack.c.l.b16 %v2864
  %v3875 = vunpack.c.h.b16 %v2864
  %v3876 = vunpack.c.l.b16 %v2865
  %v3877 = vunpack.c.h.b16 %v2865
  %v3878 = vunpack.c.l.b16 %v2866
  %v3879 = vunpack.c.h.b16 %v2866
  %v3880 = vunpack.c.l.b16 %v2867
  %v3881 = vunpack.c.h.b16 %v2867
  %v3882 = vunpack.c.l.b16 %v2868
  %v3883 = vunpack.c.h.b16 %v2868
  %v3884 = vunpack.c.l.b16 %v2869
  %v3885 = vunpack.c.h.b16 %v2869
  %v3886 = vunpack.c.l.b16 %v2870
  %v3887 = vunpack.c.h.b16 %v2870
  %v3888 = vunpack.c.l.b16 %v2871
  %v3889 = vunpack.c.h.b16 %v2871
  %v3890 = vunpack.c.l.b16 %v2872
  %v3891 = vunpack.c.h.b16 %v2872
  %v3892 = vunpack.c.l.b16 %v2873
  %v3893 = vunpack.c.h.b16 %v2873
  %v3894 = vunpack.c.l.b16 %v2874
  %v3895 = vunpack.c.h.b16 %v2874
  %v3896 = vunpack.c.l.b16 %v2875
  %v3897 = vunpack.c.h.b16 %v2875
  %v3898 = vunpack.c.l.b16 %v2876
  %v3899 = vunpack.c.h.b16 %v2876
  %v3900 = vunpack.c.l.b16 %v2877
  %v3901 = vunpack.c.h.b16 %v2877
  %v3902 = vunpack.c.l.b16 %v2878
  %v3903 = vunpack.c.h.b16 %v2878
  %v3904 = vunpack.c.l.b16 %v2879
  %v3905 = vunpack.c.h.b16 %v2879
  %v3906 = vunpack.c.l.b16 %v2880
  %v3907 = vunpack.c.h.b16 %v2880
  %v3908 = vunpack.c.l.b16 %v2881
  %v3909 = vunpack.c.h.b16 %v2881
  %v3910 = vlaneseq
  %v3911 = vand.u32 %v3910, 127
  %v3912 = vperm.slane %v3398, %v3911
  %v3913 = vadd.s32 %v3911, 4294967288
  %v3914 = vperm.slane %v3399, %v3913
  %vm3915 = vcmask 130112
  %v3916 = vsel %vm3915, %v3914, %v3912
  %v3917 = vadd.s32 %v3911, 4294967280
  %v3918 = vperm.slane %v3400, %v3917
  %vm3919 = vcmask 195712
  %v3920 = vsel %vm3919, %v3918, %v3916
  %v3921 = vadd.s32 %v3911, 4294967272
  %v3922 = vperm.slane %v3401, %v3921
  %vm3923 = vcmask 261312
  %v3924 = vsel %vm3923, %v3922, %v3920
  %v3925 = vadd.s32 %v3911, 4294967264
  %v3926 = vperm.slane %v3402, %v3925
  %vm3927 = vcmask 326912
  %v3928 = vsel %vm3927, %v3926, %v3924
  %v3929 = vadd.s32 %v3911, 4294967256
  %v3930 = vperm.slane %v3403, %v3929
  %vm3931 = vcmask 392512
  %v3932 = vsel %vm3931, %v3930, %v3928
  %v3933 = vadd.s32 %v3911, 4294967248
  %v3934 = vperm.slane %v3404, %v3933
  %vm3935 = vcmask 458112
  %v3936 = vsel %vm3935, %v3934, %v3932
  %v3937 = vadd.s32 %v3911, 4294967240
  %v3938 = vperm.slane %v3405, %v3937
  %vm3939 = vcmask 523712
  %v3940 = vsel %vm3939, %v3938, %v3936
  %v3941 = vadd.s32 %v3911, 4294967232
  %v3942 = vperm.slane %v3406, %v3941
  %vm3943 = vcmask 589312
  %v3944 = vsel %vm3943, %v3942, %v3940
  %v3945 = vadd.s32 %v3911, 4294967224
  %v3946 = vperm.slane %v3407, %v3945
  %vm3947 = vcmask 654912
  %v3948 = vsel %vm3947, %v3946, %v3944
  %v3949 = vadd.s32 %v3911, 4294967216
  %v3950 = vperm.slane %v3408, %v3949
  %vm3951 = vcmask 720512
  %v3952 = vsel %vm3951, %v3950, %v3948
  %v3953 = vadd.s32 %v3911, 4294967208
  %v3954 = vperm.slane %v3409, %v3953
  %vm3955 = vcmask 786112
  %v3956 = vsel %vm3955, %v3954, %v3952
  %v3957 = vadd.s32 %v3911, 4294967200
  %v3958 = vperm.slane %v3410, %v3957
  %vm3959 = vcmask 851712
  %v3960 = vsel %vm3959, %v3958, %v3956
  %v3961 = vadd.s32 %v3911, 4294967192
  %v3962 = vperm.slane %v3411, %v3961
  %vm3963 = vcmask 917312
  %v3964 = vsel %vm3963, %v3962, %v3960
  %v3965 = vadd.s32 %v3911, 4294967184
  %v3966 = vperm.slane %v3412, %v3965
  %vm3967 = vcmask 982912
  %v3968 = vsel %vm3967, %v3966, %v3964
  %v3969 = vadd.s32 %v3911, 4294967176
  %v3970 = vperm.slane %v3413, %v3969
  %vm3971 = vcmask 1048512
  %v3972 = vsel %vm3971, %v3970, %v3968
  %v3973 = vperm.slane %v3414, %v3911
  %v3974 = vperm.slane %v3415, %v3913
  %v3975 = vsel %vm3915, %v3974, %v3973
  %v3976 = vperm.slane %v3416, %v3917
  %v3977 = vsel %vm3919, %v3976, %v3975
  %v3978 = vperm.slane %v3417, %v3921
  %v3979 = vsel %vm3923, %v3978, %v3977
  %v3980 = vperm.slane %v3418, %v3925
  %v3981 = vsel %vm3927, %v3980, %v3979
  %v3982 = vperm.slane %v3419, %v3929
  %v3983 = vsel %vm3931, %v3982, %v3981
  %v3984 = vperm.slane %v3420, %v3933
  %v3985 = vsel %vm3935, %v3984, %v3983
  %v3986 = vperm.slane %v3421, %v3937
  %v3987 = vsel %vm3939, %v3986, %v3985
  %v3988 = vperm.slane %v3422, %v3941
  %v3989 = vsel %vm3943, %v3988, %v3987
  %v3990 = vperm.slane %v3423, %v3945
  %v3991 = vsel %vm3947, %v3990, %v3989
  %v3992 = vperm.slane %v3424, %v3949
  %v3993 = vsel %vm3951, %v3992, %v3991
  %v3994 = vperm.slane %v3425, %v3953
  %v3995 = vsel %vm3955, %v3994, %v3993
  %v3996 = vperm.slane %v3426, %v3957
  %v3997 = vsel %vm3959, %v3996, %v3995
  %v3998 = vperm.slane %v3427, %v3961
  %v3999 = vsel %vm3963, %v3998, %v3997
  %v4000 = vperm.slane %v3428, %v3965
  %v4001 = vsel %vm3967, %v4000, %v3999
  %v4002 = vperm.slane %v3429, %v3969
  %v4003 = vsel %vm3971, %v4002, %v4001
  %v4004 = vperm.slane %v3430, %v3911
  %v4005 = vperm.slane %v3431, %v3913
  %v4006 = vsel %vm3915, %v4005, %v4004
  %v4007 = vperm.slane %v3432, %v3917
  %v4008 = vsel %vm3919, %v4007, %v4006
  %v4009 = vperm.slane %v3433, %v3921
  %v4010 = vsel %vm3923, %v4009, %v4008
  %v4011 = vperm.slane %v3434, %v3925
  %v4012 = vsel %vm3927, %v4011, %v4010
  %v4013 = vperm.slane %v3435, %v3929
  %v4014 = vsel %vm3931, %v4013, %v4012
  %v4015 = vperm.slane %v3436, %v3933
  %v4016 = vsel %vm3935, %v4015, %v4014
  %v4017 = vperm.slane %v3437, %v3937
  %v4018 = vsel %vm3939, %v4017, %v4016
  %v4019 = vperm.slane %v3438, %v3941
  %v4020 = vsel %vm3943, %v4019, %v4018
  %v4021 = vperm.slane %v3439, %v3945
  %v4022 = vsel %vm3947, %v4021, %v4020
  %v4023 = vperm.slane %v3440, %v3949
  %v4024 = vsel %vm3951, %v4023, %v4022
  %v4025 = vperm.slane %v3441, %v3953
  %v4026 = vsel %vm3955, %v4025, %v4024
  %v4027 = vperm.slane %v3442, %v3957
  %v4028 = vsel %vm3959, %v4027, %v4026
  %v4029 = vperm.slane %v3443, %v3961
  %v4030 = vsel %vm3963, %v4029, %v4028
  %v4031 = vperm.slane %v3444, %v3965
  %v4032 = vsel %vm3967, %v4031, %v4030
  %v4033 = vperm.slane %v3445, %v3969
  %v4034 = vsel %vm3971, %v4033, %v4032
  %v4035 = vperm.slane %v3446, %v3911
  %v4036 = vperm.slane %v3447, %v3913
  %v4037 = vsel %vm3915, %v4036, %v4035
  %v4038 = vperm.slane %v3448, %v3917
  %v4039 = vsel %vm3919, %v4038, %v4037
  %v4040 = vperm.slane %v3449, %v3921
  %v4041 = vsel %vm3923, %v4040, %v4039
  %v4042 = vperm.slane %v3450, %v3925
  %v4043 = vsel %vm3927, %v4042, %v4041
  %v4044 = vperm.slane %v3451, %v3929
  %v4045 = vsel %vm3931, %v4044, %v4043
  %v4046 = vperm.slane %v3452, %v3933
  %v4047 = vsel %vm3935, %v4046, %v4045
  %v4048 = vperm.slane %v3453, %v3937
  %v4049 = vsel %vm3939, %v4048, %v4047
  %v4050 = vperm.slane %v3454, %v3941
  %v4051 = vsel %vm3943, %v4050, %v4049
  %v4052 = vperm.slane %v3455, %v3945
  %v4053 = vsel %vm3947, %v4052, %v4051
  %v4054 = vperm.slane %v3456, %v3949
  %v4055 = vsel %vm3951, %v4054, %v4053
  %v4056 = vperm.slane %v3457, %v3953
  %v4057 = vsel %vm3955, %v4056, %v4055
  %v4058 = vperm.slane %v3458, %v3957
  %v4059 = vsel %vm3959, %v4058, %v4057
  %v4060 = vperm.slane %v3459, %v3961
  %v4061 = vsel %vm3963, %v4060, %v4059
  %v4062 = vperm.slane %v3460, %v3965
  %v4063 = vsel %vm3967, %v4062, %v4061
  %v4064 = vperm.slane %v3461, %v3969
  %v4065 = vsel %vm3971, %v4064, %v4063
  %v4066 = vperm.slane %v3462, %v3911
  %v4067 = vperm.slane %v3463, %v3913
  %v4068 = vsel %vm3915, %v4067, %v4066
  %v4069 = vperm.slane %v3464, %v3917
  %v4070 = vsel %vm3919, %v4069, %v4068
  %v4071 = vperm.slane %v3465, %v3921
  %v4072 = vsel %vm3923, %v4071, %v4070
  %v4073 = vperm.slane %v3466, %v3925
  %v4074 = vsel %vm3927, %v4073, %v4072
  %v4075 = vperm.slane %v3467, %v3929
  %v4076 = vsel %vm3931, %v4075, %v4074
  %v4077 = vperm.slane %v3468, %v3933
  %v4078 = vsel %vm3935, %v4077, %v4076
  %v4079 = vperm.slane %v3469, %v3937
  %v4080 = vsel %vm3939, %v4079, %v4078
  %v4081 = vperm.slane %v3470, %v3941
  %v4082 = vsel %vm3943, %v4081, %v4080
  %v4083 = vperm.slane %v3471, %v3945
  %v4084 = vsel %vm3947, %v4083, %v4082
  %v4085 = vperm.slane %v3472, %v3949
  %v4086 = vsel %vm3951, %v4085, %v4084
  %v4087 = vperm.slane %v3473, %v3953
  %v4088 = vsel %vm3955, %v4087, %v4086
  %v4089 = vperm.slane %v3474, %v3957
  %v4090 = vsel %vm3959, %v4089, %v4088
  %v4091 = vperm.slane %v3475, %v3961
  %v4092 = vsel %vm3963, %v4091, %v4090
  %v4093 = vperm.slane %v3476, %v3965
  %v4094 = vsel %vm3967, %v4093, %v4092
  %v4095 = vperm.slane %v3477, %v3969
  %v4096 = vsel %vm3971, %v4095, %v4094
  %v4097 = vperm.slane %v3478, %v3911
  %v4098 = vperm.slane %v3479, %v3913
  %v4099 = vsel %vm3915, %v4098, %v4097
  %v4100 = vperm.slane %v3480, %v3917
  %v4101 = vsel %vm3919, %v4100, %v4099
  %v4102 = vperm.slane %v3481, %v3921
  %v4103 = vsel %vm3923, %v4102, %v4101
  %v4104 = vperm.slane %v3482, %v3925
  %v4105 = vsel %vm3927, %v4104, %v4103
  %v4106 = vperm.slane %v3483, %v3929
  %v4107 = vsel %vm3931, %v4106, %v4105
  %v4108 = vperm.slane %v3484, %v3933
  %v4109 = vsel %vm3935, %v4108, %v4107
  %v4110 = vperm.slane %v3485, %v3937
  %v4111 = vsel %vm3939, %v4110, %v4109
  %v4112 = vperm.slane %v3486, %v3941
  %v4113 = vsel %vm3943, %v4112, %v4111
  %v4114 = vperm.slane %v3487, %v3945
  %v4115 = vsel %vm3947, %v4114, %v4113
  %v4116 = vperm.slane %v3488, %v3949
  %v4117 = vsel %vm3951, %v4116, %v4115
  %v4118 = vperm.slane %v3489, %v3953
  %v4119 = vsel %vm3955, %v4118, %v4117
  %v4120 = vperm.slane %v3490, %v3957
  %v4121 = vsel %vm3959, %v4120, %v4119
  %v4122 = vperm.slane %v3491, %v3961
  %v4123 = vsel %vm3963, %v4122, %v4121
  %v4124 = vperm.slane %v3492, %v3965
  %v4125 = vsel %vm3967, %v4124, %v4123
  %v4126 = vperm.slane %v3493, %v3969
  %v4127 = vsel %vm3971, %v4126, %v4125
  %v4128 = vperm.slane %v3494, %v3911
  %v4129 = vperm.slane %v3495, %v3913
  %v4130 = vsel %vm3915, %v4129, %v4128
  %v4131 = vperm.slane %v3496, %v3917
  %v4132 = vsel %vm3919, %v4131, %v4130
  %v4133 = vperm.slane %v3497, %v3921
  %v4134 = vsel %vm3923, %v4133, %v4132
  %v4135 = vperm.slane %v3498, %v3925
  %v4136 = vsel %vm3927, %v4135, %v4134
  %v4137 = vperm.slane %v3499, %v3929
  %v4138 = vsel %vm3931, %v4137, %v4136
  %v4139 = vperm.slane %v3500, %v3933
  %v4140 = vsel %vm3935, %v4139, %v4138
  %v4141 = vperm.slane %v3501, %v3937
  %v4142 = vsel %vm3939, %v4141, %v4140
  %v4143 = vperm.slane %v3502, %v3941
  %v4144 = vsel %vm3943, %v4143, %v4142
  %v4145 = vperm.slane %v3503, %v3945
  %v4146 = vsel %vm3947, %v4145, %v4144
  %v4147 = vperm.slane %v3504, %v3949
  %v4148 = vsel %vm3951, %v4147, %v4146
  %v4149 = vperm.slane %v3505, %v3953
  %v4150 = vsel %vm3955, %v4149, %v4148
  %v4151 = vperm.slane %v3506, %v3957
  %v4152 = vsel %vm3959, %v4151, %v4150
  %v4153 = vperm.slane %v3507, %v3961
  %v4154 = vsel %vm3963, %v4153, %v4152
  %v4155 = vperm.slane %v3508, %v3965
  %v4156 = vsel %vm3967, %v4155, %v4154
  %v4157 = vperm.slane %v3509, %v3969
  %v4158 = vsel %vm3971, %v4157, %v4156
  %v4159 = vperm.slane %v3510, %v3911
  %v4160 = vperm.slane %v3511, %v3913
  %v4161 = vsel %vm3915, %v4160, %v4159
  %v4162 = vperm.slane %v3512, %v3917
  %v4163 = vsel %vm3919, %v4162, %v4161
  %v4164 = vperm.slane %v3513, %v3921
  %v4165 = vsel %vm3923, %v4164, %v4163
  %v4166 = vperm.slane %v3514, %v3925
  %v4167 = vsel %vm3927, %v4166, %v4165
  %v4168 = vperm.slane %v3515, %v3929
  %v4169 = vsel %vm3931, %v4168, %v4167
  %v4170 = vperm.slane %v3516, %v3933
  %v4171 = vsel %vm3935, %v4170, %v4169
  %v4172 = vperm.slane %v3517, %v3937
  %v4173 = vsel %vm3939, %v4172, %v4171
  %v4174 = vperm.slane %v3518, %v3941
  %v4175 = vsel %vm3943, %v4174, %v4173
  %v4176 = vperm.slane %v3519, %v3945
  %v4177 = vsel %vm3947, %v4176, %v4175
  %v4178 = vperm.slane %v3520, %v3949
  %v4179 = vsel %vm3951, %v4178, %v4177
  %v4180 = vperm.slane %v3521, %v3953
  %v4181 = vsel %vm3955, %v4180, %v4179
  %v4182 = vperm.slane %v3522, %v3957
  %v4183 = vsel %vm3959, %v4182, %v4181
  %v4184 = vperm.slane %v3523, %v3961
  %v4185 = vsel %vm3963, %v4184, %v4183
  %v4186 = vperm.slane %v3524, %v3965
  %v4187 = vsel %vm3967, %v4186, %v4185
  %v4188 = vperm.slane %v3525, %v3969
  %v4189 = vsel %vm3971, %v4188, %v4187
  %v4190 = vperm.slane %v3526, %v3911
  %v4191 = vperm.slane %v3527, %v3913
  %v4192 = vsel %vm3915, %v4191, %v4190
  %v4193 = vperm.slane %v3528, %v3917
  %v4194 = vsel %vm3919, %v4193, %v4192
  %v4195 = vperm.slane %v3529, %v3921
  %v4196 = vsel %vm3923, %v4195, %v4194
  %v4197 = vperm.slane %v3530, %v3925
  %v4198 = vsel %vm3927, %v4197, %v4196
  %v4199 = vperm.slane %v3531, %v3929
  %v4200 = vsel %vm3931, %v4199, %v4198
  %v4201 = vperm.slane %v3532, %v3933
  %v4202 = vsel %vm3935, %v4201, %v4200
  %v4203 = vperm.slane %v3533, %v3937
  %v4204 = vsel %vm3939, %v4203, %v4202
  %v4205 = vperm.slane %v3534, %v3941
  %v4206 = vsel %vm3943, %v4205, %v4204
  %v4207 = vperm.slane %v3535, %v3945
  %v4208 = vsel %vm3947, %v4207, %v4206
  %v4209 = vperm.slane %v3536, %v3949
  %v4210 = vsel %vm3951, %v4209, %v4208
  %v4211 = vperm.slane %v3537, %v3953
  %v4212 = vsel %vm3955, %v4211, %v4210
  %v4213 = vperm.slane %v3538, %v3957
  %v4214 = vsel %vm3959, %v4213, %v4212
  %v4215 = vperm.slane %v3539, %v3961
  %v4216 = vsel %vm3963, %v4215, %v4214
  %v4217 = vperm.slane %v3540, %v3965
  %v4218 = vsel %vm3967, %v4217, %v4216
  %v4219 = vperm.slane %v3541, %v3969
  %v4220 = vsel %vm3971, %v4219, %v4218
  %v4221 = vperm.slane %v3542, %v3911
  %v4222 = vperm.slane %v3543, %v3913
  %v4223 = vsel %vm3915, %v4222, %v4221
  %v4224 = vperm.slane %v3544, %v3917
  %v4225 = vsel %vm3919, %v4224, %v4223
  %v4226 = vperm.slane %v3545, %v3921
  %v4227 = vsel %vm3923, %v4226, %v4225
  %v4228 = vperm.slane %v3546, %v3925
  %v4229 = vsel %vm3927, %v4228, %v4227
  %v4230 = vperm.slane %v3547, %v3929
  %v4231 = vsel %vm3931, %v4230, %v4229
  %v4232 = vperm.slane %v3548, %v3933
  %v4233 = vsel %vm3935, %v4232, %v4231
  %v4234 = vperm.slane %v3549, %v3937
  %v4235 = vsel %vm3939, %v4234, %v4233
  %v4236 = vperm.slane %v3550, %v3941
  %v4237 = vsel %vm3943, %v4236, %v4235
  %v4238 = vperm.slane %v3551, %v3945
  %v4239 = vsel %vm3947, %v4238, %v4237
  %v4240 = vperm.slane %v3552, %v3949
  %v4241 = vsel %vm3951, %v4240, %v4239
  %v4242 = vperm.slane %v3553, %v3953
  %v4243 = vsel %vm3955, %v4242, %v4241
  %v4244 = vperm.slane %v3554, %v3957
  %v4245 = vsel %vm3959, %v4244, %v4243
  %v4246 = vperm.slane %v3555, %v3961
  %v4247 = vsel %vm3963, %v4246, %v4245
  %v4248 = vperm.slane %v3556, %v3965
  %v4249 = vsel %vm3967, %v4248, %v4247
  %v4250 = vperm.slane %v3557, %v3969
  %v4251 = vsel %vm3971, %v4250, %v4249
  %v4252 = vperm.slane %v3558, %v3911
  %v4253 = vperm.slane %v3559, %v3913
  %v4254 = vsel %vm3915, %v4253, %v4252
  %v4255 = vperm.slane %v3560, %v3917
  %v4256 = vsel %vm3919, %v4255, %v4254
  %v4257 = vperm.slane %v3561, %v3921
  %v4258 = vsel %vm3923, %v4257, %v4256
  %v4259 = vperm.slane %v3562, %v3925
  %v4260 = vsel %vm3927, %v4259, %v4258
  %v4261 = vperm.slane %v3563, %v3929
  %v4262 = vsel %vm3931, %v4261, %v4260
  %v4263 = vperm.slane %v3564, %v3933
  %v4264 = vsel %vm3935, %v4263, %v4262
  %v4265 = vperm.slane %v3565, %v3937
  %v4266 = vsel %vm3939, %v4265, %v4264
  %v4267 = vperm.slane %v3566, %v3941
  %v4268 = vsel %vm3943, %v4267, %v4266
  %v4269 = vperm.slane %v3567, %v3945
  %v4270 = vsel %vm3947, %v4269, %v4268
  %v4271 = vperm.slane %v3568, %v3949
  %v4272 = vsel %vm3951, %v4271, %v4270
  %v4273 = vperm.slane %v3569, %v3953
  %v4274 = vsel %vm3955, %v4273, %v4272
  %v4275 = vperm.slane %v3570, %v3957
  %v4276 = vsel %vm3959, %v4275, %v4274
  %v4277 = vperm.slane %v3571, %v3961
  %v4278 = vsel %vm3963, %v4277, %v4276
  %v4279 = vperm.slane %v3572, %v3965
  %v4280 = vsel %vm3967, %v4279, %v4278
  %v4281 = vperm.slane %v3573, %v3969
  %v4282 = vsel %vm3971, %v4281, %v4280
  %v4283 = vperm.slane %v3574, %v3911
  %v4284 = vperm.slane %v3575, %v3913
  %v4285 = vsel %vm3915, %v4284, %v4283
  %v4286 = vperm.slane %v3576, %v3917
  %v4287 = vsel %vm3919, %v4286, %v4285
  %v4288 = vperm.slane %v3577, %v3921
  %v4289 = vsel %vm3923, %v4288, %v4287
  %v4290 = vperm.slane %v3578, %v3925
  %v4291 = vsel %vm3927, %v4290, %v4289
  %v4292 = vperm.slane %v3579, %v3929
  %v4293 = vsel %vm3931, %v4292, %v4291
  %v4294 = vperm.slane %v3580, %v3933
  %v4295 = vsel %vm3935, %v4294, %v4293
  %v4296 = vperm.slane %v3581, %v3937
  %v4297 = vsel %vm3939, %v4296, %v4295
  %v4298 = vperm.slane %v3582, %v3941
  %v4299 = vsel %vm3943, %v4298, %v4297
  %v4300 = vperm.slane %v3583, %v3945
  %v4301 = vsel %vm3947, %v4300, %v4299
  %v4302 = vperm.slane %v3584, %v3949
  %v4303 = vsel %vm3951, %v4302, %v4301
  %v4304 = vperm.slane %v3585, %v3953
  %v4305 = vsel %vm3955, %v4304, %v4303
  %v4306 = vperm.slane %v3586, %v3957
  %v4307 = vsel %vm3959, %v4306, %v4305
  %v4308 = vperm.slane %v3587, %v3961
  %v4309 = vsel %vm3963, %v4308, %v4307
  %v4310 = vperm.slane %v3588, %v3965
  %v4311 = vsel %vm3967, %v4310, %v4309
  %v4312 = vperm.slane %v3589, %v3969
  %v4313 = vsel %vm3971, %v4312, %v4311
  %v4314 = vperm.slane %v3590, %v3911
  %v4315 = vperm.slane %v3591, %v3913
  %v4316 = vsel %vm3915, %v4315, %v4314
  %v4317 = vperm.slane %v3592, %v3917
  %v4318 = vsel %vm3919, %v4317, %v4316
  %v4319 = vperm.slane %v3593, %v3921
  %v4320 = vsel %vm3923, %v4319, %v4318
  %v4321 = vperm.slane %v3594, %v3925
  %v4322 = vsel %vm3927, %v4321, %v4320
  %v4323 = vperm.slane %v3595, %v3929
  %v4324 = vsel %vm3931, %v4323, %v4322
  %v4325 = vperm.slane %v3596, %v3933
  %v4326 = vsel %vm3935, %v4325, %v4324
  %v4327 = vperm.slane %v3597, %v3937
  %v4328 = vsel %vm3939, %v4327, %v4326
  %v4329 = vperm.slane %v3598, %v3941
  %v4330 = vsel %vm3943, %v4329, %v4328
  %v4331 = vperm.slane %v3599, %v3945
  %v4332 = vsel %vm3947, %v4331, %v4330
  %v4333 = vperm.slane %v3600, %v3949
  %v4334 = vsel %vm3951, %v4333, %v4332
  %v4335 = vperm.slane %v3601, %v3953
  %v4336 = vsel %vm3955, %v4335, %v4334
  %v4337 = vperm.slane %v3602, %v3957
  %v4338 = vsel %vm3959, %v4337, %v4336
  %v4339 = vperm.slane %v3603, %v3961
  %v4340 = vsel %vm3963, %v4339, %v4338
  %v4341 = vperm.slane %v3604, %v3965
  %v4342 = vsel %vm3967, %v4341, %v4340
  %v4343 = vperm.slane %v3605, %v3969
  %v4344 = vsel %vm3971, %v4343, %v4342
  %v4345 = vperm.slane %v3606, %v3911
  %v4346 = vperm.slane %v3607, %v3913
  %v4347 = vsel %vm3915, %v4346, %v4345
  %v4348 = vperm.slane %v3608, %v3917
  %v4349 = vsel %vm3919, %v4348, %v4347
  %v4350 = vperm.slane %v3609, %v3921
  %v4351 = vsel %vm3923, %v4350, %v4349
  %v4352 = vperm.slane %v3610, %v3925
  %v4353 = vsel %vm3927, %v4352, %v4351
  %v4354 = vperm.slane %v3611, %v3929
  %v4355 = vsel %vm3931, %v4354, %v4353
  %v4356 = vperm.slane %v3612, %v3933
  %v4357 = vsel %vm3935, %v4356, %v4355
  %v4358 = vperm.slane %v3613, %v3937
  %v4359 = vsel %vm3939, %v4358, %v4357
  %v4360 = vperm.slane %v3614, %v3941
  %v4361 = vsel %vm3943, %v4360, %v4359
  %v4362 = vperm.slane %v3615, %v3945
  %v4363 = vsel %vm3947, %v4362, %v4361
  %v4364 = vperm.slane %v3616, %v3949
  %v4365 = vsel %vm3951, %v4364, %v4363
  %v4366 = vperm.slane %v3617, %v3953
  %v4367 = vsel %vm3955, %v4366, %v4365
  %v4368 = vperm.slane %v3618, %v3957
  %v4369 = vsel %vm3959, %v4368, %v4367
  %v4370 = vperm.slane %v3619, %v3961
  %v4371 = vsel %vm3963, %v4370, %v4369
  %v4372 = vperm.slane %v3620, %v3965
  %v4373 = vsel %vm3967, %v4372, %v4371
  %v4374 = vperm.slane %v3621, %v3969
  %v4375 = vsel %vm3971, %v4374, %v4373
  %v4376 = vperm.slane %v3622, %v3911
  %v4377 = vperm.slane %v3623, %v3913
  %v4378 = vsel %vm3915, %v4377, %v4376
  %v4379 = vperm.slane %v3624, %v3917
  %v4380 = vsel %vm3919, %v4379, %v4378
  %v4381 = vperm.slane %v3625, %v3921
  %v4382 = vsel %vm3923, %v4381, %v4380
  %v4383 = vperm.slane %v3626, %v3925
  %v4384 = vsel %vm3927, %v4383, %v4382
  %v4385 = vperm.slane %v3627, %v3929
  %v4386 = vsel %vm3931, %v4385, %v4384
  %v4387 = vperm.slane %v3628, %v3933
  %v4388 = vsel %vm3935, %v4387, %v4386
  %v4389 = vperm.slane %v3629, %v3937
  %v4390 = vsel %vm3939, %v4389, %v4388
  %v4391 = vperm.slane %v3630, %v3941
  %v4392 = vsel %vm3943, %v4391, %v4390
  %v4393 = vperm.slane %v3631, %v3945
  %v4394 = vsel %vm3947, %v4393, %v4392
  %v4395 = vperm.slane %v3632, %v3949
  %v4396 = vsel %vm3951, %v4395, %v4394
  %v4397 = vperm.slane %v3633, %v3953
  %v4398 = vsel %vm3955, %v4397, %v4396
  %v4399 = vperm.slane %v3634, %v3957
  %v4400 = vsel %vm3959, %v4399, %v4398
  %v4401 = vperm.slane %v3635, %v3961
  %v4402 = vsel %vm3963, %v4401, %v4400
  %v4403 = vperm.slane %v3636, %v3965
  %v4404 = vsel %vm3967, %v4403, %v4402
  %v4405 = vperm.slane %v3637, %v3969
  %v4406 = vsel %vm3971, %v4405, %v4404
  %v4407 = vperm.slane %v3638, %v3911
  %v4408 = vperm.slane %v3639, %v3913
  %v4409 = vsel %vm3915, %v4408, %v4407
  %v4410 = vperm.slane %v3640, %v3917
  %v4411 = vsel %vm3919, %v4410, %v4409
  %v4412 = vperm.slane %v3641, %v3921
  %v4413 = vsel %vm3923, %v4412, %v4411
  %v4414 = vperm.slane %v3642, %v3925
  %v4415 = vsel %vm3927, %v4414, %v4413
  %v4416 = vperm.slane %v3643, %v3929
  %v4417 = vsel %vm3931, %v4416, %v4415
  %v4418 = vperm.slane %v3644, %v3933
  %v4419 = vsel %vm3935, %v4418, %v4417
  %v4420 = vperm.slane %v3645, %v3937
  %v4421 = vsel %vm3939, %v4420, %v4419
  %v4422 = vperm.slane %v3646, %v3941
  %v4423 = vsel %vm3943, %v4422, %v4421
  %v4424 = vperm.slane %v3647, %v3945
  %v4425 = vsel %vm3947, %v4424, %v4423
  %v4426 = vperm.slane %v3648, %v3949
  %v4427 = vsel %vm3951, %v4426, %v4425
  %v4428 = vperm.slane %v3649, %v3953
  %v4429 = vsel %vm3955, %v4428, %v4427
  %v4430 = vperm.slane %v3650, %v3957
  %v4431 = vsel %vm3959, %v4430, %v4429
  %v4432 = vperm.slane %v3651, %v3961
  %v4433 = vsel %vm3963, %v4432, %v4431
  %v4434 = vperm.slane %v3652, %v3965
  %v4435 = vsel %vm3967, %v4434, %v4433
  %v4436 = vperm.slane %v3653, %v3969
  %v4437 = vsel %vm3971, %v4436, %v4435
  %v4438 = vperm.slane %v3654, %v3911
  %v4439 = vperm.slane %v3655, %v3913
  %v4440 = vsel %vm3915, %v4439, %v4438
  %v4441 = vperm.slane %v3656, %v3917
  %v4442 = vsel %vm3919, %v4441, %v4440
  %v4443 = vperm.slane %v3657, %v3921
  %v4444 = vsel %vm3923, %v4443, %v4442
  %v4445 = vperm.slane %v3658, %v3925
  %v4446 = vsel %vm3927, %v4445, %v4444
  %v4447 = vperm.slane %v3659, %v3929
  %v4448 = vsel %vm3931, %v4447, %v4446
  %v4449 = vperm.slane %v3660, %v3933
  %v4450 = vsel %vm3935, %v4449, %v4448
  %v4451 = vperm.slane %v3661, %v3937
  %v4452 = vsel %vm3939, %v4451, %v4450
  %v4453 = vperm.slane %v3662, %v3941
  %v4454 = vsel %vm3943, %v4453, %v4452
  %v4455 = vperm.slane %v3663, %v3945
  %v4456 = vsel %vm3947, %v4455, %v4454
  %v4457 = vperm.slane %v3664, %v3949
  %v4458 = vsel %vm3951, %v4457, %v4456
  %v4459 = vperm.slane %v3665, %v3953
  %v4460 = vsel %vm3955, %v4459, %v4458
  %v4461 = vperm.slane %v3666, %v3957
  %v4462 = vsel %vm3959, %v4461, %v4460
  %v4463 = vperm.slane %v3667, %v3961
  %v4464 = vsel %vm3963, %v4463, %v4462
  %v4465 = vperm.slane %v3668, %v3965
  %v4466 = vsel %vm3967, %v4465, %v4464
  %v4467 = vperm.slane %v3669, %v3969
  %v4468 = vsel %vm3971, %v4467, %v4466
  %v4469 = vperm.slane %v3670, %v3911
  %v4470 = vperm.slane %v3671, %v3913
  %v4471 = vsel %vm3915, %v4470, %v4469
  %v4472 = vperm.slane %v3672, %v3917
  %v4473 = vsel %vm3919, %v4472, %v4471
  %v4474 = vperm.slane %v3673, %v3921
  %v4475 = vsel %vm3923, %v4474, %v4473
  %v4476 = vperm.slane %v3674, %v3925
  %v4477 = vsel %vm3927, %v4476, %v4475
  %v4478 = vperm.slane %v3675, %v3929
  %v4479 = vsel %vm3931, %v4478, %v4477
  %v4480 = vperm.slane %v3676, %v3933
  %v4481 = vsel %vm3935, %v4480, %v4479
  %v4482 = vperm.slane %v3677, %v3937
  %v4483 = vsel %vm3939, %v4482, %v4481
  %v4484 = vperm.slane %v3678, %v3941
  %v4485 = vsel %vm3943, %v4484, %v4483
  %v4486 = vperm.slane %v3679, %v3945
  %v4487 = vsel %vm3947, %v4486, %v4485
  %v4488 = vperm.slane %v3680, %v3949
  %v4489 = vsel %vm3951, %v4488, %v4487
  %v4490 = vperm.slane %v3681, %v3953
  %v4491 = vsel %vm3955, %v4490, %v4489
  %v4492 = vperm.slane %v3682, %v3957
  %v4493 = vsel %vm3959, %v4492, %v4491
  %v4494 = vperm.slane %v3683, %v3961
  %v4495 = vsel %vm3963, %v4494, %v4493
  %v4496 = vperm.slane %v3684, %v3965
  %v4497 = vsel %vm3967, %v4496, %v4495
  %v4498 = vperm.slane %v3685, %v3969
  %v4499 = vsel %vm3971, %v4498, %v4497
  %v4500 = vperm.slane %v3686, %v3911
  %v4501 = vperm.slane %v3687, %v3913
  %v4502 = vsel %vm3915, %v4501, %v4500
  %v4503 = vperm.slane %v3688, %v3917
  %v4504 = vsel %vm3919, %v4503, %v4502
  %v4505 = vperm.slane %v3689, %v3921
  %v4506 = vsel %vm3923, %v4505, %v4504
  %v4507 = vperm.slane %v3690, %v3925
  %v4508 = vsel %vm3927, %v4507, %v4506
  %v4509 = vperm.slane %v3691, %v3929
  %v4510 = vsel %vm3931, %v4509, %v4508
  %v4511 = vperm.slane %v3692, %v3933
  %v4512 = vsel %vm3935, %v4511, %v4510
  %v4513 = vperm.slane %v3693, %v3937
  %v4514 = vsel %vm3939, %v4513, %v4512
  %v4515 = vperm.slane %v3694, %v3941
  %v4516 = vsel %vm3943, %v4515, %v4514
  %v4517 = vperm.slane %v3695, %v3945
  %v4518 = vsel %vm3947, %v4517, %v4516
  %v4519 = vperm.slane %v3696, %v3949
  %v4520 = vsel %vm3951, %v4519, %v4518
  %v4521 = vperm.slane %v3697, %v3953
  %v4522 = vsel %vm3955, %v4521, %v4520
  %v4523 = vperm.slane %v3698, %v3957
  %v4524 = vsel %vm3959, %v4523, %v4522
  %v4525 = vperm.slane %v3699, %v3961
  %v4526 = vsel %vm3963, %v4525, %v4524
  %v4527 = vperm.slane %v3700, %v3965
  %v4528 = vsel %vm3967, %v4527, %v4526
  %v4529 = vperm.slane %v3701, %v3969
  %v4530 = vsel %vm3971, %v4529, %v4528
  %v4531 = vperm.slane %v3702, %v3911
  %v4532 = vperm.slane %v3703, %v3913
  %v4533 = vsel %vm3915, %v4532, %v4531
  %v4534 = vperm.slane %v3704, %v3917
  %v4535 = vsel %vm3919, %v4534, %v4533
  %v4536 = vperm.slane %v3705, %v3921
  %v4537 = vsel %vm3923, %v4536, %v4535
  %v4538 = vperm.slane %v3706, %v3925
  %v4539 = vsel %vm3927, %v4538, %v4537
  %v4540 = vperm.slane %v3707, %v3929
  %v4541 = vsel %vm3931, %v4540, %v4539
  %v4542 = vperm.slane %v3708, %v3933
  %v4543 = vsel %vm3935, %v4542, %v4541
  %v4544 = vperm.slane %v3709, %v3937
  %v4545 = vsel %vm3939, %v4544, %v4543
  %v4546 = vperm.slane %v3710, %v3941
  %v4547 = vsel %vm3943, %v4546, %v4545
  %v4548 = vperm.slane %v3711, %v3945
  %v4549 = vsel %vm3947, %v4548, %v4547
  %v4550 = vperm.slane %v3712, %v3949
  %v4551 = vsel %vm3951, %v4550, %v4549
  %v4552 = vperm.slane %v3713, %v3953
  %v4553 = vsel %vm3955, %v4552, %v4551
  %v4554 = vperm.slane %v3714, %v3957
  %v4555 = vsel %vm3959, %v4554, %v4553
  %v4556 = vperm.slane %v3715, %v3961
  %v4557 = vsel %vm3963, %v4556, %v4555
  %v4558 = vperm.slane %v3716, %v3965
  %v4559 = vsel %vm3967, %v4558, %v4557
  %v4560 = vperm.slane %v3717, %v3969
  %v4561 = vsel %vm3971, %v4560, %v4559
  %v4562 = vperm.slane %v3718, %v3911
  %v4563 = vperm.slane %v3719, %v3913
  %v4564 = vsel %vm3915, %v4563, %v4562
  %v4565 = vperm.slane %v3720, %v3917
  %v4566 = vsel %vm3919, %v4565, %v4564
  %v4567 = vperm.slane %v3721, %v3921
  %v4568 = vsel %vm3923, %v4567, %v4566
  %v4569 = vperm.slane %v3722, %v3925
  %v4570 = vsel %vm3927, %v4569, %v4568
  %v4571 = vperm.slane %v3723, %v3929
  %v4572 = vsel %vm3931, %v4571, %v4570
  %v4573 = vperm.slane %v3724, %v3933
  %v4574 = vsel %vm3935, %v4573, %v4572
  %v4575 = vperm.slane %v3725, %v3937
  %v4576 = vsel %vm3939, %v4575, %v4574
  %v4577 = vperm.slane %v3726, %v3941
  %v4578 = vsel %vm3943, %v4577, %v4576
  %v4579 = vperm.slane %v3727, %v3945
  %v4580 = vsel %vm3947, %v4579, %v4578
  %v4581 = vperm.slane %v3728, %v3949
  %v4582 = vsel %vm3951, %v4581, %v4580
  %v4583 = vperm.slane %v3729, %v3953
  %v4584 = vsel %vm3955, %v4583, %v4582
  %v4585 = vperm.slane %v3730, %v3957
  %v4586 = vsel %vm3959, %v4585, %v4584
  %v4587 = vperm.slane %v3731, %v3961
  %v4588 = vsel %vm3963, %v4587, %v4586
  %v4589 = vperm.slane %v3732, %v3965
  %v4590 = vsel %vm3967, %v4589, %v4588
  %v4591 = vperm.slane %v3733, %v3969
  %v4592 = vsel %vm3971, %v4591, %v4590
  %v4593 = vperm.slane %v3734, %v3911
  %v4594 = vperm.slane %v3735, %v3913
  %v4595 = vsel %vm3915, %v4594, %v4593
  %v4596 = vperm.slane %v3736, %v3917
  %v4597 = vsel %vm3919, %v4596, %v4595
  %v4598 = vperm.slane %v3737, %v3921
  %v4599 = vsel %vm3923, %v4598, %v4597
  %v4600 = vperm.slane %v3738, %v3925
  %v4601 = vsel %vm3927, %v4600, %v4599
  %v4602 = vperm.slane %v3739, %v3929
  %v4603 = vsel %vm3931, %v4602, %v4601
  %v4604 = vperm.slane %v3740, %v3933
  %v4605 = vsel %vm3935, %v4604, %v4603
  %v4606 = vperm.slane %v3741, %v3937
  %v4607 = vsel %vm3939, %v4606, %v4605
  %v4608 = vperm.slane %v3742, %v3941
  %v4609 = vsel %vm3943, %v4608, %v4607
  %v4610 = vperm.slane %v3743, %v3945
  %v4611 = vsel %vm3947, %v4610, %v4609
  %v4612 = vperm.slane %v3744, %v3949
  %v4613 = vsel %vm3951, %v4612, %v4611
  %v4614 = vperm.slane %v3745, %v3953
  %v4615 = vsel %vm3955, %v4614, %v4613
  %v4616 = vperm.slane %v3746, %v3957
  %v4617 = vsel %vm3959, %v4616, %v4615
  %v4618 = vperm.slane %v3747, %v3961
  %v4619 = vsel %vm3963, %v4618, %v4617
  %v4620 = vperm.slane %v3748, %v3965
  %v4621 = vsel %vm3967, %v4620, %v4619
  %v4622 = vperm.slane %v3749, %v3969
  %v4623 = vsel %vm3971, %v4622, %v4621
  %v4624 = vperm.slane %v3750, %v3911
  %v4625 = vperm.slane %v3751, %v3913
  %v4626 = vsel %vm3915, %v4625, %v4624
  %v4627 = vperm.slane %v3752, %v3917
  %v4628 = vsel %vm3919, %v4627, %v4626
  %v4629 = vperm.slane %v3753, %v3921
  %v4630 = vsel %vm3923, %v4629, %v4628
  %v4631 = vperm.slane %v3754, %v3925
  %v4632 = vsel %vm3927, %v4631, %v4630
  %v4633 = vperm.slane %v3755, %v3929
  %v4634 = vsel %vm3931, %v4633, %v4632
  %v4635 = vperm.slane %v3756, %v3933
  %v4636 = vsel %vm3935, %v4635, %v4634
  %v4637 = vperm.slane %v3757, %v3937
  %v4638 = vsel %vm3939, %v4637, %v4636
  %v4639 = vperm.slane %v3758, %v3941
  %v4640 = vsel %vm3943, %v4639, %v4638
  %v4641 = vperm.slane %v3759, %v3945
  %v4642 = vsel %vm3947, %v4641, %v4640
  %v4643 = vperm.slane %v3760, %v3949
  %v4644 = vsel %vm3951, %v4643, %v4642
  %v4645 = vperm.slane %v3761, %v3953
  %v4646 = vsel %vm3955, %v4645, %v4644
  %v4647 = vperm.slane %v3762, %v3957
  %v4648 = vsel %vm3959, %v4647, %v4646
  %v4649 = vperm.slane %v3763, %v3961
  %v4650 = vsel %vm3963, %v4649, %v4648
  %v4651 = vperm.slane %v3764, %v3965
  %v4652 = vsel %vm3967, %v4651, %v4650
  %v4653 = vperm.slane %v3765, %v3969
  %v4654 = vsel %vm3971, %v4653, %v4652
  %v4655 = vperm.slane %v3766, %v3911
  %v4656 = vperm.slane %v3767, %v3913
  %v4657 = vsel %vm3915, %v4656, %v4655
  %v4658 = vperm.slane %v3768, %v3917
  %v4659 = vsel %vm3919, %v4658, %v4657
  %v4660 = vperm.slane %v3769, %v3921
  %v4661 = vsel %vm3923, %v4660, %v4659
  %v4662 = vperm.slane %v3770, %v3925
  %v4663 = vsel %vm3927, %v4662, %v4661
  %v4664 = vperm.slane %v3771, %v3929
  %v4665 = vsel %vm3931, %v4664, %v4663
  %v4666 = vperm.slane %v3772, %v3933
  %v4667 = vsel %vm3935, %v4666, %v4665
  %v4668 = vperm.slane %v3773, %v3937
  %v4669 = vsel %vm3939, %v4668, %v4667
  %v4670 = vperm.slane %v3774, %v3941
  %v4671 = vsel %vm3943, %v4670, %v4669
  %v4672 = vperm.slane %v3775, %v3945
  %v4673 = vsel %vm3947, %v4672, %v4671
  %v4674 = vperm.slane %v3776, %v3949
  %v4675 = vsel %vm3951, %v4674, %v4673
  %v4676 = vperm.slane %v3777, %v3953
  %v4677 = vsel %vm3955, %v4676, %v4675
  %v4678 = vperm.slane %v3778, %v3957
  %v4679 = vsel %vm3959, %v4678, %v4677
  %v4680 = vperm.slane %v3779, %v3961
  %v4681 = vsel %vm3963, %v4680, %v4679
  %v4682 = vperm.slane %v3780, %v3965
  %v4683 = vsel %vm3967, %v4682, %v4681
  %v4684 = vperm.slane %v3781, %v3969
  %v4685 = vsel %vm3971, %v4684, %v4683
  %v4686 = vperm.slane %v3782, %v3911
  %v4687 = vperm.slane %v3783, %v3913
  %v4688 = vsel %vm3915, %v4687, %v4686
  %v4689 = vperm.slane %v3784, %v3917
  %v4690 = vsel %vm3919, %v4689, %v4688
  %v4691 = vperm.slane %v3785, %v3921
  %v4692 = vsel %vm3923, %v4691, %v4690
  %v4693 = vperm.slane %v3786, %v3925
  %v4694 = vsel %vm3927, %v4693, %v4692
  %v4695 = vperm.slane %v3787, %v3929
  %v4696 = vsel %vm3931, %v4695, %v4694
  %v4697 = vperm.slane %v3788, %v3933
  %v4698 = vsel %vm3935, %v4697, %v4696
  %v4699 = vperm.slane %v3789, %v3937
  %v4700 = vsel %vm3939, %v4699, %v4698
  %v4701 = vperm.slane %v3790, %v3941
  %v4702 = vsel %vm3943, %v4701, %v4700
  %v4703 = vperm.slane %v3791, %v3945
  %v4704 = vsel %vm3947, %v4703, %v4702
  %v4705 = vperm.slane %v3792, %v3949
  %v4706 = vsel %vm3951, %v4705, %v4704
  %v4707 = vperm.slane %v3793, %v3953
  %v4708 = vsel %vm3955, %v4707, %v4706
  %v4709 = vperm.slane %v3794, %v3957
  %v4710 = vsel %vm3959, %v4709, %v4708
  %v4711 = vperm.slane %v3795, %v3961
  %v4712 = vsel %vm3963, %v4711, %v4710
  %v4713 = vperm.slane %v3796, %v3965
  %v4714 = vsel %vm3967, %v4713, %v4712
  %v4715 = vperm.slane %v3797, %v3969
  %v4716 = vsel %vm3971, %v4715, %v4714
  %v4717 = vperm.slane %v3798, %v3911
  %v4718 = vperm.slane %v3799, %v3913
  %v4719 = vsel %vm3915, %v4718, %v4717
  %v4720 = vperm.slane %v3800, %v3917
  %v4721 = vsel %vm3919, %v4720, %v4719
  %v4722 = vperm.slane %v3801, %v3921
  %v4723 = vsel %vm3923, %v4722, %v4721
  %v4724 = vperm.slane %v3802, %v3925
  %v4725 = vsel %vm3927, %v4724, %v4723
  %v4726 = vperm.slane %v3803, %v3929
  %v4727 = vsel %vm3931, %v4726, %v4725
  %v4728 = vperm.slane %v3804, %v3933
  %v4729 = vsel %vm3935, %v4728, %v4727
  %v4730 = vperm.slane %v3805, %v3937
  %v4731 = vsel %vm3939, %v4730, %v4729
  %v4732 = vperm.slane %v3806, %v3941
  %v4733 = vsel %vm3943, %v4732, %v4731
  %v4734 = vperm.slane %v3807, %v3945
  %v4735 = vsel %vm3947, %v4734, %v4733
  %v4736 = vperm.slane %v3808, %v3949
  %v4737 = vsel %vm3951, %v4736, %v4735
  %v4738 = vperm.slane %v3809, %v3953
  %v4739 = vsel %vm3955, %v4738, %v4737
  %v4740 = vperm.slane %v3810, %v3957
  %v4741 = vsel %vm3959, %v4740, %v4739
  %v4742 = vperm.slane %v3811, %v3961
  %v4743 = vsel %vm3963, %v4742, %v4741
  %v4744 = vperm.slane %v3812, %v3965
  %v4745 = vsel %vm3967, %v4744, %v4743
  %v4746 = vperm.slane %v3813, %v3969
  %v4747 = vsel %vm3971, %v4746, %v4745
  %v4748 = vperm.slane %v3814, %v3911
  %v4749 = vperm.slane %v3815, %v3913
  %v4750 = vsel %vm3915, %v4749, %v4748
  %v4751 = vperm.slane %v3816, %v3917
  %v4752 = vsel %vm3919, %v4751, %v4750
  %v4753 = vperm.slane %v3817, %v3921
  %v4754 = vsel %vm3923, %v4753, %v4752
  %v4755 = vperm.slane %v3818, %v3925
  %v4756 = vsel %vm3927, %v4755, %v4754
  %v4757 = vperm.slane %v3819, %v3929
  %v4758 = vsel %vm3931, %v4757, %v4756
  %v4759 = vperm.slane %v3820, %v3933
  %v4760 = vsel %vm3935, %v4759, %v4758
  %v4761 = vperm.slane %v3821, %v3937
  %v4762 = vsel %vm3939, %v4761, %v4760
  %v4763 = vperm.slane %v3822, %v3941
  %v4764 = vsel %vm3943, %v4763, %v4762
  %v4765 = vperm.slane %v3823, %v3945
  %v4766 = vsel %vm3947, %v4765, %v4764
  %v4767 = vperm.slane %v3824, %v3949
  %v4768 = vsel %vm3951, %v4767, %v4766
  %v4769 = vperm.slane %v3825, %v3953
  %v4770 = vsel %vm3955, %v4769, %v4768
  %v4771 = vperm.slane %v3826, %v3957
  %v4772 = vsel %vm3959, %v4771, %v4770
  %v4773 = vperm.slane %v3827, %v3961
  %v4774 = vsel %vm3963, %v4773, %v4772
  %v4775 = vperm.slane %v3828, %v3965
  %v4776 = vsel %vm3967, %v4775, %v4774
  %v4777 = vperm.slane %v3829, %v3969
  %v4778 = vsel %vm3971, %v4777, %v4776
  %v4779 = vperm.slane %v3830, %v3911
  %v4780 = vperm.slane %v3831, %v3913
  %v4781 = vsel %vm3915, %v4780, %v4779
  %v4782 = vperm.slane %v3832, %v3917
  %v4783 = vsel %vm3919, %v4782, %v4781
  %v4784 = vperm.slane %v3833, %v3921
  %v4785 = vsel %vm3923, %v4784, %v4783
  %v4786 = vperm.slane %v3834, %v3925
  %v4787 = vsel %vm3927, %v4786, %v4785
  %v4788 = vperm.slane %v3835, %v3929
  %v4789 = vsel %vm3931, %v4788, %v4787
  %v4790 = vperm.slane %v3836, %v3933
  %v4791 = vsel %vm3935, %v4790, %v4789
  %v4792 = vperm.slane %v3837, %v3937
  %v4793 = vsel %vm3939, %v4792, %v4791
  %v4794 = vperm.slane %v3838, %v3941
  %v4795 = vsel %vm3943, %v4794, %v4793
  %v4796 = vperm.slane %v3839, %v3945
  %v4797 = vsel %vm3947, %v4796, %v4795
  %v4798 = vperm.slane %v3840, %v3949
  %v4799 = vsel %vm3951, %v4798, %v4797
  %v4800 = vperm.slane %v3841, %v3953
  %v4801 = vsel %vm3955, %v4800, %v4799
  %v4802 = vperm.slane %v3842, %v3957
  %v4803 = vsel %vm3959, %v4802, %v4801
  %v4804 = vperm.slane %v3843, %v3961
  %v4805 = vsel %vm3963, %v4804, %v4803
  %v4806 = vperm.slane %v3844, %v3965
  %v4807 = vsel %vm3967, %v4806, %v4805
  %v4808 = vperm.slane %v3845, %v3969
  %v4809 = vsel %vm3971, %v4808, %v4807
  %v4810 = vperm.slane %v3846, %v3911
  %v4811 = vperm.slane %v3847, %v3913
  %v4812 = vsel %vm3915, %v4811, %v4810
  %v4813 = vperm.slane %v3848, %v3917
  %v4814 = vsel %vm3919, %v4813, %v4812
  %v4815 = vperm.slane %v3849, %v3921
  %v4816 = vsel %vm3923, %v4815, %v4814
  %v4817 = vperm.slane %v3850, %v3925
  %v4818 = vsel %vm3927, %v4817, %v4816
  %v4819 = vperm.slane %v3851, %v3929
  %v4820 = vsel %vm3931, %v4819, %v4818
  %v4821 = vperm.slane %v3852, %v3933
  %v4822 = vsel %vm3935, %v4821, %v4820
  %v4823 = vperm.slane %v3853, %v3937
  %v4824 = vsel %vm3939, %v4823, %v4822
  %v4825 = vperm.slane %v3854, %v3941
  %v4826 = vsel %vm3943, %v4825, %v4824
  %v4827 = vperm.slane %v3855, %v3945
  %v4828 = vsel %vm3947, %v4827, %v4826
  %v4829 = vperm.slane %v3856, %v3949
  %v4830 = vsel %vm3951, %v4829, %v4828
  %v4831 = vperm.slane %v3857, %v3953
  %v4832 = vsel %vm3955, %v4831, %v4830
  %v4833 = vperm.slane %v3858, %v3957
  %v4834 = vsel %vm3959, %v4833, %v4832
  %v4835 = vperm.slane %v3859, %v3961
  %v4836 = vsel %vm3963, %v4835, %v4834
  %v4837 = vperm.slane %v3860, %v3965
  %v4838 = vsel %vm3967, %v4837, %v4836
  %v4839 = vperm.slane %v3861, %v3969
  %v4840 = vsel %vm3971, %v4839, %v4838
  %v4841 = vperm.slane %v3862, %v3911
  %v4842 = vperm.slane %v3863, %v3913
  %v4843 = vsel %vm3915, %v4842, %v4841
  %v4844 = vperm.slane %v3864, %v3917
  %v4845 = vsel %vm3919, %v4844, %v4843
  %v4846 = vperm.slane %v3865, %v3921
  %v4847 = vsel %vm3923, %v4846, %v4845
  %v4848 = vperm.slane %v3866, %v3925
  %v4849 = vsel %vm3927, %v4848, %v4847
  %v4850 = vperm.slane %v3867, %v3929
  %v4851 = vsel %vm3931, %v4850, %v4849
  %v4852 = vperm.slane %v3868, %v3933
  %v4853 = vsel %vm3935, %v4852, %v4851
  %v4854 = vperm.slane %v3869, %v3937
  %v4855 = vsel %vm3939, %v4854, %v4853
  %v4856 = vperm.slane %v3870, %v3941
  %v4857 = vsel %vm3943, %v4856, %v4855
  %v4858 = vperm.slane %v3871, %v3945
  %v4859 = vsel %vm3947, %v4858, %v4857
  %v4860 = vperm.slane %v3872, %v3949
  %v4861 = vsel %vm3951, %v4860, %v4859
  %v4862 = vperm.slane %v3873, %v3953
  %v4863 = vsel %vm3955, %v4862, %v4861
  %v4864 = vperm.slane %v3874, %v3957
  %v4865 = vsel %vm3959, %v4864, %v4863
  %v4866 = vperm.slane %v3875, %v3961
  %v4867 = vsel %vm3963, %v4866, %v4865
  %v4868 = vperm.slane %v3876, %v3965
  %v4869 = vsel %vm3967, %v4868, %v4867
  %v4870 = vperm.slane %v3877, %v3969
  %v4871 = vsel %vm3971, %v4870, %v4869
  %v4872 = vperm.slane %v3878, %v3911
  %v4873 = vperm.slane %v3879, %v3913
  %v4874 = vsel %vm3915, %v4873, %v4872
  %v4875 = vperm.slane %v3880, %v3917
  %v4876 = vsel %vm3919, %v4875, %v4874
  %v4877 = vperm.slane %v3881, %v3921
  %v4878 = vsel %vm3923, %v4877, %v4876
  %v4879 = vperm.slane %v3882, %v3925
  %v4880 = vsel %vm3927, %v4879, %v4878
  %v4881 = vperm.slane %v3883, %v3929
  %v4882 = vsel %vm3931, %v4881, %v4880
  %v4883 = vperm.slane %v3884, %v3933
  %v4884 = vsel %vm3935, %v4883, %v4882
  %v4885 = vperm.slane %v3885, %v3937
  %v4886 = vsel %vm3939, %v4885, %v4884
  %v4887 = vperm.slane %v3886, %v3941
  %v4888 = vsel %vm3943, %v4887, %v4886
  %v4889 = vperm.slane %v3887, %v3945
  %v4890 = vsel %vm3947, %v4889, %v4888
  %v4891 = vperm.slane %v3888, %v3949
  %v4892 = vsel %vm3951, %v4891, %v4890
  %v4893 = vperm.slane %v3889, %v3953
  %v4894 = vsel %vm3955, %v4893, %v4892
  %v4895 = vperm.slane %v3890, %v3957
  %v4896 = vsel %vm3959, %v4895, %v4894
  %v4897 = vperm.slane %v3891, %v3961
  %v4898 = vsel %vm3963, %v4897, %v4896
  %v4899 = vperm.slane %v3892, %v3965
  %v4900 = vsel %vm3967, %v4899, %v4898
  %v4901 = vperm.slane %v3893, %v3969
  %v4902 = vsel %vm3971, %v4901, %v4900
  %v4903 = vperm.slane %v3894, %v3911
  %v4904 = vperm.slane %v3895, %v3913
  %v4905 = vsel %vm3915, %v4904, %v4903
  %v4906 = vperm.slane %v3896, %v3917
  %v4907 = vsel %vm3919, %v4906, %v4905
  %v4908 = vperm.slane %v3897, %v3921
  %v4909 = vsel %vm3923, %v4908, %v4907
  %v4910 = vperm.slane %v3898, %v3925
  %v4911 = vsel %vm3927, %v4910, %v4909
  %v4912 = vperm.slane %v3899, %v3929
  %v4913 = vsel %vm3931, %v4912, %v4911
  %v4914 = vperm.slane %v3900, %v3933
  %v4915 = vsel %vm3935, %v4914, %v4913
  %v4916 = vperm.slane %v3901, %v3937
  %v4917 = vsel %vm3939, %v4916, %v4915
  %v4918 = vperm.slane %v3902, %v3941
  %v4919 = vsel %vm3943, %v4918, %v4917
  %v4920 = vperm.slane %v3903, %v3945
  %v4921 = vsel %vm3947, %v4920, %v4919
  %v4922 = vperm.slane %v3904, %v3949
  %v4923 = vsel %vm3951, %v4922, %v4921
  %v4924 = vperm.slane %v3905, %v3953
  %v4925 = vsel %vm3955, %v4924, %v4923
  %v4926 = vperm.slane %v3906, %v3957
  %v4927 = vsel %vm3959, %v4926, %v4925
  %v4928 = vperm.slane %v3907, %v3961
  %v4929 = vsel %vm3963, %v4928, %v4927
  %v4930 = vperm.slane %v3908, %v3965
  %v4931 = vsel %vm3967, %v4930, %v4929
  %v4932 = vperm.slane %v3909, %v3969
  %v4933 = vsel %vm3971, %v4932, %v4931
  %vm4934 = vcmask 1041409
  %v4935 = vsel %vm4934, %v4468, %v3972
  %v4936 = vsel %vm4934, %v4499, %v4003
  %v4937 = vsel %vm4934, %v4530, %v4034
  %v4938 = vsel %vm4934, %v4561, %v4065
  %v4939 = vsel %vm4934, %v4592, %v4096
  %v4940 = vsel %vm4934, %v4623, %v4127
  %v4941 = vsel %vm4934, %v4654, %v4158
  %v4942 = vsel %vm4934, %v4685, %v4189
  %v4943 = vsel %vm4934, %v4716, %v4220
  %v4944 = vsel %vm4934, %v4747, %v4251
  %v4945 = vsel %vm4934, %v4778, %v4282
  %v4946 = vsel %vm4934, %v4809, %v4313
  %v4947 = vsel %vm4934, %v4840, %v4344
  %v4948 = vsel %vm4934, %v4871, %v4375
  %v4949 = vsel %vm4934, %v4902, %v4406
  %v4950 = vsel %vm4934, %v4933, %v4437
  %v4951 = vpack.c.b16 %v4935, %v4935
  %v4952 = vpack.c.b16 %v4936, %v4936
  %v4953 = vpack.c.b16 %v4937, %v4937
  %v4954 = vpack.c.b16 %v4938, %v4938
  %v4955 = vpack.c.b16 %v4939, %v4939
  %v4956 = vpack.c.b16 %v4940, %v4940
  %v4957 = vpack.c.b16 %v4941, %v4941
  %v4958 = vpack.c.b16 %v4942, %v4942
  %v4959 = vpack.c.b16 %v4943, %v4943
  %v4960 = vpack.c.b16 %v4944, %v4944
  %v4961 = vpack.c.b16 %v4945, %v4945
  %v4962 = vpack.c.b16 %v4946, %v4946
  %v4963 = vpack.c.b16 %v4947, %v4947
  %v4964 = vpack.c.b16 %v4948, %v4948
  %v4965 = vpack.c.b16 %v4949, %v4949
  %v4966 = vpack.c.b16 %v4950, %v4950
  %v5239 = vunpack.c.l.b16 %v2882
  %v5240 = vunpack.c.l.b16 %v2883
  %v5241 = vunpack.c.l.b16 %v2884
  %v5242 = vunpack.c.l.b16 %v2885
  %v5243 = vunpack.c.l.b16 %v2886
  %v5244 = vunpack.c.l.b16 %v2887
  %v5245 = vunpack.c.l.b16 %v2888
  %v5246 = vunpack.c.l.b16 %v2889
  %v5247 = vunpack.c.l.b16 %v2890
  %v5248 = vunpack.c.l.b16 %v2891
  %v5249 = vunpack.c.l.b16 %v2892
  %v5250 = vunpack.c.l.b16 %v2893
  %v5251 = vunpack.c.l.b16 %v2894
  %v5252 = vunpack.c.l.b16 %v2895
  %v5253 = vunpack.c.l.b16 %v2896
  %v5254 = vunpack.c.l.b16 %v2897
  %v5255 = vunpack.c.l.b16 %v2898
  %v5256 = vunpack.c.l.b16 %v2899
  %v5257 = vunpack.c.l.b16 %v2900
  %v5258 = vunpack.c.l.b16 %v2901
  %v5259 = vunpack.c.l.b16 %v2902
  %v5260 = vunpack.c.l.b16 %v2903
  %v5261 = vunpack.c.l.b16 %v2904
  %v5262 = vunpack.c.l.b16 %v2905
  %v5263 = vunpack.c.l.b16 %v2906
  %v5264 = vunpack.c.l.b16 %v2907
  %v5265 = vunpack.c.l.b16 %v2908
  %v5266 = vunpack.c.l.b16 %v2909
  %v5267 = vunpack.c.l.b16 %v2910
  %v5268 = vunpack.c.l.b16 %v2911
  %v5269 = vunpack.c.l.b16 %v2912
  %v5270 = vunpack.c.l.b16 %v2913
  %v5271 = vunpack.c.l.b16 %v2914
  %v5272 = vunpack.c.l.b16 %v2915
  %v5273 = vunpack.c.l.b16 %v2916
  %v5274 = vunpack.c.l.b16 %v2917
  %v5275 = vunpack.c.l.b16 %v2918
  %v5276 = vunpack.c.l.b16 %v2919
  %v5277 = vunpack.c.l.b16 %v2920
  %v5278 = vunpack.c.l.b16 %v2921
  %v5279 = vunpack.c.l.b16 %v2922
  %v5280 = vunpack.c.l.b16 %v2923
  %v5281 = vunpack.c.l.b16 %v2924
  %v5282 = vunpack.c.l.b16 %v2925
  %v5283 = vunpack.c.l.b16 %v2926
  %v5284 = vunpack.c.l.b16 %v2927
  %v5285 = vunpack.c.l.b16 %v2928
  %v5286 = vunpack.c.l.b16 %v2929
  %v5287 = vunpack.c.l.b16 %v2930
  %v5288 = vunpack.c.l.b16 %v2931
  %v5289 = vunpack.c.l.b16 %v2932
  %v5290 = vunpack.c.l.b16 %v2933
  %v5291 = vunpack.c.l.b16 %v2934
  %v5292 = vunpack.c.l.b16 %v2935
  %v5293 = vunpack.c.l.b16 %v2936
  %v5294 = vunpack.c.l.b16 %v2937
  %v5295 = vunpack.c.l.b16 %v2938
  %v5296 = vunpack.c.l.b16 %v2939
  %v5297 = vunpack.c.l.b16 %v2940
  %v5298 = vunpack.c.l.b16 %v2941
  %v5299 = vunpack.c.l.b16 %v2942
  %v5300 = vunpack.c.l.b16 %v2943
  %v5301 = vunpack.c.l.b16 %v2944
  %v5302 = vunpack.c.l.b16 %v2945
  %v5303 = vunpack.c.l.b16 %v2946
  %v5304 = vunpack.c.l.b16 %v2947
  %v5305 = vunpack.c.l.b16 %v2948
  %v5306 = vunpack.c.l.b16 %v2949
  %v5307 = vunpack.c.l.b16 %v2950
  %v5308 = vunpack.c.l.b16 %v2951
  %v5309 = vunpack.c.l.b16 %v2952
  %v5310 = vunpack.c.l.b16 %v2953
  %v5311 = vunpack.c.l.b16 %v2954
  %v5312 = vunpack.c.l.b16 %v2955
  %v5313 = vunpack.c.l.b16 %v2956
  %v5314 = vunpack.c.l.b16 %v2957
  %v5315 = vunpack.c.l.b16 %v2958
  %v5316 = vunpack.c.l.b16 %v2959
  %v5317 = vunpack.c.l.b16 %v2960
  %v5318 = vunpack.c.l.b16 %v2961
  %v5319 = vunpack.c.l.b16 %v2962
  %v5320 = vunpack.c.l.b16 %v2963
  %v5321 = vunpack.c.l.b16 %v2964
  %v5322 = vunpack.c.l.b16 %v2965
  %v5323 = vunpack.c.l.b16 %v2966
  %v5324 = vunpack.c.l.b16 %v2967
  %v5325 = vunpack.c.l.b16 %v2968
  %v5326 = vunpack.c.l.b16 %v2969
  %v5327 = vunpack.c.l.b16 %v2970
  %v5328 = vunpack.c.l.b16 %v2971
  %v5329 = vunpack.c.l.b16 %v2972
  %v5330 = vunpack.c.l.b16 %v2973
  %v5331 = vunpack.c.l.b16 %v2974
  %v5332 = vunpack.c.l.b16 %v2975
  %v5333 = vunpack.c.l.b16 %v2976
  %v5334 = vunpack.c.l.b16 %v2977
  %v5335 = vunpack.c.l.b16 %v2978
  %v5336 = vunpack.c.l.b16 %v2979
  %v5337 = vunpack.c.l.b16 %v2980
  %v5338 = vunpack.c.l.b16 %v2981
  %v5339 = vunpack.c.l.b16 %v2982
  %v5340 = vunpack.c.l.b16 %v2983
  %v5341 = vunpack.c.l.b16 %v2984
  %v5342 = vunpack.c.l.b16 %v2985
  %v5343 = vunpack.c.l.b16 %v2986
  %v5344 = vunpack.c.l.b16 %v2987
  %v5345 = vunpack.c.l.b16 %v2988
  %v5346 = vunpack.c.l.b16 %v2989
  %v5347 = vunpack.c.l.b16 %v2990
  %v5348 = vunpack.c.l.b16 %v2991
  %v5349 = vunpack.c.l.b16 %v2992
  %v5350 = vunpack.c.l.b16 %v2993
  %v5351 = vunpack.c.l.b16 %v2994
  %v5352 = vunpack.c.l.b16 %v2995
  %v5353 = vunpack.c.l.b16 %v2996
  %v5354 = vunpack.c.l.b16 %v2997
  %v5355 = vunpack.c.l.b16 %v2998
  %v5356 = vunpack.c.l.b16 %v2999
  %v5357 = vunpack.c.l.b16 %v3000
  %v5358 = vunpack.c.l.b16 %v3001
  %v5359 = vunpack.c.l.b16 %v3002
  %v5360 = vunpack.c.l.b16 %v3003
  %v5361 = vunpack.c.l.b16 %v3004
  %v5362 = vunpack.c.l.b16 %v3005
  %v5363 = vunpack.c.l.b16 %v3006
  %v5364 = vunpack.c.l.b16 %v3007
  %v5365 = vunpack.c.l.b16 %v3008
  %v5366 = vunpack.c.l.b16 %v3009
  %v5367 = vunpack.c.l.b16 %v3010
  %v5368 = vunpack.c.l.b16 %v3011
  %v5369 = vunpack.c.l.b16 %v3012
  %v5370 = vunpack.c.l.b16 %v3013
  %v5371 = vunpack.c.l.b16 %v3014
  %v5372 = vunpack.c.l.b16 %v3015
  %v5373 = vunpack.c.l.b16 %v3016
  %v5374 = vunpack.c.l.b16 %v3017
  %v5375 = vunpack.c.l.b16 %v3018
  %v5376 = vunpack.c.l.b16 %v3019
  %v5377 = vunpack.c.l.b16 %v3020
  %v5378 = vunpack.c.l.b16 %v3021
  %v5379 = vunpack.c.l.b16 %v3022
  %v5380 = vunpack.c.l.b16 %v3023
  %v5381 = vunpack.c.l.b16 %v3024
  %v5382 = vunpack.c.l.b16 %v3025
  %v5383 = vunpack.c.l.b16 %v3026
  %v5384 = vunpack.c.l.b16 %v3027
  %v5385 = vunpack.c.l.b16 %v3028
  %v5386 = vunpack.c.l.b16 %v3029
  %v5387 = vunpack.c.l.b16 %v3030
  %v5388 = vunpack.c.l.b16 %v3031
  %v5389 = vunpack.c.l.b16 %v3032
  %v5390 = vunpack.c.l.b16 %v3033
  %v5391 = vunpack.c.l.b16 %v3034
  %v5392 = vunpack.c.l.b16 %v3035
  %v5393 = vunpack.c.l.b16 %v3036
  %v5394 = vunpack.c.l.b16 %v3037
  %v5395 = vunpack.c.l.b16 %v3038
  %v5396 = vunpack.c.l.b16 %v3039
  %v5397 = vunpack.c.l.b16 %v3040
  %v5398 = vunpack.c.l.b16 %v3041
  %v5399 = vunpack.c.l.b16 %v3042
  %v5400 = vunpack.c.l.b16 %v3043
  %v5401 = vunpack.c.l.b16 %v3044
  %v5402 = vunpack.c.l.b16 %v3045
  %v5403 = vunpack.c.l.b16 %v3046
  %v5404 = vunpack.c.l.b16 %v3047
  %v5405 = vunpack.c.l.b16 %v3048
  %v5406 = vunpack.c.l.b16 %v3049
  %v5407 = vunpack.c.l.b16 %v3050
  %v5408 = vunpack.c.l.b16 %v3051
  %v5409 = vunpack.c.l.b16 %v3052
  %v5410 = vunpack.c.l.b16 %v3053
  %v5411 = vunpack.c.l.b16 %v3054
  %v5412 = vunpack.c.l.b16 %v3055
  %v5413 = vunpack.c.l.b16 %v3056
  %v5414 = vunpack.c.l.b16 %v3057
  %v5415 = vunpack.c.l.b16 %v3058
  %v5416 = vunpack.c.l.b16 %v3059
  %v5417 = vunpack.c.l.b16 %v3060
  %v5418 = vunpack.c.l.b16 %v3061
  %v5419 = vunpack.c.l.b16 %v3062
  %v5420 = vunpack.c.l.b16 %v3063
  %v5421 = vunpack.c.l.b16 %v3064
  %v5422 = vunpack.c.l.b16 %v3065
  %v5423 = vunpack.c.l.b16 %v3066
  %v5424 = vunpack.c.l.b16 %v3067
  %v5425 = vunpack.c.l.b16 %v3068
  %v5426 = vunpack.c.l.b16 %v3069
  %v5427 = vunpack.c.l.b16 %v3070
  %v5428 = vunpack.c.l.b16 %v3071
  %v5429 = vunpack.c.l.b16 %v3072
  %v5430 = vunpack.c.l.b16 %v3073
  %v5431 = vunpack.c.l.b16 %v3074
  %v5432 = vunpack.c.l.b16 %v3075
  %v5433 = vunpack.c.l.b16 %v3076
  %v5434 = vunpack.c.l.b16 %v3077
  %v5435 = vunpack.c.l.b16 %v3078
  %v5436 = vunpack.c.l.b16 %v3079
  %v5437 = vunpack.c.l.b16 %v3080
  %v5438 = vunpack.c.l.b16 %v3081
  %v5439 = vunpack.c.l.b16 %v3082
  %v5440 = vunpack.c.l.b16 %v3083
  %v5441 = vunpack.c.l.b16 %v3084
  %v5442 = vunpack.c.l.b16 %v3085
  %v5443 = vunpack.c.l.b16 %v3086
  %v5444 = vunpack.c.l.b16 %v3087
  %v5445 = vunpack.c.l.b16 %v3088
  %v5446 = vunpack.c.l.b16 %v3089
  %v5447 = vunpack.c.l.b16 %v3090
  %v5448 = vunpack.c.l.b16 %v3091
  %v5449 = vunpack.c.l.b16 %v3092
  %v5450 = vunpack.c.l.b16 %v3093
  %v5451 = vunpack.c.l.b16 %v3094
  %v5452 = vunpack.c.l.b16 %v3095
  %v5453 = vunpack.c.l.b16 %v3096
  %v5454 = vunpack.c.l.b16 %v3097
  %v5455 = vunpack.c.l.b16 %v3098
  %v5456 = vunpack.c.l.b16 %v3099
  %v5457 = vunpack.c.l.b16 %v3100
  %v5458 = vunpack.c.l.b16 %v3101
  %v5459 = vunpack.c.l.b16 %v3102
  %v5460 = vunpack.c.l.b16 %v3103
  %v5461 = vunpack.c.l.b16 %v3104
  %v5462 = vunpack.c.l.b16 %v3105
  %v5463 = vunpack.c.l.b16 %v3106
  %v5464 = vunpack.c.l.b16 %v3107
  %v5465 = vunpack.c.l.b16 %v3108
  %v5466 = vunpack.c.l.b16 %v3109
  %v5467 = vunpack.c.l.b16 %v3110
  %v5468 = vunpack.c.l.b16 %v3111
  %v5469 = vunpack.c.l.b16 %v3112
  %v5470 = vunpack.c.l.b16 %v3113
  %v5471 = vunpack.c.l.b16 %v3114
  %v5472 = vunpack.c.l.b16 %v3115
  %v5473 = vunpack.c.l.b16 %v3116
  %v5474 = vunpack.c.l.b16 %v3117
  %v5475 = vunpack.c.l.b16 %v3118
  %v5476 = vunpack.c.l.b16 %v3119
  %v5477 = vunpack.c.l.b16 %v3120
  %v5478 = vunpack.c.l.b16 %v3121
  %v5479 = vunpack.c.l.b16 %v3122
  %v5480 = vunpack.c.l.b16 %v3123
  %v5481 = vunpack.c.l.b16 %v3124
  %v5482 = vunpack.c.l.b16 %v3125
  %v5483 = vunpack.c.l.b16 %v3126
  %v5484 = vunpack.c.l.b16 %v3127
  %v5485 = vunpack.c.l.b16 %v3128
  %v5486 = vunpack.c.l.b16 %v3129
  %v5487 = vunpack.c.l.b16 %v3130
  %v5488 = vunpack.c.l.b16 %v3131
  %v5489 = vunpack.c.l.b16 %v3132
  %v5490 = vunpack.c.l.b16 %v3133
  %v5491 = vunpack.c.l.b16 %v3134
  %v5492 = vunpack.c.l.b16 %v3135
  %v5493 = vunpack.c.l.b16 %v3136
  %v5494 = vunpack.c.l.b16 %v3137
  %v5495 = vpack.c.b16 %v5240, %v5239
  %v5496 = vpack.c.b16 %v5242, %v5241
  %v5497 = vpack.c.b16 %v5244, %v5243
  %v5498 = vpack.c.b16 %v5246, %v5245
  %v5499 = vpack.c.b16 %v5248, %v5247
  %v5500 = vpack.c.b16 %v5250, %v5249
  %v5501 = vpack.c.b16 %v5252, %v5251
  %v5502 = vpack.c.b16 %v5254, %v5253
  %v5503 = vpack.c.b16 %v5256, %v5255
  %v5504 = vpack.c.b16 %v5258, %v5257
  %v5505 = vpack.c.b16 %v5260, %v5259
  %v5506 = vpack.c.b16 %v5262, %v5261
  %v5507 = vpack.c.b16 %v5264, %v5263
  %v5508 = vpack.c.b16 %v5266, %v5265
  %v5509 = vpack.c.b16 %v5268, %v5267
  %v5510 = vpack.c.b16 %v5270, %v5269
  %v5511 = vpack.c.b16 %v5272, %v5271
  %v5512 = vpack.c.b16 %v5274, %v5273
  %v5513 = vpack.c.b16 %v5276, %v5275
  %v5514 = vpack.c.b16 %v5278, %v5277
  %v5515 = vpack.c.b16 %v5280, %v5279
  %v5516 = vpack.c.b16 %v5282, %v5281
  %v5517 = vpack.c.b16 %v5284, %v5283
  %v5518 = vpack.c.b16 %v5286, %v5285
  %v5519 = vpack.c.b16 %v5288, %v5287
  %v5520 = vpack.c.b16 %v5290, %v5289
  %v5521 = vpack.c.b16 %v5292, %v5291
  %v5522 = vpack.c.b16 %v5294, %v5293
  %v5523 = vpack.c.b16 %v5296, %v5295
  %v5524 = vpack.c.b16 %v5298, %v5297
  %v5525 = vpack.c.b16 %v5300, %v5299
  %v5526 = vpack.c.b16 %v5302, %v5301
  %v5527 = vpack.c.b16 %v5304, %v5303
  %v5528 = vpack.c.b16 %v5306, %v5305
  %v5529 = vpack.c.b16 %v5308, %v5307
  %v5530 = vpack.c.b16 %v5310, %v5309
  %v5531 = vpack.c.b16 %v5312, %v5311
  %v5532 = vpack.c.b16 %v5314, %v5313
  %v5533 = vpack.c.b16 %v5316, %v5315
  %v5534 = vpack.c.b16 %v5318, %v5317
  %v5535 = vpack.c.b16 %v5320, %v5319
  %v5536 = vpack.c.b16 %v5322, %v5321
  %v5537 = vpack.c.b16 %v5324, %v5323
  %v5538 = vpack.c.b16 %v5326, %v5325
  %v5539 = vpack.c.b16 %v5328, %v5327
  %v5540 = vpack.c.b16 %v5330, %v5329
  %v5541 = vpack.c.b16 %v5332, %v5331
  %v5542 = vpack.c.b16 %v5334, %v5333
  %v5543 = vpack.c.b16 %v5336, %v5335
  %v5544 = vpack.c.b16 %v5338, %v5337
  %v5545 = vpack.c.b16 %v5340, %v5339
  %v5546 = vpack.c.b16 %v5342, %v5341
  %v5547 = vpack.c.b16 %v5344, %v5343
  %v5548 = vpack.c.b16 %v5346, %v5345
  %v5549 = vpack.c.b16 %v5348, %v5347
  %v5550 = vpack.c.b16 %v5350, %v5349
  %v5551 = vpack.c.b16 %v5352, %v5351
  %v5552 = vpack.c.b16 %v5354, %v5353
  %v5553 = vpack.c.b16 %v5356, %v5355
  %v5554 = vpack.c.b16 %v5358, %v5357
  %v5555 = vpack.c.b16 %v5360, %v5359
  %v5556 = vpack.c.b16 %v5362, %v5361
  %v5557 = vpack.c.b16 %v5364, %v5363
  %v5558 = vpack.c.b16 %v5366, %v5365
  %v5559 = vpack.c.b16 %v5368, %v5367
  %v5560 = vpack.c.b16 %v5370, %v5369
  %v5561 = vpack.c.b16 %v5372, %v5371
  %v5562 = vpack.c.b16 %v5374, %v5373
  %v5563 = vpack.c.b16 %v5376, %v5375
  %v5564 = vpack.c.b16 %v5378, %v5377
  %v5565 = vpack.c.b16 %v5380, %v5379
  %v5566 = vpack.c.b16 %v5382, %v5381
  %v5567 = vpack.c.b16 %v5384, %v5383
  %v5568 = vpack.c.b16 %v5386, %v5385
  %v5569 = vpack.c.b16 %v5388, %v5387
  %v5570 = vpack.c.b16 %v5390, %v5389
  %v5571 = vpack.c.b16 %v5392, %v5391
  %v5572 = vpack.c.b16 %v5394, %v5393
  %v5573 = vpack.c.b16 %v5396, %v5395
  %v5574 = vpack.c.b16 %v5398, %v5397
  %v5575 = vpack.c.b16 %v5400, %v5399
  %v5576 = vpack.c.b16 %v5402, %v5401
  %v5577 = vpack.c.b16 %v5404, %v5403
  %v5578 = vpack.c.b16 %v5406, %v5405
  %v5579 = vpack.c.b16 %v5408, %v5407
  %v5580 = vpack.c.b16 %v5410, %v5409
  %v5581 = vpack.c.b16 %v5412, %v5411
  %v5582 = vpack.c.b16 %v5414, %v5413
  %v5583 = vpack.c.b16 %v5416, %v5415
  %v5584 = vpack.c.b16 %v5418, %v5417
  %v5585 = vpack.c.b16 %v5420, %v5419
  %v5586 = vpack.c.b16 %v5422, %v5421
  %v5587 = vpack.c.b16 %v5424, %v5423
  %v5588 = vpack.c.b16 %v5426, %v5425
  %v5589 = vpack.c.b16 %v5428, %v5427
  %v5590 = vpack.c.b16 %v5430, %v5429
  %v5591 = vpack.c.b16 %v5432, %v5431
  %v5592 = vpack.c.b16 %v5434, %v5433
  %v5593 = vpack.c.b16 %v5436, %v5435
  %v5594 = vpack.c.b16 %v5438, %v5437
  %v5595 = vpack.c.b16 %v5440, %v5439
  %v5596 = vpack.c.b16 %v5442, %v5441
  %v5597 = vpack.c.b16 %v5444, %v5443
  %v5598 = vpack.c.b16 %v5446, %v5445
  %v5599 = vpack.c.b16 %v5448, %v5447
  %v5600 = vpack.c.b16 %v5450, %v5449
  %v5601 = vpack.c.b16 %v5452, %v5451
  %v5602 = vpack.c.b16 %v5454, %v5453
  %v5603 = vpack.c.b16 %v5456, %v5455
  %v5604 = vpack.c.b16 %v5458, %v5457
  %v5605 = vpack.c.b16 %v5460, %v5459
  %v5606 = vpack.c.b16 %v5462, %v5461
  %v5607 = vpack.c.b16 %v5464, %v5463
  %v5608 = vpack.c.b16 %v5466, %v5465
  %v5609 = vpack.c.b16 %v5468, %v5467
  %v5610 = vpack.c.b16 %v5470, %v5469
  %v5611 = vpack.c.b16 %v5472, %v5471
  %v5612 = vpack.c.b16 %v5474, %v5473
  %v5613 = vpack.c.b16 %v5476, %v5475
  %v5614 = vpack.c.b16 %v5478, %v5477
  %v5615 = vpack.c.b16 %v5480, %v5479
  %v5616 = vpack.c.b16 %v5482, %v5481
  %v5617 = vpack.c.b16 %v5484, %v5483
  %v5618 = vpack.c.b16 %v5486, %v5485
  %v5619 = vpack.c.b16 %v5488, %v5487
  %v5620 = vpack.c.b16 %v5490, %v5489
  %v5621 = vpack.c.b16 %v5492, %v5491
  %v5622 = vpack.c.b16 %v5494, %v5493
  %5751 = vmatpush.bf16.msra.mxu0 %v5502
  %5752 = vmatpush.bf16.msra.mxu0 %v5501
  %5753 = vmatpush.bf16.msra.mxu0 %v5500
  %5754 = vmatpush.bf16.msra.mxu0 %v5499
  %5755 = vmatpush.bf16.msra.mxu0 %v5498
  %5756 = vmatpush.bf16.msra.mxu0 %v5497
  %5757 = vmatpush.bf16.msra.mxu0 %v5496
  %5758 = vmatpush.bf16.msra.mxu0 %v5495
  %5759 = vmatmul.bf16.gmra.mxu0 %v4951
  %v5760 = vpop.f32.mrf.mxu0
  %v5761 = vadd.f32 %v3140, %v5760
  %v5762 = vpop.f32.mrf.mxu0
  %5763 = vdwg.mxu0
  %5764 = vmatpush.bf16.msra.mxu0 %v5510
  %5765 = vmatpush.bf16.msra.mxu0 %v5509
  %5766 = vmatpush.bf16.msra.mxu0 %v5508
  %5767 = vmatpush.bf16.msra.mxu0 %v5507
  %5768 = vmatpush.bf16.msra.mxu0 %v5506
  %5769 = vmatpush.bf16.msra.mxu0 %v5505
  %5770 = vmatpush.bf16.msra.mxu0 %v5504
  %5771 = vmatpush.bf16.msra.mxu0 %v5503
  %5772 = vmatmul.bf16.gmra.mxu0 %v4952
  %v5773 = vpop.f32.mrf.mxu0
  %v5774 = vadd.f32 %v5761, %v5773
  %v5775 = vpop.f32.mrf.mxu0
  %5776 = vdwg.mxu0
  %5777 = vmatpush.bf16.msra.mxu0 %v5518
  %5778 = vmatpush.bf16.msra.mxu0 %v5517
  %5779 = vmatpush.bf16.msra.mxu0 %v5516
  %5780 = vmatpush.bf16.msra.mxu0 %v5515
  %5781 = vmatpush.bf16.msra.mxu0 %v5514
  %5782 = vmatpush.bf16.msra.mxu0 %v5513
  %5783 = vmatpush.bf16.msra.mxu0 %v5512
  %5784 = vmatpush.bf16.msra.mxu0 %v5511
  %5785 = vmatmul.bf16.gmra.mxu0 %v4953
  %v5786 = vpop.f32.mrf.mxu0
  %v5787 = vadd.f32 %v5774, %v5786
  %v5788 = vpop.f32.mrf.mxu0
  %5789 = vdwg.mxu0
  %5790 = vmatpush.bf16.msra.mxu0 %v5526
  %5791 = vmatpush.bf16.msra.mxu0 %v5525
  %5792 = vmatpush.bf16.msra.mxu0 %v5524
  %5793 = vmatpush.bf16.msra.mxu0 %v5523
  %5794 = vmatpush.bf16.msra.mxu0 %v5522
  %5795 = vmatpush.bf16.msra.mxu0 %v5521
  %5796 = vmatpush.bf16.msra.mxu0 %v5520
  %5797 = vmatpush.bf16.msra.mxu0 %v5519
  %5798 = vmatmul.bf16.gmra.mxu0 %v4954
  %v5799 = vpop.f32.mrf.mxu0
  %v5800 = vadd.f32 %v5787, %v5799
  %v5801 = vpop.f32.mrf.mxu0
  %5802 = vdwg.mxu0
  %5803 = vmatpush.bf16.msra.mxu0 %v5534
  %5804 = vmatpush.bf16.msra.mxu0 %v5533
  %5805 = vmatpush.bf16.msra.mxu0 %v5532
  %5806 = vmatpush.bf16.msra.mxu0 %v5531
  %5807 = vmatpush.bf16.msra.mxu0 %v5530
  %5808 = vmatpush.bf16.msra.mxu0 %v5529
  %5809 = vmatpush.bf16.msra.mxu0 %v5528
  %5810 = vmatpush.bf16.msra.mxu0 %v5527
  %5811 = vmatmul.bf16.gmra.mxu0 %v4955
  %v5812 = vpop.f32.mrf.mxu0
  %v5813 = vadd.f32 %v5800, %v5812
  %v5814 = vpop.f32.mrf.mxu0
  %5815 = vdwg.mxu0
  %5816 = vmatpush.bf16.msra.mxu0 %v5542
  %5817 = vmatpush.bf16.msra.mxu0 %v5541
  %5818 = vmatpush.bf16.msra.mxu0 %v5540
  %5819 = vmatpush.bf16.msra.mxu0 %v5539
  %5820 = vmatpush.bf16.msra.mxu0 %v5538
  %5821 = vmatpush.bf16.msra.mxu0 %v5537
  %5822 = vmatpush.bf16.msra.mxu0 %v5536
  %5823 = vmatpush.bf16.msra.mxu0 %v5535
  %5824 = vmatmul.bf16.gmra.mxu0 %v4956
  %v5825 = vpop.f32.mrf.mxu0
  %v5826 = vadd.f32 %v5813, %v5825
  %v5827 = vpop.f32.mrf.mxu0
  %5828 = vdwg.mxu0
  %5829 = vmatpush.bf16.msra.mxu0 %v5550
  %5830 = vmatpush.bf16.msra.mxu0 %v5549
  %5831 = vmatpush.bf16.msra.mxu0 %v5548
  %5832 = vmatpush.bf16.msra.mxu0 %v5547
  %5833 = vmatpush.bf16.msra.mxu0 %v5546
  %5834 = vmatpush.bf16.msra.mxu0 %v5545
  %5835 = vmatpush.bf16.msra.mxu0 %v5544
  %5836 = vmatpush.bf16.msra.mxu0 %v5543
  %5837 = vmatmul.bf16.gmra.mxu0 %v4957
  %v5838 = vpop.f32.mrf.mxu0
  %v5839 = vadd.f32 %v5826, %v5838
  %v5840 = vpop.f32.mrf.mxu0
  %5841 = vdwg.mxu0
  %5842 = vmatpush.bf16.msra.mxu0 %v5558
  %5843 = vmatpush.bf16.msra.mxu0 %v5557
  %5844 = vmatpush.bf16.msra.mxu0 %v5556
  %5845 = vmatpush.bf16.msra.mxu0 %v5555
  %5846 = vmatpush.bf16.msra.mxu0 %v5554
  %5847 = vmatpush.bf16.msra.mxu0 %v5553
  %5848 = vmatpush.bf16.msra.mxu0 %v5552
  %5849 = vmatpush.bf16.msra.mxu0 %v5551
  %5850 = vmatmul.bf16.gmra.mxu0 %v4958
  %v5851 = vpop.f32.mrf.mxu0
  %v5852 = vadd.f32 %v5839, %v5851
  %v5853 = vpop.f32.mrf.mxu0
  %5854 = vdwg.mxu0
  %5855 = vmatpush.bf16.msra.mxu0 %v5566
  %5856 = vmatpush.bf16.msra.mxu0 %v5565
  %5857 = vmatpush.bf16.msra.mxu0 %v5564
  %5858 = vmatpush.bf16.msra.mxu0 %v5563
  %5859 = vmatpush.bf16.msra.mxu0 %v5562
  %5860 = vmatpush.bf16.msra.mxu0 %v5561
  %5861 = vmatpush.bf16.msra.mxu0 %v5560
  %5862 = vmatpush.bf16.msra.mxu0 %v5559
  %5863 = vmatmul.bf16.gmra.mxu0 %v4959
  %v5864 = vpop.f32.mrf.mxu0
  %v5865 = vadd.f32 %v5852, %v5864
  %v5866 = vpop.f32.mrf.mxu0
  %5867 = vdwg.mxu0
  %5868 = vmatpush.bf16.msra.mxu0 %v5574
  %5869 = vmatpush.bf16.msra.mxu0 %v5573
  %5870 = vmatpush.bf16.msra.mxu0 %v5572
  %5871 = vmatpush.bf16.msra.mxu0 %v5571
  %5872 = vmatpush.bf16.msra.mxu0 %v5570
  %5873 = vmatpush.bf16.msra.mxu0 %v5569
  %5874 = vmatpush.bf16.msra.mxu0 %v5568
  %5875 = vmatpush.bf16.msra.mxu0 %v5567
  %5876 = vmatmul.bf16.gmra.mxu0 %v4960
  %v5877 = vpop.f32.mrf.mxu0
  %v5878 = vadd.f32 %v5865, %v5877
  %v5879 = vpop.f32.mrf.mxu0
  %5880 = vdwg.mxu0
  %5881 = vmatpush.bf16.msra.mxu0 %v5582
  %5882 = vmatpush.bf16.msra.mxu0 %v5581
  %5883 = vmatpush.bf16.msra.mxu0 %v5580
  %5884 = vmatpush.bf16.msra.mxu0 %v5579
  %5885 = vmatpush.bf16.msra.mxu0 %v5578
  %5886 = vmatpush.bf16.msra.mxu0 %v5577
  %5887 = vmatpush.bf16.msra.mxu0 %v5576
  %5888 = vmatpush.bf16.msra.mxu0 %v5575
  %5889 = vmatmul.bf16.gmra.mxu0 %v4961
  %v5890 = vpop.f32.mrf.mxu0
  %v5891 = vadd.f32 %v5878, %v5890
  %v5892 = vpop.f32.mrf.mxu0
  %5893 = vdwg.mxu0
  %5894 = vmatpush.bf16.msra.mxu0 %v5590
  %5895 = vmatpush.bf16.msra.mxu0 %v5589
  %5896 = vmatpush.bf16.msra.mxu0 %v5588
  %5897 = vmatpush.bf16.msra.mxu0 %v5587
  %5898 = vmatpush.bf16.msra.mxu0 %v5586
  %5899 = vmatpush.bf16.msra.mxu0 %v5585
  %5900 = vmatpush.bf16.msra.mxu0 %v5584
  %5901 = vmatpush.bf16.msra.mxu0 %v5583
  %5902 = vmatmul.bf16.gmra.mxu0 %v4962
  %v5903 = vpop.f32.mrf.mxu0
  %v5904 = vadd.f32 %v5891, %v5903
  %v5905 = vpop.f32.mrf.mxu0
  %5906 = vdwg.mxu0
  %5907 = vmatpush.bf16.msra.mxu0 %v5598
  %5908 = vmatpush.bf16.msra.mxu0 %v5597
  %5909 = vmatpush.bf16.msra.mxu0 %v5596
  %5910 = vmatpush.bf16.msra.mxu0 %v5595
  %5911 = vmatpush.bf16.msra.mxu0 %v5594
  %5912 = vmatpush.bf16.msra.mxu0 %v5593
  %5913 = vmatpush.bf16.msra.mxu0 %v5592
  %5914 = vmatpush.bf16.msra.mxu0 %v5591
  %5915 = vmatmul.bf16.gmra.mxu0 %v4963
  %v5916 = vpop.f32.mrf.mxu0
  %v5917 = vadd.f32 %v5904, %v5916
  %v5918 = vpop.f32.mrf.mxu0
  %5919 = vdwg.mxu0
  %5920 = vmatpush.bf16.msra.mxu0 %v5606
  %5921 = vmatpush.bf16.msra.mxu0 %v5605
  %5922 = vmatpush.bf16.msra.mxu0 %v5604
  %5923 = vmatpush.bf16.msra.mxu0 %v5603
  %5924 = vmatpush.bf16.msra.mxu0 %v5602
  %5925 = vmatpush.bf16.msra.mxu0 %v5601
  %5926 = vmatpush.bf16.msra.mxu0 %v5600
  %5927 = vmatpush.bf16.msra.mxu0 %v5599
  %5928 = vmatmul.bf16.gmra.mxu0 %v4964
  %v5929 = vpop.f32.mrf.mxu0
  %v5930 = vadd.f32 %v5917, %v5929
  %v5931 = vpop.f32.mrf.mxu0
  %5932 = vdwg.mxu0
  %5933 = vmatpush.bf16.msra.mxu0 %v5614
  %5934 = vmatpush.bf16.msra.mxu0 %v5613
  %5935 = vmatpush.bf16.msra.mxu0 %v5612
  %5936 = vmatpush.bf16.msra.mxu0 %v5611
  %5937 = vmatpush.bf16.msra.mxu0 %v5610
  %5938 = vmatpush.bf16.msra.mxu0 %v5609
  %5939 = vmatpush.bf16.msra.mxu0 %v5608
  %5940 = vmatpush.bf16.msra.mxu0 %v5607
  %5941 = vmatmul.bf16.gmra.mxu0 %v4965
  %v5942 = vpop.f32.mrf.mxu0
  %v5943 = vadd.f32 %v5930, %v5942
  %v5944 = vpop.f32.mrf.mxu0
  %5945 = vdwg.mxu0
  %5946 = vmatpush.bf16.msra.mxu0 %v5622
  %5947 = vmatpush.bf16.msra.mxu0 %v5621
  %5948 = vmatpush.bf16.msra.mxu0 %v5620
  %5949 = vmatpush.bf16.msra.mxu0 %v5619
  %5950 = vmatpush.bf16.msra.mxu0 %v5618
  %5951 = vmatpush.bf16.msra.mxu0 %v5617
  %5952 = vmatpush.bf16.msra.mxu0 %v5616
  %5953 = vmatpush.bf16.msra.mxu0 %v5615
  %5954 = vmatmul.bf16.gmra.mxu0 %v4966
  %v5955 = vpop.f32.mrf.mxu0
  %v5956 = vadd.f32 %v5943, %v5955
  %v5957 = vpop.f32.mrf.mxu0
  %5958 = vdwg.mxu0
  %v5959 = vmax.f32 %v5956, 0.0
  %v5960 = vld [vmem:[%s1] sm:$0xff]
  %v5961 = vld [vmem:[%s1 + $0x8] sm:$0xff]
  %v5962 = vld [vmem:[%s1 + $0x10] sm:$0xff]
  %v5963 = vld [vmem:[%s1 + $0x18] sm:$0xff]
  %v5964 = vld [vmem:[%s1 + $0x20] sm:$0xff]
  %v5965 = vld [vmem:[%s1 + $0x28] sm:$0xff]
  %v5966 = vld [vmem:[%s1 + $0x30] sm:$0xff]
  %v5967 = vld [vmem:[%s1 + $0x38] sm:$0xff]
  %v5968 = vld [vmem:[%s1 + $0x40] sm:$0xff]
  %v5969 = vld [vmem:[%s1 + $0x48] sm:$0xff]
  %v5970 = vld [vmem:[%s1 + $0x50] sm:$0xff]
  %v5971 = vld [vmem:[%s1 + $0x58] sm:$0xff]
  %v5972 = vld [vmem:[%s1 + $0x60] sm:$0x3]
  %v5973 = vld [vmem:[%s1 + $0x68] sm:$0x3]
  %v5974 = vld [vmem:[%s1 + $0x70] sm:$0x3]
  %v5975 = vld [vmem:[%s1 + $0x78] sm:$0x3]
  %v5976 = vpack.c.bf16 %v5964, %v5960
  %v5977 = vpack.c.bf16 %v5965, %v5961
  %v5978 = vpack.c.bf16 %v5966, %v5962
  %v5979 = vpack.c.bf16 %v5967, %v5963
  %v5980 = vpack.c.bf16 %v5972, %v5968
  %v5981 = vpack.c.bf16 %v5973, %v5969
  %v5982 = vpack.c.bf16 %v5974, %v5970
  %v5983 = vpack.c.bf16 %v5975, %v5971
  %v5984 = vld [vmem:[%s5] sm:$0xf]
  %v5985 = vld [vmem:[%s5 + $0x4] sm:$0xf]
  %v5986 = vld [vmem:[%s5 + $0x8] sm:$0xf]
  %v5987 = vld [vmem:[%s5 + $0xc] sm:$0xf]
  %v5988 = vld [vmem:[%s5 + $0x10] sm:$0xf]
  %v5989 = vld [vmem:[%s5 + $0x14] sm:$0xf]
  %v5990 = vld [vmem:[%s5 + $0x18] sm:$0xf]
  %v5991 = vld [vmem:[%s5 + $0x1c] sm:$0xf]
  %v5992 = vld [vmem:[%s5 + $0x20] sm:$0xf]
  %v5993 = vld [vmem:[%s5 + $0x24] sm:$0xf]
  %v5994 = vld [vmem:[%s5 + $0x28] sm:$0xf]
  %v5995 = vld [vmem:[%s5 + $0x2c] sm:$0xf]
  %v5996 = vld [vmem:[%s5 + $0x30] sm:$0xf]
  %v5997 = vld [vmem:[%s5 + $0x34] sm:$0xf]
  %v5998 = vld [vmem:[%s5 + $0x38] sm:$0xf]
  %v5999 = vld [vmem:[%s5 + $0x3c] sm:$0xf]
  %v6000 = vld [vmem:[%s5 + $0x40] sm:$0xf]
  %v6001 = vld [vmem:[%s5 + $0x44] sm:$0xf]
  %v6002 = vld [vmem:[%s5 + $0x48] sm:$0xf]
  %v6003 = vld [vmem:[%s5 + $0x4c] sm:$0xf]
  %v6004 = vld [vmem:[%s5 + $0x50] sm:$0xf]
  %v6005 = vld [vmem:[%s5 + $0x54] sm:$0xf]
  %v6006 = vld [vmem:[%s5 + $0x58] sm:$0xf]
  %v6007 = vld [vmem:[%s5 + $0x5c] sm:$0xf]
  %v6008 = vld [vmem:[%s5 + $0x60] sm:$0xf]
  %v6009 = vld [vmem:[%s5 + $0x64] sm:$0xf]
  %v6010 = vld [vmem:[%s5 + $0x68] sm:$0xf]
  %v6011 = vld [vmem:[%s5 + $0x6c] sm:$0xf]
  %v6012 = vld [vmem:[%s5 + $0x70] sm:$0xf]
  %v6013 = vld [vmem:[%s5 + $0x74] sm:$0xf]
  %v6014 = vld [vmem:[%s5 + $0x78] sm:$0xf]
  %v6015 = vld [vmem:[%s5 + $0x7c] sm:$0xf]
  %v6016 = vld [vmem:[%s5 + $0x80] sm:$0xf]
  %v6017 = vld [vmem:[%s5 + $0x84] sm:$0xf]
  %v6018 = vld [vmem:[%s5 + $0x88] sm:$0xf]
  %v6019 = vld [vmem:[%s5 + $0x8c] sm:$0xf]
  %v6020 = vld [vmem:[%s5 + $0x90] sm:$0xf]
  %v6021 = vld [vmem:[%s5 + $0x94] sm:$0xf]
  %v6022 = vld [vmem:[%s5 + $0x98] sm:$0xf]
  %v6023 = vld [vmem:[%s5 + $0x9c] sm:$0xf]
  %v6024 = vld [vmem:[%s5 + $0xa0] sm:$0xf]
  %v6025 = vld [vmem:[%s5 + $0xa4] sm:$0xf]
  %v6026 = vld [vmem:[%s5 + $0xa8] sm:$0xf]
  %v6027 = vld [vmem:[%s5 + $0xac] sm:$0xf]
  %v6028 = vld [vmem:[%s5 + $0xb0] sm:$0xf]
  %v6029 = vld [vmem:[%s5 + $0xb4] sm:$0xf]
  %v6030 = vld [vmem:[%s5 + $0xb8] sm:$0xf]
  %v6031 = vld [vmem:[%s5 + $0xbc] sm:$0xf]
  %v6032 = vld [vmem:[%s5 + $0xc0] sm:$0xf]
  %v6033 = vld [vmem:[%s5 + $0xc4] sm:$0xf]
  %v6034 = vld [vmem:[%s5 + $0xc8] sm:$0xf]
  %v6035 = vld [vmem:[%s5 + $0xcc] sm:$0xf]
  %v6036 = vld [vmem:[%s5 + $0xd0] sm:$0xf]
  %v6037 = vld [vmem:[%s5 + $0xd4] sm:$0xf]
  %v6038 = vld [vmem:[%s5 + $0xd8] sm:$0xf]
  %v6039 = vld [vmem:[%s5 + $0xdc] sm:$0xf]
  %v6040 = vld [vmem:[%s5 + $0xe0] sm:$0xf]
  %v6041 = vld [vmem:[%s5 + $0xe4] sm:$0xf]
  %v6042 = vld [vmem:[%s5 + $0xe8] sm:$0xf]
  %v6043 = vld [vmem:[%s5 + $0xec] sm:$0xf]
  %v6044 = vld [vmem:[%s5 + $0xf0] sm:$0xf]
  %v6045 = vld [vmem:[%s5 + $0xf4] sm:$0xf]
  %v6046 = vld [vmem:[%s5 + $0xf8] sm:$0xf]
  %v6047 = vld [vmem:[%s5 + $0xfc] sm:$0xf]
  %v6048 = vld [vmem:[%s6] sm:$0x1]
  %v6050 = vperm.slane %v6048, 0
  %v6116 = vunpack.c.l.b16 %v5984
  %v6117 = vunpack.c.l.b16 %v5985
  %v6118 = vunpack.c.l.b16 %v5986
  %v6119 = vunpack.c.l.b16 %v5987
  %v6120 = vunpack.c.l.b16 %v5988
  %v6121 = vunpack.c.l.b16 %v5989
  %v6122 = vunpack.c.l.b16 %v5990
  %v6123 = vunpack.c.l.b16 %v5991
  %v6124 = vunpack.c.l.b16 %v5992
  %v6125 = vunpack.c.l.b16 %v5993
  %v6126 = vunpack.c.l.b16 %v5994
  %v6127 = vunpack.c.l.b16 %v5995
  %v6128 = vunpack.c.l.b16 %v5996
  %v6129 = vunpack.c.l.b16 %v5997
  %v6130 = vunpack.c.l.b16 %v5998
  %v6131 = vunpack.c.l.b16 %v5999
  %v6132 = vunpack.c.l.b16 %v6000
  %v6133 = vunpack.c.l.b16 %v6001
  %v6134 = vunpack.c.l.b16 %v6002
  %v6135 = vunpack.c.l.b16 %v6003
  %v6136 = vunpack.c.l.b16 %v6004
  %v6137 = vunpack.c.l.b16 %v6005
  %v6138 = vunpack.c.l.b16 %v6006
  %v6139 = vunpack.c.l.b16 %v6007
  %v6140 = vunpack.c.l.b16 %v6008
  %v6141 = vunpack.c.l.b16 %v6009
  %v6142 = vunpack.c.l.b16 %v6010
  %v6143 = vunpack.c.l.b16 %v6011
  %v6144 = vunpack.c.l.b16 %v6012
  %v6145 = vunpack.c.l.b16 %v6013
  %v6146 = vunpack.c.l.b16 %v6014
  %v6147 = vunpack.c.l.b16 %v6015
  %v6148 = vunpack.c.l.b16 %v6016
  %v6149 = vunpack.c.l.b16 %v6017
  %v6150 = vunpack.c.l.b16 %v6018
  %v6151 = vunpack.c.l.b16 %v6019
  %v6152 = vunpack.c.l.b16 %v6020
  %v6153 = vunpack.c.l.b16 %v6021
  %v6154 = vunpack.c.l.b16 %v6022
  %v6155 = vunpack.c.l.b16 %v6023
  %v6156 = vunpack.c.l.b16 %v6024
  %v6157 = vunpack.c.l.b16 %v6025
  %v6158 = vunpack.c.l.b16 %v6026
  %v6159 = vunpack.c.l.b16 %v6027
  %v6160 = vunpack.c.l.b16 %v6028
  %v6161 = vunpack.c.l.b16 %v6029
  %v6162 = vunpack.c.l.b16 %v6030
  %v6163 = vunpack.c.l.b16 %v6031
  %v6164 = vunpack.c.l.b16 %v6032
  %v6165 = vunpack.c.l.b16 %v6033
  %v6166 = vunpack.c.l.b16 %v6034
  %v6167 = vunpack.c.l.b16 %v6035
  %v6168 = vunpack.c.l.b16 %v6036
  %v6169 = vunpack.c.l.b16 %v6037
  %v6170 = vunpack.c.l.b16 %v6038
  %v6171 = vunpack.c.l.b16 %v6039
  %v6172 = vunpack.c.l.b16 %v6040
  %v6173 = vunpack.c.l.b16 %v6041
  %v6174 = vunpack.c.l.b16 %v6042
  %v6175 = vunpack.c.l.b16 %v6043
  %v6176 = vunpack.c.l.b16 %v6044
  %v6177 = vunpack.c.l.b16 %v6045
  %v6178 = vunpack.c.l.b16 %v6046
  %v6179 = vunpack.c.l.b16 %v6047
  %v6180 = vpack.c.b16 %v6117, %v6116
  %v6181 = vpack.c.b16 %v6119, %v6118
  %v6182 = vpack.c.b16 %v6121, %v6120
  %v6183 = vpack.c.b16 %v6123, %v6122
  %v6184 = vpack.c.b16 %v6125, %v6124
  %v6185 = vpack.c.b16 %v6127, %v6126
  %v6186 = vpack.c.b16 %v6129, %v6128
  %v6187 = vpack.c.b16 %v6131, %v6130
  %v6188 = vpack.c.b16 %v6133, %v6132
  %v6189 = vpack.c.b16 %v6135, %v6134
  %v6190 = vpack.c.b16 %v6137, %v6136
  %v6191 = vpack.c.b16 %v6139, %v6138
  %v6192 = vpack.c.b16 %v6141, %v6140
  %v6193 = vpack.c.b16 %v6143, %v6142
  %v6194 = vpack.c.b16 %v6145, %v6144
  %v6195 = vpack.c.b16 %v6147, %v6146
  %v6196 = vpack.c.b16 %v6149, %v6148
  %v6197 = vpack.c.b16 %v6151, %v6150
  %v6198 = vpack.c.b16 %v6153, %v6152
  %v6199 = vpack.c.b16 %v6155, %v6154
  %v6200 = vpack.c.b16 %v6157, %v6156
  %v6201 = vpack.c.b16 %v6159, %v6158
  %v6202 = vpack.c.b16 %v6161, %v6160
  %v6203 = vpack.c.b16 %v6163, %v6162
  %v6204 = vpack.c.b16 %v6165, %v6164
  %v6205 = vpack.c.b16 %v6167, %v6166
  %v6206 = vpack.c.b16 %v6169, %v6168
  %v6207 = vpack.c.b16 %v6171, %v6170
  %v6208 = vpack.c.b16 %v6173, %v6172
  %v6209 = vpack.c.b16 %v6175, %v6174
  %v6210 = vpack.c.b16 %v6177, %v6176
  %v6211 = vpack.c.b16 %v6179, %v6178
  %6244 = vmatpush.bf16.msra.mxu0 %v6187
  %6245 = vmatpush.bf16.msra.mxu0 %v6186
  %6246 = vmatpush.bf16.msra.mxu0 %v6185
  %6247 = vmatpush.bf16.msra.mxu0 %v6184
  %6248 = vmatpush.bf16.msra.mxu0 %v6183
  %6249 = vmatpush.bf16.msra.mxu0 %v6182
  %6250 = vmatpush.bf16.msra.mxu0 %v6181
  %6251 = vmatpush.bf16.msra.mxu0 %v6180
  %6252 = vmatmul.bf16.gmra.mxu0 %v5976
  %v6253 = vpop.f32.mrf.mxu0
  %v6254 = vadd.f32 %v6050, %v6253
  %v6255 = vpop.f32.mrf.mxu0
  %v6256 = vadd.f32 %v6050, %v6255
  %6257 = vmatmul.bf16.gmra.mxu0 %v5980
  %v6258 = vpop.f32.mrf.mxu0
  %v6259 = vadd.f32 %v6050, %v6258
  %v6260 = vpop.f32.mrf.mxu0
  %v6261 = vadd.f32 %v6050, %v6260
  %6262 = vdwg.mxu0
  %6263 = vmatpush.bf16.msra.mxu0 %v6195
  %6264 = vmatpush.bf16.msra.mxu0 %v6194
  %6265 = vmatpush.bf16.msra.mxu0 %v6193
  %6266 = vmatpush.bf16.msra.mxu0 %v6192
  %6267 = vmatpush.bf16.msra.mxu0 %v6191
  %6268 = vmatpush.bf16.msra.mxu0 %v6190
  %6269 = vmatpush.bf16.msra.mxu0 %v6189
  %6270 = vmatpush.bf16.msra.mxu0 %v6188
  %6271 = vmatmul.bf16.gmra.mxu0 %v5977
  %v6272 = vpop.f32.mrf.mxu0
  %v6273 = vadd.f32 %v6254, %v6272
  %v6274 = vpop.f32.mrf.mxu0
  %v6275 = vadd.f32 %v6256, %v6274
  %6276 = vmatmul.bf16.gmra.mxu0 %v5981
  %v6277 = vpop.f32.mrf.mxu0
  %v6278 = vadd.f32 %v6259, %v6277
  %v6279 = vpop.f32.mrf.mxu0
  %v6280 = vadd.f32 %v6261, %v6279
  %6281 = vdwg.mxu0
  %6282 = vmatpush.bf16.msra.mxu0 %v6203
  %6283 = vmatpush.bf16.msra.mxu0 %v6202
  %6284 = vmatpush.bf16.msra.mxu0 %v6201
  %6285 = vmatpush.bf16.msra.mxu0 %v6200
  %6286 = vmatpush.bf16.msra.mxu0 %v6199
  %6287 = vmatpush.bf16.msra.mxu0 %v6198
  %6288 = vmatpush.bf16.msra.mxu0 %v6197
  %6289 = vmatpush.bf16.msra.mxu0 %v6196
  %6290 = vmatmul.bf16.gmra.mxu0 %v5978
  %v6291 = vpop.f32.mrf.mxu0
  %v6292 = vadd.f32 %v6273, %v6291
  %v6293 = vpop.f32.mrf.mxu0
  %v6294 = vadd.f32 %v6275, %v6293
  %6295 = vmatmul.bf16.gmra.mxu0 %v5982
  %v6296 = vpop.f32.mrf.mxu0
  %v6297 = vadd.f32 %v6278, %v6296
  %v6298 = vpop.f32.mrf.mxu0
  %v6299 = vadd.f32 %v6280, %v6298
  %6300 = vdwg.mxu0
  %6301 = vmatpush.bf16.msra.mxu0 %v6211
  %6302 = vmatpush.bf16.msra.mxu0 %v6210
  %6303 = vmatpush.bf16.msra.mxu0 %v6209
  %6304 = vmatpush.bf16.msra.mxu0 %v6208
  %6305 = vmatpush.bf16.msra.mxu0 %v6207
  %6306 = vmatpush.bf16.msra.mxu0 %v6206
  %6307 = vmatpush.bf16.msra.mxu0 %v6205
  %6308 = vmatpush.bf16.msra.mxu0 %v6204
  %6309 = vmatmul.bf16.gmra.mxu0 %v5979
  %v6310 = vpop.f32.mrf.mxu0
  %v6311 = vadd.f32 %v6292, %v6310
  %v6312 = vpop.f32.mrf.mxu0
  %v6313 = vadd.f32 %v6294, %v6312
  %6314 = vmatmul.bf16.gmra.mxu0 %v5983
  %v6315 = vpop.f32.mrf.mxu0
  %v6316 = vadd.f32 %v6297, %v6315
  %v6317 = vpop.f32.mrf.mxu0
  %v6318 = vadd.f32 %v6299, %v6317
  %6319 = vdwg.mxu0
  %v6320 = vmax.f32 %v6311, 0.0
  %v6321 = vmax.f32 %v6313, 0.0
  %v6322 = vmax.f32 %v6316, 0.0
  %v6323 = vmax.f32 %v6318, 0.0
  %v6324 = vld [vmem:[%s2] sm:$0xff]
  %v6325 = vld [vmem:[%s2 + $0x8] sm:$0xff]
  %v6326 = vld [vmem:[%s2 + $0x10] sm:$0xff]
  %v6327 = vld [vmem:[%s2 + $0x18] sm:$0xff]
  %v6328 = vld [vmem:[%s2 + $0x20] sm:$0xff]
  %v6329 = vld [vmem:[%s2 + $0x28] sm:$0xff]
  %v6330 = vld [vmem:[%s2 + $0x30] sm:$0xff]
  %v6331 = vld [vmem:[%s2 + $0x38] sm:$0xff]
  %v6332 = vld [vmem:[%s2 + $0x40] sm:$0xff]
  %v6333 = vld [vmem:[%s2 + $0x48] sm:$0xff]
  %v6334 = vld [vmem:[%s2 + $0x50] sm:$0xff]
  %v6335 = vld [vmem:[%s2 + $0x58] sm:$0xff]
  %v6336 = vld [vmem:[%s2 + $0x60] sm:$0xff]
  %v6337 = vld [vmem:[%s2 + $0x68] sm:$0xff]
  %v6338 = vld [vmem:[%s2 + $0x70] sm:$0xff]
  %v6339 = vld [vmem:[%s2 + $0x78] sm:$0xff]
  %v6340 = vld [vmem:[%s2 + $0x80] sm:$0xff]
  %v6341 = vld [vmem:[%s2 + $0x88] sm:$0xff]
  %v6342 = vld [vmem:[%s2 + $0x90] sm:$0xff]
  %v6343 = vld [vmem:[%s2 + $0x98] sm:$0xff]
  %v6344 = vld [vmem:[%s2 + $0xa0] sm:$0x3]
  %v6345 = vld [vmem:[%s2 + $0xa8] sm:$0x3]
  %v6346 = vld [vmem:[%s2 + $0xb0] sm:$0x3]
  %v6347 = vld [vmem:[%s2 + $0xb8] sm:$0x3]
  %v6348 = vpack.c.bf16 %v6328, %v6324
  %v6349 = vpack.c.bf16 %v6329, %v6325
  %v6350 = vpack.c.bf16 %v6330, %v6326
  %v6351 = vpack.c.bf16 %v6331, %v6327
  %v6352 = vpack.c.bf16 %v6336, %v6332
  %v6353 = vpack.c.bf16 %v6337, %v6333
  %v6354 = vpack.c.bf16 %v6338, %v6334
  %v6355 = vpack.c.bf16 %v6339, %v6335
  %v6356 = vpack.c.bf16 %v6344, %v6340
  %v6357 = vpack.c.bf16 %v6345, %v6341
  %v6358 = vpack.c.bf16 %v6346, %v6342
  %v6359 = vpack.c.bf16 %v6347, %v6343
  %v6360 = vld [vmem:[%s7] sm:$0xf]
  %v6361 = vld [vmem:[%s7 + $0x4] sm:$0xf]
  %v6362 = vld [vmem:[%s7 + $0x8] sm:$0xf]
  %v6363 = vld [vmem:[%s7 + $0xc] sm:$0xf]
  %v6364 = vld [vmem:[%s7 + $0x10] sm:$0xf]
  %v6365 = vld [vmem:[%s7 + $0x14] sm:$0xf]
  %v6366 = vld [vmem:[%s7 + $0x18] sm:$0xf]
  %v6367 = vld [vmem:[%s7 + $0x1c] sm:$0xf]
  %v6368 = vld [vmem:[%s7 + $0x20] sm:$0xf]
  %v6369 = vld [vmem:[%s7 + $0x24] sm:$0xf]
  %v6370 = vld [vmem:[%s7 + $0x28] sm:$0xf]
  %v6371 = vld [vmem:[%s7 + $0x2c] sm:$0xf]
  %v6372 = vld [vmem:[%s7 + $0x30] sm:$0xf]
  %v6373 = vld [vmem:[%s7 + $0x34] sm:$0xf]
  %v6374 = vld [vmem:[%s7 + $0x38] sm:$0xf]
  %v6375 = vld [vmem:[%s7 + $0x3c] sm:$0xf]
  %v6376 = vld [vmem:[%s7 + $0x40] sm:$0xf]
  %v6377 = vld [vmem:[%s7 + $0x44] sm:$0xf]
  %v6378 = vld [vmem:[%s7 + $0x48] sm:$0xf]
  %v6379 = vld [vmem:[%s7 + $0x4c] sm:$0xf]
  %v6380 = vld [vmem:[%s7 + $0x50] sm:$0xf]
  %v6381 = vld [vmem:[%s7 + $0x54] sm:$0xf]
  %v6382 = vld [vmem:[%s7 + $0x58] sm:$0xf]
  %v6383 = vld [vmem:[%s7 + $0x5c] sm:$0xf]
  %v6384 = vld [vmem:[%s7 + $0x60] sm:$0xf]
  %v6385 = vld [vmem:[%s7 + $0x64] sm:$0xf]
  %v6386 = vld [vmem:[%s7 + $0x68] sm:$0xf]
  %v6387 = vld [vmem:[%s7 + $0x6c] sm:$0xf]
  %v6388 = vld [vmem:[%s7 + $0x70] sm:$0xf]
  %v6389 = vld [vmem:[%s7 + $0x74] sm:$0xf]
  %v6390 = vld [vmem:[%s7 + $0x78] sm:$0xf]
  %v6391 = vld [vmem:[%s7 + $0x7c] sm:$0xf]
  %v6392 = vld [vmem:[%s7 + $0x80] sm:$0xf]
  %v6393 = vld [vmem:[%s7 + $0x84] sm:$0xf]
  %v6394 = vld [vmem:[%s7 + $0x88] sm:$0xf]
  %v6395 = vld [vmem:[%s7 + $0x8c] sm:$0xf]
  %v6396 = vld [vmem:[%s7 + $0x90] sm:$0xf]
  %v6397 = vld [vmem:[%s7 + $0x94] sm:$0xf]
  %v6398 = vld [vmem:[%s7 + $0x98] sm:$0xf]
  %v6399 = vld [vmem:[%s7 + $0x9c] sm:$0xf]
  %v6400 = vld [vmem:[%s7 + $0xa0] sm:$0xf]
  %v6401 = vld [vmem:[%s7 + $0xa4] sm:$0xf]
  %v6402 = vld [vmem:[%s7 + $0xa8] sm:$0xf]
  %v6403 = vld [vmem:[%s7 + $0xac] sm:$0xf]
  %v6404 = vld [vmem:[%s7 + $0xb0] sm:$0xf]
  %v6405 = vld [vmem:[%s7 + $0xb4] sm:$0xf]
  %v6406 = vld [vmem:[%s7 + $0xb8] sm:$0xf]
  %v6407 = vld [vmem:[%s7 + $0xbc] sm:$0xf]
  %v6408 = vld [vmem:[%s7 + $0xc0] sm:$0xf]
  %v6409 = vld [vmem:[%s7 + $0xc4] sm:$0xf]
  %v6410 = vld [vmem:[%s7 + $0xc8] sm:$0xf]
  %v6411 = vld [vmem:[%s7 + $0xcc] sm:$0xf]
  %v6412 = vld [vmem:[%s7 + $0xd0] sm:$0xf]
  %v6413 = vld [vmem:[%s7 + $0xd4] sm:$0xf]
  %v6414 = vld [vmem:[%s7 + $0xd8] sm:$0xf]
  %v6415 = vld [vmem:[%s7 + $0xdc] sm:$0xf]
  %v6416 = vld [vmem:[%s7 + $0xe0] sm:$0xf]
  %v6417 = vld [vmem:[%s7 + $0xe4] sm:$0xf]
  %v6418 = vld [vmem:[%s7 + $0xe8] sm:$0xf]
  %v6419 = vld [vmem:[%s7 + $0xec] sm:$0xf]
  %v6420 = vld [vmem:[%s7 + $0xf0] sm:$0xf]
  %v6421 = vld [vmem:[%s7 + $0xf4] sm:$0xf]
  %v6422 = vld [vmem:[%s7 + $0xf8] sm:$0xf]
  %v6423 = vld [vmem:[%s7 + $0xfc] sm:$0xf]
  %v6424 = vld [vmem:[%s8] sm:$0x1]
  %v6426 = vperm.slane %v6424, 0
  %v6492 = vunpack.c.l.b16 %v6360
  %v6493 = vunpack.c.l.b16 %v6361
  %v6494 = vunpack.c.l.b16 %v6362
  %v6495 = vunpack.c.l.b16 %v6363
  %v6496 = vunpack.c.l.b16 %v6364
  %v6497 = vunpack.c.l.b16 %v6365
  %v6498 = vunpack.c.l.b16 %v6366
  %v6499 = vunpack.c.l.b16 %v6367
  %v6500 = vunpack.c.l.b16 %v6368
  %v6501 = vunpack.c.l.b16 %v6369
  %v6502 = vunpack.c.l.b16 %v6370
  %v6503 = vunpack.c.l.b16 %v6371
  %v6504 = vunpack.c.l.b16 %v6372
  %v6505 = vunpack.c.l.b16 %v6373
  %v6506 = vunpack.c.l.b16 %v6374
  %v6507 = vunpack.c.l.b16 %v6375
  %v6508 = vunpack.c.l.b16 %v6376
  %v6509 = vunpack.c.l.b16 %v6377
  %v6510 = vunpack.c.l.b16 %v6378
  %v6511 = vunpack.c.l.b16 %v6379
  %v6512 = vunpack.c.l.b16 %v6380
  %v6513 = vunpack.c.l.b16 %v6381
  %v6514 = vunpack.c.l.b16 %v6382
  %v6515 = vunpack.c.l.b16 %v6383
  %v6516 = vunpack.c.l.b16 %v6384
  %v6517 = vunpack.c.l.b16 %v6385
  %v6518 = vunpack.c.l.b16 %v6386
  %v6519 = vunpack.c.l.b16 %v6387
  %v6520 = vunpack.c.l.b16 %v6388
  %v6521 = vunpack.c.l.b16 %v6389
  %v6522 = vunpack.c.l.b16 %v6390
  %v6523 = vunpack.c.l.b16 %v6391
  %v6524 = vunpack.c.l.b16 %v6392
  %v6525 = vunpack.c.l.b16 %v6393
  %v6526 = vunpack.c.l.b16 %v6394
  %v6527 = vunpack.c.l.b16 %v6395
  %v6528 = vunpack.c.l.b16 %v6396
  %v6529 = vunpack.c.l.b16 %v6397
  %v6530 = vunpack.c.l.b16 %v6398
  %v6531 = vunpack.c.l.b16 %v6399
  %v6532 = vunpack.c.l.b16 %v6400
  %v6533 = vunpack.c.l.b16 %v6401
  %v6534 = vunpack.c.l.b16 %v6402
  %v6535 = vunpack.c.l.b16 %v6403
  %v6536 = vunpack.c.l.b16 %v6404
  %v6537 = vunpack.c.l.b16 %v6405
  %v6538 = vunpack.c.l.b16 %v6406
  %v6539 = vunpack.c.l.b16 %v6407
  %v6540 = vunpack.c.l.b16 %v6408
  %v6541 = vunpack.c.l.b16 %v6409
  %v6542 = vunpack.c.l.b16 %v6410
  %v6543 = vunpack.c.l.b16 %v6411
  %v6544 = vunpack.c.l.b16 %v6412
  %v6545 = vunpack.c.l.b16 %v6413
  %v6546 = vunpack.c.l.b16 %v6414
  %v6547 = vunpack.c.l.b16 %v6415
  %v6548 = vunpack.c.l.b16 %v6416
  %v6549 = vunpack.c.l.b16 %v6417
  %v6550 = vunpack.c.l.b16 %v6418
  %v6551 = vunpack.c.l.b16 %v6419
  %v6552 = vunpack.c.l.b16 %v6420
  %v6553 = vunpack.c.l.b16 %v6421
  %v6554 = vunpack.c.l.b16 %v6422
  %v6555 = vunpack.c.l.b16 %v6423
  %v6556 = vpack.c.b16 %v6493, %v6492
  %v6557 = vpack.c.b16 %v6495, %v6494
  %v6558 = vpack.c.b16 %v6497, %v6496
  %v6559 = vpack.c.b16 %v6499, %v6498
  %v6560 = vpack.c.b16 %v6501, %v6500
  %v6561 = vpack.c.b16 %v6503, %v6502
  %v6562 = vpack.c.b16 %v6505, %v6504
  %v6563 = vpack.c.b16 %v6507, %v6506
  %v6564 = vpack.c.b16 %v6509, %v6508
  %v6565 = vpack.c.b16 %v6511, %v6510
  %v6566 = vpack.c.b16 %v6513, %v6512
  %v6567 = vpack.c.b16 %v6515, %v6514
  %v6568 = vpack.c.b16 %v6517, %v6516
  %v6569 = vpack.c.b16 %v6519, %v6518
  %v6570 = vpack.c.b16 %v6521, %v6520
  %v6571 = vpack.c.b16 %v6523, %v6522
  %v6572 = vpack.c.b16 %v6525, %v6524
  %v6573 = vpack.c.b16 %v6527, %v6526
  %v6574 = vpack.c.b16 %v6529, %v6528
  %v6575 = vpack.c.b16 %v6531, %v6530
  %v6576 = vpack.c.b16 %v6533, %v6532
  %v6577 = vpack.c.b16 %v6535, %v6534
  %v6578 = vpack.c.b16 %v6537, %v6536
  %v6579 = vpack.c.b16 %v6539, %v6538
  %v6580 = vpack.c.b16 %v6541, %v6540
  %v6581 = vpack.c.b16 %v6543, %v6542
  %v6582 = vpack.c.b16 %v6545, %v6544
  %v6583 = vpack.c.b16 %v6547, %v6546
  %v6584 = vpack.c.b16 %v6549, %v6548
  %v6585 = vpack.c.b16 %v6551, %v6550
  %v6586 = vpack.c.b16 %v6553, %v6552
  %v6587 = vpack.c.b16 %v6555, %v6554
  %6620 = vmatpush.bf16.msra.mxu0 %v6563
  %6621 = vmatpush.bf16.msra.mxu0 %v6562
  %6622 = vmatpush.bf16.msra.mxu0 %v6561
  %6623 = vmatpush.bf16.msra.mxu0 %v6560
  %6624 = vmatpush.bf16.msra.mxu0 %v6559
  %6625 = vmatpush.bf16.msra.mxu0 %v6558
  %6626 = vmatpush.bf16.msra.mxu0 %v6557
  %6627 = vmatpush.bf16.msra.mxu0 %v6556
  %6628 = vmatmul.bf16.gmra.mxu0 %v6348
  %v6629 = vpop.f32.mrf.mxu0
  %v6630 = vadd.f32 %v6426, %v6629
  %v6631 = vpop.f32.mrf.mxu0
  %v6632 = vadd.f32 %v6426, %v6631
  %6633 = vmatmul.bf16.gmra.mxu0 %v6352
  %v6634 = vpop.f32.mrf.mxu0
  %v6635 = vadd.f32 %v6426, %v6634
  %v6636 = vpop.f32.mrf.mxu0
  %v6637 = vadd.f32 %v6426, %v6636
  %6638 = vmatmul.bf16.gmra.mxu0 %v6356
  %v6639 = vpop.f32.mrf.mxu0
  %v6640 = vadd.f32 %v6426, %v6639
  %v6641 = vpop.f32.mrf.mxu0
  %v6642 = vadd.f32 %v6426, %v6641
  %6643 = vdwg.mxu0
  %6644 = vmatpush.bf16.msra.mxu0 %v6571
  %6645 = vmatpush.bf16.msra.mxu0 %v6570
  %6646 = vmatpush.bf16.msra.mxu0 %v6569
  %6647 = vmatpush.bf16.msra.mxu0 %v6568
  %6648 = vmatpush.bf16.msra.mxu0 %v6567
  %6649 = vmatpush.bf16.msra.mxu0 %v6566
  %6650 = vmatpush.bf16.msra.mxu0 %v6565
  %6651 = vmatpush.bf16.msra.mxu0 %v6564
  %6652 = vmatmul.bf16.gmra.mxu0 %v6349
  %v6653 = vpop.f32.mrf.mxu0
  %v6654 = vadd.f32 %v6630, %v6653
  %v6655 = vpop.f32.mrf.mxu0
  %v6656 = vadd.f32 %v6632, %v6655
  %6657 = vmatmul.bf16.gmra.mxu0 %v6353
  %v6658 = vpop.f32.mrf.mxu0
  %v6659 = vadd.f32 %v6635, %v6658
  %v6660 = vpop.f32.mrf.mxu0
  %v6661 = vadd.f32 %v6637, %v6660
  %6662 = vmatmul.bf16.gmra.mxu0 %v6357
  %v6663 = vpop.f32.mrf.mxu0
  %v6664 = vadd.f32 %v6640, %v6663
  %v6665 = vpop.f32.mrf.mxu0
  %v6666 = vadd.f32 %v6642, %v6665
  %6667 = vdwg.mxu0
  %6668 = vmatpush.bf16.msra.mxu0 %v6579
  %6669 = vmatpush.bf16.msra.mxu0 %v6578
  %6670 = vmatpush.bf16.msra.mxu0 %v6577
  %6671 = vmatpush.bf16.msra.mxu0 %v6576
  %6672 = vmatpush.bf16.msra.mxu0 %v6575
  %6673 = vmatpush.bf16.msra.mxu0 %v6574
  %6674 = vmatpush.bf16.msra.mxu0 %v6573
  %6675 = vmatpush.bf16.msra.mxu0 %v6572
  %6676 = vmatmul.bf16.gmra.mxu0 %v6350
  %v6677 = vpop.f32.mrf.mxu0
  %v6678 = vadd.f32 %v6654, %v6677
  %v6679 = vpop.f32.mrf.mxu0
  %v6680 = vadd.f32 %v6656, %v6679
  %6681 = vmatmul.bf16.gmra.mxu0 %v6354
  %v6682 = vpop.f32.mrf.mxu0
  %v6683 = vadd.f32 %v6659, %v6682
  %v6684 = vpop.f32.mrf.mxu0
  %v6685 = vadd.f32 %v6661, %v6684
  %6686 = vmatmul.bf16.gmra.mxu0 %v6358
  %v6687 = vpop.f32.mrf.mxu0
  %v6688 = vadd.f32 %v6664, %v6687
  %v6689 = vpop.f32.mrf.mxu0
  %v6690 = vadd.f32 %v6666, %v6689
  %6691 = vdwg.mxu0
  %6692 = vmatpush.bf16.msra.mxu0 %v6587
  %6693 = vmatpush.bf16.msra.mxu0 %v6586
  %6694 = vmatpush.bf16.msra.mxu0 %v6585
  %6695 = vmatpush.bf16.msra.mxu0 %v6584
  %6696 = vmatpush.bf16.msra.mxu0 %v6583
  %6697 = vmatpush.bf16.msra.mxu0 %v6582
  %6698 = vmatpush.bf16.msra.mxu0 %v6581
  %6699 = vmatpush.bf16.msra.mxu0 %v6580
  %6700 = vmatmul.bf16.gmra.mxu0 %v6351
  %v6701 = vpop.f32.mrf.mxu0
  %v6702 = vadd.f32 %v6678, %v6701
  %v6703 = vpop.f32.mrf.mxu0
  %v6704 = vadd.f32 %v6680, %v6703
  %6705 = vmatmul.bf16.gmra.mxu0 %v6355
  %v6706 = vpop.f32.mrf.mxu0
  %v6707 = vadd.f32 %v6683, %v6706
  %v6708 = vpop.f32.mrf.mxu0
  %v6709 = vadd.f32 %v6685, %v6708
  %6710 = vmatmul.bf16.gmra.mxu0 %v6359
  %v6711 = vpop.f32.mrf.mxu0
  %v6712 = vadd.f32 %v6688, %v6711
  %v6713 = vpop.f32.mrf.mxu0
  %v6714 = vadd.f32 %v6690, %v6713
  %6715 = vdwg.mxu0
  %v6716 = vmax.f32 %v6702, 0.0
  %v6717 = vmax.f32 %v6704, 0.0
  %v6718 = vmax.f32 %v6707, 0.0
  %v6719 = vmax.f32 %v6709, 0.0
  %v6720 = vmax.f32 %v6712, 0.0
  %v6721 = vmax.f32 %v6714, 0.0
  %v6723 = vrot.slane %v6320, 1
  %v6725 = vrot.slane %v6320, 2
  %v6727 = vrot.slane %v6320, 3
  %v6729 = vrot.slane %v6320, 4
  %v6731 = vrot.slane %v6320, 5
  %v6733 = vrot.slane %v6320, 6
  %v6735 = vrot.slane %v6320, 7
  %v6738 = vrot.slane %v6321, 1
  %v6740 = vrot.slane %v6321, 2
  %v6742 = vrot.slane %v6321, 3
  %v6744 = vrot.slane %v6321, 4
  %v6747 = vrot.slane %v6716, 1
  %v6749 = vrot.slane %v6716, 2
  %v6750 = vrot.slane %v6716, 3
  %v6751 = vrot.slane %v6716, 4
  %v6752 = vrot.slane %v6716, 5
  %v6754 = vrot.slane %v6717, 6
  %v6755 = vrot.slane %v6717, 7
  %v6756 = vrot.slane %v6717, 1
  %v6757 = vrot.slane %v6717, 2
  %v6758 = vrot.slane %v6717, 3
  %v6759 = vrot.slane %v6717, 4
  %v6760 = vrot.slane %v6717, 5
  %v6762 = vrot.slane %v6718, 6
  %v6763 = vrot.slane %v6718, 7
  %v6764 = vrot.slane %v6718, 1
  %v6765 = vrot.slane %v6718, 2
  %v6766 = vrot.slane %v6747, 2
  %v6767 = vrot.slane %v6749, 2
  %v6768 = vrot.slane %v6750, 2
  %v6769 = vrot.slane %v6751, 2
  %v6770 = vrot.slane %v6752, 2
  %v6771 = vrot.slane %v6754, 2
  %v6772 = vrot.slane %v6755, 2
  %v6773 = vrot.slane %v6756, 2
  %v6774 = vrot.slane %v6757, 2
  %v6775 = vrot.slane %v6758, 2
  %v6776 = vrot.slane %v6759, 2
  %v6777 = vrot.slane %v6760, 2
  %v6778 = vrot.slane %v6762, 2
  %v6779 = vrot.slane %v6763, 2
  %v6796 = vrot.slane %v6764, 2
  %v6797 = vrot.slane %v6765, 2
  %v6801 = vrot.slane %v6321, 5
  %v6803 = vrot.slane %v6321, 6
  %v6806 = vrot.slane %v6322, 7
  %v6808 = vrot.slane %v6322, 1
  %v6810 = vrot.slane %v6322, 2
  %v6812 = vrot.slane %v6322, 3
  %v6814 = vrot.slane %v6322, 4
  %v6816 = vrot.slane %v6322, 5
  %v6818 = vrot.slane %v6322, 6
  %v6821 = vrot.slane %v6323, 7
  %v6823 = vrot.slane %v6718, 4
  %v6825 = vrot.slane %v6718, 5
  %v6828 = vrot.slane %v6719, 1
  %v6829 = vrot.slane %v6719, 2
  %v6830 = vrot.slane %v6719, 3
  %v6831 = vrot.slane %v6719, 4
  %v6832 = vrot.slane %v6719, 5
  %v6833 = vrot.slane %v6719, 6
  %v6834 = vrot.slane %v6719, 7
  %v6836 = vrot.slane %v6720, 1
  %v6837 = vrot.slane %v6720, 2
  %v6838 = vrot.slane %v6720, 3
  %v6839 = vrot.slane %v6720, 4
  %v6840 = vrot.slane %v6720, 5
  %v6841 = vrot.slane %v6720, 6
  %v6842 = vrot.slane %v6720, 7
  %v6844 = vrot.slane %v6721, 1
  %v6845 = vrot.slane %v6721, 2
  %v6846 = vrot.slane %v6828, 6
  %v6847 = vrot.slane %v6829, 6
  %v6848 = vrot.slane %v6830, 6
  %v6849 = vrot.slane %v6831, 6
  %v6850 = vrot.slane %v6832, 6
  %v6851 = vrot.slane %v6833, 6
  %v6852 = vrot.slane %v6834, 6
  %v6853 = vrot.slane %v6836, 6
  %v6854 = vrot.slane %v6837, 6
  %v6855 = vrot.slane %v6838, 6
  %v6856 = vrot.slane %v6839, 6
  %v6857 = vrot.slane %v6840, 6
  %v6858 = vrot.slane %v6841, 6
  %v6859 = vrot.slane %v6842, 6
  %v6876 = vrot.slane %v6844, 6
  %v6877 = vrot.slane %v6845, 6
  %vm6881 = vcmask 1040384
  %v6882 = vsel %vm6881, %v6320, %v6744
  %v6883 = vsel %vm6881, %v6723, %v6801
  %v6884 = vsel %vm6881, %v6725, %v6803
  %v6885 = vsel %vm6881, %v6727, %v6806
  %v6886 = vsel %vm6881, %v6729, %v6322
  %v6887 = vsel %vm6881, %v6731, %v6808
  %v6888 = vsel %vm6881, %v6733, %v6810
  %v6889 = vsel %vm6881, %v6735, %v6812
  %v6890 = vsel %vm6881, %v6321, %v6814
  %v6891 = vsel %vm6881, %v6738, %v6816
  %v6892 = vsel %vm6881, %v6740, %v6818
  %v6893 = vsel %vm6881, %v6742, %v6821
  %v6894 = vsel %vm6881, %v6744, %v6323
  %v6895 = vsel %vm6881, %v6716, %v6823
  %v6896 = vsel %vm6881, %v6747, %v6825
  %v6897 = vsel %vm6881, %v6749, %v6762
  %v6898 = vsel %vm6881, %v6766, %v6846
  %v6899 = vsel %vm6881, %v6767, %v6847
  %v6900 = vsel %vm6881, %v6768, %v6848
  %v6901 = vsel %vm6881, %v6769, %v6849
  %v6902 = vsel %vm6881, %v6770, %v6850
  %v6903 = vsel %vm6881, %v6771, %v6851
  %v6904 = vsel %vm6881, %v6772, %v6852
  %v6905 = vsel %vm6881, %v6757, %v6833
  %v6906 = vsel %vm6881, %v6773, %v6853
  %v6907 = vsel %vm6881, %v6774, %v6854
  %v6908 = vsel %vm6881, %v6775, %v6855
  %v6909 = vsel %vm6881, %v6776, %v6856
  %v6910 = vsel %vm6881, %v6777, %v6857
  %v6911 = vsel %vm6881, %v6778, %v6858
  %v6912 = vsel %vm6881, %v6779, %v6859
  %v6913 = vsel %vm6881, %v6765, %v6841
  %v6914 = vsel %vm6881, %v6796, %v6876
  %v6915 = vsel %vm6881, %v6797, %v6877
  %vm6916 = vcmask 1041408
  %v6917 = vsel %vm6916, %v5959, 0.0
  %v6918 = vrot.slane %v6917, 4
  %v6919 = vadd.f32 %v6917, %v6918
  %v6920 = vrot.slane %v6919, 2
  %v6921 = vadd.f32 %v6919, %v6920
  %v6922 = vrot.slane %v6921, 1
  %v6923 = vadd.f32 %v6921, %v6922
  %v6924 = vsel %vm6916, %v6882, 0.0
  %v6925 = vrot.slane %v6924, 4
  %v6926 = vadd.f32 %v6924, %v6925
  %v6927 = vrot.slane %v6926, 2
  %v6928 = vadd.f32 %v6926, %v6927
  %v6929 = vrot.slane %v6928, 1
  %v6930 = vadd.f32 %v6928, %v6929
  %v6931 = vsel %vm6916, %v6883, 0.0
  %v6932 = vrot.slane %v6931, 4
  %v6933 = vadd.f32 %v6931, %v6932
  %v6934 = vrot.slane %v6933, 2
  %v6935 = vadd.f32 %v6933, %v6934
  %v6936 = vrot.slane %v6935, 1
  %v6937 = vadd.f32 %v6935, %v6936
  %v6938 = vsel %vm6916, %v6884, 0.0
  %v6939 = vrot.slane %v6938, 4
  %v6940 = vadd.f32 %v6938, %v6939
  %v6941 = vrot.slane %v6940, 2
  %v6942 = vadd.f32 %v6940, %v6941
  %v6943 = vrot.slane %v6942, 1
  %v6944 = vadd.f32 %v6942, %v6943
  %v6945 = vsel %vm6916, %v6885, 0.0
  %v6946 = vrot.slane %v6945, 4
  %v6947 = vadd.f32 %v6945, %v6946
  %v6948 = vrot.slane %v6947, 2
  %v6949 = vadd.f32 %v6947, %v6948
  %v6950 = vrot.slane %v6949, 1
  %v6951 = vadd.f32 %v6949, %v6950
  %v6952 = vsel %vm6916, %v6886, 0.0
  %v6953 = vrot.slane %v6952, 4
  %v6954 = vadd.f32 %v6952, %v6953
  %v6955 = vrot.slane %v6954, 2
  %v6956 = vadd.f32 %v6954, %v6955
  %v6957 = vrot.slane %v6956, 1
  %v6958 = vadd.f32 %v6956, %v6957
  %v6959 = vsel %vm6916, %v6887, 0.0
  %v6960 = vrot.slane %v6959, 4
  %v6961 = vadd.f32 %v6959, %v6960
  %v6962 = vrot.slane %v6961, 2
  %v6963 = vadd.f32 %v6961, %v6962
  %v6964 = vrot.slane %v6963, 1
  %v6965 = vadd.f32 %v6963, %v6964
  %v6966 = vsel %vm6916, %v6888, 0.0
  %v6967 = vrot.slane %v6966, 4
  %v6968 = vadd.f32 %v6966, %v6967
  %v6969 = vrot.slane %v6968, 2
  %v6970 = vadd.f32 %v6968, %v6969
  %v6971 = vrot.slane %v6970, 1
  %v6972 = vadd.f32 %v6970, %v6971
  %v6973 = vsel %vm6916, %v6889, 0.0
  %v6974 = vrot.slane %v6973, 4
  %v6975 = vadd.f32 %v6973, %v6974
  %v6976 = vrot.slane %v6975, 2
  %v6977 = vadd.f32 %v6975, %v6976
  %v6978 = vrot.slane %v6977, 1
  %v6979 = vadd.f32 %v6977, %v6978
  %v6980 = vsel %vm6916, %v6890, 0.0
  %v6981 = vrot.slane %v6980, 4
  %v6982 = vadd.f32 %v6980, %v6981
  %v6983 = vrot.slane %v6982, 2
  %v6984 = vadd.f32 %v6982, %v6983
  %v6985 = vrot.slane %v6984, 1
  %v6986 = vadd.f32 %v6984, %v6985
  %v6987 = vsel %vm6916, %v6891, 0.0
  %v6988 = vrot.slane %v6987, 4
  %v6989 = vadd.f32 %v6987, %v6988
  %v6990 = vrot.slane %v6989, 2
  %v6991 = vadd.f32 %v6989, %v6990
  %v6992 = vrot.slane %v6991, 1
  %v6993 = vadd.f32 %v6991, %v6992
  %v6994 = vsel %vm6916, %v6892, 0.0
  %v6995 = vrot.slane %v6994, 4
  %v6996 = vadd.f32 %v6994, %v6995
  %v6997 = vrot.slane %v6996, 2
  %v6998 = vadd.f32 %v6996, %v6997
  %v6999 = vrot.slane %v6998, 1
  %v7000 = vadd.f32 %v6998, %v6999
  %v7001 = vsel %vm6916, %v6893, 0.0
  %v7002 = vrot.slane %v7001, 4
  %v7003 = vadd.f32 %v7001, %v7002
  %v7004 = vrot.slane %v7003, 2
  %v7005 = vadd.f32 %v7003, %v7004
  %v7006 = vrot.slane %v7005, 1
  %v7007 = vadd.f32 %v7005, %v7006
  %v7008 = vsel %vm6916, %v6894, 0.0
  %v7009 = vrot.slane %v7008, 4
  %v7010 = vadd.f32 %v7008, %v7009
  %v7011 = vrot.slane %v7010, 2
  %v7012 = vadd.f32 %v7010, %v7011
  %v7013 = vrot.slane %v7012, 1
  %v7014 = vadd.f32 %v7012, %v7013
  %v7015 = vsel %vm6916, %v6895, 0.0
  %v7016 = vrot.slane %v7015, 4
  %v7017 = vadd.f32 %v7015, %v7016
  %v7018 = vrot.slane %v7017, 2
  %v7019 = vadd.f32 %v7017, %v7018
  %v7020 = vrot.slane %v7019, 1
  %v7021 = vadd.f32 %v7019, %v7020
  %v7022 = vsel %vm6916, %v6896, 0.0
  %v7023 = vrot.slane %v7022, 4
  %v7024 = vadd.f32 %v7022, %v7023
  %v7025 = vrot.slane %v7024, 2
  %v7026 = vadd.f32 %v7024, %v7025
  %v7027 = vrot.slane %v7026, 1
  %v7028 = vadd.f32 %v7026, %v7027
  %v7029 = vsel %vm6916, %v6897, 0.0
  %v7030 = vrot.slane %v7029, 4
  %v7031 = vadd.f32 %v7029, %v7030
  %v7032 = vrot.slane %v7031, 2
  %v7033 = vadd.f32 %v7031, %v7032
  %v7034 = vrot.slane %v7033, 1
  %v7035 = vadd.f32 %v7033, %v7034
  %v7036 = vsel %vm6916, %v6898, 0.0
  %v7037 = vrot.slane %v7036, 4
  %v7038 = vadd.f32 %v7036, %v7037
  %v7039 = vrot.slane %v7038, 2
  %v7040 = vadd.f32 %v7038, %v7039
  %v7041 = vrot.slane %v7040, 1
  %v7042 = vadd.f32 %v7040, %v7041
  %v7043 = vsel %vm6916, %v6899, 0.0
  %v7044 = vrot.slane %v7043, 4
  %v7045 = vadd.f32 %v7043, %v7044
  %v7046 = vrot.slane %v7045, 2
  %v7047 = vadd.f32 %v7045, %v7046
  %v7048 = vrot.slane %v7047, 1
  %v7049 = vadd.f32 %v7047, %v7048
  %v7050 = vsel %vm6916, %v6900, 0.0
  %v7051 = vrot.slane %v7050, 4
  %v7052 = vadd.f32 %v7050, %v7051
  %v7053 = vrot.slane %v7052, 2
  %v7054 = vadd.f32 %v7052, %v7053
  %v7055 = vrot.slane %v7054, 1
  %v7056 = vadd.f32 %v7054, %v7055
  %v7057 = vsel %vm6916, %v6901, 0.0
  %v7058 = vrot.slane %v7057, 4
  %v7059 = vadd.f32 %v7057, %v7058
  %v7060 = vrot.slane %v7059, 2
  %v7061 = vadd.f32 %v7059, %v7060
  %v7062 = vrot.slane %v7061, 1
  %v7063 = vadd.f32 %v7061, %v7062
  %v7064 = vsel %vm6916, %v6902, 0.0
  %v7065 = vrot.slane %v7064, 4
  %v7066 = vadd.f32 %v7064, %v7065
  %v7067 = vrot.slane %v7066, 2
  %v7068 = vadd.f32 %v7066, %v7067
  %v7069 = vrot.slane %v7068, 1
  %v7070 = vadd.f32 %v7068, %v7069
  %v7071 = vsel %vm6916, %v6903, 0.0
  %v7072 = vrot.slane %v7071, 4
  %v7073 = vadd.f32 %v7071, %v7072
  %v7074 = vrot.slane %v7073, 2
  %v7075 = vadd.f32 %v7073, %v7074
  %v7076 = vrot.slane %v7075, 1
  %v7077 = vadd.f32 %v7075, %v7076
  %v7078 = vsel %vm6916, %v6904, 0.0
  %v7079 = vrot.slane %v7078, 4
  %v7080 = vadd.f32 %v7078, %v7079
  %v7081 = vrot.slane %v7080, 2
  %v7082 = vadd.f32 %v7080, %v7081
  %v7083 = vrot.slane %v7082, 1
  %v7084 = vadd.f32 %v7082, %v7083
  %v7085 = vsel %vm6916, %v6905, 0.0
  %v7086 = vrot.slane %v7085, 4
  %v7087 = vadd.f32 %v7085, %v7086
  %v7088 = vrot.slane %v7087, 2
  %v7089 = vadd.f32 %v7087, %v7088
  %v7090 = vrot.slane %v7089, 1
  %v7091 = vadd.f32 %v7089, %v7090
  %v7092 = vsel %vm6916, %v6906, 0.0
  %v7093 = vrot.slane %v7092, 4
  %v7094 = vadd.f32 %v7092, %v7093
  %v7095 = vrot.slane %v7094, 2
  %v7096 = vadd.f32 %v7094, %v7095
  %v7097 = vrot.slane %v7096, 1
  %v7098 = vadd.f32 %v7096, %v7097
  %v7099 = vsel %vm6916, %v6907, 0.0
  %v7100 = vrot.slane %v7099, 4
  %v7101 = vadd.f32 %v7099, %v7100
  %v7102 = vrot.slane %v7101, 2
  %v7103 = vadd.f32 %v7101, %v7102
  %v7104 = vrot.slane %v7103, 1
  %v7105 = vadd.f32 %v7103, %v7104
  %v7106 = vsel %vm6916, %v6908, 0.0
  %v7107 = vrot.slane %v7106, 4
  %v7108 = vadd.f32 %v7106, %v7107
  %v7109 = vrot.slane %v7108, 2
  %v7110 = vadd.f32 %v7108, %v7109
  %v7111 = vrot.slane %v7110, 1
  %v7112 = vadd.f32 %v7110, %v7111
  %v7113 = vsel %vm6916, %v6909, 0.0
  %v7114 = vrot.slane %v7113, 4
  %v7115 = vadd.f32 %v7113, %v7114
  %v7116 = vrot.slane %v7115, 2
  %v7117 = vadd.f32 %v7115, %v7116
  %v7118 = vrot.slane %v7117, 1
  %v7119 = vadd.f32 %v7117, %v7118
  %v7120 = vsel %vm6916, %v6910, 0.0
  %v7121 = vrot.slane %v7120, 4
  %v7122 = vadd.f32 %v7120, %v7121
  %v7123 = vrot.slane %v7122, 2
  %v7124 = vadd.f32 %v7122, %v7123
  %v7125 = vrot.slane %v7124, 1
  %v7126 = vadd.f32 %v7124, %v7125
  %v7127 = vsel %vm6916, %v6911, 0.0
  %v7128 = vrot.slane %v7127, 4
  %v7129 = vadd.f32 %v7127, %v7128
  %v7130 = vrot.slane %v7129, 2
  %v7131 = vadd.f32 %v7129, %v7130
  %v7132 = vrot.slane %v7131, 1
  %v7133 = vadd.f32 %v7131, %v7132
  %v7134 = vsel %vm6916, %v6912, 0.0
  %v7135 = vrot.slane %v7134, 4
  %v7136 = vadd.f32 %v7134, %v7135
  %v7137 = vrot.slane %v7136, 2
  %v7138 = vadd.f32 %v7136, %v7137
  %v7139 = vrot.slane %v7138, 1
  %v7140 = vadd.f32 %v7138, %v7139
  %v7141 = vsel %vm6916, %v6913, 0.0
  %v7142 = vrot.slane %v7141, 4
  %v7143 = vadd.f32 %v7141, %v7142
  %v7144 = vrot.slane %v7143, 2
  %v7145 = vadd.f32 %v7143, %v7144
  %v7146 = vrot.slane %v7145, 1
  %v7147 = vadd.f32 %v7145, %v7146
  %v7148 = vsel %vm6916, %v6914, 0.0
  %v7149 = vrot.slane %v7148, 4
  %v7150 = vadd.f32 %v7148, %v7149
  %v7151 = vrot.slane %v7150, 2
  %v7152 = vadd.f32 %v7150, %v7151
  %v7153 = vrot.slane %v7152, 1
  %v7154 = vadd.f32 %v7152, %v7153
  %v7155 = vsel %vm6916, %v6915, 0.0
  %v7156 = vrot.slane %v7155, 4
  %v7157 = vadd.f32 %v7155, %v7156
  %v7158 = vrot.slane %v7157, 2
  %v7159 = vadd.f32 %v7157, %v7158
  %v7160 = vrot.slane %v7159, 1
  %v7161 = vadd.f32 %v7159, %v7160
  %v7162 = vrcp.pop 2.0
  %v7163 = vmul.f32 2.0, %v7162
  %v7164 = vsub.f32 1.0, %v7163
  %v7165 = vmul.f32 %v7162, %v7164
  %v7166 = vadd.f32 %v7162, %v7165
  %vm7167 = vweird.f32 %v7162
  %v7168 = vsel %vm7167, %v7162, %v7166
  %v7169 = vmul.f32 %v6923, %v7168
  %v7170 = vmul.f32 %v6930, %v7168
  %v7171 = vmul.f32 %v6937, %v7168
  %v7172 = vmul.f32 %v6944, %v7168
  %v7173 = vmul.f32 %v6951, %v7168
  %v7174 = vmul.f32 %v6958, %v7168
  %v7175 = vmul.f32 %v6965, %v7168
  %v7176 = vmul.f32 %v6972, %v7168
  %v7177 = vmul.f32 %v6979, %v7168
  %v7178 = vmul.f32 %v6986, %v7168
  %v7179 = vmul.f32 %v6993, %v7168
  %v7180 = vmul.f32 %v7000, %v7168
  %v7181 = vmul.f32 %v7007, %v7168
  %v7182 = vmul.f32 %v7014, %v7168
  %v7183 = vmul.f32 %v7021, %v7168
  %v7184 = vmul.f32 %v7028, %v7168
  %v7185 = vmul.f32 %v7035, %v7168
  %v7186 = vmul.f32 %v7042, %v7168
  %v7187 = vmul.f32 %v7049, %v7168
  %v7188 = vmul.f32 %v7056, %v7168
  %v7189 = vmul.f32 %v7063, %v7168
  %v7190 = vmul.f32 %v7070, %v7168
  %v7191 = vmul.f32 %v7077, %v7168
  %v7192 = vmul.f32 %v7084, %v7168
  %v7193 = vmul.f32 %v7091, %v7168
  %v7194 = vmul.f32 %v7098, %v7168
  %v7195 = vmul.f32 %v7105, %v7168
  %v7196 = vmul.f32 %v7112, %v7168
  %v7197 = vmul.f32 %v7119, %v7168
  %v7198 = vmul.f32 %v7126, %v7168
  %v7199 = vmul.f32 %v7133, %v7168
  %v7200 = vmul.f32 %v7140, %v7168
  %v7201 = vmul.f32 %v7147, %v7168
  %v7202 = vmul.f32 %v7154, %v7168
  %v7203 = vmul.f32 %v7161, %v7168
  %v7204 = vsub.f32 %v5959, %v7169
  %v7205 = vsub.f32 %v6882, %v7170
  %v7206 = vsub.f32 %v6883, %v7171
  %v7207 = vsub.f32 %v6884, %v7172
  %v7208 = vsub.f32 %v6885, %v7173
  %v7209 = vsub.f32 %v6886, %v7174
  %v7210 = vsub.f32 %v6887, %v7175
  %v7211 = vsub.f32 %v6888, %v7176
  %v7212 = vsub.f32 %v6889, %v7177
  %v7213 = vsub.f32 %v6890, %v7178
  %v7214 = vsub.f32 %v6891, %v7179
  %v7215 = vsub.f32 %v6892, %v7180
  %v7216 = vsub.f32 %v6893, %v7181
  %v7217 = vsub.f32 %v6894, %v7182
  %v7218 = vsub.f32 %v6895, %v7183
  %v7219 = vsub.f32 %v6896, %v7184
  %v7220 = vsub.f32 %v6897, %v7185
  %v7221 = vsub.f32 %v6898, %v7186
  %v7222 = vsub.f32 %v6899, %v7187
  %v7223 = vsub.f32 %v6900, %v7188
  %v7224 = vsub.f32 %v6901, %v7189
  %v7225 = vsub.f32 %v6902, %v7190
  %v7226 = vsub.f32 %v6903, %v7191
  %v7227 = vsub.f32 %v6904, %v7192
  %v7228 = vsub.f32 %v6905, %v7193
  %v7229 = vsub.f32 %v6906, %v7194
  %v7230 = vsub.f32 %v6907, %v7195
  %v7231 = vsub.f32 %v6908, %v7196
  %v7232 = vsub.f32 %v6909, %v7197
  %v7233 = vsub.f32 %v6910, %v7198
  %v7234 = vsub.f32 %v6911, %v7199
  %v7235 = vsub.f32 %v6912, %v7200
  %v7236 = vsub.f32 %v6913, %v7201
  %v7237 = vsub.f32 %v6914, %v7202
  %v7238 = vsub.f32 %v6915, %v7203
  %v7239 = vmul.f32 %v7204, %v7204
  %v7240 = vmul.f32 %v7205, %v7205
  %v7241 = vmul.f32 %v7206, %v7206
  %v7242 = vmul.f32 %v7207, %v7207
  %v7243 = vmul.f32 %v7208, %v7208
  %v7244 = vmul.f32 %v7209, %v7209
  %v7245 = vmul.f32 %v7210, %v7210
  %v7246 = vmul.f32 %v7211, %v7211
  %v7247 = vmul.f32 %v7212, %v7212
  %v7248 = vmul.f32 %v7213, %v7213
  %v7249 = vmul.f32 %v7214, %v7214
  %v7250 = vmul.f32 %v7215, %v7215
  %v7251 = vmul.f32 %v7216, %v7216
  %v7252 = vmul.f32 %v7217, %v7217
  %v7253 = vmul.f32 %v7218, %v7218
  %v7254 = vmul.f32 %v7219, %v7219
  %v7255 = vmul.f32 %v7220, %v7220
  %v7256 = vmul.f32 %v7221, %v7221
  %v7257 = vmul.f32 %v7222, %v7222
  %v7258 = vmul.f32 %v7223, %v7223
  %v7259 = vmul.f32 %v7224, %v7224
  %v7260 = vmul.f32 %v7225, %v7225
  %v7261 = vmul.f32 %v7226, %v7226
  %v7262 = vmul.f32 %v7227, %v7227
  %v7263 = vmul.f32 %v7228, %v7228
  %v7264 = vmul.f32 %v7229, %v7229
  %v7265 = vmul.f32 %v7230, %v7230
  %v7266 = vmul.f32 %v7231, %v7231
  %v7267 = vmul.f32 %v7232, %v7232
  %v7268 = vmul.f32 %v7233, %v7233
  %v7269 = vmul.f32 %v7234, %v7234
  %v7270 = vmul.f32 %v7235, %v7235
  %v7271 = vmul.f32 %v7236, %v7236
  %v7272 = vmul.f32 %v7237, %v7237
  %v7273 = vmul.f32 %v7238, %v7238
  %v7274 = vsel %vm6916, %v7239, 0.0
  %v7275 = vrot.slane %v7274, 4
  %v7276 = vadd.f32 %v7274, %v7275
  %v7277 = vrot.slane %v7276, 2
  %v7278 = vadd.f32 %v7276, %v7277
  %v7279 = vrot.slane %v7278, 1
  %v7280 = vadd.f32 %v7278, %v7279
  %v7281 = vsel %vm6916, %v7240, 0.0
  %v7282 = vrot.slane %v7281, 4
  %v7283 = vadd.f32 %v7281, %v7282
  %v7284 = vrot.slane %v7283, 2
  %v7285 = vadd.f32 %v7283, %v7284
  %v7286 = vrot.slane %v7285, 1
  %v7287 = vadd.f32 %v7285, %v7286
  %v7288 = vsel %vm6916, %v7241, 0.0
  %v7289 = vrot.slane %v7288, 4
  %v7290 = vadd.f32 %v7288, %v7289
  %v7291 = vrot.slane %v7290, 2
  %v7292 = vadd.f32 %v7290, %v7291
  %v7293 = vrot.slane %v7292, 1
  %v7294 = vadd.f32 %v7292, %v7293
  %v7295 = vsel %vm6916, %v7242, 0.0
  %v7296 = vrot.slane %v7295, 4
  %v7297 = vadd.f32 %v7295, %v7296
  %v7298 = vrot.slane %v7297, 2
  %v7299 = vadd.f32 %v7297, %v7298
  %v7300 = vrot.slane %v7299, 1
  %v7301 = vadd.f32 %v7299, %v7300
  %v7302 = vsel %vm6916, %v7243, 0.0
  %v7303 = vrot.slane %v7302, 4
  %v7304 = vadd.f32 %v7302, %v7303
  %v7305 = vrot.slane %v7304, 2
  %v7306 = vadd.f32 %v7304, %v7305
  %v7307 = vrot.slane %v7306, 1
  %v7308 = vadd.f32 %v7306, %v7307
  %v7309 = vsel %vm6916, %v7244, 0.0
  %v7310 = vrot.slane %v7309, 4
  %v7311 = vadd.f32 %v7309, %v7310
  %v7312 = vrot.slane %v7311, 2
  %v7313 = vadd.f32 %v7311, %v7312
  %v7314 = vrot.slane %v7313, 1
  %v7315 = vadd.f32 %v7313, %v7314
  %v7316 = vsel %vm6916, %v7245, 0.0
  %v7317 = vrot.slane %v7316, 4
  %v7318 = vadd.f32 %v7316, %v7317
  %v7319 = vrot.slane %v7318, 2
  %v7320 = vadd.f32 %v7318, %v7319
  %v7321 = vrot.slane %v7320, 1
  %v7322 = vadd.f32 %v7320, %v7321
  %v7323 = vsel %vm6916, %v7246, 0.0
  %v7324 = vrot.slane %v7323, 4
  %v7325 = vadd.f32 %v7323, %v7324
  %v7326 = vrot.slane %v7325, 2
  %v7327 = vadd.f32 %v7325, %v7326
  %v7328 = vrot.slane %v7327, 1
  %v7329 = vadd.f32 %v7327, %v7328
  %v7330 = vsel %vm6916, %v7247, 0.0
  %v7331 = vrot.slane %v7330, 4
  %v7332 = vadd.f32 %v7330, %v7331
  %v7333 = vrot.slane %v7332, 2
  %v7334 = vadd.f32 %v7332, %v7333
  %v7335 = vrot.slane %v7334, 1
  %v7336 = vadd.f32 %v7334, %v7335
  %v7337 = vsel %vm6916, %v7248, 0.0
  %v7338 = vrot.slane %v7337, 4
  %v7339 = vadd.f32 %v7337, %v7338
  %v7340 = vrot.slane %v7339, 2
  %v7341 = vadd.f32 %v7339, %v7340
  %v7342 = vrot.slane %v7341, 1
  %v7343 = vadd.f32 %v7341, %v7342
  %v7344 = vsel %vm6916, %v7249, 0.0
  %v7345 = vrot.slane %v7344, 4
  %v7346 = vadd.f32 %v7344, %v7345
  %v7347 = vrot.slane %v7346, 2
  %v7348 = vadd.f32 %v7346, %v7347
  %v7349 = vrot.slane %v7348, 1
  %v7350 = vadd.f32 %v7348, %v7349
  %v7351 = vsel %vm6916, %v7250, 0.0
  %v7352 = vrot.slane %v7351, 4
  %v7353 = vadd.f32 %v7351, %v7352
  %v7354 = vrot.slane %v7353, 2
  %v7355 = vadd.f32 %v7353, %v7354
  %v7356 = vrot.slane %v7355, 1
  %v7357 = vadd.f32 %v7355, %v7356
  %v7358 = vsel %vm6916, %v7251, 0.0
  %v7359 = vrot.slane %v7358, 4
  %v7360 = vadd.f32 %v7358, %v7359
  %v7361 = vrot.slane %v7360, 2
  %v7362 = vadd.f32 %v7360, %v7361
  %v7363 = vrot.slane %v7362, 1
  %v7364 = vadd.f32 %v7362, %v7363
  %v7365 = vsel %vm6916, %v7252, 0.0
  %v7366 = vrot.slane %v7365, 4
  %v7367 = vadd.f32 %v7365, %v7366
  %v7368 = vrot.slane %v7367, 2
  %v7369 = vadd.f32 %v7367, %v7368
  %v7370 = vrot.slane %v7369, 1
  %v7371 = vadd.f32 %v7369, %v7370
  %v7372 = vsel %vm6916, %v7253, 0.0
  %v7373 = vrot.slane %v7372, 4
  %v7374 = vadd.f32 %v7372, %v7373
  %v7375 = vrot.slane %v7374, 2
  %v7376 = vadd.f32 %v7374, %v7375
  %v7377 = vrot.slane %v7376, 1
  %v7378 = vadd.f32 %v7376, %v7377
  %v7379 = vsel %vm6916, %v7254, 0.0
  %v7380 = vrot.slane %v7379, 4
  %v7381 = vadd.f32 %v7379, %v7380
  %v7382 = vrot.slane %v7381, 2
  %v7383 = vadd.f32 %v7381, %v7382
  %v7384 = vrot.slane %v7383, 1
  %v7385 = vadd.f32 %v7383, %v7384
  %v7386 = vsel %vm6916, %v7255, 0.0
  %v7387 = vrot.slane %v7386, 4
  %v7388 = vadd.f32 %v7386, %v7387
  %v7389 = vrot.slane %v7388, 2
  %v7390 = vadd.f32 %v7388, %v7389
  %v7391 = vrot.slane %v7390, 1
  %v7392 = vadd.f32 %v7390, %v7391
  %v7393 = vsel %vm6916, %v7256, 0.0
  %v7394 = vrot.slane %v7393, 4
  %v7395 = vadd.f32 %v7393, %v7394
  %v7396 = vrot.slane %v7395, 2
  %v7397 = vadd.f32 %v7395, %v7396
  %v7398 = vrot.slane %v7397, 1
  %v7399 = vadd.f32 %v7397, %v7398
  %v7400 = vsel %vm6916, %v7257, 0.0
  %v7401 = vrot.slane %v7400, 4
  %v7402 = vadd.f32 %v7400, %v7401
  %v7403 = vrot.slane %v7402, 2
  %v7404 = vadd.f32 %v7402, %v7403
  %v7405 = vrot.slane %v7404, 1
  %v7406 = vadd.f32 %v7404, %v7405
  %v7407 = vsel %vm6916, %v7258, 0.0
  %v7408 = vrot.slane %v7407, 4
  %v7409 = vadd.f32 %v7407, %v7408
  %v7410 = vrot.slane %v7409, 2
  %v7411 = vadd.f32 %v7409, %v7410
  %v7412 = vrot.slane %v7411, 1
  %v7413 = vadd.f32 %v7411, %v7412
  %v7414 = vsel %vm6916, %v7259, 0.0
  %v7415 = vrot.slane %v7414, 4
  %v7416 = vadd.f32 %v7414, %v7415
  %v7417 = vrot.slane %v7416, 2
  %v7418 = vadd.f32 %v7416, %v7417
  %v7419 = vrot.slane %v7418, 1
  %v7420 = vadd.f32 %v7418, %v7419
  %v7421 = vsel %vm6916, %v7260, 0.0
  %v7422 = vrot.slane %v7421, 4
  %v7423 = vadd.f32 %v7421, %v7422
  %v7424 = vrot.slane %v7423, 2
  %v7425 = vadd.f32 %v7423, %v7424
  %v7426 = vrot.slane %v7425, 1
  %v7427 = vadd.f32 %v7425, %v7426
  %v7428 = vsel %vm6916, %v7261, 0.0
  %v7429 = vrot.slane %v7428, 4
  %v7430 = vadd.f32 %v7428, %v7429
  %v7431 = vrot.slane %v7430, 2
  %v7432 = vadd.f32 %v7430, %v7431
  %v7433 = vrot.slane %v7432, 1
  %v7434 = vadd.f32 %v7432, %v7433
  %v7435 = vsel %vm6916, %v7262, 0.0
  %v7436 = vrot.slane %v7435, 4
  %v7437 = vadd.f32 %v7435, %v7436
  %v7438 = vrot.slane %v7437, 2
  %v7439 = vadd.f32 %v7437, %v7438
  %v7440 = vrot.slane %v7439, 1
  %v7441 = vadd.f32 %v7439, %v7440
  %v7442 = vsel %vm6916, %v7263, 0.0
  %v7443 = vrot.slane %v7442, 4
  %v7444 = vadd.f32 %v7442, %v7443
  %v7445 = vrot.slane %v7444, 2
  %v7446 = vadd.f32 %v7444, %v7445
  %v7447 = vrot.slane %v7446, 1
  %v7448 = vadd.f32 %v7446, %v7447
  %v7449 = vsel %vm6916, %v7264, 0.0
  %v7450 = vrot.slane %v7449, 4
  %v7451 = vadd.f32 %v7449, %v7450
  %v7452 = vrot.slane %v7451, 2
  %v7453 = vadd.f32 %v7451, %v7452
  %v7454 = vrot.slane %v7453, 1
  %v7455 = vadd.f32 %v7453, %v7454
  %v7456 = vsel %vm6916, %v7265, 0.0
  %v7457 = vrot.slane %v7456, 4
  %v7458 = vadd.f32 %v7456, %v7457
  %v7459 = vrot.slane %v7458, 2
  %v7460 = vadd.f32 %v7458, %v7459
  %v7461 = vrot.slane %v7460, 1
  %v7462 = vadd.f32 %v7460, %v7461
  %v7463 = vsel %vm6916, %v7266, 0.0
  %v7464 = vrot.slane %v7463, 4
  %v7465 = vadd.f32 %v7463, %v7464
  %v7466 = vrot.slane %v7465, 2
  %v7467 = vadd.f32 %v7465, %v7466
  %v7468 = vrot.slane %v7467, 1
  %v7469 = vadd.f32 %v7467, %v7468
  %v7470 = vsel %vm6916, %v7267, 0.0
  %v7471 = vrot.slane %v7470, 4
  %v7472 = vadd.f32 %v7470, %v7471
  %v7473 = vrot.slane %v7472, 2
  %v7474 = vadd.f32 %v7472, %v7473
  %v7475 = vrot.slane %v7474, 1
  %v7476 = vadd.f32 %v7474, %v7475
  %v7477 = vsel %vm6916, %v7268, 0.0
  %v7478 = vrot.slane %v7477, 4
  %v7479 = vadd.f32 %v7477, %v7478
  %v7480 = vrot.slane %v7479, 2
  %v7481 = vadd.f32 %v7479, %v7480
  %v7482 = vrot.slane %v7481, 1
  %v7483 = vadd.f32 %v7481, %v7482
  %v7484 = vsel %vm6916, %v7269, 0.0
  %v7485 = vrot.slane %v7484, 4
  %v7486 = vadd.f32 %v7484, %v7485
  %v7487 = vrot.slane %v7486, 2
  %v7488 = vadd.f32 %v7486, %v7487
  %v7489 = vrot.slane %v7488, 1
  %v7490 = vadd.f32 %v7488, %v7489
  %v7491 = vsel %vm6916, %v7270, 0.0
  %v7492 = vrot.slane %v7491, 4
  %v7493 = vadd.f32 %v7491, %v7492
  %v7494 = vrot.slane %v7493, 2
  %v7495 = vadd.f32 %v7493, %v7494
  %v7496 = vrot.slane %v7495, 1
  %v7497 = vadd.f32 %v7495, %v7496
  %v7498 = vsel %vm6916, %v7271, 0.0
  %v7499 = vrot.slane %v7498, 4
  %v7500 = vadd.f32 %v7498, %v7499
  %v7501 = vrot.slane %v7500, 2
  %v7502 = vadd.f32 %v7500, %v7501
  %v7503 = vrot.slane %v7502, 1
  %v7504 = vadd.f32 %v7502, %v7503
  %v7505 = vsel %vm6916, %v7272, 0.0
  %v7506 = vrot.slane %v7505, 4
  %v7507 = vadd.f32 %v7505, %v7506
  %v7508 = vrot.slane %v7507, 2
  %v7509 = vadd.f32 %v7507, %v7508
  %v7510 = vrot.slane %v7509, 1
  %v7511 = vadd.f32 %v7509, %v7510
  %v7512 = vsel %vm6916, %v7273, 0.0
  %v7513 = vrot.slane %v7512, 4
  %v7514 = vadd.f32 %v7512, %v7513
  %v7515 = vrot.slane %v7514, 2
  %v7516 = vadd.f32 %v7514, %v7515
  %v7517 = vrot.slane %v7516, 1
  %v7518 = vadd.f32 %v7516, %v7517
  %v7519 = vmul.f32 %v7280, %v7168
  %v7520 = vmul.f32 %v7287, %v7168
  %v7521 = vmul.f32 %v7294, %v7168
  %v7522 = vmul.f32 %v7301, %v7168
  %v7523 = vmul.f32 %v7308, %v7168
  %v7524 = vmul.f32 %v7315, %v7168
  %v7525 = vmul.f32 %v7322, %v7168
  %v7526 = vmul.f32 %v7329, %v7168
  %v7527 = vmul.f32 %v7336, %v7168
  %v7528 = vmul.f32 %v7343, %v7168
  %v7529 = vmul.f32 %v7350, %v7168
  %v7530 = vmul.f32 %v7357, %v7168
  %v7531 = vmul.f32 %v7364, %v7168
  %v7532 = vmul.f32 %v7371, %v7168
  %v7533 = vmul.f32 %v7378, %v7168
  %v7534 = vmul.f32 %v7385, %v7168
  %v7535 = vmul.f32 %v7392, %v7168
  %v7536 = vmul.f32 %v7399, %v7168
  %v7537 = vmul.f32 %v7406, %v7168
  %v7538 = vmul.f32 %v7413, %v7168
  %v7539 = vmul.f32 %v7420, %v7168
  %v7540 = vmul.f32 %v7427, %v7168
  %v7541 = vmul.f32 %v7434, %v7168
  %v7542 = vmul.f32 %v7441, %v7168
  %v7543 = vmul.f32 %v7448, %v7168
  %v7544 = vmul.f32 %v7455, %v7168
  %v7545 = vmul.f32 %v7462, %v7168
  %v7546 = vmul.f32 %v7469, %v7168
  %v7547 = vmul.f32 %v7476, %v7168
  %v7548 = vmul.f32 %v7483, %v7168
  %v7549 = vmul.f32 %v7490, %v7168
  %v7550 = vmul.f32 %v7497, %v7168
  %v7551 = vmul.f32 %v7504, %v7168
  %v7552 = vmul.f32 %v7511, %v7168
  %v7553 = vmul.f32 %v7518, %v7168
  %v7554 = vadd.f32 %v7519, 1e-05
  %v7555 = vadd.f32 %v7520, 1e-05
  %v7556 = vadd.f32 %v7521, 1e-05
  %v7557 = vadd.f32 %v7522, 1e-05
  %v7558 = vadd.f32 %v7523, 1e-05
  %v7559 = vadd.f32 %v7524, 1e-05
  %v7560 = vadd.f32 %v7525, 1e-05
  %v7561 = vadd.f32 %v7526, 1e-05
  %v7562 = vadd.f32 %v7527, 1e-05
  %v7563 = vadd.f32 %v7528, 1e-05
  %v7564 = vadd.f32 %v7529, 1e-05
  %v7565 = vadd.f32 %v7530, 1e-05
  %v7566 = vadd.f32 %v7531, 1e-05
  %v7567 = vadd.f32 %v7532, 1e-05
  %v7568 = vadd.f32 %v7533, 1e-05
  %v7569 = vadd.f32 %v7534, 1e-05
  %v7570 = vadd.f32 %v7535, 1e-05
  %v7571 = vadd.f32 %v7536, 1e-05
  %v7572 = vadd.f32 %v7537, 1e-05
  %v7573 = vadd.f32 %v7538, 1e-05
  %v7574 = vadd.f32 %v7539, 1e-05
  %v7575 = vadd.f32 %v7540, 1e-05
  %v7576 = vadd.f32 %v7541, 1e-05
  %v7577 = vadd.f32 %v7542, 1e-05
  %v7578 = vadd.f32 %v7543, 1e-05
  %v7579 = vadd.f32 %v7544, 1e-05
  %v7580 = vadd.f32 %v7545, 1e-05
  %v7581 = vadd.f32 %v7546, 1e-05
  %v7582 = vadd.f32 %v7547, 1e-05
  %v7583 = vadd.f32 %v7548, 1e-05
  %v7584 = vadd.f32 %v7549, 1e-05
  %v7585 = vadd.f32 %v7550, 1e-05
  %v7586 = vadd.f32 %v7551, 1e-05
  %v7587 = vadd.f32 %v7552, 1e-05
  %v7588 = vadd.f32 %v7553, 1e-05
  %v7589 = vrsqrt.pop %v7554
  %v7590 = vmul.f32 %v7589, %v7554
  %v7591 = vmul.f32 %v7590, %v7589
  %v7592 = vmul.f32 0.5, %v7591
  %v7593 = vsub.f32 1.5, %v7592
  %v7594 = vmul.f32 %v7589, %v7593
  %vm7595 = vweird.f32 %v7554
  %vm7596 = vweird.f32 %v7589
  %vm7597 = vmor %vm7595, %vm7596
  %v7598 = vsel %vm7597, %v7589, %v7594
  %v7599 = vrsqrt.pop %v7555
  %v7600 = vmul.f32 %v7599, %v7555
  %v7601 = vmul.f32 %v7600, %v7599
  %v7602 = vmul.f32 0.5, %v7601
  %v7603 = vsub.f32 1.5, %v7602
  %v7604 = vmul.f32 %v7599, %v7603
  %vm7605 = vweird.f32 %v7555
  %vm7606 = vweird.f32 %v7599
  %vm7607 = vmor %vm7605, %vm7606
  %v7608 = vsel %vm7607, %v7599, %v7604
  %v7609 = vrsqrt.pop %v7556
  %v7610 = vmul.f32 %v7609, %v7556
  %v7611 = vmul.f32 %v7610, %v7609
  %v7612 = vmul.f32 0.5, %v7611
  %v7613 = vsub.f32 1.5, %v7612
  %v7614 = vmul.f32 %v7609, %v7613
  %vm7615 = vweird.f32 %v7556
  %vm7616 = vweird.f32 %v7609
  %vm7617 = vmor %vm7615, %vm7616
  %v7618 = vsel %vm7617, %v7609, %v7614
  %v7619 = vrsqrt.pop %v7557
  %v7620 = vmul.f32 %v7619, %v7557
  %v7621 = vmul.f32 %v7620, %v7619
  %v7622 = vmul.f32 0.5, %v7621
  %v7623 = vsub.f32 1.5, %v7622
  %v7624 = vmul.f32 %v7619, %v7623
  %vm7625 = vweird.f32 %v7557
  %vm7626 = vweird.f32 %v7619
  %vm7627 = vmor %vm7625, %vm7626
  %v7628 = vsel %vm7627, %v7619, %v7624
  %v7629 = vrsqrt.pop %v7558
  %v7630 = vmul.f32 %v7629, %v7558
  %v7631 = vmul.f32 %v7630, %v7629
  %v7632 = vmul.f32 0.5, %v7631
  %v7633 = vsub.f32 1.5, %v7632
  %v7634 = vmul.f32 %v7629, %v7633
  %vm7635 = vweird.f32 %v7558
  %vm7636 = vweird.f32 %v7629
  %vm7637 = vmor %vm7635, %vm7636
  %v7638 = vsel %vm7637, %v7629, %v7634
  %v7639 = vrsqrt.pop %v7559
  %v7640 = vmul.f32 %v7639, %v7559
  %v7641 = vmul.f32 %v7640, %v7639
  %v7642 = vmul.f32 0.5, %v7641
  %v7643 = vsub.f32 1.5, %v7642
  %v7644 = vmul.f32 %v7639, %v7643
  %vm7645 = vweird.f32 %v7559
  %vm7646 = vweird.f32 %v7639
  %vm7647 = vmor %vm7645, %vm7646
  %v7648 = vsel %vm7647, %v7639, %v7644
  %v7649 = vrsqrt.pop %v7560
  %v7650 = vmul.f32 %v7649, %v7560
  %v7651 = vmul.f32 %v7650, %v7649
  %v7652 = vmul.f32 0.5, %v7651
  %v7653 = vsub.f32 1.5, %v7652
  %v7654 = vmul.f32 %v7649, %v7653
  %vm7655 = vweird.f32 %v7560
  %vm7656 = vweird.f32 %v7649
  %vm7657 = vmor %vm7655, %vm7656
  %v7658 = vsel %vm7657, %v7649, %v7654
  %v7659 = vrsqrt.pop %v7561
  %v7660 = vmul.f32 %v7659, %v7561
  %v7661 = vmul.f32 %v7660, %v7659
  %v7662 = vmul.f32 0.5, %v7661
  %v7663 = vsub.f32 1.5, %v7662
  %v7664 = vmul.f32 %v7659, %v7663
  %vm7665 = vweird.f32 %v7561
  %vm7666 = vweird.f32 %v7659
  %vm7667 = vmor %vm7665, %vm7666
  %v7668 = vsel %vm7667, %v7659, %v7664
  %v7669 = vrsqrt.pop %v7562
  %v7670 = vmul.f32 %v7669, %v7562
  %v7671 = vmul.f32 %v7670, %v7669
  %v7672 = vmul.f32 0.5, %v7671
  %v7673 = vsub.f32 1.5, %v7672
  %v7674 = vmul.f32 %v7669, %v7673
  %vm7675 = vweird.f32 %v7562
  %vm7676 = vweird.f32 %v7669
  %vm7677 = vmor %vm7675, %vm7676
  %v7678 = vsel %vm7677, %v7669, %v7674
  %v7679 = vrsqrt.pop %v7563
  %v7680 = vmul.f32 %v7679, %v7563
  %v7681 = vmul.f32 %v7680, %v7679
  %v7682 = vmul.f32 0.5, %v7681
  %v7683 = vsub.f32 1.5, %v7682
  %v7684 = vmul.f32 %v7679, %v7683
  %vm7685 = vweird.f32 %v7563
  %vm7686 = vweird.f32 %v7679
  %vm7687 = vmor %vm7685, %vm7686
  %v7688 = vsel %vm7687, %v7679, %v7684
  %v7689 = vrsqrt.pop %v7564
  %v7690 = vmul.f32 %v7689, %v7564
  %v7691 = vmul.f32 %v7690, %v7689
  %v7692 = vmul.f32 0.5, %v7691
  %v7693 = vsub.f32 1.5, %v7692
  %v7694 = vmul.f32 %v7689, %v7693
  %vm7695 = vweird.f32 %v7564
  %vm7696 = vweird.f32 %v7689
  %vm7697 = vmor %vm7695, %vm7696
  %v7698 = vsel %vm7697, %v7689, %v7694
  %v7699 = vrsqrt.pop %v7565
  %v7700 = vmul.f32 %v7699, %v7565
  %v7701 = vmul.f32 %v7700, %v7699
  %v7702 = vmul.f32 0.5, %v7701
  %v7703 = vsub.f32 1.5, %v7702
  %v7704 = vmul.f32 %v7699, %v7703
  %vm7705 = vweird.f32 %v7565
  %vm7706 = vweird.f32 %v7699
  %vm7707 = vmor %vm7705, %vm7706
  %v7708 = vsel %vm7707, %v7699, %v7704
  %v7709 = vrsqrt.pop %v7566
  %v7710 = vmul.f32 %v7709, %v7566
  %v7711 = vmul.f32 %v7710, %v7709
  %v7712 = vmul.f32 0.5, %v7711
  %v7713 = vsub.f32 1.5, %v7712
  %v7714 = vmul.f32 %v7709, %v7713
  %vm7715 = vweird.f32 %v7566
  %vm7716 = vweird.f32 %v7709
  %vm7717 = vmor %vm7715, %vm7716
  %v7718 = vsel %vm7717, %v7709, %v7714
  %v7719 = vrsqrt.pop %v7567
  %v7720 = vmul.f32 %v7719, %v7567
  %v7721 = vmul.f32 %v7720, %v7719
  %v7722 = vmul.f32 0.5, %v7721
  %v7723 = vsub.f32 1.5, %v7722
  %v7724 = vmul.f32 %v7719, %v7723
  %vm7725 = vweird.f32 %v7567
  %vm7726 = vweird.f32 %v7719
  %vm7727 = vmor %vm7725, %vm7726
  %v7728 = vsel %vm7727, %v7719, %v7724
  %v7729 = vrsqrt.pop %v7568
  %v7730 = vmul.f32 %v7729, %v7568
  %v7731 = vmul.f32 %v7730, %v7729
  %v7732 = vmul.f32 0.5, %v7731
  %v7733 = vsub.f32 1.5, %v7732
  %v7734 = vmul.f32 %v7729, %v7733
  %vm7735 = vweird.f32 %v7568
  %vm7736 = vweird.f32 %v7729
  %vm7737 = vmor %vm7735, %vm7736
  %v7738 = vsel %vm7737, %v7729, %v7734
  %v7739 = vrsqrt.pop %v7569
  %v7740 = vmul.f32 %v7739, %v7569
  %v7741 = vmul.f32 %v7740, %v7739
  %v7742 = vmul.f32 0.5, %v7741
  %v7743 = vsub.f32 1.5, %v7742
  %v7744 = vmul.f32 %v7739, %v7743
  %vm7745 = vweird.f32 %v7569
  %vm7746 = vweird.f32 %v7739
  %vm7747 = vmor %vm7745, %vm7746
  %v7748 = vsel %vm7747, %v7739, %v7744
  %v7749 = vrsqrt.pop %v7570
  %v7750 = vmul.f32 %v7749, %v7570
  %v7751 = vmul.f32 %v7750, %v7749
  %v7752 = vmul.f32 0.5, %v7751
  %v7753 = vsub.f32 1.5, %v7752
  %v7754 = vmul.f32 %v7749, %v7753
  %vm7755 = vweird.f32 %v7570
  %vm7756 = vweird.f32 %v7749
  %vm7757 = vmor %vm7755, %vm7756
  %v7758 = vsel %vm7757, %v7749, %v7754
  %v7759 = vrsqrt.pop %v7571
  %v7760 = vmul.f32 %v7759, %v7571
  %v7761 = vmul.f32 %v7760, %v7759
  %v7762 = vmul.f32 0.5, %v7761
  %v7763 = vsub.f32 1.5, %v7762
  %v7764 = vmul.f32 %v7759, %v7763
  %vm7765 = vweird.f32 %v7571
  %vm7766 = vweird.f32 %v7759
  %vm7767 = vmor %vm7765, %vm7766
  %v7768 = vsel %vm7767, %v7759, %v7764
  %v7769 = vrsqrt.pop %v7572
  %v7770 = vmul.f32 %v7769, %v7572
  %v7771 = vmul.f32 %v7770, %v7769
  %v7772 = vmul.f32 0.5, %v7771
  %v7773 = vsub.f32 1.5, %v7772
  %v7774 = vmul.f32 %v7769, %v7773
  %vm7775 = vweird.f32 %v7572
  %vm7776 = vweird.f32 %v7769
  %vm7777 = vmor %vm7775, %vm7776
  %v7778 = vsel %vm7777, %v7769, %v7774
  %v7779 = vrsqrt.pop %v7573
  %v7780 = vmul.f32 %v7779, %v7573
  %v7781 = vmul.f32 %v7780, %v7779
  %v7782 = vmul.f32 0.5, %v7781
  %v7783 = vsub.f32 1.5, %v7782
  %v7784 = vmul.f32 %v7779, %v7783
  %vm7785 = vweird.f32 %v7573
  %vm7786 = vweird.f32 %v7779
  %vm7787 = vmor %vm7785, %vm7786
  %v7788 = vsel %vm7787, %v7779, %v7784
  %v7789 = vrsqrt.pop %v7574
  %v7790 = vmul.f32 %v7789, %v7574
  %v7791 = vmul.f32 %v7790, %v7789
  %v7792 = vmul.f32 0.5, %v7791
  %v7793 = vsub.f32 1.5, %v7792
  %v7794 = vmul.f32 %v7789, %v7793
  %vm7795 = vweird.f32 %v7574
  %vm7796 = vweird.f32 %v7789
  %vm7797 = vmor %vm7795, %vm7796
  %v7798 = vsel %vm7797, %v7789, %v7794
  %v7799 = vrsqrt.pop %v7575
  %v7800 = vmul.f32 %v7799, %v7575
  %v7801 = vmul.f32 %v7800, %v7799
  %v7802 = vmul.f32 0.5, %v7801
  %v7803 = vsub.f32 1.5, %v7802
  %v7804 = vmul.f32 %v7799, %v7803
  %vm7805 = vweird.f32 %v7575
  %vm7806 = vweird.f32 %v7799
  %vm7807 = vmor %vm7805, %vm7806
  %v7808 = vsel %vm7807, %v7799, %v7804
  %v7809 = vrsqrt.pop %v7576
  %v7810 = vmul.f32 %v7809, %v7576
  %v7811 = vmul.f32 %v7810, %v7809
  %v7812 = vmul.f32 0.5, %v7811
  %v7813 = vsub.f32 1.5, %v7812
  %v7814 = vmul.f32 %v7809, %v7813
  %vm7815 = vweird.f32 %v7576
  %vm7816 = vweird.f32 %v7809
  %vm7817 = vmor %vm7815, %vm7816
  %v7818 = vsel %vm7817, %v7809, %v7814
  %v7819 = vrsqrt.pop %v7577
  %v7820 = vmul.f32 %v7819, %v7577
  %v7821 = vmul.f32 %v7820, %v7819
  %v7822 = vmul.f32 0.5, %v7821
  %v7823 = vsub.f32 1.5, %v7822
  %v7824 = vmul.f32 %v7819, %v7823
  %vm7825 = vweird.f32 %v7577
  %vm7826 = vweird.f32 %v7819
  %vm7827 = vmor %vm7825, %vm7826
  %v7828 = vsel %vm7827, %v7819, %v7824
  %v7829 = vrsqrt.pop %v7578
  %v7830 = vmul.f32 %v7829, %v7578
  %v7831 = vmul.f32 %v7830, %v7829
  %v7832 = vmul.f32 0.5, %v7831
  %v7833 = vsub.f32 1.5, %v7832
  %v7834 = vmul.f32 %v7829, %v7833
  %vm7835 = vweird.f32 %v7578
  %vm7836 = vweird.f32 %v7829
  %vm7837 = vmor %vm7835, %vm7836
  %v7838 = vsel %vm7837, %v7829, %v7834
  %v7839 = vrsqrt.pop %v7579
  %v7840 = vmul.f32 %v7839, %v7579
  %v7841 = vmul.f32 %v7840, %v7839
  %v7842 = vmul.f32 0.5, %v7841
  %v7843 = vsub.f32 1.5, %v7842
  %v7844 = vmul.f32 %v7839, %v7843
  %vm7845 = vweird.f32 %v7579
  %vm7846 = vweird.f32 %v7839
  %vm7847 = vmor %vm7845, %vm7846
  %v7848 = vsel %vm7847, %v7839, %v7844
  %v7849 = vrsqrt.pop %v7580
  %v7850 = vmul.f32 %v7849, %v7580
  %v7851 = vmul.f32 %v7850, %v7849
  %v7852 = vmul.f32 0.5, %v7851
  %v7853 = vsub.f32 1.5, %v7852
  %v7854 = vmul.f32 %v7849, %v7853
  %vm7855 = vweird.f32 %v7580
  %vm7856 = vweird.f32 %v7849
  %vm7857 = vmor %vm7855, %vm7856
  %v7858 = vsel %vm7857, %v7849, %v7854
  %v7859 = vrsqrt.pop %v7581
  %v7860 = vmul.f32 %v7859, %v7581
  %v7861 = vmul.f32 %v7860, %v7859
  %v7862 = vmul.f32 0.5, %v7861
  %v7863 = vsub.f32 1.5, %v7862
  %v7864 = vmul.f32 %v7859, %v7863
  %vm7865 = vweird.f32 %v7581
  %vm7866 = vweird.f32 %v7859
  %vm7867 = vmor %vm7865, %vm7866
  %v7868 = vsel %vm7867, %v7859, %v7864
  %v7869 = vrsqrt.pop %v7582
  %v7870 = vmul.f32 %v7869, %v7582
  %v7871 = vmul.f32 %v7870, %v7869
  %v7872 = vmul.f32 0.5, %v7871
  %v7873 = vsub.f32 1.5, %v7872
  %v7874 = vmul.f32 %v7869, %v7873
  %vm7875 = vweird.f32 %v7582
  %vm7876 = vweird.f32 %v7869
  %vm7877 = vmor %vm7875, %vm7876
  %v7878 = vsel %vm7877, %v7869, %v7874
  %v7879 = vrsqrt.pop %v7583
  %v7880 = vmul.f32 %v7879, %v7583
  %v7881 = vmul.f32 %v7880, %v7879
  %v7882 = vmul.f32 0.5, %v7881
  %v7883 = vsub.f32 1.5, %v7882
  %v7884 = vmul.f32 %v7879, %v7883
  %vm7885 = vweird.f32 %v7583
  %vm7886 = vweird.f32 %v7879
  %vm7887 = vmor %vm7885, %vm7886
  %v7888 = vsel %vm7887, %v7879, %v7884
  %v7889 = vrsqrt.pop %v7584
  %v7890 = vmul.f32 %v7889, %v7584
  %v7891 = vmul.f32 %v7890, %v7889
  %v7892 = vmul.f32 0.5, %v7891
  %v7893 = vsub.f32 1.5, %v7892
  %v7894 = vmul.f32 %v7889, %v7893
  %vm7895 = vweird.f32 %v7584
  %vm7896 = vweird.f32 %v7889
  %vm7897 = vmor %vm7895, %vm7896
  %v7898 = vsel %vm7897, %v7889, %v7894
  %v7899 = vrsqrt.pop %v7585
  %v7900 = vmul.f32 %v7899, %v7585
  %v7901 = vmul.f32 %v7900, %v7899
  %v7902 = vmul.f32 0.5, %v7901
  %v7903 = vsub.f32 1.5, %v7902
  %v7904 = vmul.f32 %v7899, %v7903
  %vm7905 = vweird.f32 %v7585
  %vm7906 = vweird.f32 %v7899
  %vm7907 = vmor %vm7905, %vm7906
  %v7908 = vsel %vm7907, %v7899, %v7904
  %v7909 = vrsqrt.pop %v7586
  %v7910 = vmul.f32 %v7909, %v7586
  %v7911 = vmul.f32 %v7910, %v7909
  %v7912 = vmul.f32 0.5, %v7911
  %v7913 = vsub.f32 1.5, %v7912
  %v7914 = vmul.f32 %v7909, %v7913
  %vm7915 = vweird.f32 %v7586
  %vm7916 = vweird.f32 %v7909
  %vm7917 = vmor %vm7915, %vm7916
  %v7918 = vsel %vm7917, %v7909, %v7914
  %v7919 = vrsqrt.pop %v7587
  %v7920 = vmul.f32 %v7919, %v7587
  %v7921 = vmul.f32 %v7920, %v7919
  %v7922 = vmul.f32 0.5, %v7921
  %v7923 = vsub.f32 1.5, %v7922
  %v7924 = vmul.f32 %v7919, %v7923
  %vm7925 = vweird.f32 %v7587
  %vm7926 = vweird.f32 %v7919
  %vm7927 = vmor %vm7925, %vm7926
  %v7928 = vsel %vm7927, %v7919, %v7924
  %v7929 = vrsqrt.pop %v7588
  %v7930 = vmul.f32 %v7929, %v7588
  %v7931 = vmul.f32 %v7930, %v7929
  %v7932 = vmul.f32 0.5, %v7931
  %v7933 = vsub.f32 1.5, %v7932
  %v7934 = vmul.f32 %v7929, %v7933
  %vm7935 = vweird.f32 %v7588
  %vm7936 = vweird.f32 %v7929
  %vm7937 = vmor %vm7935, %vm7936
  %v7938 = vsel %vm7937, %v7929, %v7934
  %v7939 = vmul.f32 %v7204, %v7598
  %v7940 = vmul.f32 %v7205, %v7608
  %v7941 = vmul.f32 %v7206, %v7618
  %v7942 = vmul.f32 %v7207, %v7628
  %v7943 = vmul.f32 %v7208, %v7638
  %v7944 = vmul.f32 %v7209, %v7648
  %v7945 = vmul.f32 %v7210, %v7658
  %v7946 = vmul.f32 %v7211, %v7668
  %v7947 = vmul.f32 %v7212, %v7678
  %v7948 = vmul.f32 %v7213, %v7688
  %v7949 = vmul.f32 %v7214, %v7698
  %v7950 = vmul.f32 %v7215, %v7708
  %v7951 = vmul.f32 %v7216, %v7718
  %v7952 = vmul.f32 %v7217, %v7728
  %v7953 = vmul.f32 %v7218, %v7738
  %v7954 = vmul.f32 %v7219, %v7748
  %v7955 = vmul.f32 %v7220, %v7758
  %v7956 = vmul.f32 %v7221, %v7768
  %v7957 = vmul.f32 %v7222, %v7778
  %v7958 = vmul.f32 %v7223, %v7788
  %v7959 = vmul.f32 %v7224, %v7798
  %v7960 = vmul.f32 %v7225, %v7808
  %v7961 = vmul.f32 %v7226, %v7818
  %v7962 = vmul.f32 %v7227, %v7828
  %v7963 = vmul.f32 %v7228, %v7838
  %v7964 = vmul.f32 %v7229, %v7848
  %v7965 = vmul.f32 %v7230, %v7858
  %v7966 = vmul.f32 %v7231, %v7868
  %v7967 = vmul.f32 %v7232, %v7878
  %v7968 = vmul.f32 %v7233, %v7888
  %v7969 = vmul.f32 %v7234, %v7898
  %v7970 = vmul.f32 %v7235, %v7908
  %v7971 = vmul.f32 %v7236, %v7918
  %v7972 = vmul.f32 %v7237, %v7928
  %v7973 = vmul.f32 %v7238, %v7938
  %v7974 = vld [vmem:[%s9] sm:$0xff]
  %v7975 = vld [vmem:[%s9 + $0x8] sm:$0xff]
  %v7976 = vld [vmem:[%s9 + $0x10] sm:$0xff]
  %v7977 = vld [vmem:[%s9 + $0x18] sm:$0xff]
  %v7978 = vld [vmem:[%s9 + $0x20] sm:$0x7]
  %v7984 = vperm.slane %v7974, 0
  %v7985 = vperm.slane %v7974, 1
  %v7986 = vperm.slane %v7974, 2
  %v7987 = vperm.slane %v7974, 3
  %v7988 = vperm.slane %v7974, 4
  %v7989 = vperm.slane %v7974, 5
  %v7990 = vperm.slane %v7974, 6
  %v7991 = vperm.slane %v7974, 7
  %v7992 = vperm.slane %v7975, 0
  %v7993 = vperm.slane %v7975, 1
  %v7994 = vperm.slane %v7975, 2
  %v7995 = vperm.slane %v7975, 3
  %v7996 = vperm.slane %v7975, 4
  %v7997 = vperm.slane %v7975, 5
  %v7998 = vperm.slane %v7975, 6
  %v7999 = vperm.slane %v7975, 7
  %v8000 = vperm.slane %v7976, 0
  %v8001 = vperm.slane %v7976, 1
  %v8002 = vperm.slane %v7976, 2
  %v8003 = vperm.slane %v7976, 3
  %v8004 = vperm.slane %v7976, 4
  %v8005 = vperm.slane %v7976, 5
  %v8006 = vperm.slane %v7976, 6
  %v8007 = vperm.slane %v7976, 7
  %v8008 = vperm.slane %v7977, 0
  %v8009 = vperm.slane %v7977, 1
  %v8010 = vperm.slane %v7977, 2
  %v8011 = vperm.slane %v7977, 3
  %v8012 = vperm.slane %v7977, 4
  %v8013 = vperm.slane %v7977, 5
  %v8014 = vperm.slane %v7977, 6
  %v8015 = vperm.slane %v7977, 7
  %v8016 = vperm.slane %v7978, 0
  %v8017 = vperm.slane %v7978, 1
  %v8018 = vperm.slane %v7978, 2
  %v8054 = vmul.f32 %v7939, %v7984
  %v8055 = vmul.f32 %v7940, %v7985
  %v8056 = vmul.f32 %v7941, %v7986
  %v8057 = vmul.f32 %v7942, %v7987
  %v8058 = vmul.f32 %v7943, %v7988
  %v8059 = vmul.f32 %v7944, %v7989
  %v8060 = vmul.f32 %v7945, %v7990
  %v8061 = vmul.f32 %v7946, %v7991
  %v8062 = vmul.f32 %v7947, %v7992
  %v8063 = vmul.f32 %v7948, %v7993
  %v8064 = vmul.f32 %v7949, %v7994
  %v8065 = vmul.f32 %v7950, %v7995
  %v8066 = vmul.f32 %v7951, %v7996
  %v8067 = vmul.f32 %v7952, %v7997
  %v8068 = vmul.f32 %v7953, %v7998
  %v8069 = vmul.f32 %v7954, %v7999
  %v8070 = vmul.f32 %v7955, %v8000
  %v8071 = vmul.f32 %v7956, %v8001
  %v8072 = vmul.f32 %v7957, %v8002
  %v8073 = vmul.f32 %v7958, %v8003
  %v8074 = vmul.f32 %v7959, %v8004
  %v8075 = vmul.f32 %v7960, %v8005
  %v8076 = vmul.f32 %v7961, %v8006
  %v8077 = vmul.f32 %v7962, %v8007
  %v8078 = vmul.f32 %v7963, %v8008
  %v8079 = vmul.f32 %v7964, %v8009
  %v8080 = vmul.f32 %v7965, %v8010
  %v8081 = vmul.f32 %v7966, %v8011
  %v8082 = vmul.f32 %v7967, %v8012
  %v8083 = vmul.f32 %v7968, %v8013
  %v8084 = vmul.f32 %v7969, %v8014
  %v8085 = vmul.f32 %v7970, %v8015
  %v8086 = vmul.f32 %v7971, %v8016
  %v8087 = vmul.f32 %v7972, %v8017
  %v8088 = vmul.f32 %v7973, %v8018
  %v8089 = vld [vmem:[%s10] sm:$0xff]
  %v8090 = vld [vmem:[%s10 + $0x8] sm:$0xff]
  %v8091 = vld [vmem:[%s10 + $0x10] sm:$0xff]
  %v8092 = vld [vmem:[%s10 + $0x18] sm:$0xff]
  %v8093 = vld [vmem:[%s10 + $0x20] sm:$0x7]
  %v8099 = vperm.slane %v8089, 0
  %v8100 = vperm.slane %v8089, 1
  %v8101 = vperm.slane %v8089, 2
  %v8102 = vperm.slane %v8089, 3
  %v8103 = vperm.slane %v8089, 4
  %v8104 = vperm.slane %v8089, 5
  %v8105 = vperm.slane %v8089, 6
  %v8106 = vperm.slane %v8089, 7
  %v8107 = vperm.slane %v8090, 0
  %v8108 = vperm.slane %v8090, 1
  %v8109 = vperm.slane %v8090, 2
  %v8110 = vperm.slane %v8090, 3
  %v8111 = vperm.slane %v8090, 4
  %v8112 = vperm.slane %v8090, 5
  %v8113 = vperm.slane %v8090, 6
  %v8114 = vperm.slane %v8090, 7
  %v8115 = vperm.slane %v8091, 0
  %v8116 = vperm.slane %v8091, 1
  %v8117 = vperm.slane %v8091, 2
  %v8118 = vperm.slane %v8091, 3
  %v8119 = vperm.slane %v8091, 4
  %v8120 = vperm.slane %v8091, 5
  %v8121 = vperm.slane %v8091, 6
  %v8122 = vperm.slane %v8091, 7
  %v8123 = vperm.slane %v8092, 0
  %v8124 = vperm.slane %v8092, 1
  %v8125 = vperm.slane %v8092, 2
  %v8126 = vperm.slane %v8092, 3
  %v8127 = vperm.slane %v8092, 4
  %v8128 = vperm.slane %v8092, 5
  %v8129 = vperm.slane %v8092, 6
  %v8130 = vperm.slane %v8092, 7
  %v8131 = vperm.slane %v8093, 0
  %v8132 = vperm.slane %v8093, 1
  %v8133 = vperm.slane %v8093, 2
  %v8169 = vadd.f32 %v8054, %v8099
  %v8170 = vadd.f32 %v8055, %v8100
  %v8171 = vadd.f32 %v8056, %v8101
  %v8172 = vadd.f32 %v8057, %v8102
  %v8173 = vadd.f32 %v8058, %v8103
  %v8174 = vadd.f32 %v8059, %v8104
  %v8175 = vadd.f32 %v8060, %v8105
  %v8176 = vadd.f32 %v8061, %v8106
  %v8177 = vadd.f32 %v8062, %v8107
  %v8178 = vadd.f32 %v8063, %v8108
  %v8179 = vadd.f32 %v8064, %v8109
  %v8180 = vadd.f32 %v8065, %v8110
  %v8181 = vadd.f32 %v8066, %v8111
  %v8182 = vadd.f32 %v8067, %v8112
  %v8183 = vadd.f32 %v8068, %v8113
  %v8184 = vadd.f32 %v8069, %v8114
  %v8185 = vadd.f32 %v8070, %v8115
  %v8186 = vadd.f32 %v8071, %v8116
  %v8187 = vadd.f32 %v8072, %v8117
  %v8188 = vadd.f32 %v8073, %v8118
  %v8189 = vadd.f32 %v8074, %v8119
  %v8190 = vadd.f32 %v8075, %v8120
  %v8191 = vadd.f32 %v8076, %v8121
  %v8192 = vadd.f32 %v8077, %v8122
  %v8193 = vadd.f32 %v8078, %v8123
  %v8194 = vadd.f32 %v8079, %v8124
  %v8195 = vadd.f32 %v8080, %v8125
  %v8196 = vadd.f32 %v8081, %v8126
  %v8197 = vadd.f32 %v8082, %v8127
  %v8198 = vadd.f32 %v8083, %v8128
  %v8199 = vadd.f32 %v8084, %v8129
  %v8200 = vadd.f32 %v8085, %v8130
  %v8201 = vadd.f32 %v8086, %v8131
  %v8202 = vadd.f32 %v8087, %v8132
  %v8203 = vadd.f32 %v8088, %v8133
  %v8204 = vpack.c.bf16 %v8169, %v8169
  %v8205 = vpack.c.bf16 %v8170, %v8170
  %v8206 = vpack.c.bf16 %v8171, %v8171
  %v8207 = vpack.c.bf16 %v8172, %v8172
  %v8208 = vpack.c.bf16 %v8173, %v8173
  %v8209 = vpack.c.bf16 %v8174, %v8174
  %v8210 = vpack.c.bf16 %v8175, %v8175
  %v8211 = vpack.c.bf16 %v8176, %v8176
  %v8212 = vpack.c.bf16 %v8177, %v8177
  %v8213 = vpack.c.bf16 %v8178, %v8178
  %v8214 = vpack.c.bf16 %v8179, %v8179
  %v8215 = vpack.c.bf16 %v8180, %v8180
  %v8216 = vpack.c.bf16 %v8181, %v8181
  %v8217 = vpack.c.bf16 %v8182, %v8182
  %v8218 = vpack.c.bf16 %v8183, %v8183
  %v8219 = vpack.c.bf16 %v8184, %v8184
  %v8220 = vpack.c.bf16 %v8185, %v8185
  %v8221 = vpack.c.bf16 %v8186, %v8186
  %v8222 = vpack.c.bf16 %v8187, %v8187
  %v8223 = vpack.c.bf16 %v8188, %v8188
  %v8224 = vpack.c.bf16 %v8189, %v8189
  %v8225 = vpack.c.bf16 %v8190, %v8190
  %v8226 = vpack.c.bf16 %v8191, %v8191
  %v8227 = vpack.c.bf16 %v8192, %v8192
  %v8228 = vpack.c.bf16 %v8193, %v8193
  %v8229 = vpack.c.bf16 %v8194, %v8194
  %v8230 = vpack.c.bf16 %v8195, %v8195
  %v8231 = vpack.c.bf16 %v8196, %v8196
  %v8232 = vpack.c.bf16 %v8197, %v8197
  %v8233 = vpack.c.bf16 %v8198, %v8198
  %v8234 = vpack.c.bf16 %v8199, %v8199
  %v8235 = vpack.c.bf16 %v8200, %v8200
  %v8236 = vpack.c.bf16 %v8201, %v8201
  %v8237 = vpack.c.bf16 %v8202, %v8202
  %v8238 = vpack.c.bf16 %v8203, %v8203
  %v8239 = vld [vmem:[%s11] sm:$0xf]
  %v8240 = vld [vmem:[%s11 + $0x4] sm:$0xf]
  %v8241 = vld [vmem:[%s11 + $0x8] sm:$0xf]
  %v8242 = vld [vmem:[%s11 + $0xc] sm:$0xf]
  %v8243 = vld [vmem:[%s11 + $0x10] sm:$0xf]
  %v8244 = vld [vmem:[%s11 + $0x14] sm:$0xf]
  %v8245 = vld [vmem:[%s11 + $0x18] sm:$0xf]
  %v8246 = vld [vmem:[%s11 + $0x1c] sm:$0xf]
  %v8247 = vld [vmem:[%s11 + $0x20] sm:$0xf]
  %v8248 = vld [vmem:[%s11 + $0x24] sm:$0xf]
  %v8249 = vld [vmem:[%s11 + $0x28] sm:$0xf]
  %v8250 = vld [vmem:[%s11 + $0x2c] sm:$0xf]
  %v8251 = vld [vmem:[%s11 + $0x30] sm:$0xf]
  %v8252 = vld [vmem:[%s11 + $0x34] sm:$0xf]
  %v8253 = vld [vmem:[%s11 + $0x38] sm:$0xf]
  %v8254 = vld [vmem:[%s11 + $0x3c] sm:$0xf]
  %v8255 = vld [vmem:[%s11 + $0x40] sm:$0xf]
  %v8256 = vld [vmem:[%s11 + $0x44] sm:$0xf]
  %v8257 = vld [vmem:[%s11 + $0x48] sm:$0xf]
  %v8258 = vld [vmem:[%s11 + $0x4c] sm:$0xf]
  %v8259 = vld [vmem:[%s11 + $0x50] sm:$0xf]
  %v8260 = vld [vmem:[%s11 + $0x54] sm:$0xf]
  %v8261 = vld [vmem:[%s11 + $0x58] sm:$0xf]
  %v8262 = vld [vmem:[%s11 + $0x5c] sm:$0xf]
  %v8263 = vld [vmem:[%s11 + $0x60] sm:$0xf]
  %v8264 = vld [vmem:[%s11 + $0x64] sm:$0xf]
  %v8265 = vld [vmem:[%s11 + $0x68] sm:$0xf]
  %v8266 = vld [vmem:[%s11 + $0x6c] sm:$0xf]
  %v8267 = vld [vmem:[%s11 + $0x70] sm:$0xf]
  %v8268 = vld [vmem:[%s11 + $0x74] sm:$0xf]
  %v8269 = vld [vmem:[%s11 + $0x78] sm:$0xf]
  %v8270 = vld [vmem:[%s11 + $0x7c] sm:$0xf]
  %v8271 = vld [vmem:[%s11 + $0x80] sm:$0xf]
  %v8272 = vld [vmem:[%s11 + $0x84] sm:$0xf]
  %v8273 = vld [vmem:[%s11 + $0x88] sm:$0xf]
  %v8274 = vld [vmem:[%s11 + $0x8c] sm:$0xf]
  %v8275 = vld [vmem:[%s11 + $0x90] sm:$0xf]
  %v8276 = vld [vmem:[%s11 + $0x94] sm:$0xf]
  %v8277 = vld [vmem:[%s11 + $0x98] sm:$0xf]
  %v8278 = vld [vmem:[%s11 + $0x9c] sm:$0xf]
  %v8279 = vld [vmem:[%s11 + $0xa0] sm:$0xf]
  %v8280 = vld [vmem:[%s11 + $0xa4] sm:$0xf]
  %v8281 = vld [vmem:[%s11 + $0xa8] sm:$0xf]
  %v8282 = vld [vmem:[%s11 + $0xac] sm:$0xf]
  %v8283 = vld [vmem:[%s11 + $0xb0] sm:$0xf]
  %v8284 = vld [vmem:[%s11 + $0xb4] sm:$0xf]
  %v8285 = vld [vmem:[%s11 + $0xb8] sm:$0xf]
  %v8286 = vld [vmem:[%s11 + $0xbc] sm:$0xf]
  %v8287 = vld [vmem:[%s11 + $0xc0] sm:$0xf]
  %v8288 = vld [vmem:[%s11 + $0xc4] sm:$0xf]
  %v8289 = vld [vmem:[%s11 + $0xc8] sm:$0xf]
  %v8290 = vld [vmem:[%s11 + $0xcc] sm:$0xf]
  %v8291 = vld [vmem:[%s11 + $0xd0] sm:$0xf]
  %v8292 = vld [vmem:[%s11 + $0xd4] sm:$0xf]
  %v8293 = vld [vmem:[%s11 + $0xd8] sm:$0xf]
  %v8294 = vld [vmem:[%s11 + $0xdc] sm:$0xf]
  %v8295 = vld [vmem:[%s11 + $0xe0] sm:$0xf]
  %v8296 = vld [vmem:[%s11 + $0xe4] sm:$0xf]
  %v8297 = vld [vmem:[%s11 + $0xe8] sm:$0xf]
  %v8298 = vld [vmem:[%s11 + $0xec] sm:$0xf]
  %v8299 = vld [vmem:[%s11 + $0xf0] sm:$0xf]
  %v8300 = vld [vmem:[%s11 + $0xf4] sm:$0xf]
  %v8301 = vld [vmem:[%s11 + $0xf8] sm:$0xf]
  %v8302 = vld [vmem:[%s11 + $0xfc] sm:$0xf]
  %v8303 = vld [vmem:[%s11 + $0x100] sm:$0xf]
  %v8304 = vld [vmem:[%s11 + $0x104] sm:$0xf]
  %v8305 = vld [vmem:[%s11 + $0x108] sm:$0xf]
  %v8306 = vld [vmem:[%s11 + $0x10c] sm:$0xf]
  %v8307 = vld [vmem:[%s11 + $0x110] sm:$0xf]
  %v8308 = vld [vmem:[%s11 + $0x114] sm:$0xf]
  %v8309 = vld [vmem:[%s11 + $0x118] sm:$0xf]
  %v8310 = vld [vmem:[%s11 + $0x11c] sm:$0xf]
  %v8311 = vld [vmem:[%s11 + $0x120] sm:$0xf]
  %v8312 = vld [vmem:[%s11 + $0x124] sm:$0xf]
  %v8313 = vld [vmem:[%s11 + $0x128] sm:$0xf]
  %v8314 = vld [vmem:[%s11 + $0x12c] sm:$0xf]
  %v8315 = vld [vmem:[%s11 + $0x130] sm:$0xf]
  %v8316 = vld [vmem:[%s11 + $0x134] sm:$0xf]
  %v8317 = vld [vmem:[%s11 + $0x138] sm:$0xf]
  %v8318 = vld [vmem:[%s11 + $0x13c] sm:$0xf]
  %v8319 = vld [vmem:[%s11 + $0x140] sm:$0xf]
  %v8320 = vld [vmem:[%s11 + $0x144] sm:$0xf]
  %v8321 = vld [vmem:[%s11 + $0x148] sm:$0xf]
  %v8322 = vld [vmem:[%s11 + $0x14c] sm:$0xf]
  %v8323 = vld [vmem:[%s11 + $0x150] sm:$0xf]
  %v8324 = vld [vmem:[%s11 + $0x154] sm:$0xf]
  %v8325 = vld [vmem:[%s11 + $0x158] sm:$0xf]
  %v8326 = vld [vmem:[%s11 + $0x15c] sm:$0xf]
  %v8327 = vld [vmem:[%s11 + $0x160] sm:$0xf]
  %v8328 = vld [vmem:[%s11 + $0x164] sm:$0xf]
  %v8329 = vld [vmem:[%s11 + $0x168] sm:$0xf]
  %v8330 = vld [vmem:[%s11 + $0x16c] sm:$0xf]
  %v8331 = vld [vmem:[%s11 + $0x170] sm:$0xf]
  %v8332 = vld [vmem:[%s11 + $0x174] sm:$0xf]
  %v8333 = vld [vmem:[%s11 + $0x178] sm:$0xf]
  %v8334 = vld [vmem:[%s11 + $0x17c] sm:$0xf]
  %v8335 = vld [vmem:[%s11 + $0x180] sm:$0xf]
  %v8336 = vld [vmem:[%s11 + $0x184] sm:$0xf]
  %v8337 = vld [vmem:[%s11 + $0x188] sm:$0xf]
  %v8338 = vld [vmem:[%s11 + $0x18c] sm:$0xf]
  %v8339 = vld [vmem:[%s11 + $0x190] sm:$0xf]
  %v8340 = vld [vmem:[%s11 + $0x194] sm:$0xf]
  %v8341 = vld [vmem:[%s11 + $0x198] sm:$0xf]
  %v8342 = vld [vmem:[%s11 + $0x19c] sm:$0xf]
  %v8343 = vld [vmem:[%s11 + $0x1a0] sm:$0xf]
  %v8344 = vld [vmem:[%s11 + $0x1a4] sm:$0xf]
  %v8345 = vld [vmem:[%s11 + $0x1a8] sm:$0xf]
  %v8346 = vld [vmem:[%s11 + $0x1ac] sm:$0xf]
  %v8347 = vld [vmem:[%s11 + $0x1b0] sm:$0xf]
  %v8348 = vld [vmem:[%s11 + $0x1b4] sm:$0xf]
  %v8349 = vld [vmem:[%s11 + $0x1b8] sm:$0xf]
  %v8350 = vld [vmem:[%s11 + $0x1bc] sm:$0xf]
  %v8351 = vld [vmem:[%s11 + $0x1c0] sm:$0xf]
  %v8352 = vld [vmem:[%s11 + $0x1c4] sm:$0xf]
  %v8353 = vld [vmem:[%s11 + $0x1c8] sm:$0xf]
  %v8354 = vld [vmem:[%s11 + $0x1cc] sm:$0xf]
  %v8355 = vld [vmem:[%s11 + $0x1d0] sm:$0xf]
  %v8356 = vld [vmem:[%s11 + $0x1d4] sm:$0xf]
  %v8357 = vld [vmem:[%s11 + $0x1d8] sm:$0xf]
  %v8358 = vld [vmem:[%s11 + $0x1dc] sm:$0xf]
  %v8359 = vld [vmem:[%s11 + $0x1e0] sm:$0xf]
  %v8360 = vld [vmem:[%s11 + $0x1e4] sm:$0xf]
  %v8361 = vld [vmem:[%s11 + $0x1e8] sm:$0xf]
  %v8362 = vld [vmem:[%s11 + $0x1ec] sm:$0xf]
  %v8363 = vld [vmem:[%s11 + $0x1f0] sm:$0xf]
  %v8364 = vld [vmem:[%s11 + $0x1f4] sm:$0xf]
  %v8365 = vld [vmem:[%s11 + $0x1f8] sm:$0xf]
  %v8366 = vld [vmem:[%s11 + $0x1fc] sm:$0xf]
  %v8367 = vld [vmem:[%s11 + $0x200] sm:$0xf]
  %v8368 = vld [vmem:[%s11 + $0x204] sm:$0xf]
  %v8369 = vld [vmem:[%s11 + $0x208] sm:$0xf]
  %v8370 = vld [vmem:[%s11 + $0x20c] sm:$0xf]
  %v8371 = vld [vmem:[%s11 + $0x210] sm:$0xf]
  %v8372 = vld [vmem:[%s11 + $0x214] sm:$0xf]
  %v8373 = vld [vmem:[%s11 + $0x218] sm:$0xf]
  %v8374 = vld [vmem:[%s11 + $0x21c] sm:$0xf]
  %v8375 = vld [vmem:[%s11 + $0x220] sm:$0xf]
  %v8376 = vld [vmem:[%s11 + $0x224] sm:$0xf]
  %v8377 = vld [vmem:[%s11 + $0x228] sm:$0xf]
  %v8378 = vld [vmem:[%s11 + $0x22c] sm:$0xf]
  %v8379 = vld [vmem:[%s11 + $0x230] sm:$0xf]
  %v8380 = vld [vmem:[%s11 + $0x234] sm:$0xf]
  %v8381 = vld [vmem:[%s11 + $0x238] sm:$0xf]
  %v8382 = vld [vmem:[%s11 + $0x23c] sm:$0xf]
  %v8383 = vld [vmem:[%s11 + $0x240] sm:$0xf]
  %v8384 = vld [vmem:[%s11 + $0x244] sm:$0xf]
  %v8385 = vld [vmem:[%s11 + $0x248] sm:$0xf]
  %v8386 = vld [vmem:[%s11 + $0x24c] sm:$0xf]
  %v8387 = vld [vmem:[%s11 + $0x250] sm:$0xf]
  %v8388 = vld [vmem:[%s11 + $0x254] sm:$0xf]
  %v8389 = vld [vmem:[%s11 + $0x258] sm:$0xf]
  %v8390 = vld [vmem:[%s11 + $0x25c] sm:$0xf]
  %v8391 = vld [vmem:[%s11 + $0x260] sm:$0xf]
  %v8392 = vld [vmem:[%s11 + $0x264] sm:$0xf]
  %v8393 = vld [vmem:[%s11 + $0x268] sm:$0xf]
  %v8394 = vld [vmem:[%s11 + $0x26c] sm:$0xf]
  %v8395 = vld [vmem:[%s11 + $0x270] sm:$0xf]
  %v8396 = vld [vmem:[%s11 + $0x274] sm:$0xf]
  %v8397 = vld [vmem:[%s11 + $0x278] sm:$0xf]
  %v8398 = vld [vmem:[%s11 + $0x27c] sm:$0xf]
  %v8399 = vld [vmem:[%s11 + $0x280] sm:$0xf]
  %v8400 = vld [vmem:[%s11 + $0x284] sm:$0xf]
  %v8401 = vld [vmem:[%s11 + $0x288] sm:$0xf]
  %v8402 = vld [vmem:[%s11 + $0x28c] sm:$0xf]
  %v8403 = vld [vmem:[%s11 + $0x290] sm:$0xf]
  %v8404 = vld [vmem:[%s11 + $0x294] sm:$0xf]
  %v8405 = vld [vmem:[%s11 + $0x298] sm:$0xf]
  %v8406 = vld [vmem:[%s11 + $0x29c] sm:$0xf]
  %v8407 = vld [vmem:[%s11 + $0x2a0] sm:$0xf]
  %v8408 = vld [vmem:[%s11 + $0x2a4] sm:$0xf]
  %v8409 = vld [vmem:[%s11 + $0x2a8] sm:$0xf]
  %v8410 = vld [vmem:[%s11 + $0x2ac] sm:$0xf]
  %v8411 = vld [vmem:[%s11 + $0x2b0] sm:$0xf]
  %v8412 = vld [vmem:[%s11 + $0x2b4] sm:$0xf]
  %v8413 = vld [vmem:[%s11 + $0x2b8] sm:$0xf]
  %v8414 = vld [vmem:[%s11 + $0x2bc] sm:$0xf]
  %v8415 = vld [vmem:[%s11 + $0x2c0] sm:$0xf]
  %v8416 = vld [vmem:[%s11 + $0x2c4] sm:$0xf]
  %v8417 = vld [vmem:[%s11 + $0x2c8] sm:$0xf]
  %v8418 = vld [vmem:[%s11 + $0x2cc] sm:$0xf]
  %v8419 = vld [vmem:[%s11 + $0x2d0] sm:$0xf]
  %v8420 = vld [vmem:[%s11 + $0x2d4] sm:$0xf]
  %v8421 = vld [vmem:[%s11 + $0x2d8] sm:$0xf]
  %v8422 = vld [vmem:[%s11 + $0x2dc] sm:$0xf]
  %v8423 = vld [vmem:[%s11 + $0x2e0] sm:$0xf]
  %v8424 = vld [vmem:[%s11 + $0x2e4] sm:$0xf]
  %v8425 = vld [vmem:[%s11 + $0x2e8] sm:$0xf]
  %v8426 = vld [vmem:[%s11 + $0x2ec] sm:$0xf]
  %v8427 = vld [vmem:[%s11 + $0x2f0] sm:$0xf]
  %v8428 = vld [vmem:[%s11 + $0x2f4] sm:$0xf]
  %v8429 = vld [vmem:[%s11 + $0x2f8] sm:$0xf]
  %v8430 = vld [vmem:[%s11 + $0x2fc] sm:$0xf]
  %v8431 = vld [vmem:[%s11 + $0x300] sm:$0xf]
  %v8432 = vld [vmem:[%s11 + $0x304] sm:$0xf]
  %v8433 = vld [vmem:[%s11 + $0x308] sm:$0xf]
  %v8434 = vld [vmem:[%s11 + $0x30c] sm:$0xf]
  %v8435 = vld [vmem:[%s11 + $0x310] sm:$0xf]
  %v8436 = vld [vmem:[%s11 + $0x314] sm:$0xf]
  %v8437 = vld [vmem:[%s11 + $0x318] sm:$0xf]
  %v8438 = vld [vmem:[%s11 + $0x31c] sm:$0xf]
  %v8439 = vld [vmem:[%s11 + $0x320] sm:$0xf]
  %v8440 = vld [vmem:[%s11 + $0x324] sm:$0xf]
  %v8441 = vld [vmem:[%s11 + $0x328] sm:$0xf]
  %v8442 = vld [vmem:[%s11 + $0x32c] sm:$0xf]
  %v8443 = vld [vmem:[%s11 + $0x330] sm:$0xf]
  %v8444 = vld [vmem:[%s11 + $0x334] sm:$0xf]
  %v8445 = vld [vmem:[%s11 + $0x338] sm:$0xf]
  %v8446 = vld [vmem:[%s11 + $0x33c] sm:$0xf]
  %v8447 = vld [vmem:[%s11 + $0x340] sm:$0xf]
  %v8448 = vld [vmem:[%s11 + $0x344] sm:$0xf]
  %v8449 = vld [vmem:[%s11 + $0x348] sm:$0xf]
  %v8450 = vld [vmem:[%s11 + $0x34c] sm:$0xf]
  %v8451 = vld [vmem:[%s11 + $0x350] sm:$0xf]
  %v8452 = vld [vmem:[%s11 + $0x354] sm:$0xf]
  %v8453 = vld [vmem:[%s11 + $0x358] sm:$0xf]
  %v8454 = vld [vmem:[%s11 + $0x35c] sm:$0xf]
  %v8455 = vld [vmem:[%s11 + $0x360] sm:$0xf]
  %v8456 = vld [vmem:[%s11 + $0x364] sm:$0xf]
  %v8457 = vld [vmem:[%s11 + $0x368] sm:$0xf]
  %v8458 = vld [vmem:[%s11 + $0x36c] sm:$0xf]
  %v8459 = vld [vmem:[%s11 + $0x370] sm:$0xf]
  %v8460 = vld [vmem:[%s11 + $0x374] sm:$0xf]
  %v8461 = vld [vmem:[%s11 + $0x378] sm:$0xf]
  %v8462 = vld [vmem:[%s11 + $0x37c] sm:$0xf]
  %v8463 = vld [vmem:[%s11 + $0x380] sm:$0xf]
  %v8464 = vld [vmem:[%s11 + $0x384] sm:$0xf]
  %v8465 = vld [vmem:[%s11 + $0x388] sm:$0xf]
  %v8466 = vld [vmem:[%s11 + $0x38c] sm:$0xf]
  %v8467 = vld [vmem:[%s11 + $0x390] sm:$0xf]
  %v8468 = vld [vmem:[%s11 + $0x394] sm:$0xf]
  %v8469 = vld [vmem:[%s11 + $0x398] sm:$0xf]
  %v8470 = vld [vmem:[%s11 + $0x39c] sm:$0xf]
  %v8471 = vld [vmem:[%s11 + $0x3a0] sm:$0xf]
  %v8472 = vld [vmem:[%s11 + $0x3a4] sm:$0xf]
  %v8473 = vld [vmem:[%s11 + $0x3a8] sm:$0xf]
  %v8474 = vld [vmem:[%s11 + $0x3ac] sm:$0xf]
  %v8475 = vld [vmem:[%s11 + $0x3b0] sm:$0xf]
  %v8476 = vld [vmem:[%s11 + $0x3b4] sm:$0xf]
  %v8477 = vld [vmem:[%s11 + $0x3b8] sm:$0xf]
  %v8478 = vld [vmem:[%s11 + $0x3bc] sm:$0xf]
  %v8479 = vld [vmem:[%s11 + $0x3c0] sm:$0xf]
  %v8480 = vld [vmem:[%s11 + $0x3c4] sm:$0xf]
  %v8481 = vld [vmem:[%s11 + $0x3c8] sm:$0xf]
  %v8482 = vld [vmem:[%s11 + $0x3cc] sm:$0xf]
  %v8483 = vld [vmem:[%s11 + $0x3d0] sm:$0xf]
  %v8484 = vld [vmem:[%s11 + $0x3d4] sm:$0xf]
  %v8485 = vld [vmem:[%s11 + $0x3d8] sm:$0xf]
  %v8486 = vld [vmem:[%s11 + $0x3dc] sm:$0xf]
  %v8487 = vld [vmem:[%s11 + $0x3e0] sm:$0xf]
  %v8488 = vld [vmem:[%s11 + $0x3e4] sm:$0xf]
  %v8489 = vld [vmem:[%s11 + $0x3e8] sm:$0xf]
  %v8490 = vld [vmem:[%s11 + $0x3ec] sm:$0xf]
  %v8491 = vld [vmem:[%s11 + $0x3f0] sm:$0xf]
  %v8492 = vld [vmem:[%s11 + $0x3f4] sm:$0xf]
  %v8493 = vld [vmem:[%s11 + $0x3f8] sm:$0xf]
  %v8494 = vld [vmem:[%s11 + $0x3fc] sm:$0xf]
  %v8495 = vld [vmem:[%s11 + $0x400] sm:$0xf]
  %v8496 = vld [vmem:[%s11 + $0x404] sm:$0xf]
  %v8497 = vld [vmem:[%s11 + $0x408] sm:$0xf]
  %v8498 = vld [vmem:[%s11 + $0x40c] sm:$0xf]
  %v8499 = vld [vmem:[%s11 + $0x410] sm:$0xf]
  %v8500 = vld [vmem:[%s11 + $0x414] sm:$0xf]
  %v8501 = vld [vmem:[%s11 + $0x418] sm:$0xf]
  %v8502 = vld [vmem:[%s11 + $0x41c] sm:$0xf]
  %v8503 = vld [vmem:[%s11 + $0x420] sm:$0xf]
  %v8504 = vld [vmem:[%s11 + $0x424] sm:$0xf]
  %v8505 = vld [vmem:[%s11 + $0x428] sm:$0xf]
  %v8506 = vld [vmem:[%s11 + $0x42c] sm:$0xf]
  %v8507 = vld [vmem:[%s11 + $0x430] sm:$0xf]
  %v8508 = vld [vmem:[%s11 + $0x434] sm:$0xf]
  %v8509 = vld [vmem:[%s11 + $0x438] sm:$0xf]
  %v8510 = vld [vmem:[%s11 + $0x43c] sm:$0xf]
  %v8511 = vld [vmem:[%s11 + $0x440] sm:$0xf]
  %v8512 = vld [vmem:[%s11 + $0x444] sm:$0xf]
  %v8513 = vld [vmem:[%s11 + $0x448] sm:$0xf]
  %v8514 = vld [vmem:[%s11 + $0x44c] sm:$0xf]
  %v8515 = vld [vmem:[%s11 + $0x450] sm:$0xf]
  %v8516 = vld [vmem:[%s11 + $0x454] sm:$0xf]
  %v8517 = vld [vmem:[%s11 + $0x458] sm:$0xf]
  %v8518 = vld [vmem:[%s11 + $0x45c] sm:$0xf]
  %v8519 = vld [vmem:[%s11 + $0x460] sm:$0xf]
  %v8520 = vld [vmem:[%s11 + $0x464] sm:$0xf]
  %v8521 = vld [vmem:[%s11 + $0x468] sm:$0xf]
  %v8522 = vld [vmem:[%s11 + $0x46c] sm:$0xf]
  %v8523 = vld [vmem:[%s11 + $0x470] sm:$0xf]
  %v8524 = vld [vmem:[%s11 + $0x474] sm:$0xf]
  %v8525 = vld [vmem:[%s11 + $0x478] sm:$0xf]
  %v8526 = vld [vmem:[%s11 + $0x47c] sm:$0xf]
  %v8527 = vld [vmem:[%s11 + $0x480] sm:$0xf]
  %v8528 = vld [vmem:[%s11 + $0x484] sm:$0xf]
  %v8529 = vld [vmem:[%s11 + $0x488] sm:$0xf]
  %v8530 = vld [vmem:[%s11 + $0x48c] sm:$0xf]
  %v8531 = vld [vmem:[%s11 + $0x490] sm:$0xf]
  %v8532 = vld [vmem:[%s11 + $0x494] sm:$0xf]
  %v8533 = vld [vmem:[%s11 + $0x498] sm:$0xf]
  %v8534 = vld [vmem:[%s11 + $0x49c] sm:$0xf]
  %v8535 = vld [vmem:[%s11 + $0x4a0] sm:$0xf]
  %v8536 = vld [vmem:[%s11 + $0x4a4] sm:$0xf]
  %v8537 = vld [vmem:[%s11 + $0x4a8] sm:$0xf]
  %v8538 = vld [vmem:[%s11 + $0x4ac] sm:$0xf]
  %v8539 = vld [vmem:[%s11 + $0x4b0] sm:$0xf]
  %v8540 = vld [vmem:[%s11 + $0x4b4] sm:$0xf]
  %v8541 = vld [vmem:[%s11 + $0x4b8] sm:$0xf]
  %v8542 = vld [vmem:[%s11 + $0x4bc] sm:$0xf]
  %v8543 = vld [vmem:[%s11 + $0x4c0] sm:$0xf]
  %v8544 = vld [vmem:[%s11 + $0x4c4] sm:$0xf]
  %v8545 = vld [vmem:[%s11 + $0x4c8] sm:$0xf]
  %v8546 = vld [vmem:[%s11 + $0x4cc] sm:$0xf]
  %v8547 = vld [vmem:[%s11 + $0x4d0] sm:$0xf]
  %v8548 = vld [vmem:[%s11 + $0x4d4] sm:$0xf]
  %v8549 = vld [vmem:[%s11 + $0x4d8] sm:$0xf]
  %v8550 = vld [vmem:[%s11 + $0x4dc] sm:$0xf]
  %v8551 = vld [vmem:[%s11 + $0x4e0] sm:$0xf]
  %v8552 = vld [vmem:[%s11 + $0x4e4] sm:$0xf]
  %v8553 = vld [vmem:[%s11 + $0x4e8] sm:$0xf]
  %v8554 = vld [vmem:[%s11 + $0x4ec] sm:$0xf]
  %v8555 = vld [vmem:[%s11 + $0x4f0] sm:$0xf]
  %v8556 = vld [vmem:[%s11 + $0x4f4] sm:$0xf]
  %v8557 = vld [vmem:[%s11 + $0x4f8] sm:$0xf]
  %v8558 = vld [vmem:[%s11 + $0x4fc] sm:$0xf]
  %v8559 = vld [vmem:[%s11 + $0x500] sm:$0xf]
  %v8560 = vld [vmem:[%s11 + $0x504] sm:$0xf]
  %v8561 = vld [vmem:[%s11 + $0x508] sm:$0xf]
  %v8562 = vld [vmem:[%s11 + $0x50c] sm:$0xf]
  %v8563 = vld [vmem:[%s11 + $0x510] sm:$0xf]
  %v8564 = vld [vmem:[%s11 + $0x514] sm:$0xf]
  %v8565 = vld [vmem:[%s11 + $0x518] sm:$0xf]
  %v8566 = vld [vmem:[%s11 + $0x51c] sm:$0xf]
  %v8567 = vld [vmem:[%s11 + $0x520] sm:$0xf]
  %v8568 = vld [vmem:[%s11 + $0x524] sm:$0xf]
  %v8569 = vld [vmem:[%s11 + $0x528] sm:$0xf]
  %v8570 = vld [vmem:[%s11 + $0x52c] sm:$0xf]
  %v8571 = vld [vmem:[%s11 + $0x530] sm:$0xf]
  %v8572 = vld [vmem:[%s11 + $0x534] sm:$0xf]
  %v8573 = vld [vmem:[%s11 + $0x538] sm:$0xf]
  %v8574 = vld [vmem:[%s11 + $0x53c] sm:$0xf]
  %v8575 = vld [vmem:[%s11 + $0x540] sm:$0xf]
  %v8576 = vld [vmem:[%s11 + $0x544] sm:$0xf]
  %v8577 = vld [vmem:[%s11 + $0x548] sm:$0xf]
  %v8578 = vld [vmem:[%s11 + $0x54c] sm:$0xf]
  %v8579 = vld [vmem:[%s11 + $0x550] sm:$0xf]
  %v8580 = vld [vmem:[%s11 + $0x554] sm:$0xf]
  %v8581 = vld [vmem:[%s11 + $0x558] sm:$0xf]
  %v8582 = vld [vmem:[%s11 + $0x55c] sm:$0xf]
  %v8583 = vld [vmem:[%s11 + $0x560] sm:$0xf]
  %v8584 = vld [vmem:[%s11 + $0x564] sm:$0xf]
  %v8585 = vld [vmem:[%s11 + $0x568] sm:$0xf]
  %v8586 = vld [vmem:[%s11 + $0x56c] sm:$0xf]
  %v8587 = vld [vmem:[%s11 + $0x570] sm:$0xf]
  %v8588 = vld [vmem:[%s11 + $0x574] sm:$0xf]
  %v8589 = vld [vmem:[%s11 + $0x578] sm:$0xf]
  %v8590 = vld [vmem:[%s11 + $0x57c] sm:$0xf]
  %v8591 = vld [vmem:[%s11 + $0x580] sm:$0xf]
  %v8592 = vld [vmem:[%s11 + $0x584] sm:$0xf]
  %v8593 = vld [vmem:[%s11 + $0x588] sm:$0xf]
  %v8594 = vld [vmem:[%s11 + $0x58c] sm:$0xf]
  %v8595 = vld [vmem:[%s11 + $0x590] sm:$0xf]
  %v8596 = vld [vmem:[%s11 + $0x594] sm:$0xf]
  %v8597 = vld [vmem:[%s11 + $0x598] sm:$0xf]
  %v8598 = vld [vmem:[%s11 + $0x59c] sm:$0xf]
  %v8599 = vld [vmem:[%s11 + $0x5a0] sm:$0xf]
  %v8600 = vld [vmem:[%s11 + $0x5a4] sm:$0xf]
  %v8601 = vld [vmem:[%s11 + $0x5a8] sm:$0xf]
  %v8602 = vld [vmem:[%s11 + $0x5ac] sm:$0xf]
  %v8603 = vld [vmem:[%s11 + $0x5b0] sm:$0xf]
  %v8604 = vld [vmem:[%s11 + $0x5b4] sm:$0xf]
  %v8605 = vld [vmem:[%s11 + $0x5b8] sm:$0xf]
  %v8606 = vld [vmem:[%s11 + $0x5bc] sm:$0xf]
  %v8607 = vld [vmem:[%s11 + $0x5c0] sm:$0xf]
  %v8608 = vld [vmem:[%s11 + $0x5c4] sm:$0xf]
  %v8609 = vld [vmem:[%s11 + $0x5c8] sm:$0xf]
  %v8610 = vld [vmem:[%s11 + $0x5cc] sm:$0xf]
  %v8611 = vld [vmem:[%s11 + $0x5d0] sm:$0xf]
  %v8612 = vld [vmem:[%s11 + $0x5d4] sm:$0xf]
  %v8613 = vld [vmem:[%s11 + $0x5d8] sm:$0xf]
  %v8614 = vld [vmem:[%s11 + $0x5dc] sm:$0xf]
  %v8615 = vld [vmem:[%s11 + $0x5e0] sm:$0xf]
  %v8616 = vld [vmem:[%s11 + $0x5e4] sm:$0xf]
  %v8617 = vld [vmem:[%s11 + $0x5e8] sm:$0xf]
  %v8618 = vld [vmem:[%s11 + $0x5ec] sm:$0xf]
  %v8619 = vld [vmem:[%s11 + $0x5f0] sm:$0xf]
  %v8620 = vld [vmem:[%s11 + $0x5f4] sm:$0xf]
  %v8621 = vld [vmem:[%s11 + $0x5f8] sm:$0xf]
  %v8622 = vld [vmem:[%s11 + $0x5fc] sm:$0xf]
  %v8623 = vld [vmem:[%s11 + $0x600] sm:$0xf]
  %v8624 = vld [vmem:[%s11 + $0x604] sm:$0xf]
  %v8625 = vld [vmem:[%s11 + $0x608] sm:$0xf]
  %v8626 = vld [vmem:[%s11 + $0x60c] sm:$0xf]
  %v8627 = vld [vmem:[%s11 + $0x610] sm:$0xf]
  %v8628 = vld [vmem:[%s11 + $0x614] sm:$0xf]
  %v8629 = vld [vmem:[%s11 + $0x618] sm:$0xf]
  %v8630 = vld [vmem:[%s11 + $0x61c] sm:$0xf]
  %v8631 = vld [vmem:[%s11 + $0x620] sm:$0xf]
  %v8632 = vld [vmem:[%s11 + $0x624] sm:$0xf]
  %v8633 = vld [vmem:[%s11 + $0x628] sm:$0xf]
  %v8634 = vld [vmem:[%s11 + $0x62c] sm:$0xf]
  %v8635 = vld [vmem:[%s11 + $0x630] sm:$0xf]
  %v8636 = vld [vmem:[%s11 + $0x634] sm:$0xf]
  %v8637 = vld [vmem:[%s11 + $0x638] sm:$0xf]
  %v8638 = vld [vmem:[%s11 + $0x63c] sm:$0xf]
  %v8639 = vld [vmem:[%s11 + $0x640] sm:$0xf]
  %v8640 = vld [vmem:[%s11 + $0x644] sm:$0xf]
  %v8641 = vld [vmem:[%s11 + $0x648] sm:$0xf]
  %v8642 = vld [vmem:[%s11 + $0x64c] sm:$0xf]
  %v8643 = vld [vmem:[%s11 + $0x650] sm:$0xf]
  %v8644 = vld [vmem:[%s11 + $0x654] sm:$0xf]
  %v8645 = vld [vmem:[%s11 + $0x658] sm:$0xf]
  %v8646 = vld [vmem:[%s11 + $0x65c] sm:$0xf]
  %v8647 = vld [vmem:[%s11 + $0x660] sm:$0xf]
  %v8648 = vld [vmem:[%s11 + $0x664] sm:$0xf]
  %v8649 = vld [vmem:[%s11 + $0x668] sm:$0xf]
  %v8650 = vld [vmem:[%s11 + $0x66c] sm:$0xf]
  %v8651 = vld [vmem:[%s11 + $0x670] sm:$0xf]
  %v8652 = vld [vmem:[%s11 + $0x674] sm:$0xf]
  %v8653 = vld [vmem:[%s11 + $0x678] sm:$0xf]
  %v8654 = vld [vmem:[%s11 + $0x67c] sm:$0xf]
  %v8655 = vld [vmem:[%s11 + $0x680] sm:$0xf]
  %v8656 = vld [vmem:[%s11 + $0x684] sm:$0xf]
  %v8657 = vld [vmem:[%s11 + $0x688] sm:$0xf]
  %v8658 = vld [vmem:[%s11 + $0x68c] sm:$0xf]
  %v8659 = vld [vmem:[%s11 + $0x690] sm:$0xf]
  %v8660 = vld [vmem:[%s11 + $0x694] sm:$0xf]
  %v8661 = vld [vmem:[%s11 + $0x698] sm:$0xf]
  %v8662 = vld [vmem:[%s11 + $0x69c] sm:$0xf]
  %v8663 = vld [vmem:[%s11 + $0x6a0] sm:$0xf]
  %v8664 = vld [vmem:[%s11 + $0x6a4] sm:$0xf]
  %v8665 = vld [vmem:[%s11 + $0x6a8] sm:$0xf]
  %v8666 = vld [vmem:[%s11 + $0x6ac] sm:$0xf]
  %v8667 = vld [vmem:[%s11 + $0x6b0] sm:$0xf]
  %v8668 = vld [vmem:[%s11 + $0x6b4] sm:$0xf]
  %v8669 = vld [vmem:[%s11 + $0x6b8] sm:$0xf]
  %v8670 = vld [vmem:[%s11 + $0x6bc] sm:$0xf]
  %v8671 = vld [vmem:[%s11 + $0x6c0] sm:$0xf]
  %v8672 = vld [vmem:[%s11 + $0x6c4] sm:$0xf]
  %v8673 = vld [vmem:[%s11 + $0x6c8] sm:$0xf]
  %v8674 = vld [vmem:[%s11 + $0x6cc] sm:$0xf]
  %v8675 = vld [vmem:[%s11 + $0x6d0] sm:$0xf]
  %v8676 = vld [vmem:[%s11 + $0x6d4] sm:$0xf]
  %v8677 = vld [vmem:[%s11 + $0x6d8] sm:$0xf]
  %v8678 = vld [vmem:[%s11 + $0x6dc] sm:$0xf]
  %v8679 = vld [vmem:[%s11 + $0x6e0] sm:$0xf]
  %v8680 = vld [vmem:[%s11 + $0x6e4] sm:$0xf]
  %v8681 = vld [vmem:[%s11 + $0x6e8] sm:$0xf]
  %v8682 = vld [vmem:[%s11 + $0x6ec] sm:$0xf]
  %v8683 = vld [vmem:[%s11 + $0x6f0] sm:$0xf]
  %v8684 = vld [vmem:[%s11 + $0x6f4] sm:$0xf]
  %v8685 = vld [vmem:[%s11 + $0x6f8] sm:$0xf]
  %v8686 = vld [vmem:[%s11 + $0x6fc] sm:$0xf]
  %v8687 = vld [vmem:[%s11 + $0x700] sm:$0xf]
  %v8688 = vld [vmem:[%s11 + $0x704] sm:$0xf]
  %v8689 = vld [vmem:[%s11 + $0x708] sm:$0xf]
  %v8690 = vld [vmem:[%s11 + $0x70c] sm:$0xf]
  %v8691 = vld [vmem:[%s11 + $0x710] sm:$0xf]
  %v8692 = vld [vmem:[%s11 + $0x714] sm:$0xf]
  %v8693 = vld [vmem:[%s11 + $0x718] sm:$0xf]
  %v8694 = vld [vmem:[%s11 + $0x71c] sm:$0xf]
  %v8695 = vld [vmem:[%s11 + $0x720] sm:$0xf]
  %v8696 = vld [vmem:[%s11 + $0x724] sm:$0xf]
  %v8697 = vld [vmem:[%s11 + $0x728] sm:$0xf]
  %v8698 = vld [vmem:[%s11 + $0x72c] sm:$0xf]
  %v8699 = vld [vmem:[%s11 + $0x730] sm:$0xf]
  %v8700 = vld [vmem:[%s11 + $0x734] sm:$0xf]
  %v8701 = vld [vmem:[%s11 + $0x738] sm:$0xf]
  %v8702 = vld [vmem:[%s11 + $0x73c] sm:$0xf]
  %v8703 = vld [vmem:[%s11 + $0x740] sm:$0xf]
  %v8704 = vld [vmem:[%s11 + $0x744] sm:$0xf]
  %v8705 = vld [vmem:[%s11 + $0x748] sm:$0xf]
  %v8706 = vld [vmem:[%s11 + $0x74c] sm:$0xf]
  %v8707 = vld [vmem:[%s11 + $0x750] sm:$0xf]
  %v8708 = vld [vmem:[%s11 + $0x754] sm:$0xf]
  %v8709 = vld [vmem:[%s11 + $0x758] sm:$0xf]
  %v8710 = vld [vmem:[%s11 + $0x75c] sm:$0xf]
  %v8711 = vld [vmem:[%s11 + $0x760] sm:$0xf]
  %v8712 = vld [vmem:[%s11 + $0x764] sm:$0xf]
  %v8713 = vld [vmem:[%s11 + $0x768] sm:$0xf]
  %v8714 = vld [vmem:[%s11 + $0x76c] sm:$0xf]
  %v8715 = vld [vmem:[%s11 + $0x770] sm:$0xf]
  %v8716 = vld [vmem:[%s11 + $0x774] sm:$0xf]
  %v8717 = vld [vmem:[%s11 + $0x778] sm:$0xf]
  %v8718 = vld [vmem:[%s11 + $0x77c] sm:$0xf]
  %v8719 = vld [vmem:[%s11 + $0x780] sm:$0xf]
  %v8720 = vld [vmem:[%s11 + $0x784] sm:$0xf]
  %v8721 = vld [vmem:[%s11 + $0x788] sm:$0xf]
  %v8722 = vld [vmem:[%s11 + $0x78c] sm:$0xf]
  %v8723 = vld [vmem:[%s11 + $0x790] sm:$0xf]
  %v8724 = vld [vmem:[%s11 + $0x794] sm:$0xf]
  %v8725 = vld [vmem:[%s11 + $0x798] sm:$0xf]
  %v8726 = vld [vmem:[%s11 + $0x79c] sm:$0xf]
  %v8727 = vld [vmem:[%s11 + $0x7a0] sm:$0xf]
  %v8728 = vld [vmem:[%s11 + $0x7a4] sm:$0xf]
  %v8729 = vld [vmem:[%s11 + $0x7a8] sm:$0xf]
  %v8730 = vld [vmem:[%s11 + $0x7ac] sm:$0xf]
  %v8731 = vld [vmem:[%s11 + $0x7b0] sm:$0xf]
  %v8732 = vld [vmem:[%s11 + $0x7b4] sm:$0xf]
  %v8733 = vld [vmem:[%s11 + $0x7b8] sm:$0xf]
  %v8734 = vld [vmem:[%s11 + $0x7bc] sm:$0xf]
  %v8735 = vld [vmem:[%s11 + $0x7c0] sm:$0xf]
  %v8736 = vld [vmem:[%s11 + $0x7c4] sm:$0xf]
  %v8737 = vld [vmem:[%s11 + $0x7c8] sm:$0xf]
  %v8738 = vld [vmem:[%s11 + $0x7cc] sm:$0xf]
  %v8739 = vld [vmem:[%s11 + $0x7d0] sm:$0xf]
  %v8740 = vld [vmem:[%s11 + $0x7d4] sm:$0xf]
  %v8741 = vld [vmem:[%s11 + $0x7d8] sm:$0xf]
  %v8742 = vld [vmem:[%s11 + $0x7dc] sm:$0xf]
  %v8743 = vld [vmem:[%s11 + $0x7e0] sm:$0xf]
  %v8744 = vld [vmem:[%s11 + $0x7e4] sm:$0xf]
  %v8745 = vld [vmem:[%s11 + $0x7e8] sm:$0xf]
  %v8746 = vld [vmem:[%s11 + $0x7ec] sm:$0xf]
  %v8747 = vld [vmem:[%s11 + $0x7f0] sm:$0xf]
  %v8748 = vld [vmem:[%s11 + $0x7f4] sm:$0xf]
  %v8749 = vld [vmem:[%s11 + $0x7f8] sm:$0xf]
  %v8750 = vld [vmem:[%s11 + $0x7fc] sm:$0xf]
  %v8751 = vld [vmem:[%s11 + $0x800] sm:$0xf]
  %v8752 = vld [vmem:[%s11 + $0x804] sm:$0xf]
  %v8753 = vld [vmem:[%s11 + $0x808] sm:$0xf]
  %v8754 = vld [vmem:[%s11 + $0x80c] sm:$0xf]
  %v8755 = vld [vmem:[%s11 + $0x810] sm:$0xf]
  %v8756 = vld [vmem:[%s11 + $0x814] sm:$0xf]
  %v8757 = vld [vmem:[%s11 + $0x818] sm:$0xf]
  %v8758 = vld [vmem:[%s11 + $0x81c] sm:$0xf]
  %v8759 = vld [vmem:[%s11 + $0x820] sm:$0xf]
  %v8760 = vld [vmem:[%s11 + $0x824] sm:$0xf]
  %v8761 = vld [vmem:[%s11 + $0x828] sm:$0xf]
  %v8762 = vld [vmem:[%s11 + $0x82c] sm:$0xf]
  %v8763 = vld [vmem:[%s11 + $0x830] sm:$0xf]
  %v8764 = vld [vmem:[%s11 + $0x834] sm:$0xf]
  %v8765 = vld [vmem:[%s11 + $0x838] sm:$0xf]
  %v8766 = vld [vmem:[%s11 + $0x83c] sm:$0xf]
  %v8767 = vld [vmem:[%s11 + $0x840] sm:$0xf]
  %v8768 = vld [vmem:[%s11 + $0x844] sm:$0xf]
  %v8769 = vld [vmem:[%s11 + $0x848] sm:$0xf]
  %v8770 = vld [vmem:[%s11 + $0x84c] sm:$0xf]
  %v8771 = vld [vmem:[%s11 + $0x850] sm:$0xf]
  %v8772 = vld [vmem:[%s11 + $0x854] sm:$0xf]
  %v8773 = vld [vmem:[%s11 + $0x858] sm:$0xf]
  %v8774 = vld [vmem:[%s11 + $0x85c] sm:$0xf]
  %v8775 = vld [vmem:[%s11 + $0x860] sm:$0xf]
  %v8776 = vld [vmem:[%s11 + $0x864] sm:$0xf]
  %v8777 = vld [vmem:[%s11 + $0x868] sm:$0xf]
  %v8778 = vld [vmem:[%s11 + $0x86c] sm:$0xf]
  %v8779 = vld [vmem:[%s11 + $0x870] sm:$0xf]
  %v8780 = vld [vmem:[%s11 + $0x874] sm:$0xf]
  %v8781 = vld [vmem:[%s11 + $0x878] sm:$0xf]
  %v8782 = vld [vmem:[%s11 + $0x87c] sm:$0xf]
  %v8783 = vld [vmem:[%s11 + $0x880] sm:$0xf]
  %v8784 = vld [vmem:[%s11 + $0x884] sm:$0xf]
  %v8785 = vld [vmem:[%s11 + $0x888] sm:$0xf]
  %v8786 = vld [vmem:[%s11 + $0x88c] sm:$0xf]
  %v8787 = vld [vmem:[%s11 + $0x890] sm:$0xf]
  %v8788 = vld [vmem:[%s11 + $0x894] sm:$0xf]
  %v8789 = vld [vmem:[%s11 + $0x898] sm:$0xf]
  %v8790 = vld [vmem:[%s11 + $0x89c] sm:$0xf]
  %v8791 = vld [vmem:[%s11 + $0x8a0] sm:$0xf]
  %v8792 = vld [vmem:[%s11 + $0x8a4] sm:$0xf]
  %v8793 = vld [vmem:[%s11 + $0x8a8] sm:$0xf]
  %v8794 = vld [vmem:[%s11 + $0x8ac] sm:$0xf]
  %v8795 = vld [vmem:[%s11 + $0x8b0] sm:$0xf]
  %v8796 = vld [vmem:[%s11 + $0x8b4] sm:$0xf]
  %v8797 = vld [vmem:[%s11 + $0x8b8] sm:$0xf]
  %v8798 = vld [vmem:[%s11 + $0x8bc] sm:$0xf]
  %v8799 = vld [vmem:[%s12] sm:$0x1]
  %v8801 = vperm.slane %v8799, 0
  %v9363 = vunpack.c.l.b16 %v8239
  %v9364 = vunpack.c.l.b16 %v8240
  %v9365 = vunpack.c.l.b16 %v8241
  %v9366 = vunpack.c.l.b16 %v8242
  %v9367 = vunpack.c.l.b16 %v8243
  %v9368 = vunpack.c.l.b16 %v8244
  %v9369 = vunpack.c.l.b16 %v8245
  %v9370 = vunpack.c.l.b16 %v8246
  %v9371 = vunpack.c.l.b16 %v8247
  %v9372 = vunpack.c.l.b16 %v8248
  %v9373 = vunpack.c.l.b16 %v8249
  %v9374 = vunpack.c.l.b16 %v8250
  %v9375 = vunpack.c.l.b16 %v8251
  %v9376 = vunpack.c.l.b16 %v8252
  %v9377 = vunpack.c.l.b16 %v8253
  %v9378 = vunpack.c.l.b16 %v8254
  %v9379 = vunpack.c.l.b16 %v8255
  %v9380 = vunpack.c.l.b16 %v8256
  %v9381 = vunpack.c.l.b16 %v8257
  %v9382 = vunpack.c.l.b16 %v8258
  %v9383 = vunpack.c.l.b16 %v8259
  %v9384 = vunpack.c.l.b16 %v8260
  %v9385 = vunpack.c.l.b16 %v8261
  %v9386 = vunpack.c.l.b16 %v8262
  %v9387 = vunpack.c.l.b16 %v8263
  %v9388 = vunpack.c.l.b16 %v8264
  %v9389 = vunpack.c.l.b16 %v8265
  %v9390 = vunpack.c.l.b16 %v8266
  %v9391 = vunpack.c.l.b16 %v8267
  %v9392 = vunpack.c.l.b16 %v8268
  %v9393 = vunpack.c.l.b16 %v8269
  %v9394 = vunpack.c.l.b16 %v8270
  %v9395 = vunpack.c.l.b16 %v8271
  %v9396 = vunpack.c.l.b16 %v8272
  %v9397 = vunpack.c.l.b16 %v8273
  %v9398 = vunpack.c.l.b16 %v8274
  %v9399 = vunpack.c.l.b16 %v8275
  %v9400 = vunpack.c.l.b16 %v8276
  %v9401 = vunpack.c.l.b16 %v8277
  %v9402 = vunpack.c.l.b16 %v8278
  %v9403 = vunpack.c.l.b16 %v8279
  %v9404 = vunpack.c.l.b16 %v8280
  %v9405 = vunpack.c.l.b16 %v8281
  %v9406 = vunpack.c.l.b16 %v8282
  %v9407 = vunpack.c.l.b16 %v8283
  %v9408 = vunpack.c.l.b16 %v8284
  %v9409 = vunpack.c.l.b16 %v8285
  %v9410 = vunpack.c.l.b16 %v8286
  %v9411 = vunpack.c.l.b16 %v8287
  %v9412 = vunpack.c.l.b16 %v8288
  %v9413 = vunpack.c.l.b16 %v8289
  %v9414 = vunpack.c.l.b16 %v8290
  %v9415 = vunpack.c.l.b16 %v8291
  %v9416 = vunpack.c.l.b16 %v8292
  %v9417 = vunpack.c.l.b16 %v8293
  %v9418 = vunpack.c.l.b16 %v8294
  %v9419 = vunpack.c.l.b16 %v8295
  %v9420 = vunpack.c.l.b16 %v8296
  %v9421 = vunpack.c.l.b16 %v8297
  %v9422 = vunpack.c.l.b16 %v8298
  %v9423 = vunpack.c.l.b16 %v8299
  %v9424 = vunpack.c.l.b16 %v8300
  %v9425 = vunpack.c.l.b16 %v8301
  %v9426 = vunpack.c.l.b16 %v8302
  %v9427 = vunpack.c.l.b16 %v8303
  %v9428 = vunpack.c.l.b16 %v8304
  %v9429 = vunpack.c.l.b16 %v8305
  %v9430 = vunpack.c.l.b16 %v8306
  %v9431 = vunpack.c.l.b16 %v8307
  %v9432 = vunpack.c.l.b16 %v8308
  %v9433 = vunpack.c.l.b16 %v8309
  %v9434 = vunpack.c.l.b16 %v8310
  %v9435 = vunpack.c.l.b16 %v8311
  %v9436 = vunpack.c.l.b16 %v8312
  %v9437 = vunpack.c.l.b16 %v8313
  %v9438 = vunpack.c.l.b16 %v8314
  %v9439 = vunpack.c.l.b16 %v8315
  %v9440 = vunpack.c.l.b16 %v8316
  %v9441 = vunpack.c.l.b16 %v8317
  %v9442 = vunpack.c.l.b16 %v8318
  %v9443 = vunpack.c.l.b16 %v8319
  %v9444 = vunpack.c.l.b16 %v8320
  %v9445 = vunpack.c.l.b16 %v8321
  %v9446 = vunpack.c.l.b16 %v8322
  %v9447 = vunpack.c.l.b16 %v8323
  %v9448 = vunpack.c.l.b16 %v8324
  %v9449 = vunpack.c.l.b16 %v8325
  %v9450 = vunpack.c.l.b16 %v8326
  %v9451 = vunpack.c.l.b16 %v8327
  %v9452 = vunpack.c.l.b16 %v8328
  %v9453 = vunpack.c.l.b16 %v8329
  %v9454 = vunpack.c.l.b16 %v8330
  %v9455 = vunpack.c.l.b16 %v8331
  %v9456 = vunpack.c.l.b16 %v8332
  %v9457 = vunpack.c.l.b16 %v8333
  %v9458 = vunpack.c.l.b16 %v8334
  %v9459 = vunpack.c.l.b16 %v8335
  %v9460 = vunpack.c.l.b16 %v8336
  %v9461 = vunpack.c.l.b16 %v8337
  %v9462 = vunpack.c.l.b16 %v8338
  %v9463 = vunpack.c.l.b16 %v8339
  %v9464 = vunpack.c.l.b16 %v8340
  %v9465 = vunpack.c.l.b16 %v8341
  %v9466 = vunpack.c.l.b16 %v8342
  %v9467 = vunpack.c.l.b16 %v8343
  %v9468 = vunpack.c.l.b16 %v8344
  %v9469 = vunpack.c.l.b16 %v8345
  %v9470 = vunpack.c.l.b16 %v8346
  %v9471 = vunpack.c.l.b16 %v8347
  %v9472 = vunpack.c.l.b16 %v8348
  %v9473 = vunpack.c.l.b16 %v8349
  %v9474 = vunpack.c.l.b16 %v8350
  %v9475 = vunpack.c.l.b16 %v8351
  %v9476 = vunpack.c.l.b16 %v8352
  %v9477 = vunpack.c.l.b16 %v8353
  %v9478 = vunpack.c.l.b16 %v8354
  %v9479 = vunpack.c.l.b16 %v8355
  %v9480 = vunpack.c.l.b16 %v8356
  %v9481 = vunpack.c.l.b16 %v8357
  %v9482 = vunpack.c.l.b16 %v8358
  %v9483 = vunpack.c.l.b16 %v8359
  %v9484 = vunpack.c.l.b16 %v8360
  %v9485 = vunpack.c.l.b16 %v8361
  %v9486 = vunpack.c.l.b16 %v8362
  %v9487 = vunpack.c.l.b16 %v8363
  %v9488 = vunpack.c.l.b16 %v8364
  %v9489 = vunpack.c.l.b16 %v8365
  %v9490 = vunpack.c.l.b16 %v8366
  %v9491 = vunpack.c.l.b16 %v8367
  %v9492 = vunpack.c.l.b16 %v8368
  %v9493 = vunpack.c.l.b16 %v8369
  %v9494 = vunpack.c.l.b16 %v8370
  %v9495 = vunpack.c.l.b16 %v8371
  %v9496 = vunpack.c.l.b16 %v8372
  %v9497 = vunpack.c.l.b16 %v8373
  %v9498 = vunpack.c.l.b16 %v8374
  %v9499 = vunpack.c.l.b16 %v8375
  %v9500 = vunpack.c.l.b16 %v8376
  %v9501 = vunpack.c.l.b16 %v8377
  %v9502 = vunpack.c.l.b16 %v8378
  %v9503 = vunpack.c.l.b16 %v8379
  %v9504 = vunpack.c.l.b16 %v8380
  %v9505 = vunpack.c.l.b16 %v8381
  %v9506 = vunpack.c.l.b16 %v8382
  %v9507 = vunpack.c.l.b16 %v8383
  %v9508 = vunpack.c.l.b16 %v8384
  %v9509 = vunpack.c.l.b16 %v8385
  %v9510 = vunpack.c.l.b16 %v8386
  %v9511 = vunpack.c.l.b16 %v8387
  %v9512 = vunpack.c.l.b16 %v8388
  %v9513 = vunpack.c.l.b16 %v8389
  %v9514 = vunpack.c.l.b16 %v8390
  %v9515 = vunpack.c.l.b16 %v8391
  %v9516 = vunpack.c.l.b16 %v8392
  %v9517 = vunpack.c.l.b16 %v8393
  %v9518 = vunpack.c.l.b16 %v8394
  %v9519 = vunpack.c.l.b16 %v8395
  %v9520 = vunpack.c.l.b16 %v8396
  %v9521 = vunpack.c.l.b16 %v8397
  %v9522 = vunpack.c.l.b16 %v8398
  %v9523 = vunpack.c.l.b16 %v8399
  %v9524 = vunpack.c.l.b16 %v8400
  %v9525 = vunpack.c.l.b16 %v8401
  %v9526 = vunpack.c.l.b16 %v8402
  %v9527 = vunpack.c.l.b16 %v8403
  %v9528 = vunpack.c.l.b16 %v8404
  %v9529 = vunpack.c.l.b16 %v8405
  %v9530 = vunpack.c.l.b16 %v8406
  %v9531 = vunpack.c.l.b16 %v8407
  %v9532 = vunpack.c.l.b16 %v8408
  %v9533 = vunpack.c.l.b16 %v8409
  %v9534 = vunpack.c.l.b16 %v8410
  %v9535 = vunpack.c.l.b16 %v8411
  %v9536 = vunpack.c.l.b16 %v8412
  %v9537 = vunpack.c.l.b16 %v8413
  %v9538 = vunpack.c.l.b16 %v8414
  %v9539 = vunpack.c.l.b16 %v8415
  %v9540 = vunpack.c.l.b16 %v8416
  %v9541 = vunpack.c.l.b16 %v8417
  %v9542 = vunpack.c.l.b16 %v8418
  %v9543 = vunpack.c.l.b16 %v8419
  %v9544 = vunpack.c.l.b16 %v8420
  %v9545 = vunpack.c.l.b16 %v8421
  %v9546 = vunpack.c.l.b16 %v8422
  %v9547 = vunpack.c.l.b16 %v8423
  %v9548 = vunpack.c.l.b16 %v8424
  %v9549 = vunpack.c.l.b16 %v8425
  %v9550 = vunpack.c.l.b16 %v8426
  %v9551 = vunpack.c.l.b16 %v8427
  %v9552 = vunpack.c.l.b16 %v8428
  %v9553 = vunpack.c.l.b16 %v8429
  %v9554 = vunpack.c.l.b16 %v8430
  %v9555 = vunpack.c.l.b16 %v8431
  %v9556 = vunpack.c.l.b16 %v8432
  %v9557 = vunpack.c.l.b16 %v8433
  %v9558 = vunpack.c.l.b16 %v8434
  %v9559 = vunpack.c.l.b16 %v8435
  %v9560 = vunpack.c.l.b16 %v8436
  %v9561 = vunpack.c.l.b16 %v8437
  %v9562 = vunpack.c.l.b16 %v8438
  %v9563 = vunpack.c.l.b16 %v8439
  %v9564 = vunpack.c.l.b16 %v8440
  %v9565 = vunpack.c.l.b16 %v8441
  %v9566 = vunpack.c.l.b16 %v8442
  %v9567 = vunpack.c.l.b16 %v8443
  %v9568 = vunpack.c.l.b16 %v8444
  %v9569 = vunpack.c.l.b16 %v8445
  %v9570 = vunpack.c.l.b16 %v8446
  %v9571 = vunpack.c.l.b16 %v8447
  %v9572 = vunpack.c.l.b16 %v8448
  %v9573 = vunpack.c.l.b16 %v8449
  %v9574 = vunpack.c.l.b16 %v8450
  %v9575 = vunpack.c.l.b16 %v8451
  %v9576 = vunpack.c.l.b16 %v8452
  %v9577 = vunpack.c.l.b16 %v8453
  %v9578 = vunpack.c.l.b16 %v8454
  %v9579 = vunpack.c.l.b16 %v8455
  %v9580 = vunpack.c.l.b16 %v8456
  %v9581 = vunpack.c.l.b16 %v8457
  %v9582 = vunpack.c.l.b16 %v8458
  %v9583 = vunpack.c.l.b16 %v8459
  %v9584 = vunpack.c.l.b16 %v8460
  %v9585 = vunpack.c.l.b16 %v8461
  %v9586 = vunpack.c.l.b16 %v8462
  %v9587 = vunpack.c.l.b16 %v8463
  %v9588 = vunpack.c.l.b16 %v8464
  %v9589 = vunpack.c.l.b16 %v8465
  %v9590 = vunpack.c.l.b16 %v8466
  %v9591 = vunpack.c.l.b16 %v8467
  %v9592 = vunpack.c.l.b16 %v8468
  %v9593 = vunpack.c.l.b16 %v8469
  %v9594 = vunpack.c.l.b16 %v8470
  %v9595 = vunpack.c.l.b16 %v8471
  %v9596 = vunpack.c.l.b16 %v8472
  %v9597 = vunpack.c.l.b16 %v8473
  %v9598 = vunpack.c.l.b16 %v8474
  %v9599 = vunpack.c.l.b16 %v8475
  %v9600 = vunpack.c.l.b16 %v8476
  %v9601 = vunpack.c.l.b16 %v8477
  %v9602 = vunpack.c.l.b16 %v8478
  %v9603 = vunpack.c.l.b16 %v8479
  %v9604 = vunpack.c.l.b16 %v8480
  %v9605 = vunpack.c.l.b16 %v8481
  %v9606 = vunpack.c.l.b16 %v8482
  %v9607 = vunpack.c.l.b16 %v8483
  %v9608 = vunpack.c.l.b16 %v8484
  %v9609 = vunpack.c.l.b16 %v8485
  %v9610 = vunpack.c.l.b16 %v8486
  %v9611 = vunpack.c.l.b16 %v8487
  %v9612 = vunpack.c.l.b16 %v8488
  %v9613 = vunpack.c.l.b16 %v8489
  %v9614 = vunpack.c.l.b16 %v8490
  %v9615 = vunpack.c.l.b16 %v8491
  %v9616 = vunpack.c.l.b16 %v8492
  %v9617 = vunpack.c.l.b16 %v8493
  %v9618 = vunpack.c.l.b16 %v8494
  %v9619 = vunpack.c.l.b16 %v8495
  %v9620 = vunpack.c.l.b16 %v8496
  %v9621 = vunpack.c.l.b16 %v8497
  %v9622 = vunpack.c.l.b16 %v8498
  %v9623 = vunpack.c.l.b16 %v8499
  %v9624 = vunpack.c.l.b16 %v8500
  %v9625 = vunpack.c.l.b16 %v8501
  %v9626 = vunpack.c.l.b16 %v8502
  %v9627 = vunpack.c.l.b16 %v8503
  %v9628 = vunpack.c.l.b16 %v8504
  %v9629 = vunpack.c.l.b16 %v8505
  %v9630 = vunpack.c.l.b16 %v8506
  %v9631 = vunpack.c.l.b16 %v8507
  %v9632 = vunpack.c.l.b16 %v8508
  %v9633 = vunpack.c.l.b16 %v8509
  %v9634 = vunpack.c.l.b16 %v8510
  %v9635 = vunpack.c.l.b16 %v8511
  %v9636 = vunpack.c.l.b16 %v8512
  %v9637 = vunpack.c.l.b16 %v8513
  %v9638 = vunpack.c.l.b16 %v8514
  %v9639 = vunpack.c.l.b16 %v8515
  %v9640 = vunpack.c.l.b16 %v8516
  %v9641 = vunpack.c.l.b16 %v8517
  %v9642 = vunpack.c.l.b16 %v8518
  %v9643 = vunpack.c.l.b16 %v8519
  %v9644 = vunpack.c.l.b16 %v8520
  %v9645 = vunpack.c.l.b16 %v8521
  %v9646 = vunpack.c.l.b16 %v8522
  %v9647 = vunpack.c.l.b16 %v8523
  %v9648 = vunpack.c.l.b16 %v8524
  %v9649 = vunpack.c.l.b16 %v8525
  %v9650 = vunpack.c.l.b16 %v8526
  %v9651 = vunpack.c.l.b16 %v8527
  %v9652 = vunpack.c.l.b16 %v8528
  %v9653 = vunpack.c.l.b16 %v8529
  %v9654 = vunpack.c.l.b16 %v8530
  %v9655 = vunpack.c.l.b16 %v8531
  %v9656 = vunpack.c.l.b16 %v8532
  %v9657 = vunpack.c.l.b16 %v8533
  %v9658 = vunpack.c.l.b16 %v8534
  %v9659 = vunpack.c.l.b16 %v8535
  %v9660 = vunpack.c.l.b16 %v8536
  %v9661 = vunpack.c.l.b16 %v8537
  %v9662 = vunpack.c.l.b16 %v8538
  %v9663 = vunpack.c.l.b16 %v8539
  %v9664 = vunpack.c.l.b16 %v8540
  %v9665 = vunpack.c.l.b16 %v8541
  %v9666 = vunpack.c.l.b16 %v8542
  %v9667 = vunpack.c.l.b16 %v8543
  %v9668 = vunpack.c.l.b16 %v8544
  %v9669 = vunpack.c.l.b16 %v8545
  %v9670 = vunpack.c.l.b16 %v8546
  %v9671 = vunpack.c.l.b16 %v8547
  %v9672 = vunpack.c.l.b16 %v8548
  %v9673 = vunpack.c.l.b16 %v8549
  %v9674 = vunpack.c.l.b16 %v8550
  %v9675 = vunpack.c.l.b16 %v8551
  %v9676 = vunpack.c.l.b16 %v8552
  %v9677 = vunpack.c.l.b16 %v8553
  %v9678 = vunpack.c.l.b16 %v8554
  %v9679 = vunpack.c.l.b16 %v8555
  %v9680 = vunpack.c.l.b16 %v8556
  %v9681 = vunpack.c.l.b16 %v8557
  %v9682 = vunpack.c.l.b16 %v8558
  %v9683 = vunpack.c.l.b16 %v8559
  %v9684 = vunpack.c.l.b16 %v8560
  %v9685 = vunpack.c.l.b16 %v8561
  %v9686 = vunpack.c.l.b16 %v8562
  %v9687 = vunpack.c.l.b16 %v8563
  %v9688 = vunpack.c.l.b16 %v8564
  %v9689 = vunpack.c.l.b16 %v8565
  %v9690 = vunpack.c.l.b16 %v8566
  %v9691 = vunpack.c.l.b16 %v8567
  %v9692 = vunpack.c.l.b16 %v8568
  %v9693 = vunpack.c.l.b16 %v8569
  %v9694 = vunpack.c.l.b16 %v8570
  %v9695 = vunpack.c.l.b16 %v8571
  %v9696 = vunpack.c.l.b16 %v8572
  %v9697 = vunpack.c.l.b16 %v8573
  %v9698 = vunpack.c.l.b16 %v8574
  %v9699 = vunpack.c.l.b16 %v8575
  %v9700 = vunpack.c.l.b16 %v8576
  %v9701 = vunpack.c.l.b16 %v8577
  %v9702 = vunpack.c.l.b16 %v8578
  %v9703 = vunpack.c.l.b16 %v8579
  %v9704 = vunpack.c.l.b16 %v8580
  %v9705 = vunpack.c.l.b16 %v8581
  %v9706 = vunpack.c.l.b16 %v8582
  %v9707 = vunpack.c.l.b16 %v8583
  %v9708 = vunpack.c.l.b16 %v8584
  %v9709 = vunpack.c.l.b16 %v8585
  %v9710 = vunpack.c.l.b16 %v8586
  %v9711 = vunpack.c.l.b16 %v8587
  %v9712 = vunpack.c.l.b16 %v8588
  %v9713 = vunpack.c.l.b16 %v8589
  %v9714 = vunpack.c.l.b16 %v8590
  %v9715 = vunpack.c.l.b16 %v8591
  %v9716 = vunpack.c.l.b16 %v8592
  %v9717 = vunpack.c.l.b16 %v8593
  %v9718 = vunpack.c.l.b16 %v8594
  %v9719 = vunpack.c.l.b16 %v8595
  %v9720 = vunpack.c.l.b16 %v8596
  %v9721 = vunpack.c.l.b16 %v8597
  %v9722 = vunpack.c.l.b16 %v8598
  %v9723 = vunpack.c.l.b16 %v8599
  %v9724 = vunpack.c.l.b16 %v8600
  %v9725 = vunpack.c.l.b16 %v8601
  %v9726 = vunpack.c.l.b16 %v8602
  %v9727 = vunpack.c.l.b16 %v8603
  %v9728 = vunpack.c.l.b16 %v8604
  %v9729 = vunpack.c.l.b16 %v8605
  %v9730 = vunpack.c.l.b16 %v8606
  %v9731 = vunpack.c.l.b16 %v8607
  %v9732 = vunpack.c.l.b16 %v8608
  %v9733 = vunpack.c.l.b16 %v8609
  %v9734 = vunpack.c.l.b16 %v8610
  %v9735 = vunpack.c.l.b16 %v8611
  %v9736 = vunpack.c.l.b16 %v8612
  %v9737 = vunpack.c.l.b16 %v8613
  %v9738 = vunpack.c.l.b16 %v8614
  %v9739 = vunpack.c.l.b16 %v8615
  %v9740 = vunpack.c.l.b16 %v8616
  %v9741 = vunpack.c.l.b16 %v8617
  %v9742 = vunpack.c.l.b16 %v8618
  %v9743 = vunpack.c.l.b16 %v8619
  %v9744 = vunpack.c.l.b16 %v8620
  %v9745 = vunpack.c.l.b16 %v8621
  %v9746 = vunpack.c.l.b16 %v8622
  %v9747 = vunpack.c.l.b16 %v8623
  %v9748 = vunpack.c.l.b16 %v8624
  %v9749 = vunpack.c.l.b16 %v8625
  %v9750 = vunpack.c.l.b16 %v8626
  %v9751 = vunpack.c.l.b16 %v8627
  %v9752 = vunpack.c.l.b16 %v8628
  %v9753 = vunpack.c.l.b16 %v8629
  %v9754 = vunpack.c.l.b16 %v8630
  %v9755 = vunpack.c.l.b16 %v8631
  %v9756 = vunpack.c.l.b16 %v8632
  %v9757 = vunpack.c.l.b16 %v8633
  %v9758 = vunpack.c.l.b16 %v8634
  %v9759 = vunpack.c.l.b16 %v8635
  %v9760 = vunpack.c.l.b16 %v8636
  %v9761 = vunpack.c.l.b16 %v8637
  %v9762 = vunpack.c.l.b16 %v8638
  %v9763 = vunpack.c.l.b16 %v8639
  %v9764 = vunpack.c.l.b16 %v8640
  %v9765 = vunpack.c.l.b16 %v8641
  %v9766 = vunpack.c.l.b16 %v8642
  %v9767 = vunpack.c.l.b16 %v8643
  %v9768 = vunpack.c.l.b16 %v8644
  %v9769 = vunpack.c.l.b16 %v8645
  %v9770 = vunpack.c.l.b16 %v8646
  %v9771 = vunpack.c.l.b16 %v8647
  %v9772 = vunpack.c.l.b16 %v8648
  %v9773 = vunpack.c.l.b16 %v8649
  %v9774 = vunpack.c.l.b16 %v8650
  %v9775 = vunpack.c.l.b16 %v8651
  %v9776 = vunpack.c.l.b16 %v8652
  %v9777 = vunpack.c.l.b16 %v8653
  %v9778 = vunpack.c.l.b16 %v8654
  %v9779 = vunpack.c.l.b16 %v8655
  %v9780 = vunpack.c.l.b16 %v8656
  %v9781 = vunpack.c.l.b16 %v8657
  %v9782 = vunpack.c.l.b16 %v8658
  %v9783 = vunpack.c.l.b16 %v8659
  %v9784 = vunpack.c.l.b16 %v8660
  %v9785 = vunpack.c.l.b16 %v8661
  %v9786 = vunpack.c.l.b16 %v8662
  %v9787 = vunpack.c.l.b16 %v8663
  %v9788 = vunpack.c.l.b16 %v8664
  %v9789 = vunpack.c.l.b16 %v8665
  %v9790 = vunpack.c.l.b16 %v8666
  %v9791 = vunpack.c.l.b16 %v8667
  %v9792 = vunpack.c.l.b16 %v8668
  %v9793 = vunpack.c.l.b16 %v8669
  %v9794 = vunpack.c.l.b16 %v8670
  %v9795 = vunpack.c.l.b16 %v8671
  %v9796 = vunpack.c.l.b16 %v8672
  %v9797 = vunpack.c.l.b16 %v8673
  %v9798 = vunpack.c.l.b16 %v8674
  %v9799 = vunpack.c.l.b16 %v8675
  %v9800 = vunpack.c.l.b16 %v8676
  %v9801 = vunpack.c.l.b16 %v8677
  %v9802 = vunpack.c.l.b16 %v8678
  %v9803 = vunpack.c.l.b16 %v8679
  %v9804 = vunpack.c.l.b16 %v8680
  %v9805 = vunpack.c.l.b16 %v8681
  %v9806 = vunpack.c.l.b16 %v8682
  %v9807 = vunpack.c.l.b16 %v8683
  %v9808 = vunpack.c.l.b16 %v8684
  %v9809 = vunpack.c.l.b16 %v8685
  %v9810 = vunpack.c.l.b16 %v8686
  %v9811 = vunpack.c.l.b16 %v8687
  %v9812 = vunpack.c.l.b16 %v8688
  %v9813 = vunpack.c.l.b16 %v8689
  %v9814 = vunpack.c.l.b16 %v8690
  %v9815 = vunpack.c.l.b16 %v8691
  %v9816 = vunpack.c.l.b16 %v8692
  %v9817 = vunpack.c.l.b16 %v8693
  %v9818 = vunpack.c.l.b16 %v8694
  %v9819 = vunpack.c.l.b16 %v8695
  %v9820 = vunpack.c.l.b16 %v8696
  %v9821 = vunpack.c.l.b16 %v8697
  %v9822 = vunpack.c.l.b16 %v8698
  %v9823 = vunpack.c.l.b16 %v8699
  %v9824 = vunpack.c.l.b16 %v8700
  %v9825 = vunpack.c.l.b16 %v8701
  %v9826 = vunpack.c.l.b16 %v8702
  %v9827 = vunpack.c.l.b16 %v8703
  %v9828 = vunpack.c.l.b16 %v8704
  %v9829 = vunpack.c.l.b16 %v8705
  %v9830 = vunpack.c.l.b16 %v8706
  %v9831 = vunpack.c.l.b16 %v8707
  %v9832 = vunpack.c.l.b16 %v8708
  %v9833 = vunpack.c.l.b16 %v8709
  %v9834 = vunpack.c.l.b16 %v8710
  %v9835 = vunpack.c.l.b16 %v8711
  %v9836 = vunpack.c.l.b16 %v8712
  %v9837 = vunpack.c.l.b16 %v8713
  %v9838 = vunpack.c.l.b16 %v8714
  %v9839 = vunpack.c.l.b16 %v8715
  %v9840 = vunpack.c.l.b16 %v8716
  %v9841 = vunpack.c.l.b16 %v8717
  %v9842 = vunpack.c.l.b16 %v8718
  %v9843 = vunpack.c.l.b16 %v8719
  %v9844 = vunpack.c.l.b16 %v8720
  %v9845 = vunpack.c.l.b16 %v8721
  %v9846 = vunpack.c.l.b16 %v8722
  %v9847 = vunpack.c.l.b16 %v8723
  %v9848 = vunpack.c.l.b16 %v8724
  %v9849 = vunpack.c.l.b16 %v8725
  %v9850 = vunpack.c.l.b16 %v8726
  %v9851 = vunpack.c.l.b16 %v8727
  %v9852 = vunpack.c.l.b16 %v8728
  %v9853 = vunpack.c.l.b16 %v8729
  %v9854 = vunpack.c.l.b16 %v8730
  %v9855 = vunpack.c.l.b16 %v8731
  %v9856 = vunpack.c.l.b16 %v8732
  %v9857 = vunpack.c.l.b16 %v8733
  %v9858 = vunpack.c.l.b16 %v8734
  %v9859 = vunpack.c.l.b16 %v8735
  %v9860 = vunpack.c.l.b16 %v8736
  %v9861 = vunpack.c.l.b16 %v8737
  %v9862 = vunpack.c.l.b16 %v8738
  %v9863 = vunpack.c.l.b16 %v8739
  %v9864 = vunpack.c.l.b16 %v8740
  %v9865 = vunpack.c.l.b16 %v8741
  %v9866 = vunpack.c.l.b16 %v8742
  %v9867 = vunpack.c.l.b16 %v8743
  %v9868 = vunpack.c.l.b16 %v8744
  %v9869 = vunpack.c.l.b16 %v8745
  %v9870 = vunpack.c.l.b16 %v8746
  %v9871 = vunpack.c.l.b16 %v8747
  %v9872 = vunpack.c.l.b16 %v8748
  %v9873 = vunpack.c.l.b16 %v8749
  %v9874 = vunpack.c.l.b16 %v8750
  %v9875 = vunpack.c.l.b16 %v8751
  %v9876 = vunpack.c.l.b16 %v8752
  %v9877 = vunpack.c.l.b16 %v8753
  %v9878 = vunpack.c.l.b16 %v8754
  %v9879 = vunpack.c.l.b16 %v8755
  %v9880 = vunpack.c.l.b16 %v8756
  %v9881 = vunpack.c.l.b16 %v8757
  %v9882 = vunpack.c.l.b16 %v8758
  %v9883 = vunpack.c.l.b16 %v8759
  %v9884 = vunpack.c.l.b16 %v8760
  %v9885 = vunpack.c.l.b16 %v8761
  %v9886 = vunpack.c.l.b16 %v8762
  %v9887 = vunpack.c.l.b16 %v8763
  %v9888 = vunpack.c.l.b16 %v8764
  %v9889 = vunpack.c.l.b16 %v8765
  %v9890 = vunpack.c.l.b16 %v8766
  %v9891 = vunpack.c.l.b16 %v8767
  %v9892 = vunpack.c.l.b16 %v8768
  %v9893 = vunpack.c.l.b16 %v8769
  %v9894 = vunpack.c.l.b16 %v8770
  %v9895 = vunpack.c.l.b16 %v8771
  %v9896 = vunpack.c.l.b16 %v8772
  %v9897 = vunpack.c.l.b16 %v8773
  %v9898 = vunpack.c.l.b16 %v8774
  %v9899 = vunpack.c.l.b16 %v8775
  %v9900 = vunpack.c.l.b16 %v8776
  %v9901 = vunpack.c.l.b16 %v8777
  %v9902 = vunpack.c.l.b16 %v8778
  %v9903 = vunpack.c.l.b16 %v8779
  %v9904 = vunpack.c.l.b16 %v8780
  %v9905 = vunpack.c.l.b16 %v8781
  %v9906 = vunpack.c.l.b16 %v8782
  %v9907 = vunpack.c.l.b16 %v8783
  %v9908 = vunpack.c.l.b16 %v8784
  %v9909 = vunpack.c.l.b16 %v8785
  %v9910 = vunpack.c.l.b16 %v8786
  %v9911 = vunpack.c.l.b16 %v8787
  %v9912 = vunpack.c.l.b16 %v8788
  %v9913 = vunpack.c.l.b16 %v8789
  %v9914 = vunpack.c.l.b16 %v8790
  %v9915 = vunpack.c.l.b16 %v8791
  %v9916 = vunpack.c.l.b16 %v8792
  %v9917 = vunpack.c.l.b16 %v8793
  %v9918 = vunpack.c.l.b16 %v8794
  %v9919 = vunpack.c.l.b16 %v8795
  %v9920 = vunpack.c.l.b16 %v8796
  %v9921 = vunpack.c.l.b16 %v8797
  %v9922 = vunpack.c.l.b16 %v8798
  %v9923 = vpack.c.b16 %v9364, %v9363
  %v9924 = vpack.c.b16 %v9366, %v9365
  %v9925 = vpack.c.b16 %v9368, %v9367
  %v9926 = vpack.c.b16 %v9370, %v9369
  %v9927 = vpack.c.b16 %v9372, %v9371
  %v9928 = vpack.c.b16 %v9374, %v9373
  %v9929 = vpack.c.b16 %v9376, %v9375
  %v9930 = vpack.c.b16 %v9378, %v9377
  %v9931 = vpack.c.b16 %v9380, %v9379
  %v9932 = vpack.c.b16 %v9382, %v9381
  %v9933 = vpack.c.b16 %v9384, %v9383
  %v9934 = vpack.c.b16 %v9386, %v9385
  %v9935 = vpack.c.b16 %v9388, %v9387
  %v9936 = vpack.c.b16 %v9390, %v9389
  %v9937 = vpack.c.b16 %v9392, %v9391
  %v9938 = vpack.c.b16 %v9394, %v9393
  %v9939 = vpack.c.b16 %v9396, %v9395
  %v9940 = vpack.c.b16 %v9398, %v9397
  %v9941 = vpack.c.b16 %v9400, %v9399
  %v9942 = vpack.c.b16 %v9402, %v9401
  %v9943 = vpack.c.b16 %v9404, %v9403
  %v9944 = vpack.c.b16 %v9406, %v9405
  %v9945 = vpack.c.b16 %v9408, %v9407
  %v9946 = vpack.c.b16 %v9410, %v9409
  %v9947 = vpack.c.b16 %v9412, %v9411
  %v9948 = vpack.c.b16 %v9414, %v9413
  %v9949 = vpack.c.b16 %v9416, %v9415
  %v9950 = vpack.c.b16 %v9418, %v9417
  %v9951 = vpack.c.b16 %v9420, %v9419
  %v9952 = vpack.c.b16 %v9422, %v9421
  %v9953 = vpack.c.b16 %v9424, %v9423
  %v9954 = vpack.c.b16 %v9426, %v9425
  %v9955 = vpack.c.b16 %v9428, %v9427
  %v9956 = vpack.c.b16 %v9430, %v9429
  %v9957 = vpack.c.b16 %v9432, %v9431
  %v9958 = vpack.c.b16 %v9434, %v9433
  %v9959 = vpack.c.b16 %v9436, %v9435
  %v9960 = vpack.c.b16 %v9438, %v9437
  %v9961 = vpack.c.b16 %v9440, %v9439
  %v9962 = vpack.c.b16 %v9442, %v9441
  %v9963 = vpack.c.b16 %v9444, %v9443
  %v9964 = vpack.c.b16 %v9446, %v9445
  %v9965 = vpack.c.b16 %v9448, %v9447
  %v9966 = vpack.c.b16 %v9450, %v9449
  %v9967 = vpack.c.b16 %v9452, %v9451
  %v9968 = vpack.c.b16 %v9454, %v9453
  %v9969 = vpack.c.b16 %v9456, %v9455
  %v9970 = vpack.c.b16 %v9458, %v9457
  %v9971 = vpack.c.b16 %v9460, %v9459
  %v9972 = vpack.c.b16 %v9462, %v9461
  %v9973 = vpack.c.b16 %v9464, %v9463
  %v9974 = vpack.c.b16 %v9466, %v9465
  %v9975 = vpack.c.b16 %v9468, %v9467
  %v9976 = vpack.c.b16 %v9470, %v9469
  %v9977 = vpack.c.b16 %v9472, %v9471
  %v9978 = vpack.c.b16 %v9474, %v9473
  %v9979 = vpack.c.b16 %v9476, %v9475
  %v9980 = vpack.c.b16 %v9478, %v9477
  %v9981 = vpack.c.b16 %v9480, %v9479
  %v9982 = vpack.c.b16 %v9482, %v9481
  %v9983 = vpack.c.b16 %v9484, %v9483
  %v9984 = vpack.c.b16 %v9486, %v9485
  %v9985 = vpack.c.b16 %v9488, %v9487
  %v9986 = vpack.c.b16 %v9490, %v9489
  %v9987 = vpack.c.b16 %v9492, %v9491
  %v9988 = vpack.c.b16 %v9494, %v9493
  %v9989 = vpack.c.b16 %v9496, %v9495
  %v9990 = vpack.c.b16 %v9498, %v9497
  %v9991 = vpack.c.b16 %v9500, %v9499
  %v9992 = vpack.c.b16 %v9502, %v9501
  %v9993 = vpack.c.b16 %v9504, %v9503
  %v9994 = vpack.c.b16 %v9506, %v9505
  %v9995 = vpack.c.b16 %v9508, %v9507
  %v9996 = vpack.c.b16 %v9510, %v9509
  %v9997 = vpack.c.b16 %v9512, %v9511
  %v9998 = vpack.c.b16 %v9514, %v9513
  %v9999 = vpack.c.b16 %v9516, %v9515
  %v10000 = vpack.c.b16 %v9518, %v9517
  %v10001 = vpack.c.b16 %v9520, %v9519
  %v10002 = vpack.c.b16 %v9522, %v9521
  %v10003 = vpack.c.b16 %v9524, %v9523
  %v10004 = vpack.c.b16 %v9526, %v9525
  %v10005 = vpack.c.b16 %v9528, %v9527
  %v10006 = vpack.c.b16 %v9530, %v9529
  %v10007 = vpack.c.b16 %v9532, %v9531
  %v10008 = vpack.c.b16 %v9534, %v9533
  %v10009 = vpack.c.b16 %v9536, %v9535
  %v10010 = vpack.c.b16 %v9538, %v9537
  %v10011 = vpack.c.b16 %v9540, %v9539
  %v10012 = vpack.c.b16 %v9542, %v9541
  %v10013 = vpack.c.b16 %v9544, %v9543
  %v10014 = vpack.c.b16 %v9546, %v9545
  %v10015 = vpack.c.b16 %v9548, %v9547
  %v10016 = vpack.c.b16 %v9550, %v9549
  %v10017 = vpack.c.b16 %v9552, %v9551
  %v10018 = vpack.c.b16 %v9554, %v9553
  %v10019 = vpack.c.b16 %v9556, %v9555
  %v10020 = vpack.c.b16 %v9558, %v9557
  %v10021 = vpack.c.b16 %v9560, %v9559
  %v10022 = vpack.c.b16 %v9562, %v9561
  %v10023 = vpack.c.b16 %v9564, %v9563
  %v10024 = vpack.c.b16 %v9566, %v9565
  %v10025 = vpack.c.b16 %v9568, %v9567
  %v10026 = vpack.c.b16 %v9570, %v9569
  %v10027 = vpack.c.b16 %v9572, %v9571
  %v10028 = vpack.c.b16 %v9574, %v9573
  %v10029 = vpack.c.b16 %v9576, %v9575
  %v10030 = vpack.c.b16 %v9578, %v9577
  %v10031 = vpack.c.b16 %v9580, %v9579
  %v10032 = vpack.c.b16 %v9582, %v9581
  %v10033 = vpack.c.b16 %v9584, %v9583
  %v10034 = vpack.c.b16 %v9586, %v9585
  %v10035 = vpack.c.b16 %v9588, %v9587
  %v10036 = vpack.c.b16 %v9590, %v9589
  %v10037 = vpack.c.b16 %v9592, %v9591
  %v10038 = vpack.c.b16 %v9594, %v9593
  %v10039 = vpack.c.b16 %v9596, %v9595
  %v10040 = vpack.c.b16 %v9598, %v9597
  %v10041 = vpack.c.b16 %v9600, %v9599
  %v10042 = vpack.c.b16 %v9602, %v9601
  %v10043 = vpack.c.b16 %v9604, %v9603
  %v10044 = vpack.c.b16 %v9606, %v9605
  %v10045 = vpack.c.b16 %v9608, %v9607
  %v10046 = vpack.c.b16 %v9610, %v9609
  %v10047 = vpack.c.b16 %v9612, %v9611
  %v10048 = vpack.c.b16 %v9614, %v9613
  %v10049 = vpack.c.b16 %v9616, %v9615
  %v10050 = vpack.c.b16 %v9618, %v9617
  %v10051 = vpack.c.b16 %v9620, %v9619
  %v10052 = vpack.c.b16 %v9622, %v9621
  %v10053 = vpack.c.b16 %v9624, %v9623
  %v10054 = vpack.c.b16 %v9626, %v9625
  %v10055 = vpack.c.b16 %v9628, %v9627
  %v10056 = vpack.c.b16 %v9630, %v9629
  %v10057 = vpack.c.b16 %v9632, %v9631
  %v10058 = vpack.c.b16 %v9634, %v9633
  %v10059 = vpack.c.b16 %v9636, %v9635
  %v10060 = vpack.c.b16 %v9638, %v9637
  %v10061 = vpack.c.b16 %v9640, %v9639
  %v10062 = vpack.c.b16 %v9642, %v9641
  %v10063 = vpack.c.b16 %v9644, %v9643
  %v10064 = vpack.c.b16 %v9646, %v9645
  %v10065 = vpack.c.b16 %v9648, %v9647
  %v10066 = vpack.c.b16 %v9650, %v9649
  %v10067 = vpack.c.b16 %v9652, %v9651
  %v10068 = vpack.c.b16 %v9654, %v9653
  %v10069 = vpack.c.b16 %v9656, %v9655
  %v10070 = vpack.c.b16 %v9658, %v9657
  %v10071 = vpack.c.b16 %v9660, %v9659
  %v10072 = vpack.c.b16 %v9662, %v9661
  %v10073 = vpack.c.b16 %v9664, %v9663
  %v10074 = vpack.c.b16 %v9666, %v9665
  %v10075 = vpack.c.b16 %v9668, %v9667
  %v10076 = vpack.c.b16 %v9670, %v9669
  %v10077 = vpack.c.b16 %v9672, %v9671
  %v10078 = vpack.c.b16 %v9674, %v9673
  %v10079 = vpack.c.b16 %v9676, %v9675
  %v10080 = vpack.c.b16 %v9678, %v9677
  %v10081 = vpack.c.b16 %v9680, %v9679
  %v10082 = vpack.c.b16 %v9682, %v9681
  %v10083 = vpack.c.b16 %v9684, %v9683
  %v10084 = vpack.c.b16 %v9686, %v9685
  %v10085 = vpack.c.b16 %v9688, %v9687
  %v10086 = vpack.c.b16 %v9690, %v9689
  %v10087 = vpack.c.b16 %v9692, %v9691
  %v10088 = vpack.c.b16 %v9694, %v9693
  %v10089 = vpack.c.b16 %v9696, %v9695
  %v10090 = vpack.c.b16 %v9698, %v9697
  %v10091 = vpack.c.b16 %v9700, %v9699
  %v10092 = vpack.c.b16 %v9702, %v9701
  %v10093 = vpack.c.b16 %v9704, %v9703
  %v10094 = vpack.c.b16 %v9706, %v9705
  %v10095 = vpack.c.b16 %v9708, %v9707
  %v10096 = vpack.c.b16 %v9710, %v9709
  %v10097 = vpack.c.b16 %v9712, %v9711
  %v10098 = vpack.c.b16 %v9714, %v9713
  %v10099 = vpack.c.b16 %v9716, %v9715
  %v10100 = vpack.c.b16 %v9718, %v9717
  %v10101 = vpack.c.b16 %v9720, %v9719
  %v10102 = vpack.c.b16 %v9722, %v9721
  %v10103 = vpack.c.b16 %v9724, %v9723
  %v10104 = vpack.c.b16 %v9726, %v9725
  %v10105 = vpack.c.b16 %v9728, %v9727
  %v10106 = vpack.c.b16 %v9730, %v9729
  %v10107 = vpack.c.b16 %v9732, %v9731
  %v10108 = vpack.c.b16 %v9734, %v9733
  %v10109 = vpack.c.b16 %v9736, %v9735
  %v10110 = vpack.c.b16 %v9738, %v9737
  %v10111 = vpack.c.b16 %v9740, %v9739
  %v10112 = vpack.c.b16 %v9742, %v9741
  %v10113 = vpack.c.b16 %v9744, %v9743
  %v10114 = vpack.c.b16 %v9746, %v9745
  %v10115 = vpack.c.b16 %v9748, %v9747
  %v10116 = vpack.c.b16 %v9750, %v9749
  %v10117 = vpack.c.b16 %v9752, %v9751
  %v10118 = vpack.c.b16 %v9754, %v9753
  %v10119 = vpack.c.b16 %v9756, %v9755
  %v10120 = vpack.c.b16 %v9758, %v9757
  %v10121 = vpack.c.b16 %v9760, %v9759
  %v10122 = vpack.c.b16 %v9762, %v9761
  %v10123 = vpack.c.b16 %v9764, %v9763
  %v10124 = vpack.c.b16 %v9766, %v9765
  %v10125 = vpack.c.b16 %v9768, %v9767
  %v10126 = vpack.c.b16 %v9770, %v9769
  %v10127 = vpack.c.b16 %v9772, %v9771
  %v10128 = vpack.c.b16 %v9774, %v9773
  %v10129 = vpack.c.b16 %v9776, %v9775
  %v10130 = vpack.c.b16 %v9778, %v9777
  %v10131 = vpack.c.b16 %v9780, %v9779
  %v10132 = vpack.c.b16 %v9782, %v9781
  %v10133 = vpack.c.b16 %v9784, %v9783
  %v10134 = vpack.c.b16 %v9786, %v9785
  %v10135 = vpack.c.b16 %v9788, %v9787
  %v10136 = vpack.c.b16 %v9790, %v9789
  %v10137 = vpack.c.b16 %v9792, %v9791
  %v10138 = vpack.c.b16 %v9794, %v9793
  %v10139 = vpack.c.b16 %v9796, %v9795
  %v10140 = vpack.c.b16 %v9798, %v9797
  %v10141 = vpack.c.b16 %v9800, %v9799
  %v10142 = vpack.c.b16 %v9802, %v9801
  %v10143 = vpack.c.b16 %v9804, %v9803
  %v10144 = vpack.c.b16 %v9806, %v9805
  %v10145 = vpack.c.b16 %v9808, %v9807
  %v10146 = vpack.c.b16 %v9810, %v9809
  %v10147 = vpack.c.b16 %v9812, %v9811
  %v10148 = vpack.c.b16 %v9814, %v9813
  %v10149 = vpack.c.b16 %v9816, %v9815
  %v10150 = vpack.c.b16 %v9818, %v9817
  %v10151 = vpack.c.b16 %v9820, %v9819
  %v10152 = vpack.c.b16 %v9822, %v9821
  %v10153 = vpack.c.b16 %v9824, %v9823
  %v10154 = vpack.c.b16 %v9826, %v9825
  %v10155 = vpack.c.b16 %v9828, %v9827
  %v10156 = vpack.c.b16 %v9830, %v9829
  %v10157 = vpack.c.b16 %v9832, %v9831
  %v10158 = vpack.c.b16 %v9834, %v9833
  %v10159 = vpack.c.b16 %v9836, %v9835
  %v10160 = vpack.c.b16 %v9838, %v9837
  %v10161 = vpack.c.b16 %v9840, %v9839
  %v10162 = vpack.c.b16 %v9842, %v9841
  %v10163 = vpack.c.b16 %v9844, %v9843
  %v10164 = vpack.c.b16 %v9846, %v9845
  %v10165 = vpack.c.b16 %v9848, %v9847
  %v10166 = vpack.c.b16 %v9850, %v9849
  %v10167 = vpack.c.b16 %v9852, %v9851
  %v10168 = vpack.c.b16 %v9854, %v9853
  %v10169 = vpack.c.b16 %v9856, %v9855
  %v10170 = vpack.c.b16 %v9858, %v9857
  %v10171 = vpack.c.b16 %v9860, %v9859
  %v10172 = vpack.c.b16 %v9862, %v9861
  %v10173 = vpack.c.b16 %v9864, %v9863
  %v10174 = vpack.c.b16 %v9866, %v9865
  %v10175 = vpack.c.b16 %v9868, %v9867
  %v10176 = vpack.c.b16 %v9870, %v9869
  %v10177 = vpack.c.b16 %v9872, %v9871
  %v10178 = vpack.c.b16 %v9874, %v9873
  %v10179 = vpack.c.b16 %v9876, %v9875
  %v10180 = vpack.c.b16 %v9878, %v9877
  %v10181 = vpack.c.b16 %v9880, %v9879
  %v10182 = vpack.c.b16 %v9882, %v9881
  %v10183 = vpack.c.b16 %v9884, %v9883
  %v10184 = vpack.c.b16 %v9886, %v9885
  %v10185 = vpack.c.b16 %v9888, %v9887
  %v10186 = vpack.c.b16 %v9890, %v9889
  %v10187 = vpack.c.b16 %v9892, %v9891
  %v10188 = vpack.c.b16 %v9894, %v9893
  %v10189 = vpack.c.b16 %v9896, %v9895
  %v10190 = vpack.c.b16 %v9898, %v9897
  %v10191 = vpack.c.b16 %v9900, %v9899
  %v10192 = vpack.c.b16 %v9902, %v9901
  %v10193 = vpack.c.b16 %v9904, %v9903
  %v10194 = vpack.c.b16 %v9906, %v9905
  %v10195 = vpack.c.b16 %v9908, %v9907
  %v10196 = vpack.c.b16 %v9910, %v9909
  %v10197 = vpack.c.b16 %v9912, %v9911
  %v10198 = vpack.c.b16 %v9914, %v9913
  %v10199 = vpack.c.b16 %v9916, %v9915
  %v10200 = vpack.c.b16 %v9918, %v9917
  %v10201 = vpack.c.b16 %v9920, %v9919
  %v10202 = vpack.c.b16 %v9922, %v9921
  %10483 = vmatpush.bf16.msra.mxu0 %v9930
  %10484 = vmatpush.bf16.msra.mxu0 %v9929
  %10485 = vmatpush.bf16.msra.mxu0 %v9928
  %10486 = vmatpush.bf16.msra.mxu0 %v9927
  %10487 = vmatpush.bf16.msra.mxu0 %v9926
  %10488 = vmatpush.bf16.msra.mxu0 %v9925
  %10489 = vmatpush.bf16.msra.mxu0 %v9924
  %10490 = vmatpush.bf16.msra.mxu0 %v9923
  %10491 = vmatmul.bf16.gmra.mxu0 %v8204
  %v10492 = vpop.f32.mrf.mxu0
  %v10493 = vadd.f32 %v8801, %v10492
  %v10494 = vpop.f32.mrf.mxu0
  %10495 = vdwg.mxu0
  %10496 = vmatpush.bf16.msra.mxu0 %v9938
  %10497 = vmatpush.bf16.msra.mxu0 %v9937
  %10498 = vmatpush.bf16.msra.mxu0 %v9936
  %10499 = vmatpush.bf16.msra.mxu0 %v9935
  %10500 = vmatpush.bf16.msra.mxu0 %v9934
  %10501 = vmatpush.bf16.msra.mxu0 %v9933
  %10502 = vmatpush.bf16.msra.mxu0 %v9932
  %10503 = vmatpush.bf16.msra.mxu0 %v9931
  %10504 = vmatmul.bf16.gmra.mxu0 %v8205
  %v10505 = vpop.f32.mrf.mxu0
  %v10506 = vadd.f32 %v10493, %v10505
  %v10507 = vpop.f32.mrf.mxu0
  %10508 = vdwg.mxu0
  %10509 = vmatpush.bf16.msra.mxu0 %v9946
  %10510 = vmatpush.bf16.msra.mxu0 %v9945
  %10511 = vmatpush.bf16.msra.mxu0 %v9944
  %10512 = vmatpush.bf16.msra.mxu0 %v9943
  %10513 = vmatpush.bf16.msra.mxu0 %v9942
  %10514 = vmatpush.bf16.msra.mxu0 %v9941
  %10515 = vmatpush.bf16.msra.mxu0 %v9940
  %10516 = vmatpush.bf16.msra.mxu0 %v9939
  %10517 = vmatmul.bf16.gmra.mxu0 %v8206
  %v10518 = vpop.f32.mrf.mxu0
  %v10519 = vadd.f32 %v10506, %v10518
  %v10520 = vpop.f32.mrf.mxu0
  %10521 = vdwg.mxu0
  %10522 = vmatpush.bf16.msra.mxu0 %v9954
  %10523 = vmatpush.bf16.msra.mxu0 %v9953
  %10524 = vmatpush.bf16.msra.mxu0 %v9952
  %10525 = vmatpush.bf16.msra.mxu0 %v9951
  %10526 = vmatpush.bf16.msra.mxu0 %v9950
  %10527 = vmatpush.bf16.msra.mxu0 %v9949
  %10528 = vmatpush.bf16.msra.mxu0 %v9948
  %10529 = vmatpush.bf16.msra.mxu0 %v9947
  %10530 = vmatmul.bf16.gmra.mxu0 %v8207
  %v10531 = vpop.f32.mrf.mxu0
  %v10532 = vadd.f32 %v10519, %v10531
  %v10533 = vpop.f32.mrf.mxu0
  %10534 = vdwg.mxu0
  %10535 = vmatpush.bf16.msra.mxu0 %v9962
  %10536 = vmatpush.bf16.msra.mxu0 %v9961
  %10537 = vmatpush.bf16.msra.mxu0 %v9960
  %10538 = vmatpush.bf16.msra.mxu0 %v9959
  %10539 = vmatpush.bf16.msra.mxu0 %v9958
  %10540 = vmatpush.bf16.msra.mxu0 %v9957
  %10541 = vmatpush.bf16.msra.mxu0 %v9956
  %10542 = vmatpush.bf16.msra.mxu0 %v9955
  %10543 = vmatmul.bf16.gmra.mxu0 %v8208
  %v10544 = vpop.f32.mrf.mxu0
  %v10545 = vadd.f32 %v10532, %v10544
  %v10546 = vpop.f32.mrf.mxu0
  %10547 = vdwg.mxu0
  %10548 = vmatpush.bf16.msra.mxu0 %v9970
  %10549 = vmatpush.bf16.msra.mxu0 %v9969
  %10550 = vmatpush.bf16.msra.mxu0 %v9968
  %10551 = vmatpush.bf16.msra.mxu0 %v9967
  %10552 = vmatpush.bf16.msra.mxu0 %v9966
  %10553 = vmatpush.bf16.msra.mxu0 %v9965
  %10554 = vmatpush.bf16.msra.mxu0 %v9964
  %10555 = vmatpush.bf16.msra.mxu0 %v9963
  %10556 = vmatmul.bf16.gmra.mxu0 %v8209
  %v10557 = vpop.f32.mrf.mxu0
  %v10558 = vadd.f32 %v10545, %v10557
  %v10559 = vpop.f32.mrf.mxu0
  %10560 = vdwg.mxu0
  %10561 = vmatpush.bf16.msra.mxu0 %v9978
  %10562 = vmatpush.bf16.msra.mxu0 %v9977
  %10563 = vmatpush.bf16.msra.mxu0 %v9976
  %10564 = vmatpush.bf16.msra.mxu0 %v9975
  %10565 = vmatpush.bf16.msra.mxu0 %v9974
  %10566 = vmatpush.bf16.msra.mxu0 %v9973
  %10567 = vmatpush.bf16.msra.mxu0 %v9972
  %10568 = vmatpush.bf16.msra.mxu0 %v9971
  %10569 = vmatmul.bf16.gmra.mxu0 %v8210
  %v10570 = vpop.f32.mrf.mxu0
  %v10571 = vadd.f32 %v10558, %v10570
  %v10572 = vpop.f32.mrf.mxu0
  %10573 = vdwg.mxu0
  %10574 = vmatpush.bf16.msra.mxu0 %v9986
  %10575 = vmatpush.bf16.msra.mxu0 %v9985
  %10576 = vmatpush.bf16.msra.mxu0 %v9984
  %10577 = vmatpush.bf16.msra.mxu0 %v9983
  %10578 = vmatpush.bf16.msra.mxu0 %v9982
  %10579 = vmatpush.bf16.msra.mxu0 %v9981
  %10580 = vmatpush.bf16.msra.mxu0 %v9980
  %10581 = vmatpush.bf16.msra.mxu0 %v9979
  %10582 = vmatmul.bf16.gmra.mxu0 %v8211
  %v10583 = vpop.f32.mrf.mxu0
  %v10584 = vadd.f32 %v10571, %v10583
  %v10585 = vpop.f32.mrf.mxu0
  %10586 = vdwg.mxu0
  %10587 = vmatpush.bf16.msra.mxu0 %v9994
  %10588 = vmatpush.bf16.msra.mxu0 %v9993
  %10589 = vmatpush.bf16.msra.mxu0 %v9992
  %10590 = vmatpush.bf16.msra.mxu0 %v9991
  %10591 = vmatpush.bf16.msra.mxu0 %v9990
  %10592 = vmatpush.bf16.msra.mxu0 %v9989
  %10593 = vmatpush.bf16.msra.mxu0 %v9988
  %10594 = vmatpush.bf16.msra.mxu0 %v9987
  %10595 = vmatmul.bf16.gmra.mxu0 %v8212
  %v10596 = vpop.f32.mrf.mxu0
  %v10597 = vadd.f32 %v10584, %v10596
  %v10598 = vpop.f32.mrf.mxu0
  %10599 = vdwg.mxu0
  %10600 = vmatpush.bf16.msra.mxu0 %v10002
  %10601 = vmatpush.bf16.msra.mxu0 %v10001
  %10602 = vmatpush.bf16.msra.mxu0 %v10000
  %10603 = vmatpush.bf16.msra.mxu0 %v9999
  %10604 = vmatpush.bf16.msra.mxu0 %v9998
  %10605 = vmatpush.bf16.msra.mxu0 %v9997
  %10606 = vmatpush.bf16.msra.mxu0 %v9996
  %10607 = vmatpush.bf16.msra.mxu0 %v9995
  %10608 = vmatmul.bf16.gmra.mxu0 %v8213
  %v10609 = vpop.f32.mrf.mxu0
  %v10610 = vadd.f32 %v10597, %v10609
  %v10611 = vpop.f32.mrf.mxu0
  %10612 = vdwg.mxu0
  %10613 = vmatpush.bf16.msra.mxu0 %v10010
  %10614 = vmatpush.bf16.msra.mxu0 %v10009
  %10615 = vmatpush.bf16.msra.mxu0 %v10008
  %10616 = vmatpush.bf16.msra.mxu0 %v10007
  %10617 = vmatpush.bf16.msra.mxu0 %v10006
  %10618 = vmatpush.bf16.msra.mxu0 %v10005
  %10619 = vmatpush.bf16.msra.mxu0 %v10004
  %10620 = vmatpush.bf16.msra.mxu0 %v10003
  %10621 = vmatmul.bf16.gmra.mxu0 %v8214
  %v10622 = vpop.f32.mrf.mxu0
  %v10623 = vadd.f32 %v10610, %v10622
  %v10624 = vpop.f32.mrf.mxu0
  %10625 = vdwg.mxu0
  %10626 = vmatpush.bf16.msra.mxu0 %v10018
  %10627 = vmatpush.bf16.msra.mxu0 %v10017
  %10628 = vmatpush.bf16.msra.mxu0 %v10016
  %10629 = vmatpush.bf16.msra.mxu0 %v10015
  %10630 = vmatpush.bf16.msra.mxu0 %v10014
  %10631 = vmatpush.bf16.msra.mxu0 %v10013
  %10632 = vmatpush.bf16.msra.mxu0 %v10012
  %10633 = vmatpush.bf16.msra.mxu0 %v10011
  %10634 = vmatmul.bf16.gmra.mxu0 %v8215
  %v10635 = vpop.f32.mrf.mxu0
  %v10636 = vadd.f32 %v10623, %v10635
  %v10637 = vpop.f32.mrf.mxu0
  %10638 = vdwg.mxu0
  %10639 = vmatpush.bf16.msra.mxu0 %v10026
  %10640 = vmatpush.bf16.msra.mxu0 %v10025
  %10641 = vmatpush.bf16.msra.mxu0 %v10024
  %10642 = vmatpush.bf16.msra.mxu0 %v10023
  %10643 = vmatpush.bf16.msra.mxu0 %v10022
  %10644 = vmatpush.bf16.msra.mxu0 %v10021
  %10645 = vmatpush.bf16.msra.mxu0 %v10020
  %10646 = vmatpush.bf16.msra.mxu0 %v10019
  %10647 = vmatmul.bf16.gmra.mxu0 %v8216
  %v10648 = vpop.f32.mrf.mxu0
  %v10649 = vadd.f32 %v10636, %v10648
  %v10650 = vpop.f32.mrf.mxu0
  %10651 = vdwg.mxu0
  %10652 = vmatpush.bf16.msra.mxu0 %v10034
  %10653 = vmatpush.bf16.msra.mxu0 %v10033
  %10654 = vmatpush.bf16.msra.mxu0 %v10032
  %10655 = vmatpush.bf16.msra.mxu0 %v10031
  %10656 = vmatpush.bf16.msra.mxu0 %v10030
  %10657 = vmatpush.bf16.msra.mxu0 %v10029
  %10658 = vmatpush.bf16.msra.mxu0 %v10028
  %10659 = vmatpush.bf16.msra.mxu0 %v10027
  %10660 = vmatmul.bf16.gmra.mxu0 %v8217
  %v10661 = vpop.f32.mrf.mxu0
  %v10662 = vadd.f32 %v10649, %v10661
  %v10663 = vpop.f32.mrf.mxu0
  %10664 = vdwg.mxu0
  %10665 = vmatpush.bf16.msra.mxu0 %v10042
  %10666 = vmatpush.bf16.msra.mxu0 %v10041
  %10667 = vmatpush.bf16.msra.mxu0 %v10040
  %10668 = vmatpush.bf16.msra.mxu0 %v10039
  %10669 = vmatpush.bf16.msra.mxu0 %v10038
  %10670 = vmatpush.bf16.msra.mxu0 %v10037
  %10671 = vmatpush.bf16.msra.mxu0 %v10036
  %10672 = vmatpush.bf16.msra.mxu0 %v10035
  %10673 = vmatmul.bf16.gmra.mxu0 %v8218
  %v10674 = vpop.f32.mrf.mxu0
  %v10675 = vadd.f32 %v10662, %v10674
  %v10676 = vpop.f32.mrf.mxu0
  %10677 = vdwg.mxu0
  %10678 = vmatpush.bf16.msra.mxu0 %v10050
  %10679 = vmatpush.bf16.msra.mxu0 %v10049
  %10680 = vmatpush.bf16.msra.mxu0 %v10048
  %10681 = vmatpush.bf16.msra.mxu0 %v10047
  %10682 = vmatpush.bf16.msra.mxu0 %v10046
  %10683 = vmatpush.bf16.msra.mxu0 %v10045
  %10684 = vmatpush.bf16.msra.mxu0 %v10044
  %10685 = vmatpush.bf16.msra.mxu0 %v10043
  %10686 = vmatmul.bf16.gmra.mxu0 %v8219
  %v10687 = vpop.f32.mrf.mxu0
  %v10688 = vadd.f32 %v10675, %v10687
  %v10689 = vpop.f32.mrf.mxu0
  %10690 = vdwg.mxu0
  %10691 = vmatpush.bf16.msra.mxu0 %v10058
  %10692 = vmatpush.bf16.msra.mxu0 %v10057
  %10693 = vmatpush.bf16.msra.mxu0 %v10056
  %10694 = vmatpush.bf16.msra.mxu0 %v10055
  %10695 = vmatpush.bf16.msra.mxu0 %v10054
  %10696 = vmatpush.bf16.msra.mxu0 %v10053
  %10697 = vmatpush.bf16.msra.mxu0 %v10052
  %10698 = vmatpush.bf16.msra.mxu0 %v10051
  %10699 = vmatmul.bf16.gmra.mxu0 %v8220
  %v10700 = vpop.f32.mrf.mxu0
  %v10701 = vadd.f32 %v10688, %v10700
  %v10702 = vpop.f32.mrf.mxu0
  %10703 = vdwg.mxu0
  %10704 = vmatpush.bf16.msra.mxu0 %v10066
  %10705 = vmatpush.bf16.msra.mxu0 %v10065
  %10706 = vmatpush.bf16.msra.mxu0 %v10064
  %10707 = vmatpush.bf16.msra.mxu0 %v10063
  %10708 = vmatpush.bf16.msra.mxu0 %v10062
  %10709 = vmatpush.bf16.msra.mxu0 %v10061
  %10710 = vmatpush.bf16.msra.mxu0 %v10060
  %10711 = vmatpush.bf16.msra.mxu0 %v10059
  %10712 = vmatmul.bf16.gmra.mxu0 %v8221
  %v10713 = vpop.f32.mrf.mxu0
  %v10714 = vadd.f32 %v10701, %v10713
  %v10715 = vpop.f32.mrf.mxu0
  %10716 = vdwg.mxu0
  %10717 = vmatpush.bf16.msra.mxu0 %v10074
  %10718 = vmatpush.bf16.msra.mxu0 %v10073
  %10719 = vmatpush.bf16.msra.mxu0 %v10072
  %10720 = vmatpush.bf16.msra.mxu0 %v10071
  %10721 = vmatpush.bf16.msra.mxu0 %v10070
  %10722 = vmatpush.bf16.msra.mxu0 %v10069
  %10723 = vmatpush.bf16.msra.mxu0 %v10068
  %10724 = vmatpush.bf16.msra.mxu0 %v10067
  %10725 = vmatmul.bf16.gmra.mxu0 %v8222
  %v10726 = vpop.f32.mrf.mxu0
  %v10727 = vadd.f32 %v10714, %v10726
  %v10728 = vpop.f32.mrf.mxu0
  %10729 = vdwg.mxu0
  %10730 = vmatpush.bf16.msra.mxu0 %v10082
  %10731 = vmatpush.bf16.msra.mxu0 %v10081
  %10732 = vmatpush.bf16.msra.mxu0 %v10080
  %10733 = vmatpush.bf16.msra.mxu0 %v10079
  %10734 = vmatpush.bf16.msra.mxu0 %v10078
  %10735 = vmatpush.bf16.msra.mxu0 %v10077
  %10736 = vmatpush.bf16.msra.mxu0 %v10076
  %10737 = vmatpush.bf16.msra.mxu0 %v10075
  %10738 = vmatmul.bf16.gmra.mxu0 %v8223
  %v10739 = vpop.f32.mrf.mxu0
  %v10740 = vadd.f32 %v10727, %v10739
  %v10741 = vpop.f32.mrf.mxu0
  %10742 = vdwg.mxu0
  %10743 = vmatpush.bf16.msra.mxu0 %v10090
  %10744 = vmatpush.bf16.msra.mxu0 %v10089
  %10745 = vmatpush.bf16.msra.mxu0 %v10088
  %10746 = vmatpush.bf16.msra.mxu0 %v10087
  %10747 = vmatpush.bf16.msra.mxu0 %v10086
  %10748 = vmatpush.bf16.msra.mxu0 %v10085
  %10749 = vmatpush.bf16.msra.mxu0 %v10084
  %10750 = vmatpush.bf16.msra.mxu0 %v10083
  %10751 = vmatmul.bf16.gmra.mxu0 %v8224
  %v10752 = vpop.f32.mrf.mxu0
  %v10753 = vadd.f32 %v10740, %v10752
  %v10754 = vpop.f32.mrf.mxu0
  %10755 = vdwg.mxu0
  %10756 = vmatpush.bf16.msra.mxu0 %v10098
  %10757 = vmatpush.bf16.msra.mxu0 %v10097
  %10758 = vmatpush.bf16.msra.mxu0 %v10096
  %10759 = vmatpush.bf16.msra.mxu0 %v10095
  %10760 = vmatpush.bf16.msra.mxu0 %v10094
  %10761 = vmatpush.bf16.msra.mxu0 %v10093
  %10762 = vmatpush.bf16.msra.mxu0 %v10092
  %10763 = vmatpush.bf16.msra.mxu0 %v10091
  %10764 = vmatmul.bf16.gmra.mxu0 %v8225
  %v10765 = vpop.f32.mrf.mxu0
  %v10766 = vadd.f32 %v10753, %v10765
  %v10767 = vpop.f32.mrf.mxu0
  %10768 = vdwg.mxu0
  %10769 = vmatpush.bf16.msra.mxu0 %v10106
  %10770 = vmatpush.bf16.msra.mxu0 %v10105
  %10771 = vmatpush.bf16.msra.mxu0 %v10104
  %10772 = vmatpush.bf16.msra.mxu0 %v10103
  %10773 = vmatpush.bf16.msra.mxu0 %v10102
  %10774 = vmatpush.bf16.msra.mxu0 %v10101
  %10775 = vmatpush.bf16.msra.mxu0 %v10100
  %10776 = vmatpush.bf16.msra.mxu0 %v10099
  %10777 = vmatmul.bf16.gmra.mxu0 %v8226
  %v10778 = vpop.f32.mrf.mxu0
  %v10779 = vadd.f32 %v10766, %v10778
  %v10780 = vpop.f32.mrf.mxu0
  %10781 = vdwg.mxu0
  %10782 = vmatpush.bf16.msra.mxu0 %v10114
  %10783 = vmatpush.bf16.msra.mxu0 %v10113
  %10784 = vmatpush.bf16.msra.mxu0 %v10112
  %10785 = vmatpush.bf16.msra.mxu0 %v10111
  %10786 = vmatpush.bf16.msra.mxu0 %v10110
  %10787 = vmatpush.bf16.msra.mxu0 %v10109
  %10788 = vmatpush.bf16.msra.mxu0 %v10108
  %10789 = vmatpush.bf16.msra.mxu0 %v10107
  %10790 = vmatmul.bf16.gmra.mxu0 %v8227
  %v10791 = vpop.f32.mrf.mxu0
  %v10792 = vadd.f32 %v10779, %v10791
  %v10793 = vpop.f32.mrf.mxu0
  %10794 = vdwg.mxu0
  %10795 = vmatpush.bf16.msra.mxu0 %v10122
  %10796 = vmatpush.bf16.msra.mxu0 %v10121
  %10797 = vmatpush.bf16.msra.mxu0 %v10120
  %10798 = vmatpush.bf16.msra.mxu0 %v10119
  %10799 = vmatpush.bf16.msra.mxu0 %v10118
  %10800 = vmatpush.bf16.msra.mxu0 %v10117
  %10801 = vmatpush.bf16.msra.mxu0 %v10116
  %10802 = vmatpush.bf16.msra.mxu0 %v10115
  %10803 = vmatmul.bf16.gmra.mxu0 %v8228
  %v10804 = vpop.f32.mrf.mxu0
  %v10805 = vadd.f32 %v10792, %v10804
  %v10806 = vpop.f32.mrf.mxu0
  %10807 = vdwg.mxu0
  %10808 = vmatpush.bf16.msra.mxu0 %v10130
  %10809 = vmatpush.bf16.msra.mxu0 %v10129
  %10810 = vmatpush.bf16.msra.mxu0 %v10128
  %10811 = vmatpush.bf16.msra.mxu0 %v10127
  %10812 = vmatpush.bf16.msra.mxu0 %v10126
  %10813 = vmatpush.bf16.msra.mxu0 %v10125
  %10814 = vmatpush.bf16.msra.mxu0 %v10124
  %10815 = vmatpush.bf16.msra.mxu0 %v10123
  %10816 = vmatmul.bf16.gmra.mxu0 %v8229
  %v10817 = vpop.f32.mrf.mxu0
  %v10818 = vadd.f32 %v10805, %v10817
  %v10819 = vpop.f32.mrf.mxu0
  %10820 = vdwg.mxu0
  %10821 = vmatpush.bf16.msra.mxu0 %v10138
  %10822 = vmatpush.bf16.msra.mxu0 %v10137
  %10823 = vmatpush.bf16.msra.mxu0 %v10136
  %10824 = vmatpush.bf16.msra.mxu0 %v10135
  %10825 = vmatpush.bf16.msra.mxu0 %v10134
  %10826 = vmatpush.bf16.msra.mxu0 %v10133
  %10827 = vmatpush.bf16.msra.mxu0 %v10132
  %10828 = vmatpush.bf16.msra.mxu0 %v10131
  %10829 = vmatmul.bf16.gmra.mxu0 %v8230
  %v10830 = vpop.f32.mrf.mxu0
  %v10831 = vadd.f32 %v10818, %v10830
  %v10832 = vpop.f32.mrf.mxu0
  %10833 = vdwg.mxu0
  %10834 = vmatpush.bf16.msra.mxu0 %v10146
  %10835 = vmatpush.bf16.msra.mxu0 %v10145
  %10836 = vmatpush.bf16.msra.mxu0 %v10144
  %10837 = vmatpush.bf16.msra.mxu0 %v10143
  %10838 = vmatpush.bf16.msra.mxu0 %v10142
  %10839 = vmatpush.bf16.msra.mxu0 %v10141
  %10840 = vmatpush.bf16.msra.mxu0 %v10140
  %10841 = vmatpush.bf16.msra.mxu0 %v10139
  %10842 = vmatmul.bf16.gmra.mxu0 %v8231
  %v10843 = vpop.f32.mrf.mxu0
  %v10844 = vadd.f32 %v10831, %v10843
  %v10845 = vpop.f32.mrf.mxu0
  %10846 = vdwg.mxu0
  %10847 = vmatpush.bf16.msra.mxu0 %v10154
  %10848 = vmatpush.bf16.msra.mxu0 %v10153
  %10849 = vmatpush.bf16.msra.mxu0 %v10152
  %10850 = vmatpush.bf16.msra.mxu0 %v10151
  %10851 = vmatpush.bf16.msra.mxu0 %v10150
  %10852 = vmatpush.bf16.msra.mxu0 %v10149
  %10853 = vmatpush.bf16.msra.mxu0 %v10148
  %10854 = vmatpush.bf16.msra.mxu0 %v10147
  %10855 = vmatmul.bf16.gmra.mxu0 %v8232
  %v10856 = vpop.f32.mrf.mxu0
  %v10857 = vadd.f32 %v10844, %v10856
  %v10858 = vpop.f32.mrf.mxu0
  %10859 = vdwg.mxu0
  %10860 = vmatpush.bf16.msra.mxu0 %v10162
  %10861 = vmatpush.bf16.msra.mxu0 %v10161
  %10862 = vmatpush.bf16.msra.mxu0 %v10160
  %10863 = vmatpush.bf16.msra.mxu0 %v10159
  %10864 = vmatpush.bf16.msra.mxu0 %v10158
  %10865 = vmatpush.bf16.msra.mxu0 %v10157
  %10866 = vmatpush.bf16.msra.mxu0 %v10156
  %10867 = vmatpush.bf16.msra.mxu0 %v10155
  %10868 = vmatmul.bf16.gmra.mxu0 %v8233
  %v10869 = vpop.f32.mrf.mxu0
  %v10870 = vadd.f32 %v10857, %v10869
  %v10871 = vpop.f32.mrf.mxu0
  %10872 = vdwg.mxu0
  %10873 = vmatpush.bf16.msra.mxu0 %v10170
  %10874 = vmatpush.bf16.msra.mxu0 %v10169
  %10875 = vmatpush.bf16.msra.mxu0 %v10168
  %10876 = vmatpush.bf16.msra.mxu0 %v10167
  %10877 = vmatpush.bf16.msra.mxu0 %v10166
  %10878 = vmatpush.bf16.msra.mxu0 %v10165
  %10879 = vmatpush.bf16.msra.mxu0 %v10164
  %10880 = vmatpush.bf16.msra.mxu0 %v10163
  %10881 = vmatmul.bf16.gmra.mxu0 %v8234
  %v10882 = vpop.f32.mrf.mxu0
  %v10883 = vadd.f32 %v10870, %v10882
  %v10884 = vpop.f32.mrf.mxu0
  %10885 = vdwg.mxu0
  %10886 = vmatpush.bf16.msra.mxu0 %v10178
  %10887 = vmatpush.bf16.msra.mxu0 %v10177
  %10888 = vmatpush.bf16.msra.mxu0 %v10176
  %10889 = vmatpush.bf16.msra.mxu0 %v10175
  %10890 = vmatpush.bf16.msra.mxu0 %v10174
  %10891 = vmatpush.bf16.msra.mxu0 %v10173
  %10892 = vmatpush.bf16.msra.mxu0 %v10172
  %10893 = vmatpush.bf16.msra.mxu0 %v10171
  %10894 = vmatmul.bf16.gmra.mxu0 %v8235
  %v10895 = vpop.f32.mrf.mxu0
  %v10896 = vadd.f32 %v10883, %v10895
  %v10897 = vpop.f32.mrf.mxu0
  %10898 = vdwg.mxu0
  %10899 = vmatpush.bf16.msra.mxu0 %v10186
  %10900 = vmatpush.bf16.msra.mxu0 %v10185
  %10901 = vmatpush.bf16.msra.mxu0 %v10184
  %10902 = vmatpush.bf16.msra.mxu0 %v10183
  %10903 = vmatpush.bf16.msra.mxu0 %v10182
  %10904 = vmatpush.bf16.msra.mxu0 %v10181
  %10905 = vmatpush.bf16.msra.mxu0 %v10180
  %10906 = vmatpush.bf16.msra.mxu0 %v10179
  %10907 = vmatmul.bf16.gmra.mxu0 %v8236
  %v10908 = vpop.f32.mrf.mxu0
  %v10909 = vadd.f32 %v10896, %v10908
  %v10910 = vpop.f32.mrf.mxu0
  %10911 = vdwg.mxu0
  %10912 = vmatpush.bf16.msra.mxu0 %v10194
  %10913 = vmatpush.bf16.msra.mxu0 %v10193
  %10914 = vmatpush.bf16.msra.mxu0 %v10192
  %10915 = vmatpush.bf16.msra.mxu0 %v10191
  %10916 = vmatpush.bf16.msra.mxu0 %v10190
  %10917 = vmatpush.bf16.msra.mxu0 %v10189
  %10918 = vmatpush.bf16.msra.mxu0 %v10188
  %10919 = vmatpush.bf16.msra.mxu0 %v10187
  %10920 = vmatmul.bf16.gmra.mxu0 %v8237
  %v10921 = vpop.f32.mrf.mxu0
  %v10922 = vadd.f32 %v10909, %v10921
  %v10923 = vpop.f32.mrf.mxu0
  %10924 = vdwg.mxu0
  %10925 = vmatpush.bf16.msra.mxu0 %v10202
  %10926 = vmatpush.bf16.msra.mxu0 %v10201
  %10927 = vmatpush.bf16.msra.mxu0 %v10200
  %10928 = vmatpush.bf16.msra.mxu0 %v10199
  %10929 = vmatpush.bf16.msra.mxu0 %v10198
  %10930 = vmatpush.bf16.msra.mxu0 %v10197
  %10931 = vmatpush.bf16.msra.mxu0 %v10196
  %10932 = vmatpush.bf16.msra.mxu0 %v10195
  %10933 = vmatmul.bf16.gmra.mxu0 %v8238
  %v10934 = vpop.f32.mrf.mxu0
  %v10935 = vadd.f32 %v10922, %v10934
  %v10936 = vpop.f32.mrf.mxu0
  %10937 = vdwg.mxu0
  %v10938 = vmax.f32 %v10935, 0.0
  %vm10939 = vcmask 123904
  %v10940 = vsel %vm10939, %v10938, 0.0
  %v10941 = vrot.slane %v10940, 4
  %v10942 = vadd.f32 %v10940, %v10941
  %v10943 = vrot.slane %v10942, 2
  %v10944 = vadd.f32 %v10942, %v10943
  %v10945 = vrot.slane %v10944, 1
  %v10946 = vadd.f32 %v10944, %v10945
  %v10947 = vmul.f32 %v10946, %v7168
  %v10948 = vsub.f32 %v10938, %v10947
  %v10949 = vmul.f32 %v10948, %v10948
  %v10950 = vsel %vm10939, %v10949, 0.0
  %v10951 = vrot.slane %v10950, 4
  %v10952 = vadd.f32 %v10950, %v10951
  %v10953 = vrot.slane %v10952, 2
  %v10954 = vadd.f32 %v10952, %v10953
  %v10955 = vrot.slane %v10954, 1
  %v10956 = vadd.f32 %v10954, %v10955
  %v10957 = vmul.f32 %v10956, %v7168
  %v10958 = vadd.f32 %v10957, 1e-05
  %v10959 = vrsqrt.pop %v10958
  %v10960 = vmul.f32 %v10959, %v10958
  %v10961 = vmul.f32 %v10960, %v10959
  %v10962 = vmul.f32 0.5, %v10961
  %v10963 = vsub.f32 1.5, %v10962
  %v10964 = vmul.f32 %v10959, %v10963
  %vm10965 = vweird.f32 %v10958
  %vm10966 = vweird.f32 %v10959
  %vm10967 = vmor %vm10965, %vm10966
  %v10968 = vsel %vm10967, %v10959, %v10964
  %v10969 = vmul.f32 %v10948, %v10968
  %v10970 = vld [vmem:[%s13] sm:$0x1]
  %v10972 = vperm.slane %v10970, 0
  %v10974 = vmul.f32 %v10969, %v10972
  %v10975 = vld [vmem:[%s14] sm:$0x1]
  %v10977 = vperm.slane %v10975, 0
  %v10979 = vadd.f32 %v10974, %v10977
  %v10980 = vld [vmem:[%s15] sm:$0xff]
  %v10981 = vld [vmem:[%s15 + $0x8] sm:$0xff]
  %v10982 = vld [vmem:[#allocation2] sm:$0x1]
  %v10984 = vperm.slane %v10982, 0
  %vm10986 = vcmask 130048
  %v10988 = vsel %vm10986, %v10979, 0
  %10990 = vmatpush.msra.mxu0 0.0
  %10991 = vmatpush.msra.mxu0 0.0
  %10992 = vmatpush.msra.mxu0 0.0
  %10993 = vmatpush.msra.mxu0 0.0
  %10994 = vmatpush.msra.mxu0 0.0
  %10995 = vmatpush.msra.mxu0 0.0
  %10996 = vmatpush.msra.mxu0 0.0
  %10997 = vmatpush.msra.mxu0 0.0
  %10998 = vmatpush.msra.mxu0 0.0
  %10999 = vmatpush.msra.mxu0 0.0
  %11000 = vmatpush.msra.mxu0 0.0
  %11001 = vmatpush.msra.mxu0 0.0
  %11002 = vmatpush.msra.mxu0 0.0
  %11003 = vmatpush.msra.mxu0 0.0
  %11004 = vmatpush.msra.mxu0 %v10981
  %11005 = vmatpush.msra.mxu0 %v10980
  %11006 = vmatmul.f32.gmra.mxu0 %v10988
  %v11007 = vpop.f32.mrf.mxu0
  %v11008 = vadd.f32 %v10984, %v11007
  %11009 = vdwg.mxu0
  %vm11010 = vcmask 1024
  %11011 = vst.msk [vmem:[%s17] sm:$0x3] %vm11010, %v11008
  // Predicated region
  $region70: #{isnet_forward.1} parent=0 // pred_check
    _
  $region71: #{isnet_forward.1} parent=0 // pred_check_branch
    %11013 = sbr.rel (0) target = $region73
  $region72: #{isnet_forward.1} parent=0 // pred_region
    _
  $region73: #{isnet_forward.1} parent=0 // pred_fallthru
    _
  // Predicated region
  $region74: #{isnet_forward.1} parent=0 // pred_check
    _
  $region75: #{isnet_forward.1} parent=0 // pred_check_branch
    %11015 = sbr.rel (0) target = $region77
  $region76: #{isnet_forward.1} parent=0 // pred_region
    _
  $region77: #{isnet_forward.1} parent=0 // pred_fallthru
    _

</llo_original>
